<compile_context>
chip_gen: v7x
topology: tpu7x:2x2x1
jax: 0.10.0
libtpu: 0.0.40
codegen_flags: <defaults>
</compile_context>

<pallas_src>
import jax
import jax.numpy as jnp
from jax.experimental import pallas as pl
from jax.experimental.pallas import tpu as pltpu

# ---- ViT configuration implied by the module ------------------------------
IMAGE_SIZE = 100
PATCH = 10
CHANNELS = 1
DIM = 256
DEPTH = 6
HEADS = 4
DIM_HEAD = 64                                # vit-pytorch default
INNER = HEADS * DIM_HEAD                     # 256
QKV_DIM = 3 * INNER                          # 768
MLP_DIM = 512
NUM_CLASSES = 64
NUM_PATCHES = (IMAGE_SIZE // PATCH) ** 2     # 100
PATCH_DIM = CHANNELS * PATCH * PATCH         # 100
SEQ = NUM_PATCHES + 1                        # 101 (cls token)
SEQ_PAD = 128                                # padded sequence length
PATCH_DIM_PAD = 128                          # padded patch feature dim
CLS_PAD = 128                                # padded head output width
EPS = 1e-5                                   # torch.nn.LayerNorm default
SCALE = DIM_HEAD ** -0.5
NEG_INF = -1e30


# ---- in-kernel helpers ------------------------------------------------------
def _layer_norm(x, g, b):
    mu = jnp.mean(x, axis=-1, keepdims=True)
    xc = x - mu
    var = jnp.mean(xc * xc, axis=-1, keepdims=True)
    return xc * jax.lax.rsqrt(var + EPS) * g + b


def _gelu_tanh(x):
    # TODO(synk): PyTorch nn.GELU() is the exact erf form; erf lowering inside
    # Mosaic is not guaranteed, so the tanh approximation is used (diff ~1e-3).
    c = jnp.float32(0.7978845608028654)      # sqrt(2/pi)
    return 0.5 * x * (1.0 + jnp.tanh(c * (x + 0.044715 * x * x * x)))


def _bf16(x):
    return x.astype(jnp.bfloat16)


# ---- the fused ViT kernel (factory over the batch block size) ---------------
def _make_vit_kernel(bq):
    m = bq * SEQ_PAD  # flattened token rows per grid step

    def kernel(patches_ref, patch_w_ref, add_ref,
               wqkv_ref, wo_ref, w1_ref, w2_ref, sp_ref,
               headp_ref, head_w_ref, out_ref, acc_ref):
        layer = pl.program_id(1)

        # --- depth step 0: fused patch embedding + cls token + pos embedding ---
        @pl.when(layer == 0)
        def _():
            p = patches_ref[...].reshape(m, PATCH_DIM_PAD)          # bf16
            emb = jnp.dot(p, patch_w_ref[...],
                          preferred_element_type=jnp.float32)        # (m, DIM)
            # add_slab carries cls token, positional embedding and patch bias
            acc_ref[...] = emb.reshape(bq, SEQ_PAD, DIM) + add_ref[...][None]

        xs = acc_ref[...].reshape(m, DIM)                             # f32

        # packed per-layer vectors (rows of a (8, 512) slab for this layer)
        sp = sp_ref[layer]                                            # (8, 512)
        ln1_g = sp[0:1, :DIM]
        ln1_b = sp[1:2, :DIM]
        ln2_g = sp[2:3, :DIM]
        ln2_b = sp[3:4, :DIM]
        b_o = sp[4:5, :DIM]
        b1 = sp[5:6, :]                                               # (1, MLP_DIM)
        b2 = sp[6:7, :DIM]

        # --- attention (pre-norm, fused QKV, single-shot W_o, residual) ---
        h = _layer_norm(xs, ln1_g, ln1_b)
        qkv = _bf16(jnp.dot(_bf16(h), wqkv_ref[layer],
                            preferred_element_type=jnp.float32))      # (m, 768)

        kcol = jax.lax.broadcasted_iota(jnp.int32, (1, 1, SEQ_PAD), 2)
        mask = jnp.where(kcol < SEQ, 0.0, NEG_INF).astype(jnp.float32)

        heads_out = []
        for hd in range(HEADS):
            q0 = hd * DIM_HEAD
            qh = qkv[:, q0:q0 + DIM_HEAD].reshape(bq, SEQ_PAD, DIM_HEAD)
            kh = qkv[:, INNER + q0:INNER + q0 + DIM_HEAD].reshape(
                bq, SEQ_PAD, DIM_HEAD)
            vh = qkv[:, 2 * INNER + q0:2 * INNER + q0 + DIM_HEAD].reshape(
                bq, SEQ_PAD, DIM_HEAD)
            # scores: scale already folded into W_q, padded keys masked
            s = jnp.einsum('bqd,bkd->bqk', qh, kh,
                           preferred_element_type=jnp.float32) + mask
            mmax = jnp.max(s, axis=-1, keepdims=True)
            p = jnp.exp(s - mmax)
            p = p / jnp.sum(p, axis=-1, keepdims=True)
            oh = jnp.einsum('bqk,bkd->bqd', _bf16(p), vh,
                            preferred_element_type=jnp.float32)
            heads_out.append(oh.reshape(m, DIM_HEAD))
        attn = _bf16(jnp.concatenate(heads_out, axis=-1))             # (m, INNER)
        attn_out = jnp.dot(attn, wo_ref[layer],
                           preferred_element_type=jnp.float32)
        xs = xs + attn_out + b_o

        # --- feed-forward (pre-norm, bias + GELU + residual fused) ---
        h = _layer_norm(xs, ln2_g, ln2_b)
        h = jnp.dot(_bf16(h), w1_ref[layer],
                    preferred_element_type=jnp.float32) + b1
        h = _gelu_tanh(h)
        h = jnp.dot(_bf16(h), w2_ref[layer],
                    preferred_element_type=jnp.float32) + b2
        xs = xs + h

        acc_ref[...] = xs.reshape(bq, SEQ_PAD, DIM)

        # --- last depth step: fused mlp_head (LayerNorm -> Linear) + tanh ---
        @pl.when(layer == DEPTH - 1)
        def _():
            rows = acc_ref[:, 0:8, :].reshape(bq * 8, DIM)   # row 0 = cls token
            hn = _layer_norm(rows, headp_ref[0:1, :], headp_ref[1:2, :])
            logits = jnp.dot(_bf16(hn), head_w_ref[...],
                             preferred_element_type=jnp.float32)
            logits = logits + headp_ref[2:3, :CLS_PAD]
            out_ref[...] = jnp.tanh(logits).reshape(bq, 8, CLS_PAD)

    return kernel


def _pick_bq(b):
    # at least two batch grid steps so v7x megacore gets work on both cores
    for bq in (8, 4, 2):
        if b % bq == 0 and (b // bq) >= 2:
            return bq
    return 1


# ---- parameter init (deterministic, synthetic, pre-packed for the kernel) ---
def init_params(key):
    ks = jax.random.split(key, 10)

    def nrm(k, shape, std):
        return std * jax.random.normal(k, shape, jnp.float32)

    # natural (K, N) layouts; Q/K/V fused along N, head hd at columns hd*64..
    wq = nrm(ks[0], (DEPTH, DIM, INNER), DIM ** -0.5)
    wk = nrm(ks[1], (DEPTH, DIM, INNER), DIM ** -0.5)
    wv = nrm(ks[2], (DEPTH, DIM, INNER), DIM ** -0.5)
    w_qkv = jnp.concatenate([wq * SCALE, wk, wv], axis=-1)   # scale folded in
    wo = nrm(ks[3], (DEPTH, INNER, DIM), INNER ** -0.5)
    w1 = nrm(ks[4], (DEPTH, DIM, MLP_DIM), DIM ** -0.5)
    w2 = nrm(ks[5], (DEPTH, MLP_DIM, DIM), MLP_DIM ** -0.5)

    # packed per-layer vectors: rows = ln1_g, ln1_b, ln2_g, ln2_b, b_o, b1, b2, pad
    smallp = jnp.zeros((DEPTH, 8, 512), jnp.float32)
    smallp = smallp.at[:, 0, :DIM].set(1.0)          # ln1 gamma
    smallp = smallp.at[:, 2, :DIM].set(1.0)          # ln2 gamma
    # ln betas / biases start at zero (PyTorch defaults)

    patch_w = nrm(ks[6], (PATCH_DIM, DIM), PATCH_DIM ** -0.5)
    patch_b = jnp.zeros((DIM,), jnp.float32)
    pos_emb = nrm(ks[7], (SEQ, DIM), 0.02)
    cls_tok = nrm(ks[8], (DIM,), 0.02)

    patch_w_pad = jnp.zeros((PATCH_DIM_PAD, DIM), jnp.float32)
    patch_w_pad = patch_w_pad.at[:PATCH_DIM].set(patch_w)

    # add_slab: row 0 = cls + pos[0]; rows 1..SEQ-1 = pos[i] + patch bias; rest 0
    add_slab = jnp.zeros((SEQ_PAD, DIM), jnp.float32)
    add_slab = add_slab.at[0].set(cls_tok + pos_emb[0])
    add_slab = add_slab.at[1:SEQ].set(pos_emb[1:] + patch_b)

    head_w = nrm(ks[9], (DIM, NUM_CLASSES), DIM ** -0.5)
    head_b = jnp.zeros((NUM_CLASSES,), jnp.float32)
    head_w_pad = jnp.zeros((DIM, CLS_PAD), jnp.float32)
    head_w_pad = head_w_pad.at[:, :NUM_CLASSES].set(head_w)

    # headp rows: 0 = head LN gamma, 1 = head LN beta, 2 = head bias (padded)
    headp = jnp.zeros((8, DIM), jnp.float32)
    headp = headp.at[0].set(1.0)
    headp = headp.at[2, :NUM_CLASSES].set(head_b)

    bf = jnp.bfloat16
    return dict(
        patch_w=patch_w_pad.astype(bf), add_slab=add_slab,
        w_qkv=w_qkv.astype(bf), wo=wo.astype(bf),
        w1=w1.astype(bf), w2=w2.astype(bf), smallp=smallp,
        headp=headp, head_w=head_w_pad.astype(bf),
    )


# ---- forward pass -----------------------------------------------------------
def vit_forward(params, x):
    b = x.shape[0]
    nh = IMAGE_SIZE // PATCH

    # 'b c (h p1) (w p2) -> b (h w) (p1 p2 c)'
    p = x.reshape(b, CHANNELS, nh, PATCH, nh, PATCH)
    p = p.transpose(0, 2, 4, 3, 5, 1).reshape(b, NUM_PATCHES, PATCH_DIM)
    # row 0 reserved for the cls token; rows 1..NUM_PATCHES hold patches; rest zero
    patches = jnp.pad(p, ((0, 0),
                          (1, SEQ_PAD - 1 - NUM_PATCHES),
                          (0, PATCH_DIM_PAD - PATCH_DIM))).astype(jnp.bfloat16)

    bq = _pick_bq(b)
    kernel = _make_vit_kernel(bq)

    out = pl.pallas_call(
        kernel,
        grid=(b // bq, DEPTH),
        in_specs=[
            pl.BlockSpec((bq, SEQ_PAD, PATCH_DIM_PAD), lambda i, l: (i, 0, 0)),
            pl.BlockSpec((PATCH_DIM_PAD, DIM), lambda i, l: (0, 0)),
            pl.BlockSpec((SEQ_PAD, DIM), lambda i, l: (0, 0)),
            # full-DEPTH resident weight slabs (constant index maps -> one DMA)
            pl.BlockSpec((DEPTH, DIM, QKV_DIM), lambda i, l: (0, 0, 0)),
            pl.BlockSpec((DEPTH, INNER, DIM), lambda i, l: (0, 0, 0)),
            pl.BlockSpec((DEPTH, DIM, MLP_DIM), lambda i, l: (0, 0, 0)),
            pl.BlockSpec((DEPTH, MLP_DIM, DIM), lambda i, l: (0, 0, 0)),
            pl.BlockSpec((DEPTH, 8, 512), lambda i, l: (0, 0, 0)),
            pl.BlockSpec((8, DIM), lambda i, l: (0, 0)),
            pl.BlockSpec((DIM, CLS_PAD), lambda i, l: (0, 0)),
        ],
        out_specs=pl.BlockSpec((bq, 8, CLS_PAD), lambda i, l: (i, 0, 0)),
        out_shape=jax.ShapeDtypeStruct((b, 8, CLS_PAD), jnp.float32),
        scratch_shapes=[pltpu.VMEM((bq, SEQ_PAD, DIM), jnp.float32)],
        compiler_params=pltpu.CompilerParams(
            dimension_semantics=("parallel", "arbitrary"),
            vmem_limit_bytes=40 * 1024 * 1024),
    )(patches, params["patch_w"], params["add_slab"],
      params["w_qkv"], params["wo"], params["w1"], params["w2"],
      params["smallp"], params["headp"], params["head_w"])

    # row 0 of the padded head block is the cls prediction; first 64 lanes real
    return out[:, 0, :NUM_CLASSES]                   # (B, 64), tanh-bounded


if __name__ == "__main__":
    key = jax.random.PRNGKey(0)
    pkey, xkey = jax.random.split(key)
    params = init_params(pkey)
    x = jax.random.normal(xkey, (2, CHANNELS, IMAGE_SIZE, IMAGE_SIZE), jnp.float32)

    out = jax.jit(vit_forward)(params, x)
    out = jax.block_until_ready(out)

    assert out.shape == (2, NUM_CLASSES), out.shape
    assert bool(jnp.all(jnp.isfinite(out)))
    assert bool(jnp.all(jnp.abs(out) <= 1.0))  # tanh-bounded
    print("KERNEL_OK")
</pallas_src>

<mosaic_0001>
module attributes {stable_mosaic.version = 11 : i64} {
  func.func @kernel(%arg0: i32, %arg1: i32, %arg2: memref<1x128x128xbf16, #tpu.memory_space<vmem>>, %arg3: memref<128x256xbf16, #tpu.memory_space<vmem>>, %arg4: memref<128x256xf32, #tpu.memory_space<vmem>>, %arg5: memref<6x256x768xbf16, #tpu.memory_space<vmem>>, %arg6: memref<6x256x256xbf16, #tpu.memory_space<vmem>>, %arg7: memref<6x256x512xbf16, #tpu.memory_space<vmem>>, %arg8: memref<6x512x256xbf16, #tpu.memory_space<vmem>>, %arg9: memref<6x8x512xf32, #tpu.memory_space<vmem>>, %arg10: memref<8x256xf32, #tpu.memory_space<vmem>>, %arg11: memref<256x128xbf16, #tpu.memory_space<vmem>>, %arg12: memref<1x8x128xf32, #tpu.memory_space<vmem>>, %arg13: memref<1x128x256xf32, #tpu.memory_space<vmem>>) attributes {dimension_semantics = [#tpu.dimension_semantics<parallel>, #tpu.dimension_semantics<arbitrary>], iteration_bounds = array<i64: 2, 6>, scalar_prefetch = 0 : i64, scratch_operands = 1 : i64, tpu.core_type = #tpu.core_type<tc>, window_params = [{transform_indices = @transform_0, window_bounds = array<i64: 1, 128, 128>}, {pipeline_mode = #tpu.pipeline_mode<synchronous>, transform_indices = @transform_1, window_bounds = array<i64: 128, 256>}, {pipeline_mode = #tpu.pipeline_mode<synchronous>, transform_indices = @transform_2, window_bounds = array<i64: 128, 256>}, {pipeline_mode = #tpu.pipeline_mode<synchronous>, transform_indices = @transform_3, window_bounds = array<i64: 6, 256, 768>}, {pipeline_mode = #tpu.pipeline_mode<synchronous>, transform_indices = @transform_4, window_bounds = array<i64: 6, 256, 256>}, {pipeline_mode = #tpu.pipeline_mode<synchronous>, transform_indices = @transform_5, window_bounds = array<i64: 6, 256, 512>}, {pipeline_mode = #tpu.pipeline_mode<synchronous>, transform_indices = @transform_6, window_bounds = array<i64: 6, 512, 256>}, {pipeline_mode = #tpu.pipeline_mode<synchronous>, transform_indices = @transform_7, window_bounds = array<i64: 6, 8, 512>}, {pipeline_mode = #tpu.pipeline_mode<synchronous>, transform_indices = @transform_8, window_bounds = array<i64: 8, 256>}, {pipeline_mode = #tpu.pipeline_mode<synchronous>, transform_indices = @transform_9, window_bounds = array<i64: 256, 128>}, {transform_indices = @transform_10, window_bounds = array<i64: 1, 8, 128>}]} {
    %c0_i32 = arith.constant 0 : i32
    %0 = arith.cmpi eq, %arg1, %c0_i32 : i32
    %1 = arith.extui %0 : i1 to i32
    %c0_i32_0 = arith.constant 0 : i32
    %2 = arith.cmpi ne, %1, %c0_i32_0 : i32
    scf.if %2 {
      %c0_52 = arith.constant 0 : index
      %c0_53 = arith.constant 0 : index
      %c0_54 = arith.constant 0 : index
      %193 = vector.load %arg2[%c0_52, %c0_53, %c0_54] : memref<1x128x128xbf16, #tpu.memory_space<vmem>>, vector<1x128x128xbf16>
      %194 = vector.shape_cast %193 : vector<1x128x128xbf16> to vector<128x128xbf16>
      %c0_55 = arith.constant 0 : index
      %c0_56 = arith.constant 0 : index
      %195 = vector.load %arg3[%c0_55, %c0_56] : memref<128x256xbf16, #tpu.memory_space<vmem>>, vector<128x256xbf16>
      %cst_57 = arith.constant dense<0.000000e+00> : vector<128x256xf32>
      %196 = tpu.matmul %194, %195, %cst_57 {dimension_numbers = #tpu.dot_dimension_numbers<[1], [0], [0], [1], [0, 0, 1, 1], [], []>} : vector<128x128xbf16>, vector<128x256xbf16>, vector<128x256xf32> -> vector<128x256xf32>
      %197 = vector.shape_cast %196 : vector<128x256xf32> to vector<1x128x256xf32>
      %c0_58 = arith.constant 0 : index
      %c0_59 = arith.constant 0 : index
      %198 = vector.load %arg4[%c0_58, %c0_59] : memref<128x256xf32, #tpu.memory_space<vmem>>, vector<128x256xf32>
      %199 = vector.shape_cast %198 : vector<128x256xf32> to vector<1x128x256xf32>
      %200 = arith.addf %197, %199 : vector<1x128x256xf32>
      %c0_60 = arith.constant 0 : index
      %c0_61 = arith.constant 0 : index
      %c0_62 = arith.constant 0 : index
      %201 = vector.load %arg13[%c0_60, %c0_61, %c0_62] : memref<1x128x256xf32, #tpu.memory_space<vmem>>, vector<1x128x256xf32>
      tpu.vector_store %arg13[%c0_60, %c0_61, %c0_62], %200 {strides = array<i32>} : memref<1x128x256xf32, #tpu.memory_space<vmem>>, vector<1x128x256xf32>,
    } else {
    }
    %c0 = arith.constant 0 : index
    %c0_1 = arith.constant 0 : index
    %c0_2 = arith.constant 0 : index
    %3 = vector.load %arg13[%c0, %c0_1, %c0_2] : memref<1x128x256xf32, #tpu.memory_space<vmem>>, vector<1x128x256xf32>
    %4 = vector.shape_cast %3 : vector<1x128x256xf32> to vector<128x256xf32>
    %5 = arith.index_cast %arg1 : i32 to index
    %c0_3 = arith.constant 0 : index
    %c0_4 = arith.constant 0 : index
    %6 = vector.load %arg9[%5, %c0_3, %c0_4] : memref<6x8x512xf32, #tpu.memory_space<vmem>>, vector<1x8x512xf32>
    %7 = vector.shape_cast %6 : vector<1x8x512xf32> to vector<8x512xf32>
    %8 = vector.extract_strided_slice %7 {offsets = [0, 0], sizes = [1, 256], strides = [1, 1]} : vector<8x512xf32> to vector<1x256xf32>
    %9 = vector.extract_strided_slice %7 {offsets = [1, 0], sizes = [1, 256], strides = [1, 1]} : vector<8x512xf32> to vector<1x256xf32>
    %10 = vector.extract_strided_slice %7 {offsets = [2, 0], sizes = [1, 256], strides = [1, 1]} : vector<8x512xf32> to vector<1x256xf32>
    %11 = vector.extract_strided_slice %7 {offsets = [3, 0], sizes = [1, 256], strides = [1, 1]} : vector<8x512xf32> to vector<1x256xf32>
    %12 = vector.extract_strided_slice %7 {offsets = [4, 0], sizes = [1, 256], strides = [1, 1]} : vector<8x512xf32> to vector<1x256xf32>
    %13 = vector.extract_strided_slice %7 {offsets = [5, 0], sizes = [1, 512], strides = [1, 1]} : vector<8x512xf32> to vector<1x512xf32>
    %14 = vector.extract_strided_slice %7 {offsets = [6, 0], sizes = [1, 256], strides = [1, 1]} : vector<8x512xf32> to vector<1x256xf32>
    %cst = arith.constant dense<0.000000e+00> : vector<128xf32>
    %15 = vector.multi_reduction <add>, %4, %cst [1] : vector<128x256xf32> to vector<128xf32>
    %16 = vector.shape_cast %15 : vector<128xf32> to vector<128x1xf32>
    %cst_5 = arith.constant 2.560000e+02 : f32
    %17 = vector.broadcast %cst_5 : f32 to vector<128x1xf32>
    %18 = arith.divf %16, %17 : vector<128x1xf32>
    %19 = vector.broadcast %18 : vector<128x1xf32> to vector<128x256xf32>
    %20 = arith.subf %4, %19 : vector<128x256xf32>
    %21 = arith.mulf %20, %20 : vector<128x256xf32>
    %cst_6 = arith.constant dense<0.000000e+00> : vector<128xf32>
    %22 = vector.multi_reduction <add>, %21, %cst_6 [1] : vector<128x256xf32> to vector<128xf32>
    %23 = vector.shape_cast %22 : vector<128xf32> to vector<128x1xf32>
    %cst_7 = arith.constant 2.560000e+02 : f32
    %24 = vector.broadcast %cst_7 : f32 to vector<128x1xf32>
    %25 = arith.divf %23, %24 : vector<128x1xf32>
    %cst_8 = arith.constant 9.99999974E-6 : f32
    %26 = vector.broadcast %cst_8 : f32 to vector<128x1xf32>
    %27 = arith.addf %25, %26 : vector<128x1xf32>
    %28 = math.rsqrt %27 : vector<128x1xf32>
    %29 = vector.broadcast %28 : vector<128x1xf32> to vector<128x256xf32>
    %30 = arith.mulf %20, %29 : vector<128x256xf32>
    %31 = vector.broadcast %8 : vector<1x256xf32> to vector<128x256xf32>
    %32 = arith.mulf %30, %31 : vector<128x256xf32>
    %33 = vector.broadcast %9 : vector<1x256xf32> to vector<128x256xf32>
    %34 = arith.addf %32, %33 : vector<128x256xf32>
    %35 = arith.truncf %34 : vector<128x256xf32> to vector<128x256xbf16>
    %36 = arith.index_cast %arg1 : i32 to index
    %c0_9 = arith.constant 0 : index
    %c0_10 = arith.constant 0 : index
    %37 = vector.load %arg5[%36, %c0_9, %c0_10] : memref<6x256x768xbf16, #tpu.memory_space<vmem>>, vector<1x256x768xbf16>
    %38 = vector.shape_cast %37 : vector<1x256x768xbf16> to vector<256x768xbf16>
    %cst_11 = arith.constant dense<0.000000e+00> : vector<128x768xf32>
    %39 = tpu.matmul %35, %38, %cst_11 {dimension_numbers = #tpu.dot_dimension_numbers<[1], [0], [0], [1], [0, 0, 1, 1], [], []>} : vector<128x256xbf16>, vector<256x768xbf16>, vector<128x768xf32> -> vector<128x768xf32>
    %40 = arith.truncf %39 : vector<128x768xf32> to vector<128x768xbf16>
    %41 = tpu.iota {dimensions = array<i32: 2>} : vector<1x1x128xi32>
    %c101_i32 = arith.constant 101 : i32
    %42 = vector.broadcast %c101_i32 : i32 to vector<1x1x128xi32>
    %43 = arith.cmpi slt, %41, %42 : vector<1x1x128xi32>
    %cst_12 = arith.constant 0.000000e+00 : f32
    %cst_13 = arith.constant -1.000000e+30 : f32
    %44 = vector.broadcast %cst_12 : f32 to vector<1x1x128xf32>
    %45 = vector.broadcast %cst_13 : f32 to vector<1x1x128xf32>
    %46 = arith.select %43, %44, %45 : vector<1x1x128xi1>, vector<1x1x128xf32>
    %47 = vector.extract_strided_slice %40 {offsets = [0, 0], sizes = [128, 64], strides = [1, 1]} : vector<128x768xbf16> to vector<128x64xbf16>
    %48 = vector.shape_cast %47 : vector<128x64xbf16> to vector<1x128x64xbf16>
    %49 = vector.extract_strided_slice %40 {offsets = [0, 256], sizes = [128, 64], strides = [1, 1]} : vector<128x768xbf16> to vector<128x64xbf16>
    %50 = vector.shape_cast %49 : vector<128x64xbf16> to vector<1x128x64xbf16>
    %51 = vector.extract_strided_slice %40 {offsets = [0, 512], sizes = [128, 64], strides = [1, 1]} : vector<128x768xbf16> to vector<128x64xbf16>
    %52 = vector.shape_cast %51 : vector<128x64xbf16> to vector<1x128x64xbf16>
    "tpu.trace_start"() <{level = 10 : i32, message = "bqd,bkd->bqk"}> : () -> ()
    %cst_14 = arith.constant dense<0.000000e+00> : vector<1x128x128xf32>
    %53 = tpu.matmul %48, %50, %cst_14 {dimension_numbers = #tpu.dot_dimension_numbers<[2], [2], [1], [1], [0, 0, 0, 1, 1, 1], [0], [0]>} : vector<1x128x64xbf16>, vector<1x128x64xbf16>, vector<1x128x128xf32> -> vector<1x128x128xf32>
    "tpu.trace_stop"() : () -> ()
    %54 = vector.broadcast %46 : vector<1x1x128xf32> to vector<1x128x128xf32>
    %55 = arith.addf %53, %54 : vector<1x128x128xf32>
    %cst_15 = arith.constant dense<0xFF800000> : vector<1x128xf32>
    %56 = vector.multi_reduction <maximumf>, %55, %cst_15 [2] : vector<1x128x128xf32> to vector<1x128xf32>
    %57 = vector.shape_cast %56 : vector<1x128xf32> to vector<1x128x1xf32>
    %58 = vector.broadcast %57 : vector<1x128x1xf32> to vector<1x128x128xf32>
    %59 = arith.subf %55, %58 : vector<1x128x128xf32>
    %60 = math.exp %59 : vector<1x128x128xf32>
    %cst_16 = arith.constant dense<0.000000e+00> : vector<1x128xf32>
    %61 = vector.multi_reduction <add>, %60, %cst_16 [2] : vector<1x128x128xf32> to vector<1x128xf32>
    %62 = vector.shape_cast %61 : vector<1x128xf32> to vector<1x128x1xf32>
    %63 = vector.broadcast %62 : vector<1x128x1xf32> to vector<1x128x128xf32>
    %64 = arith.divf %60, %63 : vector<1x128x128xf32>
    %65 = arith.truncf %64 : vector<1x128x128xf32> to vector<1x128x128xbf16>
    "tpu.trace_start"() <{level = 10 : i32, message = "bqk,bkd->bqd"}> : () -> ()
    %cst_17 = arith.constant dense<0.000000e+00> : vector<1x128x64xf32>
    %66 = tpu.matmul %65, %52, %cst_17 {dimension_numbers = #tpu.dot_dimension_numbers<[2], [1], [1], [2], [0, 0, 0, 1, 1, 2], [0], [0]>} : vector<1x128x128xbf16>, vector<1x128x64xbf16>, vector<1x128x64xf32> -> vector<1x128x64xf32>
    "tpu.trace_stop"() : () -> ()
    %67 = vector.shape_cast %66 : vector<1x128x64xf32> to vector<128x64xf32>
    %68 = vector.extract_strided_slice %40 {offsets = [0, 64], sizes = [128, 64], strides = [1, 1]} : vector<128x768xbf16> to vector<128x64xbf16>
    %69 = vector.shape_cast %68 : vector<128x64xbf16> to vector<1x128x64xbf16>
    %70 = vector.extract_strided_slice %40 {offsets = [0, 320], sizes = [128, 64], strides = [1, 1]} : vector<128x768xbf16> to vector<128x64xbf16>
    %71 = vector.shape_cast %70 : vector<128x64xbf16> to vector<1x128x64xbf16>
    %72 = vector.extract_strided_slice %40 {offsets = [0, 576], sizes = [128, 64], strides = [1, 1]} : vector<128x768xbf16> to vector<128x64xbf16>
    %73 = vector.shape_cast %72 : vector<128x64xbf16> to vector<1x128x64xbf16>
    "tpu.trace_start"() <{level = 10 : i32, message = "bqd,bkd->bqk"}> : () -> ()
    %cst_18 = arith.constant dense<0.000000e+00> : vector<1x128x128xf32>
    %74 = tpu.matmul %69, %71, %cst_18 {dimension_numbers = #tpu.dot_dimension_numbers<[2], [2], [1], [1], [0, 0, 0, 1, 1, 1], [0], [0]>} : vector<1x128x64xbf16>, vector<1x128x64xbf16>, vector<1x128x128xf32> -> vector<1x128x128xf32>
    "tpu.trace_stop"() : () -> ()
    %75 = vector.broadcast %46 : vector<1x1x128xf32> to vector<1x128x128xf32>
    %76 = arith.addf %74, %75 : vector<1x128x128xf32>
    %cst_19 = arith.constant dense<0xFF800000> : vector<1x128xf32>
    %77 = vector.multi_reduction <maximumf>, %76, %cst_19 [2] : vector<1x128x128xf32> to vector<1x128xf32>
    %78 = vector.shape_cast %77 : vector<1x128xf32> to vector<1x128x1xf32>
    %79 = vector.broadcast %78 : vector<1x128x1xf32> to vector<1x128x128xf32>
    %80 = arith.subf %76, %79 : vector<1x128x128xf32>
    %81 = math.exp %80 : vector<1x128x128xf32>
    %cst_20 = arith.constant dense<0.000000e+00> : vector<1x128xf32>
    %82 = vector.multi_reduction <add>, %81, %cst_20 [2] : vector<1x128x128xf32> to vector<1x128xf32>
    %83 = vector.shape_cast %82 : vector<1x128xf32> to vector<1x128x1xf32>
    %84 = vector.broadcast %83 : vector<1x128x1xf32> to vector<1x128x128xf32>
    %85 = arith.divf %81, %84 : vector<1x128x128xf32>
    %86 = arith.truncf %85 : vector<1x128x128xf32> to vector<1x128x128xbf16>
    "tpu.trace_start"() <{level = 10 : i32, message = "bqk,bkd->bqd"}> : () -> ()
    %cst_21 = arith.constant dense<0.000000e+00> : vector<1x128x64xf32>
    %87 = tpu.matmul %86, %73, %cst_21 {dimension_numbers = #tpu.dot_dimension_numbers<[2], [1], [1], [2], [0, 0, 0, 1, 1, 2], [0], [0]>} : vector<1x128x128xbf16>, vector<1x128x64xbf16>, vector<1x128x64xf32> -> vector<1x128x64xf32>
    "tpu.trace_stop"() : () -> ()
    %88 = vector.shape_cast %87 : vector<1x128x64xf32> to vector<128x64xf32>
    %89 = vector.extract_strided_slice %40 {offsets = [0, 128], sizes = [128, 64], strides = [1, 1]} : vector<128x768xbf16> to vector<128x64xbf16>
    %90 = vector.shape_cast %89 : vector<128x64xbf16> to vector<1x128x64xbf16>
    %91 = vector.extract_strided_slice %40 {offsets = [0, 384], sizes = [128, 64], strides = [1, 1]} : vector<128x768xbf16> to vector<128x64xbf16>
    %92 = vector.shape_cast %91 : vector<128x64xbf16> to vector<1x128x64xbf16>
    %93 = vector.extract_strided_slice %40 {offsets = [0, 640], sizes = [128, 64], strides = [1, 1]} : vector<128x768xbf16> to vector<128x64xbf16>
    %94 = vector.shape_cast %93 : vector<128x64xbf16> to vector<1x128x64xbf16>
    "tpu.trace_start"() <{level = 10 : i32, message = "bqd,bkd->bqk"}> : () -> ()
    %cst_22 = arith.constant dense<0.000000e+00> : vector<1x128x128xf32>
    %95 = tpu.matmul %90, %92, %cst_22 {dimension_numbers = #tpu.dot_dimension_numbers<[2], [2], [1], [1], [0, 0, 0, 1, 1, 1], [0], [0]>} : vector<1x128x64xbf16>, vector<1x128x64xbf16>, vector<1x128x128xf32> -> vector<1x128x128xf32>
    "tpu.trace_stop"() : () -> ()
    %96 = vector.broadcast %46 : vector<1x1x128xf32> to vector<1x128x128xf32>
    %97 = arith.addf %95, %96 : vector<1x128x128xf32>
    %cst_23 = arith.constant dense<0xFF800000> : vector<1x128xf32>
    %98 = vector.multi_reduction <maximumf>, %97, %cst_23 [2] : vector<1x128x128xf32> to vector<1x128xf32>
    %99 = vector.shape_cast %98 : vector<1x128xf32> to vector<1x128x1xf32>
    %100 = vector.broadcast %99 : vector<1x128x1xf32> to vector<1x128x128xf32>
    %101 = arith.subf %97, %100 : vector<1x128x128xf32>
    %102 = math.exp %101 : vector<1x128x128xf32>
    %cst_24 = arith.constant dense<0.000000e+00> : vector<1x128xf32>
    %103 = vector.multi_reduction <add>, %102, %cst_24 [2] : vector<1x128x128xf32> to vector<1x128xf32>
    %104 = vector.shape_cast %103 : vector<1x128xf32> to vector<1x128x1xf32>
    %105 = vector.broadcast %104 : vector<1x128x1xf32> to vector<1x128x128xf32>
    %106 = arith.divf %102, %105 : vector<1x128x128xf32>
    %107 = arith.truncf %106 : vector<1x128x128xf32> to vector<1x128x128xbf16>
    "tpu.trace_start"() <{level = 10 : i32, message = "bqk,bkd->bqd"}> : () -> ()
    %cst_25 = arith.constant dense<0.000000e+00> : vector<1x128x64xf32>
    %108 = tpu.matmul %107, %94, %cst_25 {dimension_numbers = #tpu.dot_dimension_numbers<[2], [1], [1], [2], [0, 0, 0, 1, 1, 2], [0], [0]>} : vector<1x128x128xbf16>, vector<1x128x64xbf16>, vector<1x128x64xf32> -> vector<1x128x64xf32>
    "tpu.trace_stop"() : () -> ()
    %109 = vector.shape_cast %108 : vector<1x128x64xf32> to vector<128x64xf32>
    %110 = vector.extract_strided_slice %40 {offsets = [0, 192], sizes = [128, 64], strides = [1, 1]} : vector<128x768xbf16> to vector<128x64xbf16>
    %111 = vector.shape_cast %110 : vector<128x64xbf16> to vector<1x128x64xbf16>
    %112 = vector.extract_strided_slice %40 {offsets = [0, 448], sizes = [128, 64], strides = [1, 1]} : vector<128x768xbf16> to vector<128x64xbf16>
    %113 = vector.shape_cast %112 : vector<128x64xbf16> to vector<1x128x64xbf16>
    %114 = vector.extract_strided_slice %40 {offsets = [0, 704], sizes = [128, 64], strides = [1, 1]} : vector<128x768xbf16> to vector<128x64xbf16>
    %115 = vector.shape_cast %114 : vector<128x64xbf16> to vector<1x128x64xbf16>
    "tpu.trace_start"() <{level = 10 : i32, message = "bqd,bkd->bqk"}> : () -> ()
    %cst_26 = arith.constant dense<0.000000e+00> : vector<1x128x128xf32>
    %116 = tpu.matmul %111, %113, %cst_26 {dimension_numbers = #tpu.dot_dimension_numbers<[2], [2], [1], [1], [0, 0, 0, 1, 1, 1], [0], [0]>} : vector<1x128x64xbf16>, vector<1x128x64xbf16>, vector<1x128x128xf32> -> vector<1x128x128xf32>
    "tpu.trace_stop"() : () -> ()
    %117 = vector.broadcast %46 : vector<1x1x128xf32> to vector<1x128x128xf32>
    %118 = arith.addf %116, %117 : vector<1x128x128xf32>
    %cst_27 = arith.constant dense<0xFF800000> : vector<1x128xf32>
    %119 = vector.multi_reduction <maximumf>, %118, %cst_27 [2] : vector<1x128x128xf32> to vector<1x128xf32>
    %120 = vector.shape_cast %119 : vector<1x128xf32> to vector<1x128x1xf32>
    %121 = vector.broadcast %120 : vector<1x128x1xf32> to vector<1x128x128xf32>
    %122 = arith.subf %118, %121 : vector<1x128x128xf32>
    %123 = math.exp %122 : vector<1x128x128xf32>
    %cst_28 = arith.constant dense<0.000000e+00> : vector<1x128xf32>
    %124 = vector.multi_reduction <add>, %123, %cst_28 [2] : vector<1x128x128xf32> to vector<1x128xf32>
    %125 = vector.shape_cast %124 : vector<1x128xf32> to vector<1x128x1xf32>
    %126 = vector.broadcast %125 : vector<1x128x1xf32> to vector<1x128x128xf32>
    %127 = arith.divf %123, %126 : vector<1x128x128xf32>
    %128 = arith.truncf %127 : vector<1x128x128xf32> to vector<1x128x128xbf16>
    "tpu.trace_start"() <{level = 10 : i32, message = "bqk,bkd->bqd"}> : () -> ()
    %cst_29 = arith.constant dense<0.000000e+00> : vector<1x128x64xf32>
    %129 = tpu.matmul %128, %115, %cst_29 {dimension_numbers = #tpu.dot_dimension_numbers<[2], [1], [1], [2], [0, 0, 0, 1, 1, 2], [0], [0]>} : vector<1x128x128xbf16>, vector<1x128x64xbf16>, vector<1x128x64xf32> -> vector<1x128x64xf32>
    "tpu.trace_stop"() : () -> ()
    %130 = vector.shape_cast %129 : vector<1x128x64xf32> to vector<128x64xf32>
    %131 = tpu.concatenate %67, %88, %109, %130 in 1 : vector<128x64xf32>, vector<128x64xf32>, vector<128x64xf32>, vector<128x64xf32> -> vector<128x256xf32>
    %132 = arith.truncf %131 : vector<128x256xf32> to vector<128x256xbf16>
    %133 = arith.index_cast %arg1 : i32 to index
    %c0_30 = arith.constant 0 : index
    %c0_31 = arith.constant 0 : index
    %134 = vector.load %arg6[%133, %c0_30, %c0_31] : memref<6x256x256xbf16, #tpu.memory_space<vmem>>, vector<1x256x256xbf16>
    %135 = vector.shape_cast %134 : vector<1x256x256xbf16> to vector<256x256xbf16>
    %cst_32 = arith.constant dense<0.000000e+00> : vector<128x256xf32>
    %136 = tpu.matmul %132, %135, %cst_32 {dimension_numbers = #tpu.dot_dimension_numbers<[1], [0], [0], [1], [0, 0, 1, 1], [], []>} : vector<128x256xbf16>, vector<256x256xbf16>, vector<128x256xf32> -> vector<128x256xf32>
    %137 = arith.addf %4, %136 : vector<128x256xf32>
    %138 = vector.broadcast %12 : vector<1x256xf32> to vector<128x256xf32>
    %139 = arith.addf %137, %138 : vector<128x256xf32>
    %cst_33 = arith.constant dense<0.000000e+00> : vector<128xf32>
    %140 = vector.multi_reduction <add>, %139, %cst_33 [1] : vector<128x256xf32> to vector<128xf32>
    %141 = vector.shape_cast %140 : vector<128xf32> to vector<128x1xf32>
    %cst_34 = arith.constant 2.560000e+02 : f32
    %142 = vector.broadcast %cst_34 : f32 to vector<128x1xf32>
    %143 = arith.divf %141, %142 : vector<128x1xf32>
    %144 = vector.broadcast %143 : vector<128x1xf32> to vector<128x256xf32>
    %145 = arith.subf %139, %144 : vector<128x256xf32>
    %146 = arith.mulf %145, %145 : vector<128x256xf32>
    %cst_35 = arith.constant dense<0.000000e+00> : vector<128xf32>
    %147 = vector.multi_reduction <add>, %146, %cst_35 [1] : vector<128x256xf32> to vector<128xf32>
    %148 = vector.shape_cast %147 : vector<128xf32> to vector<128x1xf32>
    %cst_36 = arith.constant 2.560000e+02 : f32
    %149 = vector.broadcast %cst_36 : f32 to vector<128x1xf32>
    %150 = arith.divf %148, %149 : vector<128x1xf32>
    %cst_37 = arith.constant 9.99999974E-6 : f32
    %151 = vector.broadcast %cst_37 : f32 to vector<128x1xf32>
    %152 = arith.addf %150, %151 : vector<128x1xf32>
    %153 = math.rsqrt %152 : vector<128x1xf32>
    %154 = vector.broadcast %153 : vector<128x1xf32> to vector<128x256xf32>
    %155 = arith.mulf %145, %154 : vector<128x256xf32>
    %156 = vector.broadcast %10 : vector<1x256xf32> to vector<128x256xf32>
    %157 = arith.mulf %155, %156 : vector<128x256xf32>
    %158 = vector.broadcast %11 : vector<1x256xf32> to vector<128x256xf32>
    %159 = arith.addf %157, %158 : vector<128x256xf32>
    %160 = arith.truncf %159 : vector<128x256xf32> to vector<128x256xbf16>
    %161 = arith.index_cast %arg1 : i32 to index
    %c0_38 = arith.constant 0 : index
    %c0_39 = arith.constant 0 : index
    %162 = vector.load %arg7[%161, %c0_38, %c0_39] : memref<6x256x512xbf16, #tpu.memory_space<vmem>>, vector<1x256x512xbf16>
    %163 = vector.shape_cast %162 : vector<1x256x512xbf16> to vector<256x512xbf16>
    %cst_40 = arith.constant dense<0.000000e+00> : vector<128x512xf32>
    %164 = tpu.matmul %160, %163, %cst_40 {dimension_numbers = #tpu.dot_dimension_numbers<[1], [0], [0], [1], [0, 0, 1, 1], [], []>} : vector<128x256xbf16>, vector<256x512xbf16>, vector<128x512xf32> -> vector<128x512xf32>
    %165 = vector.broadcast %13 : vector<1x512xf32> to vector<128x512xf32>
    %166 = arith.addf %164, %165 : vector<128x512xf32>
    %cst_41 = arith.constant 5.000000e-01 : f32
    %167 = vector.broadcast %cst_41 : f32 to vector<128x512xf32>
    %168 = arith.mulf %167, %166 : vector<128x512xf32>
    %cst_42 = arith.constant 4.471500e-02 : f32
    %169 = vector.broadcast %cst_42 : f32 to vector<128x512xf32>
    %170 = arith.mulf %169, %166 : vector<128x512xf32>
    %171 = arith.mulf %170, %166 : vector<128x512xf32>
    %172 = arith.mulf %171, %166 : vector<128x512xf32>
    %173 = arith.addf %166, %172 : vector<128x512xf32>
    %cst_43 = arith.constant 0.797884583 : f32
    %174 = vector.broadcast %cst_43 : f32 to vector<128x512xf32>
    %175 = arith.mulf %174, %173 : vector<128x512xf32>
    %176 = math.tanh %175 : vector<128x512xf32>
    %cst_44 = arith.constant 1.000000e+00 : f32
    %177 = vector.broadcast %cst_44 : f32 to vector<128x512xf32>
    %178 = arith.addf %177, %176 : vector<128x512xf32>
    %179 = arith.mulf %168, %178 : vector<128x512xf32>
    %180 = arith.truncf %179 : vector<128x512xf32> to vector<128x512xbf16>
    %181 = arith.index_cast %arg1 : i32 to index
    %c0_45 = arith.constant 0 : index
    %c0_46 = arith.constant 0 : index
    %182 = vector.load %arg8[%181, %c0_45, %c0_46] : memref<6x512x256xbf16, #tpu.memory_space<vmem>>, vector<1x512x256xbf16>
    %183 = vector.shape_cast %182 : vector<1x512x256xbf16> to vector<512x256xbf16>
    %cst_47 = arith.constant dense<0.000000e+00> : vector<128x256xf32>
    %184 = tpu.matmul %180, %183, %cst_47 {dimension_numbers = #tpu.dot_dimension_numbers<[1], [0], [0], [1], [0, 0, 1, 1], [], []>} : vector<128x512xbf16>, vector<512x256xbf16>, vector<128x256xf32> -> vector<128x256xf32>
    %185 = vector.broadcast %14 : vector<1x256xf32> to vector<128x256xf32>
    %186 = arith.addf %184, %185 : vector<128x256xf32>
    %187 = arith.addf %139, %186 : vector<128x256xf32>
    %188 = vector.shape_cast %187 : vector<128x256xf32> to vector<1x128x256xf32>
    %c0_48 = arith.constant 0 : index
    %c0_49 = arith.constant 0 : index
    %c0_50 = arith.constant 0 : index
    %189 = vector.load %arg13[%c0_48, %c0_49, %c0_50] : memref<1x128x256xf32, #tpu.memory_space<vmem>>, vector<1x128x256xf32>
    tpu.vector_store %arg13[%c0_48, %c0_49, %c0_50], %188 {strides = array<i32>} : memref<1x128x256xf32, #tpu.memory_space<vmem>>, vector<1x128x256xf32>,
    %c5_i32 = arith.constant 5 : i32
    %190 = arith.cmpi eq, %arg1, %c5_i32 : i32
    %191 = arith.extui %190 : i1 to i32
    %c0_i32_51 = arith.constant 0 : i32
    %192 = arith.cmpi ne, %191, %c0_i32_51 : i32
    scf.if %192 {
      %c0_52 = arith.constant 0 : index
      %c0_53 = arith.constant 0 : index
      %c0_54 = arith.constant 0 : index
      %193 = vector.load %arg13[%c0_52, %c0_53, %c0_54] : memref<1x128x256xf32, #tpu.memory_space<vmem>>, vector<1x8x256xf32>
      %194 = vector.shape_cast %193 : vector<1x8x256xf32> to vector<8x256xf32>
      %c0_55 = arith.constant 0 : index
      %c0_56 = arith.constant 0 : index
      %195 = vector.load %arg10[%c0_55, %c0_56] : memref<8x256xf32, #tpu.memory_space<vmem>>, vector<1x256xf32>
      %c1 = arith.constant 1 : index
      %c0_57 = arith.constant 0 : index
      %196 = vector.load %arg10[%c1, %c0_57] : memref<8x256xf32, #tpu.memory_space<vmem>>, vector<1x256xf32>
      %cst_58 = arith.constant dense<0.000000e+00> : vector<8xf32>
      %197 = vector.multi_reduction <add>, %194, %cst_58 [1] : vector<8x256xf32> to vector<8xf32>
      %198 = vector.shape_cast %197 : vector<8xf32> to vector<8x1xf32>
      %cst_59 = arith.constant 2.560000e+02 : f32
      %199 = vector.broadcast %cst_59 : f32 to vector<8x1xf32>
      %200 = arith.divf %198, %199 : vector<8x1xf32>
      %201 = vector.broadcast %200 : vector<8x1xf32> to vector<8x256xf32>
      %202 = arith.subf %194, %201 : vector<8x256xf32>
      %203 = arith.mulf %202, %202 : vector<8x256xf32>
      %cst_60 = arith.constant dense<0.000000e+00> : vector<8xf32>
      %204 = vector.multi_reduction <add>, %203, %cst_60 [1] : vector<8x256xf32> to vector<8xf32>
      %205 = vector.shape_cast %204 : vector<8xf32> to vector<8x1xf32>
      %cst_61 = arith.constant 2.560000e+02 : f32
      %206 = vector.broadcast %cst_61 : f32 to vector<8x1xf32>
      %207 = arith.divf %205, %206 : vector<8x1xf32>
      %cst_62 = arith.constant 9.99999974E-6 : f32
      %208 = vector.broadcast %cst_62 : f32 to vector<8x1xf32>
      %209 = arith.addf %207, %208 : vector<8x1xf32>
      %210 = math.rsqrt %209 : vector<8x1xf32>
      %211 = vector.broadcast %210 : vector<8x1xf32> to vector<8x256xf32>
      %212 = arith.mulf %202, %211 : vector<8x256xf32>
      %213 = vector.broadcast %195 : vector<1x256xf32> to vector<8x256xf32>
      %214 = arith.mulf %212, %213 : vector<8x256xf32>
      %215 = vector.broadcast %196 : vector<1x256xf32> to vector<8x256xf32>
      %216 = arith.addf %214, %215 : vector<8x256xf32>
      %217 = arith.truncf %216 : vector<8x256xf32> to vector<8x256xbf16>
      %c0_63 = arith.constant 0 : index
      %c0_64 = arith.constant 0 : index
      %218 = vector.load %arg11[%c0_63, %c0_64] : memref<256x128xbf16, #tpu.memory_space<vmem>>, vector<256x128xbf16>
      %cst_65 = arith.constant dense<0.000000e+00> : vector<8x128xf32>
      %219 = tpu.matmul %217, %218, %cst_65 {dimension_numbers = #tpu.dot_dimension_numbers<[1], [0], [0], [1], [0, 0, 1, 1], [], []>} : vector<8x256xbf16>, vector<256x128xbf16>, vector<8x128xf32> -> vector<8x128xf32>
      %c2 = arith.constant 2 : index
      %c0_66 = arith.constant 0 : index
      %220 = vector.load %arg10[%c2, %c0_66] : memref<8x256xf32, #tpu.memory_space<vmem>>, vector<1x128xf32>
      %221 = vector.broadcast %220 : vector<1x128xf32> to vector<8x128xf32>
      %222 = arith.addf %219, %221 : vector<8x128xf32>
      %223 = math.tanh %222 : vector<8x128xf32>
      %224 = vector.shape_cast %223 : vector<8x128xf32> to vector<1x8x128xf32>
      %c0_67 = arith.constant 0 : index
      %c0_68 = arith.constant 0 : index
      %c0_69 = arith.constant 0 : index
      %225 = vector.load %arg12[%c0_67, %c0_68, %c0_69] : memref<1x8x128xf32, #tpu.memory_space<vmem>>, vector<1x8x128xf32>
      tpu.vector_store %arg12[%c0_67, %c0_68, %c0_69], %224 {strides = array<i32>} : memref<1x8x128xf32, #tpu.memory_space<vmem>>, vector<1x8x128xf32>,
    } else {
    }
    return
  }
  func.func @transform_0(%arg0: i32, %arg1: i32) -> (i32, i32, i32) {
    %c0_i32 = arith.constant 0 : i32
    %c0_i32_0 = arith.constant 0 : i32
    %c0_i32_1 = arith.constant 0 : i32
    return %arg0, %c0_i32, %c0_i32_0 : i32, i32, i32
  }
  func.func @transform_1(%arg0: i32, %arg1: i32) -> (i32, i32) {
    %c0_i32 = arith.constant 0 : i32
    %c0_i32_0 = arith.constant 0 : i32
    %c0_i32_1 = arith.constant 0 : i32
    return %c0_i32, %c0_i32_0 : i32, i32
  }
  func.func @transform_2(%arg0: i32, %arg1: i32) -> (i32, i32) {
    %c0_i32 = arith.constant 0 : i32
    %c0_i32_0 = arith.constant 0 : i32
    %c0_i32_1 = arith.constant 0 : i32
    return %c0_i32, %c0_i32_0 : i32, i32
  }
  func.func @transform_3(%arg0: i32, %arg1: i32) -> (i32, i32, i32) {
    %c0_i32 = arith.constant 0 : i32
    %c0_i32_0 = arith.constant 0 : i32
    %c0_i32_1 = arith.constant 0 : i32
    %c0_i32_2 = arith.constant 0 : i32
    return %c0_i32, %c0_i32_0, %c0_i32_1 : i32, i32, i32
  }
  func.func @transform_4(%arg0: i32, %arg1: i32) -> (i32, i32, i32) {
    %c0_i32 = arith.constant 0 : i32
    %c0_i32_0 = arith.constant 0 : i32
    %c0_i32_1 = arith.constant 0 : i32
    %c0_i32_2 = arith.constant 0 : i32
    return %c0_i32, %c0_i32_0, %c0_i32_1 : i32, i32, i32
  }
  func.func @transform_5(%arg0: i32, %arg1: i32) -> (i32, i32, i32) {
    %c0_i32 = arith.constant 0 : i32
    %c0_i32_0 = arith.constant 0 : i32
    %c0_i32_1 = arith.constant 0 : i32
    %c0_i32_2 = arith.constant 0 : i32
    return %c0_i32, %c0_i32_0, %c0_i32_1 : i32, i32, i32
  }
  func.func @transform_6(%arg0: i32, %arg1: i32) -> (i32, i32, i32) {
    %c0_i32 = arith.constant 0 : i32
    %c0_i32_0 = arith.constant 0 : i32
    %c0_i32_1 = arith.constant 0 : i32
    %c0_i32_2 = arith.constant 0 : i32
    return %c0_i32, %c0_i32_0, %c0_i32_1 : i32, i32, i32
  }
  func.func @transform_7(%arg0: i32, %arg1: i32) -> (i32, i32, i32) {
    %c0_i32 = arith.constant 0 : i32
    %c0_i32_0 = arith.constant 0 : i32
    %c0_i32_1 = arith.constant 0 : i32
    %c0_i32_2 = arith.constant 0 : i32
    return %c0_i32, %c0_i32_0, %c0_i32_1 : i32, i32, i32
  }
  func.func @transform_8(%arg0: i32, %arg1: i32) -> (i32, i32) {
    %c0_i32 = arith.constant 0 : i32
    %c0_i32_0 = arith.constant 0 : i32
    %c0_i32_1 = arith.constant 0 : i32
    return %c0_i32, %c0_i32_0 : i32, i32
  }
  func.func @transform_9(%arg0: i32, %arg1: i32) -> (i32, i32) {
    %c0_i32 = arith.constant 0 : i32
    %c0_i32_0 = arith.constant 0 : i32
    %c0_i32_1 = arith.constant 0 : i32
    return %c0_i32, %c0_i32_0 : i32, i32
  }
  func.func @transform_10(%arg0: i32, %arg1: i32) -> (i32, i32, i32) {
    %c0_i32 = arith.constant 0 : i32
    %c0_i32_0 = arith.constant 0 : i32
    %c0_i32_1 = arith.constant 0 : i32
    return %arg0, %c0_i32, %c0_i32_0 : i32, i32, i32
  }
}

</mosaic_0001>

<llo_original>
// kernel: vit_forward.1
$region0: #{vit_forward.1}
  #allocation0 [shape = 'u32[]', space=smem, size = 0x4, offset = 0x4, fixed_abs, tag = 'smem constant byte address 0x4 - core index']
  #allocation1 [shape = 'u32[144,128]{1,0:T(1,128)}', space=vmem, size = 0x12000, scoped, tag = 'internal scratch']
  #allocation2 [shape = 'f32[1,128,256]{2,1,0:T(8,128)}', space=vmem, size = 0x20000, scoped, tag = 'scratch operand']
  %s0 = inlined_call_operand.vmem [shape: bf16[2,128,128], index: 0, kind: input, shape index: {}]
  %s1 = inlined_call_operand.vmem [shape: bf16[128,256], index: 1, kind: input, shape index: {}]
  %s2 = inlined_call_operand.vmem [shape: f32[128,256], index: 2, kind: input, shape index: {}]
  %s3 = inlined_call_operand.vmem [shape: bf16[6,256,768], index: 3, kind: input, shape index: {}]
  %s4 = inlined_call_operand.vmem [shape: bf16[6,256,256], index: 4, kind: input, shape index: {}]
  %s5 = inlined_call_operand.hbm [shape: bf16[6,256,512], index: 5, kind: input, shape index: {}]
  %s6 = inlined_call_operand.hbm [shape: bf16[6,512,256], index: 6, kind: input, shape index: {}]
  %s7 = inlined_call_operand.vmem [shape: f32[6,8,512], index: 7, kind: input, shape index: {}]
  %s8 = inlined_call_operand.vmem [shape: f32[8,256], index: 8, kind: input, shape index: {}]
  %s9 = inlined_call_operand.vmem [shape: bf16[256,128], index: 9, kind: input, shape index: {}]
  %s10 = inlined_call_operand.vmem [shape: f32[2,8,128], index: 10, kind: output, shape index: {}]
  %s11 = sld [smem:[#allocation0]]
  $region89: #{vit_forward.1} parent=0
    _
  %s13 = ssub.s32 1, %s11
  %s14 = scalar_select 0, %s13, %s11
  $region1: #{vit_forward.1} parent=0
    #allocation3 [shape = 'u8[1572864]{0}', space=vmem, size = 0x180000, scoped, tag = 'input window, operand 5, single buffered']
    #allocation4 [shape = 's32[2]{0}', space=sflag, size = 0x8, scoped, tag = 'scoped memory for vit_forward.1']
    #allocation5 [shape = 'u8[1572864]{0}', space=vmem, size = 0x180000, scoped, tag = 'input window, operand 6, single buffered']
    #allocation6 [shape = 's32[1]{0}', space=sflag, size = 0x4, scoped, tag = 'scoped memory for vit_forward.1']
    %15 = vsyncpa [#allocation4], 0
    %16 = vsyncpa [#allocation6], 0
    loop: start=0, step=1, limit=14
    $region2: #{vit_forward.1} parent=1 // loop_pre_header
      _
    $region3: #{vit_forward.1} parent=1 // loop_header
      %s18 = sphi 0, %s22
      %p19 = scmp.ge.s32.totalorder %s18, 14
      %s25 = sphi 0, %s37
      %s26 = sphi 0, %s33
      %s27 = sphi 0, %s25
      %s28 = sphi 0, %s26
      %s29 = sphi 0, %s27
      %s30 = sphi 0, %s28
      %s40 = sphi 0, %s42
      %s43 = sphi 0, %s40
      %s44 = sphi 0, %s43
      %s60 = sphi 0, %s44
      %s64 = sphi 0, %s64
      %s66 = sphi 0, %s64
      %s67 = sphi 0, %s66
      %s81 = sphi 0, %s67
      %s85 = sphi 0, %s85
      %s87 = sphi 0, %s85
      %s88 = sphi 0, %s87
      %s102 = sphi 0, %s88
      %s106 = sphi 0, %s106
      %s108 = sphi 0, %s106
      %s109 = sphi 0, %s108
      %s123 = sphi 0, %s109
      %s127 = sphi 0, %s127
      %s129 = sphi 0, %s127
      %s130 = sphi 0, %s129
      %s144 = sphi 0, %s130
      %s148 = sphi 0, %s148
      %s150 = sphi 0, %s148
      %s151 = sphi 0, %s150
      %s165 = sphi 0, %s151
      %s169 = sphi 0, %s169
      %s171 = sphi 0, %s169
      %s172 = sphi 0, %s171
      %s186 = sphi 0, %s172
      %s190 = sphi 0, %s190
      %s192 = sphi 0, %s190
      %s193 = sphi 0, %s192
      %s207 = sphi 0, %s193
      %s211 = sphi 0, %s211
      %s213 = sphi 0, %s211
      %s214 = sphi 0, %s213
      %s228 = sphi 0, %s214
      %s232 = sphi 0, %s232
      %s234 = sphi 0, %s232
      %s235 = sphi 0, %s234
      %s249 = sphi 0, %s235
      %s255 = sphi 0, %s257
      %s258 = sphi 0, %s255
      %s259 = sphi 0, %s258
      %s275 = sphi 0, %s259
    $region4: #{vit_forward.1} parent=1 // loop_header_branch
      %21 = sbr.rel (%p19) target = $region8
    $region5: #{vit_forward.1} parent=1 // loop_body
      %s23 = ssub.s32 %s18, 1
      %s24 = ssub.s32 %s18, 2
      %s31 = sadd.s32 1, %s26
      %p32 = scmp.ge.s32.totalorder %s31, 6
      %s33 = scalar_select %p32, 0, %s31
      %s34 = sadd.s32 1, %s25
      %s35 = scalar_select %p32, %s34, %s25
      %p36 = scmp.ge.s32.totalorder %s35, 2
      %s37 = scalar_select %p36, 0, %s35
      %s38 = ssub.s32 %s25, %s37
      %p39 = scmp.eq.s32.totalorder %s38, 0
      %s41 = sadd.s32 %s40, 1
      %s42 = scalar_select %p39, %s40, %s41
      %p45 = pneg %p39
      %p46 = scmp.eq.s32.totalorder %s18, 11
      %p47 = por %p45, %p46
      %p48 = scmp.ne.s32.totalorder %s40, %s43
      %p49 = scmp.eq.s32.totalorder %s18, 0
      %p50 = por %p48, %p49
      %p51 = scmp.ne.s32.totalorder %s40, %s43
      %p52 = scmp.eq.s32.totalorder %s23, 11
      %p53 = por %p51, %p52
      %p54 = scmp.ne.s32.totalorder %s43, %s44
      %p55 = scmp.eq.s32.totalorder %s23, 0
      %p56 = por %p54, %p55
      %p57 = scmp.ne.s32.totalorder %s43, %s44
      %p58 = scmp.eq.s32.totalorder %s24, 11
      %p59 = por %p57, %p58
      %p61 = scmp.ne.s32.totalorder %s44, %s60
      %p62 = scmp.eq.s32.totalorder %s24, 0
      %p63 = por %p61, %p62
      %s65 = sadd.s32 %s64, 1
      %p68 = scmp.eq.s32.totalorder %s18, 11
      %p69 = scmp.ne.s32.totalorder %s64, %s66
      %p70 = scmp.eq.s32.totalorder %s18, 0
      %p71 = por %p69, %p70
      %p72 = scmp.ne.s32.totalorder %s64, %s66
      %p73 = scmp.eq.s32.totalorder %s23, 11
      %p74 = por %p72, %p73
      %p75 = scmp.ne.s32.totalorder %s66, %s67
      %p76 = scmp.eq.s32.totalorder %s23, 0
      %p77 = por %p75, %p76
      %p78 = scmp.ne.s32.totalorder %s66, %s67
      %p79 = scmp.eq.s32.totalorder %s24, 11
      %p80 = por %p78, %p79
      %p82 = scmp.ne.s32.totalorder %s67, %s81
      %p83 = scmp.eq.s32.totalorder %s24, 0
      %p84 = por %p82, %p83
      %s86 = sadd.s32 %s85, 1
      %p89 = scmp.eq.s32.totalorder %s18, 11
      %p90 = scmp.ne.s32.totalorder %s85, %s87
      %p91 = scmp.eq.s32.totalorder %s18, 0
      %p92 = por %p90, %p91
      %p93 = scmp.ne.s32.totalorder %s85, %s87
      %p94 = scmp.eq.s32.totalorder %s23, 11
      %p95 = por %p93, %p94
      %p96 = scmp.ne.s32.totalorder %s87, %s88
      %p97 = scmp.eq.s32.totalorder %s23, 0
      %p98 = por %p96, %p97
      %p99 = scmp.ne.s32.totalorder %s87, %s88
      %p100 = scmp.eq.s32.totalorder %s24, 11
      %p101 = por %p99, %p100
      %p103 = scmp.ne.s32.totalorder %s88, %s102
      %p104 = scmp.eq.s32.totalorder %s24, 0
      %p105 = por %p103, %p104
      %s107 = sadd.s32 %s106, 1
      %p110 = scmp.eq.s32.totalorder %s18, 11
      %p111 = scmp.ne.s32.totalorder %s106, %s108
      %p112 = scmp.eq.s32.totalorder %s18, 0
      %p113 = por %p111, %p112
      %p114 = scmp.ne.s32.totalorder %s106, %s108
      %p115 = scmp.eq.s32.totalorder %s23, 11
      %p116 = por %p114, %p115
      %p117 = scmp.ne.s32.totalorder %s108, %s109
      %p118 = scmp.eq.s32.totalorder %s23, 0
      %p119 = por %p117, %p118
      %p120 = scmp.ne.s32.totalorder %s108, %s109
      %p121 = scmp.eq.s32.totalorder %s24, 11
      %p122 = por %p120, %p121
      %p124 = scmp.ne.s32.totalorder %s109, %s123
      %p125 = scmp.eq.s32.totalorder %s24, 0
      %p126 = por %p124, %p125
      %s128 = sadd.s32 %s127, 1
      %p131 = scmp.eq.s32.totalorder %s18, 11
      %p132 = scmp.ne.s32.totalorder %s127, %s129
      %p133 = scmp.eq.s32.totalorder %s18, 0
      %p134 = por %p132, %p133
      %p135 = scmp.ne.s32.totalorder %s127, %s129
      %p136 = scmp.eq.s32.totalorder %s23, 11
      %p137 = por %p135, %p136
      %p138 = scmp.ne.s32.totalorder %s129, %s130
      %p139 = scmp.eq.s32.totalorder %s23, 0
      %p140 = por %p138, %p139
      %p141 = scmp.ne.s32.totalorder %s129, %s130
      %p142 = scmp.eq.s32.totalorder %s24, 11
      %p143 = por %p141, %p142
      %p145 = scmp.ne.s32.totalorder %s130, %s144
      %p146 = scmp.eq.s32.totalorder %s24, 0
      %p147 = por %p145, %p146
      %s149 = sadd.s32 %s148, 1
      %p152 = scmp.eq.s32.totalorder %s18, 11
      %p153 = scmp.ne.s32.totalorder %s148, %s150
      %p154 = scmp.eq.s32.totalorder %s18, 0
      %p155 = por %p153, %p154
      %p156 = scmp.ne.s32.totalorder %s148, %s150
      %p157 = scmp.eq.s32.totalorder %s23, 11
      %p158 = por %p156, %p157
      %p159 = scmp.ne.s32.totalorder %s150, %s151
      %p160 = scmp.eq.s32.totalorder %s23, 0
      %p161 = por %p159, %p160
      %p162 = scmp.ne.s32.totalorder %s150, %s151
      %p163 = scmp.eq.s32.totalorder %s24, 11
      %p164 = por %p162, %p163
      %p166 = scmp.ne.s32.totalorder %s151, %s165
      %p167 = scmp.eq.s32.totalorder %s24, 0
      %p168 = por %p166, %p167
      %s170 = sadd.s32 %s169, 1
      %p173 = scmp.eq.s32.totalorder %s18, 11
      %p174 = scmp.ne.s32.totalorder %s169, %s171
      %p175 = scmp.eq.s32.totalorder %s18, 0
      %p176 = por %p174, %p175
      %p177 = scmp.ne.s32.totalorder %s169, %s171
      %p178 = scmp.eq.s32.totalorder %s23, 11
      %p179 = por %p177, %p178
      %p180 = scmp.ne.s32.totalorder %s171, %s172
      %p181 = scmp.eq.s32.totalorder %s23, 0
      %p182 = por %p180, %p181
      %p183 = scmp.ne.s32.totalorder %s171, %s172
      %p184 = scmp.eq.s32.totalorder %s24, 11
      %p185 = por %p183, %p184
      %p187 = scmp.ne.s32.totalorder %s172, %s186
      %p188 = scmp.eq.s32.totalorder %s24, 0
      %p189 = por %p187, %p188
      %s191 = sadd.s32 %s190, 1
      %p194 = scmp.eq.s32.totalorder %s18, 11
      %p195 = scmp.ne.s32.totalorder %s190, %s192
      %p196 = scmp.eq.s32.totalorder %s18, 0
      %p197 = por %p195, %p196
      %p198 = scmp.ne.s32.totalorder %s190, %s192
      %p199 = scmp.eq.s32.totalorder %s23, 11
      %p200 = por %p198, %p199
      %p201 = scmp.ne.s32.totalorder %s192, %s193
      %p202 = scmp.eq.s32.totalorder %s23, 0
      %p203 = por %p201, %p202
      %p204 = scmp.ne.s32.totalorder %s192, %s193
      %p205 = scmp.eq.s32.totalorder %s24, 11
      %p206 = por %p204, %p205
      %p208 = scmp.ne.s32.totalorder %s193, %s207
      %p209 = scmp.eq.s32.totalorder %s24, 0
      %p210 = por %p208, %p209
      %s212 = sadd.s32 %s211, 1
      %p215 = scmp.eq.s32.totalorder %s18, 11
      %p216 = scmp.ne.s32.totalorder %s211, %s213
      %p217 = scmp.eq.s32.totalorder %s18, 0
      %p218 = por %p216, %p217
      %p219 = scmp.ne.s32.totalorder %s211, %s213
      %p220 = scmp.eq.s32.totalorder %s23, 11
      %p221 = por %p219, %p220
      %p222 = scmp.ne.s32.totalorder %s213, %s214
      %p223 = scmp.eq.s32.totalorder %s23, 0
      %p224 = por %p222, %p223
      %p225 = scmp.ne.s32.totalorder %s213, %s214
      %p226 = scmp.eq.s32.totalorder %s24, 11
      %p227 = por %p225, %p226
      %p229 = scmp.ne.s32.totalorder %s214, %s228
      %p230 = scmp.eq.s32.totalorder %s24, 0
      %p231 = por %p229, %p230
      %s233 = sadd.s32 %s232, 1
      %p236 = scmp.eq.s32.totalorder %s18, 11
      %p237 = scmp.ne.s32.totalorder %s232, %s234
      %p238 = scmp.eq.s32.totalorder %s18, 0
      %p239 = por %p237, %p238
      %p240 = scmp.ne.s32.totalorder %s232, %s234
      %p241 = scmp.eq.s32.totalorder %s23, 11
      %p242 = por %p240, %p241
      %p243 = scmp.ne.s32.totalorder %s234, %s235
      %p244 = scmp.eq.s32.totalorder %s23, 0
      %p245 = por %p243, %p244
      %p246 = scmp.ne.s32.totalorder %s234, %s235
      %p247 = scmp.eq.s32.totalorder %s24, 11
      %p248 = por %p246, %p247
      %p250 = scmp.ne.s32.totalorder %s235, %s249
      %p251 = scmp.eq.s32.totalorder %s24, 0
      %p252 = por %p250, %p251
      %s253 = ssub.s32 %s25, %s37
      %p254 = scmp.eq.s32.totalorder %s253, 0
      %s256 = sadd.s32 %s255, 1
      %s257 = scalar_select %p254, %s255, %s256
      %p260 = pneg %p254
      %p261 = scmp.eq.s32.totalorder %s18, 11
      %p262 = por %p260, %p261
      %p263 = scmp.ne.s32.totalorder %s255, %s258
      %p264 = scmp.eq.s32.totalorder %s18, 0
      %p265 = por %p263, %p264
      %p266 = scmp.ne.s32.totalorder %s255, %s258
      %p267 = scmp.eq.s32.totalorder %s23, 11
      %p268 = por %p266, %p267
      %p269 = scmp.ne.s32.totalorder %s258, %s259
      %p270 = scmp.eq.s32.totalorder %s23, 0
      %p271 = por %p269, %p270
      %p272 = scmp.ne.s32.totalorder %s258, %s259
      %p273 = scmp.eq.s32.totalorder %s24, 11
      %p274 = por %p272, %p273
      %p276 = scmp.ne.s32.totalorder %s259, %s275
      %p277 = scmp.eq.s32.totalorder %s24, 0
      %p278 = por %p276, %p277
      %p279 = scmp.le.s32.totalorder 1, %s18
      %p280 = scmp.lt.s32.totalorder %s18, 13
      %p281 = pnand %p279, %p280
      %p282 = pneg %p281
      // Predicated region
      $region9: #{vit_forward.1} parent=5 // pred_check
        _
      $region10: #{vit_forward.1} parent=5 // pred_check_branch
        %284 = sbr.rel (%p281) target = $region12
      $region11: #{vit_forward.1} parent=5 // pred_region
        %s285 = ssub.s32 %s18, 1
        // Predicated region
        $region13: #{vit_forward.1} parent=11 // pred_check
          %p286 = pneg %p77
        $region14: #{vit_forward.1} parent=11 // pred_check_branch
          %288 = sbr.rel (%p286) target = $region16
        $region15: #{vit_forward.1} parent=11 // pred_region
          _
        $region16: #{vit_forward.1} parent=11 // pred_fallthru
          _
        // Predicated region
        $region17: #{vit_forward.1} parent=11 // pred_check
          %p289 = pneg %p98
        $region18: #{vit_forward.1} parent=11 // pred_check_branch
          %291 = sbr.rel (%p289) target = $region20
        $region19: #{vit_forward.1} parent=11 // pred_region
          _
        $region20: #{vit_forward.1} parent=11 // pred_fallthru
          _
        // Predicated region
        $region21: #{vit_forward.1} parent=11 // pred_check
          %p292 = pneg %p119
        $region22: #{vit_forward.1} parent=11 // pred_check_branch
          %294 = sbr.rel (%p292) target = $region24
        $region23: #{vit_forward.1} parent=11 // pred_region
          _
        $region24: #{vit_forward.1} parent=11 // pred_fallthru
          _
        // Predicated region
        $region25: #{vit_forward.1} parent=11 // pred_check
          %p295 = pneg %p140
        $region26: #{vit_forward.1} parent=11 // pred_check_branch
          %297 = sbr.rel (%p295) target = $region28
        $region27: #{vit_forward.1} parent=11 // pred_region
          _
        $region28: #{vit_forward.1} parent=11 // pred_fallthru
          _
        // Predicated region
        $region29: #{vit_forward.1} parent=11 // pred_check
          %p298 = pneg %p161
        $region30: #{vit_forward.1} parent=11 // pred_check_branch
          %300 = sbr.rel (%p298) target = $region32
        $region31: #{vit_forward.1} parent=11 // pred_region
          %s302 = ssub.s32 49152, 49152
          %303 = vsyncadd [#allocation4], %s302
          %s304 = sshll.u32 [#allocation3], 4
          %s305 = int_to_ptr.vmem [resolvable:$true] %s304
          %310 = dma.hbm_to_vmem [thread:$0]  %s5, 49152, %s305, [#allocation4], 256, 256, 16
        $region32: #{vit_forward.1} parent=11 // pred_fallthru
          _
        // Predicated region
        $region33: #{vit_forward.1} parent=11 // pred_check
          %p311 = pneg %p182
        $region34: #{vit_forward.1} parent=11 // pred_check_branch
          %313 = sbr.rel (%p311) target = $region36
        $region35: #{vit_forward.1} parent=11 // pred_region
          %s315 = ssub.s32 49152, 49152
          %316 = vsyncadd [#allocation6], %s315
          %s317 = sshll.u32 [#allocation5], 4
          %s318 = int_to_ptr.vmem [resolvable:$true] %s317
          %323 = dma.hbm_to_vmem [thread:$0]  %s6, 49152, %s318, [#allocation6], 128, 128, 8
        $region36: #{vit_forward.1} parent=11 // pred_fallthru
          _
        // Predicated region
        $region37: #{vit_forward.1} parent=11 // pred_check
          %p324 = pneg %p203
        $region38: #{vit_forward.1} parent=11 // pred_check_branch
          %326 = sbr.rel (%p324) target = $region40
        $region39: #{vit_forward.1} parent=11 // pred_region
          _
        $region40: #{vit_forward.1} parent=11 // pred_fallthru
          _
        // Predicated region
        $region41: #{vit_forward.1} parent=11 // pred_check
          %p327 = pneg %p224
        $region42: #{vit_forward.1} parent=11 // pred_check_branch
          %329 = sbr.rel (%p327) target = $region44
        $region43: #{vit_forward.1} parent=11 // pred_region
          _
        $region44: #{vit_forward.1} parent=11 // pred_fallthru
          _
        // Predicated region
        $region45: #{vit_forward.1} parent=11 // pred_check
          %p330 = pneg %p245
        $region46: #{vit_forward.1} parent=11 // pred_check_branch
          %332 = sbr.rel (%p330) target = $region48
        $region47: #{vit_forward.1} parent=11 // pred_region
          _
        $region48: #{vit_forward.1} parent=11 // pred_fallthru
          _
      $region12: #{vit_forward.1} parent=5 // pred_fallthru
        _
      %p333 = scmp.lt.s32.totalorder %s18, 12
      // Predicated region
      $region49: #{vit_forward.1} parent=5 // pred_check
        %p334 = pneg %p333
      $region50: #{vit_forward.1} parent=5 // pred_check_branch
        %336 = sbr.rel (%p334) target = $region52
      $region51: #{vit_forward.1} parent=5 // pred_region
        // Predicated region
        $region53: #{vit_forward.1} parent=51 // pred_check
          %p337 = pneg %p50
        $region54: #{vit_forward.1} parent=51 // pred_check_branch
          %339 = sbr.rel (%p337) target = $region56
        $region55: #{vit_forward.1} parent=51 // pred_region
          %p340 = scmp.lt.s32.totalorder %s25, 1
          %s341 = scalar_select %p340, %s25, 1
          %s342 = smul.addr %s341, 16
          %s343 = smul.addr %s342, 4
          %s344 = scalar_lea.vmem %s0, %s343
        $region56: #{vit_forward.1} parent=51 // pred_fallthru
          _
      $region52: #{vit_forward.1} parent=5 // pred_fallthru
        _
      %p345 = scmp.le.s32.totalorder 1, %s18
      %p346 = scmp.lt.s32.totalorder %s18, 13
      %p347 = pnand %p345, %p346
      %p348 = pneg %p347
      // Predicated region
      $region57: #{vit_forward.1} parent=5 // pred_check
        _
      $region58: #{vit_forward.1} parent=5 // pred_check_branch
        %350 = sbr.rel (%p347) target = $region60
      $region59: #{vit_forward.1} parent=5 // pred_region
        %s351 = ssub.s32 %s18, 1
        // Predicated region
        $region61: #{vit_forward.1} parent=59 // pred_check
          %p352 = pneg %p161
        $region62: #{vit_forward.1} parent=59 // pred_check_branch
          %354 = sbr.rel (%p352) target = $region64
        $region63: #{vit_forward.1} parent=59 // pred_region
          %355 = dma.done [#allocation4], 49152
        $region64: #{vit_forward.1} parent=59 // pred_fallthru
          _
        // Predicated region
        $region65: #{vit_forward.1} parent=59 // pred_check
          %p356 = pneg %p182
        $region66: #{vit_forward.1} parent=59 // pred_check_branch
          %358 = sbr.rel (%p356) target = $region68
        $region67: #{vit_forward.1} parent=59 // pred_region
          %359 = dma.done [#allocation6], 49152
        $region68: #{vit_forward.1} parent=59 // pred_fallthru
          _
        %p360 = scmp.lt.s32.totalorder %s27, 1
        %s361 = scalar_select %p360, %s27, 1
        %s362 = smul.addr %s361, 16
        %s363 = smul.addr %s362, 4
        %s364 = scalar_lea.vmem %s0, %s363
        %p365 = pneg %p56
        %p366 = pneg %p53
        %p367 = pneg %p77
        %p368 = pneg %p74
        %p369 = pneg %p98
        %p370 = pneg %p95
        %p371 = pneg %p119
        %p372 = pneg %p116
        %p373 = pneg %p140
        %p374 = pneg %p137
        %p375 = pneg %p161
        %p376 = pneg %p158
        %p377 = pneg %p182
        %p378 = pneg %p179
        %p379 = pneg %p203
        %p380 = pneg %p200
        %p381 = pneg %p224
        %p382 = pneg %p221
        %p383 = pneg %p245
        %p384 = pneg %p242
        %p385 = pneg %p271
        %p386 = pneg %p268
        %p387 = scmp.lt.s32.totalorder %s27, 1
        %s388 = scalar_select %p387, %s27, 1
        %s389 = smul.addr %s388, 8
        %s390 = scalar_lea.vmem %s10, %s389
        %p391 = scmp.lt.s32.totalorder %s27, 1
        %s392 = scalar_select %p391, %s27, 1
        %s393 = smul.addr %s392, 16
        %s394 = smul.addr %s393, 4
        %s395 = scalar_lea.vmem %s0, %s394
        %p396 = scmp.lt.s32.totalorder %s27, 1
        %s397 = scalar_select %p396, %s27, 1
        %s398 = smul.addr %s397, 8
        %s399 = scalar_lea.vmem %s10, %s398
        %p401 = scmp.eq.s32.totalorder %s28, 0
        // Predicated region
        $region69: #{vit_forward.1} parent=59 // pred_check
          %p402 = pneg %p401
        $region70: #{vit_forward.1} parent=59 // pred_check_branch
          %404 = sbr.rel (%p402) target = $region72
        $region71: #{vit_forward.1} parent=59 // pred_region
          %v405 = vld [vmem:[%s395] sm:$0xf]
          %v406 = vld [vmem:[%s395 + $0x4] sm:$0xf]
          %v407 = vld [vmem:[%s395 + $0x8] sm:$0xf]
          %v408 = vld [vmem:[%s395 + $0xc] sm:$0xf]
          %v409 = vld [vmem:[%s395 + $0x10] sm:$0xf]
          %v410 = vld [vmem:[%s395 + $0x14] sm:$0xf]
          %v411 = vld [vmem:[%s395 + $0x18] sm:$0xf]
          %v412 = vld [vmem:[%s395 + $0x1c] sm:$0xf]
          %v413 = vld [vmem:[%s395 + $0x20] sm:$0xf]
          %v414 = vld [vmem:[%s395 + $0x24] sm:$0xf]
          %v415 = vld [vmem:[%s395 + $0x28] sm:$0xf]
          %v416 = vld [vmem:[%s395 + $0x2c] sm:$0xf]
          %v417 = vld [vmem:[%s395 + $0x30] sm:$0xf]
          %v418 = vld [vmem:[%s395 + $0x34] sm:$0xf]
          %v419 = vld [vmem:[%s395 + $0x38] sm:$0xf]
          %v420 = vld [vmem:[%s395 + $0x3c] sm:$0xf]
          %v421 = vld [vmem:[%s1] sm:$0xff]
          %v422 = vld [vmem:[%s1 + $0x8] sm:$0xff]
          %v423 = vld [vmem:[%s1 + $0x10] sm:$0xff]
          %v424 = vld [vmem:[%s1 + $0x18] sm:$0xff]
          %v425 = vld [vmem:[%s1 + $0x20] sm:$0xff]
          %v426 = vld [vmem:[%s1 + $0x28] sm:$0xff]
          %v427 = vld [vmem:[%s1 + $0x30] sm:$0xff]
          %v428 = vld [vmem:[%s1 + $0x38] sm:$0xff]
          %v429 = vld [vmem:[%s1 + $0x40] sm:$0xff]
          %v430 = vld [vmem:[%s1 + $0x48] sm:$0xff]
          %v431 = vld [vmem:[%s1 + $0x50] sm:$0xff]
          %v432 = vld [vmem:[%s1 + $0x58] sm:$0xff]
          %v433 = vld [vmem:[%s1 + $0x60] sm:$0xff]
          %v434 = vld [vmem:[%s1 + $0x68] sm:$0xff]
          %v435 = vld [vmem:[%s1 + $0x70] sm:$0xff]
          %v436 = vld [vmem:[%s1 + $0x78] sm:$0xff]
          %v453 = vunpack.c.l.b16 %v405
          %v454 = vunpack.c.l.b16 %v406
          %v455 = vunpack.c.l.b16 %v407
          %v456 = vunpack.c.l.b16 %v408
          %v457 = vunpack.c.l.b16 %v409
          %v458 = vunpack.c.l.b16 %v410
          %v459 = vunpack.c.l.b16 %v411
          %v460 = vunpack.c.l.b16 %v412
          %v461 = vunpack.c.l.b16 %v413
          %v462 = vunpack.c.l.b16 %v414
          %v463 = vunpack.c.l.b16 %v415
          %v464 = vunpack.c.l.b16 %v416
          %v465 = vunpack.c.l.b16 %v417
          %v466 = vunpack.c.l.b16 %v418
          %v467 = vunpack.c.l.b16 %v419
          %v468 = vunpack.c.l.b16 %v420
          %v469 = vpack.c.b16 %v454, %v453
          %v470 = vpack.c.b16 %v456, %v455
          %v471 = vpack.c.b16 %v458, %v457
          %v472 = vpack.c.b16 %v460, %v459
          %v473 = vpack.c.b16 %v462, %v461
          %v474 = vpack.c.b16 %v464, %v463
          %v475 = vpack.c.b16 %v466, %v465
          %v476 = vpack.c.b16 %v468, %v467
          %v501 = vunpack.c.l.b16 %v421
          %v502 = vunpack.c.h.b16 %v421
          %v503 = vunpack.c.l.b16 %v422
          %v504 = vunpack.c.h.b16 %v422
          %v505 = vunpack.c.l.b16 %v423
          %v506 = vunpack.c.h.b16 %v423
          %v507 = vunpack.c.l.b16 %v424
          %v508 = vunpack.c.h.b16 %v424
          %v509 = vunpack.c.l.b16 %v425
          %v510 = vunpack.c.h.b16 %v425
          %v511 = vunpack.c.l.b16 %v426
          %v512 = vunpack.c.h.b16 %v426
          %v513 = vunpack.c.l.b16 %v427
          %v514 = vunpack.c.h.b16 %v427
          %v515 = vunpack.c.l.b16 %v428
          %v516 = vunpack.c.h.b16 %v428
          %v517 = vunpack.c.l.b16 %v429
          %v518 = vunpack.c.h.b16 %v429
          %v519 = vunpack.c.l.b16 %v430
          %v520 = vunpack.c.h.b16 %v430
          %v521 = vunpack.c.l.b16 %v431
          %v522 = vunpack.c.h.b16 %v431
          %v523 = vunpack.c.l.b16 %v432
          %v524 = vunpack.c.h.b16 %v432
          %v525 = vunpack.c.l.b16 %v433
          %v526 = vunpack.c.h.b16 %v433
          %v527 = vunpack.c.l.b16 %v434
          %v528 = vunpack.c.h.b16 %v434
          %v529 = vunpack.c.l.b16 %v435
          %v530 = vunpack.c.h.b16 %v435
          %v531 = vunpack.c.l.b16 %v436
          %v532 = vunpack.c.h.b16 %v436
          %v533 = vpack.c.b16 %v503, %v501
          %v534 = vpack.c.b16 %v504, %v502
          %v535 = vpack.c.b16 %v507, %v505
          %v536 = vpack.c.b16 %v508, %v506
          %v537 = vpack.c.b16 %v511, %v509
          %v538 = vpack.c.b16 %v512, %v510
          %v539 = vpack.c.b16 %v515, %v513
          %v540 = vpack.c.b16 %v516, %v514
          %v541 = vpack.c.b16 %v519, %v517
          %v542 = vpack.c.b16 %v520, %v518
          %v543 = vpack.c.b16 %v523, %v521
          %v544 = vpack.c.b16 %v524, %v522
          %v545 = vpack.c.b16 %v527, %v525
          %v546 = vpack.c.b16 %v528, %v526
          %v547 = vpack.c.b16 %v531, %v529
          %v548 = vpack.c.b16 %v532, %v530
          %565 = vmatprep.subr.bf16.mxu0 %v534
          %566 = vmatpush1.bf16.msra.mxu0 %v533
          %567 = vmatprep.subr.bf16.mxu0 %v536
          %568 = vmatpush1.bf16.msra.mxu0 %v535
          %569 = vmatprep.subr.bf16.mxu0 %v538
          %570 = vmatpush1.bf16.msra.mxu0 %v537
          %571 = vmatprep.subr.bf16.mxu0 %v540
          %572 = vmatpush1.bf16.msra.mxu0 %v539
          %573 = vmatprep.subr.bf16.mxu0 %v542
          %574 = vmatpush1.bf16.msra.mxu0 %v541
          %575 = vmatprep.subr.bf16.mxu0 %v544
          %576 = vmatpush1.bf16.msra.mxu0 %v543
          %577 = vmatprep.subr.bf16.mxu0 %v546
          %578 = vmatpush1.bf16.msra.mxu0 %v545
          %579 = vmatprep.subr.bf16.mxu0 %v548
          %580 = vmatpush1.bf16.msra.mxu0 %v547
          %581 = vmatprep.subr.bf16.mxu0 0
          %582 = vmatpush1.bf16.msra.mxu0 0
          %583 = vmatprep.subr.bf16.mxu0 0
          %584 = vmatpush1.bf16.msra.mxu0 0
          %585 = vmatprep.subr.bf16.mxu0 0
          %586 = vmatpush1.bf16.msra.mxu0 0
          %587 = vmatprep.subr.bf16.mxu0 0
          %588 = vmatpush1.bf16.msra.mxu0 0
          %589 = vmatprep.subr.bf16.mxu0 0
          %590 = vmatpush1.bf16.msra.mxu0 0
          %591 = vmatprep.subr.bf16.mxu0 0
          %592 = vmatpush1.bf16.msra.mxu0 0
          %593 = vmatprep.subr.bf16.mxu0 0
          %594 = vmatpush1.bf16.msra.mxu0 0
          %595 = vmatprep.subr.bf16.mxu0 0
          %596 = vmatpush1.bf16.msra.mxu0 0
          %597 = vmatprep.mubr.bf16.mxu0 0
          %598 = vmatmul.mubr.bf16.gmra.mrb[0].mxu0 %v469
          %v599 = vpop.f32.mrb[0].mxu0
          %v600 = vadd.f32 0.0, %v599
          %v601 = vpop.f32.mrb[0].mxu0
          %v602 = vadd.f32 0.0, %v601
          %v603 = vpop.f32.mrb[0].mxu0
          %v604 = vadd.f32 0.0, %v603
          %v605 = vpop.f32.mrb[0].mxu0
          %v606 = vadd.f32 0.0, %v605
          %607 = vmatprep.mubr.bf16.mxu0 0
          %608 = vmatmul.mubr.bf16.gmra.mrb[0].mxu0 %v470
          %v609 = vpop.f32.mrb[0].mxu0
          %v610 = vadd.f32 0.0, %v609
          %v611 = vpop.f32.mrb[0].mxu0
          %v612 = vadd.f32 0.0, %v611
          %v613 = vpop.f32.mrb[0].mxu0
          %v614 = vadd.f32 0.0, %v613
          %v615 = vpop.f32.mrb[0].mxu0
          %v616 = vadd.f32 0.0, %v615
          %617 = vmatprep.mubr.bf16.mxu0 0
          %618 = vmatmul.mubr.bf16.gmra.mrb[0].mxu0 %v471
          %v619 = vpop.f32.mrb[0].mxu0
          %v620 = vadd.f32 0.0, %v619
          %v621 = vpop.f32.mrb[0].mxu0
          %v622 = vadd.f32 0.0, %v621
          %v623 = vpop.f32.mrb[0].mxu0
          %v624 = vadd.f32 0.0, %v623
          %v625 = vpop.f32.mrb[0].mxu0
          %v626 = vadd.f32 0.0, %v625
          %627 = vmatprep.mubr.bf16.mxu0 0
          %628 = vmatmul.mubr.bf16.gmra.mrb[0].mxu0 %v472
          %v629 = vpop.f32.mrb[0].mxu0
          %v630 = vadd.f32 0.0, %v629
          %v631 = vpop.f32.mrb[0].mxu0
          %v632 = vadd.f32 0.0, %v631
          %v633 = vpop.f32.mrb[0].mxu0
          %v634 = vadd.f32 0.0, %v633
          %v635 = vpop.f32.mrb[0].mxu0
          %v636 = vadd.f32 0.0, %v635
          %637 = vmatprep.mubr.bf16.mxu0 0
          %638 = vmatmul.mubr.bf16.gmra.mrb[0].mxu0 %v473
          %v639 = vpop.f32.mrb[0].mxu0
          %v640 = vadd.f32 0.0, %v639
          %v641 = vpop.f32.mrb[0].mxu0
          %v642 = vadd.f32 0.0, %v641
          %v643 = vpop.f32.mrb[0].mxu0
          %v644 = vadd.f32 0.0, %v643
          %v645 = vpop.f32.mrb[0].mxu0
          %v646 = vadd.f32 0.0, %v645
          %647 = vmatprep.mubr.bf16.mxu0 0
          %648 = vmatmul.mubr.bf16.gmra.mrb[0].mxu0 %v474
          %v649 = vpop.f32.mrb[0].mxu0
          %v650 = vadd.f32 0.0, %v649
          %v651 = vpop.f32.mrb[0].mxu0
          %v652 = vadd.f32 0.0, %v651
          %v653 = vpop.f32.mrb[0].mxu0
          %v654 = vadd.f32 0.0, %v653
          %v655 = vpop.f32.mrb[0].mxu0
          %v656 = vadd.f32 0.0, %v655
          %657 = vmatprep.mubr.bf16.mxu0 0
          %658 = vmatmul.mubr.bf16.gmra.mrb[0].mxu0 %v475
          %v659 = vpop.f32.mrb[0].mxu0
          %v660 = vadd.f32 0.0, %v659
          %v661 = vpop.f32.mrb[0].mxu0
          %v662 = vadd.f32 0.0, %v661
          %v663 = vpop.f32.mrb[0].mxu0
          %v664 = vadd.f32 0.0, %v663
          %v665 = vpop.f32.mrb[0].mxu0
          %v666 = vadd.f32 0.0, %v665
          %667 = vmatprep.mubr.bf16.mxu0 0
          %668 = vmatmul.mubr.bf16.gmra.mrb[0].mxu0 %v476
          %v669 = vpop.f32.mrb[0].mxu0
          %v670 = vadd.f32 0.0, %v669
          %v671 = vpop.f32.mrb[0].mxu0
          %v672 = vadd.f32 0.0, %v671
          %v673 = vpop.f32.mrb[0].mxu0
          %v674 = vadd.f32 0.0, %v673
          %v675 = vpop.f32.mrb[0].mxu0
          %v676 = vadd.f32 0.0, %v675
          %677 = vdwg.mxu0
          %v678 = vld [vmem:[%s2] sm:$0xff]
          %v679 = vld [vmem:[%s2 + $0x8] sm:$0xff]
          %v680 = vld [vmem:[%s2 + $0x10] sm:$0xff]
          %v681 = vld [vmem:[%s2 + $0x18] sm:$0xff]
          %v682 = vld [vmem:[%s2 + $0x20] sm:$0xff]
          %v683 = vld [vmem:[%s2 + $0x28] sm:$0xff]
          %v684 = vld [vmem:[%s2 + $0x30] sm:$0xff]
          %v685 = vld [vmem:[%s2 + $0x38] sm:$0xff]
          %v686 = vld [vmem:[%s2 + $0x40] sm:$0xff]
          %v687 = vld [vmem:[%s2 + $0x48] sm:$0xff]
          %v688 = vld [vmem:[%s2 + $0x50] sm:$0xff]
          %v689 = vld [vmem:[%s2 + $0x58] sm:$0xff]
          %v690 = vld [vmem:[%s2 + $0x60] sm:$0xff]
          %v691 = vld [vmem:[%s2 + $0x68] sm:$0xff]
          %v692 = vld [vmem:[%s2 + $0x70] sm:$0xff]
          %v693 = vld [vmem:[%s2 + $0x78] sm:$0xff]
          %v694 = vld [vmem:[%s2 + $0x80] sm:$0xff]
          %v695 = vld [vmem:[%s2 + $0x88] sm:$0xff]
          %v696 = vld [vmem:[%s2 + $0x90] sm:$0xff]
          %v697 = vld [vmem:[%s2 + $0x98] sm:$0xff]
          %v698 = vld [vmem:[%s2 + $0xa0] sm:$0xff]
          %v699 = vld [vmem:[%s2 + $0xa8] sm:$0xff]
          %v700 = vld [vmem:[%s2 + $0xb0] sm:$0xff]
          %v701 = vld [vmem:[%s2 + $0xb8] sm:$0xff]
          %v702 = vld [vmem:[%s2 + $0xc0] sm:$0xff]
          %v703 = vld [vmem:[%s2 + $0xc8] sm:$0xff]
          %v704 = vld [vmem:[%s2 + $0xd0] sm:$0xff]
          %v705 = vld [vmem:[%s2 + $0xd8] sm:$0xff]
          %v706 = vld [vmem:[%s2 + $0xe0] sm:$0xff]
          %v707 = vld [vmem:[%s2 + $0xe8] sm:$0xff]
          %v708 = vld [vmem:[%s2 + $0xf0] sm:$0xff]
          %v709 = vld [vmem:[%s2 + $0xf8] sm:$0xff]
          %v710 = vadd.f32 %v600, %v678
          %v711 = vadd.f32 %v602, %v679
          %v712 = vadd.f32 %v604, %v680
          %v713 = vadd.f32 %v606, %v681
          %v714 = vadd.f32 %v610, %v682
          %v715 = vadd.f32 %v612, %v683
          %v716 = vadd.f32 %v614, %v684
          %v717 = vadd.f32 %v616, %v685
          %v718 = vadd.f32 %v620, %v686
          %v719 = vadd.f32 %v622, %v687
          %v720 = vadd.f32 %v624, %v688
          %v721 = vadd.f32 %v626, %v689
          %v722 = vadd.f32 %v630, %v690
          %v723 = vadd.f32 %v632, %v691
          %v724 = vadd.f32 %v634, %v692
          %v725 = vadd.f32 %v636, %v693
          %v726 = vadd.f32 %v640, %v694
          %v727 = vadd.f32 %v642, %v695
          %v728 = vadd.f32 %v644, %v696
          %v729 = vadd.f32 %v646, %v697
          %v730 = vadd.f32 %v650, %v698
          %v731 = vadd.f32 %v652, %v699
          %v732 = vadd.f32 %v654, %v700
          %v733 = vadd.f32 %v656, %v701
          %v734 = vadd.f32 %v660, %v702
          %v735 = vadd.f32 %v662, %v703
          %v736 = vadd.f32 %v664, %v704
          %v737 = vadd.f32 %v666, %v705
          %v738 = vadd.f32 %v670, %v706
          %v739 = vadd.f32 %v672, %v707
          %v740 = vadd.f32 %v674, %v708
          %v741 = vadd.f32 %v676, %v709
          %742 = vst [vmem:[#allocation2] sm:$0xff] %v710
          %743 = vst [vmem:[#allocation2 + $0x8] sm:$0xff] %v711
          %744 = vst [vmem:[#allocation2 + $0x10] sm:$0xff] %v712
          %745 = vst [vmem:[#allocation2 + $0x18] sm:$0xff] %v713
          %746 = vst [vmem:[#allocation2 + $0x20] sm:$0xff] %v714
          %747 = vst [vmem:[#allocation2 + $0x28] sm:$0xff] %v715
          %748 = vst [vmem:[#allocation2 + $0x30] sm:$0xff] %v716
          %749 = vst [vmem:[#allocation2 + $0x38] sm:$0xff] %v717
          %750 = vst [vmem:[#allocation2 + $0x40] sm:$0xff] %v718
          %751 = vst [vmem:[#allocation2 + $0x48] sm:$0xff] %v719
          %752 = vst [vmem:[#allocation2 + $0x50] sm:$0xff] %v720
          %753 = vst [vmem:[#allocation2 + $0x58] sm:$0xff] %v721
          %754 = vst [vmem:[#allocation2 + $0x60] sm:$0xff] %v722
          %755 = vst [vmem:[#allocation2 + $0x68] sm:$0xff] %v723
          %756 = vst [vmem:[#allocation2 + $0x70] sm:$0xff] %v724
          %757 = vst [vmem:[#allocation2 + $0x78] sm:$0xff] %v725
          %758 = vst [vmem:[#allocation2 + $0x80] sm:$0xff] %v726
          %759 = vst [vmem:[#allocation2 + $0x88] sm:$0xff] %v727
          %760 = vst [vmem:[#allocation2 + $0x90] sm:$0xff] %v728
          %761 = vst [vmem:[#allocation2 + $0x98] sm:$0xff] %v729
          %762 = vst [vmem:[#allocation2 + $0xa0] sm:$0xff] %v730
          %763 = vst [vmem:[#allocation2 + $0xa8] sm:$0xff] %v731
          %764 = vst [vmem:[#allocation2 + $0xb0] sm:$0xff] %v732
          %765 = vst [vmem:[#allocation2 + $0xb8] sm:$0xff] %v733
          %766 = vst [vmem:[#allocation2 + $0xc0] sm:$0xff] %v734
          %767 = vst [vmem:[#allocation2 + $0xc8] sm:$0xff] %v735
          %768 = vst [vmem:[#allocation2 + $0xd0] sm:$0xff] %v736
          %769 = vst [vmem:[#allocation2 + $0xd8] sm:$0xff] %v737
          %770 = vst [vmem:[#allocation2 + $0xe0] sm:$0xff] %v738
          %771 = vst [vmem:[#allocation2 + $0xe8] sm:$0xff] %v739
          %772 = vst [vmem:[#allocation2 + $0xf0] sm:$0xff] %v740
          %773 = vst [vmem:[#allocation2 + $0xf8] sm:$0xff] %v741
        $region72: #{vit_forward.1} parent=59 // pred_fallthru
          _
        %v774 = vld [vmem:[#allocation2] sm:$0xff]
        %v775 = vld [vmem:[#allocation2 + $0x8] sm:$0xff]
        %v776 = vld [vmem:[#allocation2 + $0x10] sm:$0xff]
        %v777 = vld [vmem:[#allocation2 + $0x18] sm:$0xff]
        %v778 = vld [vmem:[#allocation2 + $0x20] sm:$0xff]
        %v779 = vld [vmem:[#allocation2 + $0x28] sm:$0xff]
        %v780 = vld [vmem:[#allocation2 + $0x30] sm:$0xff]
        %v781 = vld [vmem:[#allocation2 + $0x38] sm:$0xff]
        %v782 = vld [vmem:[#allocation2 + $0x40] sm:$0xff]
        %v783 = vld [vmem:[#allocation2 + $0x48] sm:$0xff]
        %v784 = vld [vmem:[#allocation2 + $0x50] sm:$0xff]
        %v785 = vld [vmem:[#allocation2 + $0x58] sm:$0xff]
        %v786 = vld [vmem:[#allocation2 + $0x60] sm:$0xff]
        %v787 = vld [vmem:[#allocation2 + $0x68] sm:$0xff]
        %v788 = vld [vmem:[#allocation2 + $0x70] sm:$0xff]
        %v789 = vld [vmem:[#allocation2 + $0x78] sm:$0xff]
        %v790 = vld [vmem:[#allocation2 + $0x80] sm:$0xff]
        %v791 = vld [vmem:[#allocation2 + $0x88] sm:$0xff]
        %v792 = vld [vmem:[#allocation2 + $0x90] sm:$0xff]
        %v793 = vld [vmem:[#allocation2 + $0x98] sm:$0xff]
        %v794 = vld [vmem:[#allocation2 + $0xa0] sm:$0xff]
        %v795 = vld [vmem:[#allocation2 + $0xa8] sm:$0xff]
        %v796 = vld [vmem:[#allocation2 + $0xb0] sm:$0xff]
        %v797 = vld [vmem:[#allocation2 + $0xb8] sm:$0xff]
        %v798 = vld [vmem:[#allocation2 + $0xc0] sm:$0xff]
        %v799 = vld [vmem:[#allocation2 + $0xc8] sm:$0xff]
        %v800 = vld [vmem:[#allocation2 + $0xd0] sm:$0xff]
        %v801 = vld [vmem:[#allocation2 + $0xd8] sm:$0xff]
        %v802 = vld [vmem:[#allocation2 + $0xe0] sm:$0xff]
        %v803 = vld [vmem:[#allocation2 + $0xe8] sm:$0xff]
        %v804 = vld [vmem:[#allocation2 + $0xf0] sm:$0xff]
        %v805 = vld [vmem:[#allocation2 + $0xf8] sm:$0xff]
        %s806 = smul.u32 %s28, 4
        %s807 = smul.addr %s806, 8
        %s808 = scalar_lea.vmem %s7, %s807
        %v809 = vld [vmem:[%s808] sm:$0xff]
        %v810 = vld [vmem:[%s808 + $0x8] sm:$0xff]
        %v811 = vld [vmem:[%s808 + $0x10] sm:$0xff]
        %v812 = vld [vmem:[%s808 + $0x18] sm:$0xff]
        %v813 = vadd.f32 %v774, %v775
        %814 = vadd.xlane.f32.xlu0 %v813
        %v815 = vpop.xlane.xlu0 %814
        %v816 = vadd.f32 %v776, %v777
        %817 = vadd.xlane.f32.xlu0 %v816
        %v818 = vpop.xlane.xlu0 %817
        %v819 = vadd.f32 %v778, %v779
        %820 = vadd.xlane.f32.xlu0 %v819
        %v821 = vpop.xlane.xlu0 %820
        %v822 = vadd.f32 %v780, %v781
        %823 = vadd.xlane.f32.xlu0 %v822
        %v824 = vpop.xlane.xlu0 %823
        %v825 = vadd.f32 %v782, %v783
        %826 = vadd.xlane.f32.xlu0 %v825
        %v827 = vpop.xlane.xlu0 %826
        %v828 = vadd.f32 %v784, %v785
        %829 = vadd.xlane.f32.xlu0 %v828
        %v830 = vpop.xlane.xlu0 %829
        %v831 = vadd.f32 %v786, %v787
        %832 = vadd.xlane.f32.xlu0 %v831
        %v833 = vpop.xlane.xlu0 %832
        %v834 = vadd.f32 %v788, %v789
        %835 = vadd.xlane.f32.xlu0 %v834
        %v836 = vpop.xlane.xlu0 %835
        %v837 = vadd.f32 %v790, %v791
        %838 = vadd.xlane.f32.xlu0 %v837
        %v839 = vpop.xlane.xlu0 %838
        %v840 = vadd.f32 %v792, %v793
        %841 = vadd.xlane.f32.xlu0 %v840
        %v842 = vpop.xlane.xlu0 %841
        %v843 = vadd.f32 %v794, %v795
        %844 = vadd.xlane.f32.xlu0 %v843
        %v845 = vpop.xlane.xlu0 %844
        %v846 = vadd.f32 %v796, %v797
        %847 = vadd.xlane.f32.xlu0 %v846
        %v848 = vpop.xlane.xlu0 %847
        %v849 = vadd.f32 %v798, %v799
        %850 = vadd.xlane.f32.xlu0 %v849
        %v851 = vpop.xlane.xlu0 %850
        %v852 = vadd.f32 %v800, %v801
        %853 = vadd.xlane.f32.xlu0 %v852
        %v854 = vpop.xlane.xlu0 %853
        %v855 = vadd.f32 %v802, %v803
        %856 = vadd.xlane.f32.xlu0 %v855
        %v857 = vpop.xlane.xlu0 %856
        %v858 = vadd.f32 %v804, %v805
        %859 = vadd.xlane.f32.xlu0 %v858
        %v860 = vpop.xlane.xlu0 %859
        %v861 = vrcp.pop 256.0
        %v862 = vmul.f32 %v815, %v861
        %v863 = vmul.f32 %v818, %v861
        %v864 = vmul.f32 %v821, %v861
        %v865 = vmul.f32 %v824, %v861
        %v866 = vmul.f32 %v827, %v861
        %v867 = vmul.f32 %v830, %v861
        %v868 = vmul.f32 %v833, %v861
        %v869 = vmul.f32 %v836, %v861
        %v870 = vmul.f32 %v839, %v861
        %v871 = vmul.f32 %v842, %v861
        %v872 = vmul.f32 %v845, %v861
        %v873 = vmul.f32 %v848, %v861
        %v874 = vmul.f32 %v851, %v861
        %v875 = vmul.f32 %v854, %v861
        %v876 = vmul.f32 %v857, %v861
        %v877 = vmul.f32 %v860, %v861
        %v878 = vsub.f32 %v774, %v862
        %v879 = vsub.f32 %v775, %v862
        %v880 = vsub.f32 %v776, %v863
        %v881 = vsub.f32 %v777, %v863
        %v882 = vsub.f32 %v778, %v864
        %v883 = vsub.f32 %v779, %v864
        %v884 = vsub.f32 %v780, %v865
        %v885 = vsub.f32 %v781, %v865
        %v886 = vsub.f32 %v782, %v866
        %v887 = vsub.f32 %v783, %v866
        %v888 = vsub.f32 %v784, %v867
        %v889 = vsub.f32 %v785, %v867
        %v890 = vsub.f32 %v786, %v868
        %v891 = vsub.f32 %v787, %v868
        %v892 = vsub.f32 %v788, %v869
        %v893 = vsub.f32 %v789, %v869
        %v894 = vsub.f32 %v790, %v870
        %v895 = vsub.f32 %v791, %v870
        %v896 = vsub.f32 %v792, %v871
        %v897 = vsub.f32 %v793, %v871
        %v898 = vsub.f32 %v794, %v872
        %v899 = vsub.f32 %v795, %v872
        %v900 = vsub.f32 %v796, %v873
        %v901 = vsub.f32 %v797, %v873
        %v902 = vsub.f32 %v798, %v874
        %v903 = vsub.f32 %v799, %v874
        %v904 = vsub.f32 %v800, %v875
        %v905 = vsub.f32 %v801, %v875
        %v906 = vsub.f32 %v802, %v876
        %v907 = vsub.f32 %v803, %v876
        %v908 = vsub.f32 %v804, %v877
        %v909 = vsub.f32 %v805, %v877
        %v910 = vmul.f32 %v878, %v878
        %v911 = vmul.f32 %v879, %v879
        %v912 = vmul.f32 %v880, %v880
        %v913 = vmul.f32 %v881, %v881
        %v914 = vmul.f32 %v882, %v882
        %v915 = vmul.f32 %v883, %v883
        %v916 = vmul.f32 %v884, %v884
        %v917 = vmul.f32 %v885, %v885
        %v918 = vmul.f32 %v886, %v886
        %v919 = vmul.f32 %v887, %v887
        %v920 = vmul.f32 %v888, %v888
        %v921 = vmul.f32 %v889, %v889
        %v922 = vmul.f32 %v890, %v890
        %v923 = vmul.f32 %v891, %v891
        %v924 = vmul.f32 %v892, %v892
        %v925 = vmul.f32 %v893, %v893
        %v926 = vmul.f32 %v894, %v894
        %v927 = vmul.f32 %v895, %v895
        %v928 = vmul.f32 %v896, %v896
        %v929 = vmul.f32 %v897, %v897
        %v930 = vmul.f32 %v898, %v898
        %v931 = vmul.f32 %v899, %v899
        %v932 = vmul.f32 %v900, %v900
        %v933 = vmul.f32 %v901, %v901
        %v934 = vmul.f32 %v902, %v902
        %v935 = vmul.f32 %v903, %v903
        %v936 = vmul.f32 %v904, %v904
        %v937 = vmul.f32 %v905, %v905
        %v938 = vmul.f32 %v906, %v906
        %v939 = vmul.f32 %v907, %v907
        %v940 = vmul.f32 %v908, %v908
        %v941 = vmul.f32 %v909, %v909
        %v942 = vadd.f32 %v910, %v911
        %943 = vadd.xlane.f32.xlu0 %v942
        %v944 = vpop.xlane.xlu0 %943
        %v945 = vadd.f32 %v912, %v913
        %946 = vadd.xlane.f32.xlu0 %v945
        %v947 = vpop.xlane.xlu0 %946
        %v948 = vadd.f32 %v914, %v915
        %949 = vadd.xlane.f32.xlu0 %v948
        %v950 = vpop.xlane.xlu0 %949
        %v951 = vadd.f32 %v916, %v917
        %952 = vadd.xlane.f32.xlu0 %v951
        %v953 = vpop.xlane.xlu0 %952
        %v954 = vadd.f32 %v918, %v919
        %955 = vadd.xlane.f32.xlu0 %v954
        %v956 = vpop.xlane.xlu0 %955
        %v957 = vadd.f32 %v920, %v921
        %958 = vadd.xlane.f32.xlu0 %v957
        %v959 = vpop.xlane.xlu0 %958
        %v960 = vadd.f32 %v922, %v923
        %961 = vadd.xlane.f32.xlu0 %v960
        %v962 = vpop.xlane.xlu0 %961
        %v963 = vadd.f32 %v924, %v925
        %964 = vadd.xlane.f32.xlu0 %v963
        %v965 = vpop.xlane.xlu0 %964
        %v966 = vadd.f32 %v926, %v927
        %967 = vadd.xlane.f32.xlu0 %v966
        %v968 = vpop.xlane.xlu0 %967
        %v969 = vadd.f32 %v928, %v929
        %970 = vadd.xlane.f32.xlu0 %v969
        %v971 = vpop.xlane.xlu0 %970
        %v972 = vadd.f32 %v930, %v931
        %973 = vadd.xlane.f32.xlu0 %v972
        %v974 = vpop.xlane.xlu0 %973
        %v975 = vadd.f32 %v932, %v933
        %976 = vadd.xlane.f32.xlu0 %v975
        %v977 = vpop.xlane.xlu0 %976
        %v978 = vadd.f32 %v934, %v935
        %979 = vadd.xlane.f32.xlu0 %v978
        %v980 = vpop.xlane.xlu0 %979
        %v981 = vadd.f32 %v936, %v937
        %982 = vadd.xlane.f32.xlu0 %v981
        %v983 = vpop.xlane.xlu0 %982
        %v984 = vadd.f32 %v938, %v939
        %985 = vadd.xlane.f32.xlu0 %v984
        %v986 = vpop.xlane.xlu0 %985
        %v987 = vadd.f32 %v940, %v941
        %988 = vadd.xlane.f32.xlu0 %v987
        %v989 = vpop.xlane.xlu0 %988
        %v990 = vmul.f32 %v944, %v861
        %v991 = vmul.f32 %v947, %v861
        %v992 = vmul.f32 %v950, %v861
        %v993 = vmul.f32 %v953, %v861
        %v994 = vmul.f32 %v956, %v861
        %v995 = vmul.f32 %v959, %v861
        %v996 = vmul.f32 %v962, %v861
        %v997 = vmul.f32 %v965, %v861
        %v998 = vmul.f32 %v968, %v861
        %v999 = vmul.f32 %v971, %v861
        %v1000 = vmul.f32 %v974, %v861
        %v1001 = vmul.f32 %v977, %v861
        %v1002 = vmul.f32 %v980, %v861
        %v1003 = vmul.f32 %v983, %v861
        %v1004 = vmul.f32 %v986, %v861
        %v1005 = vmul.f32 %v989, %v861
        %v1006 = vadd.f32 %v990, 1e-05
        %v1007 = vadd.f32 %v991, 1e-05
        %v1008 = vadd.f32 %v992, 1e-05
        %v1009 = vadd.f32 %v993, 1e-05
        %v1010 = vadd.f32 %v994, 1e-05
        %v1011 = vadd.f32 %v995, 1e-05
        %v1012 = vadd.f32 %v996, 1e-05
        %v1013 = vadd.f32 %v997, 1e-05
        %v1014 = vadd.f32 %v998, 1e-05
        %v1015 = vadd.f32 %v999, 1e-05
        %v1016 = vadd.f32 %v1000, 1e-05
        %v1017 = vadd.f32 %v1001, 1e-05
        %v1018 = vadd.f32 %v1002, 1e-05
        %v1019 = vadd.f32 %v1003, 1e-05
        %v1020 = vadd.f32 %v1004, 1e-05
        %v1021 = vadd.f32 %v1005, 1e-05
        %v1022 = vrsqrt.pop %v1006
        %v1023 = vrsqrt.pop %v1007
        %v1024 = vrsqrt.pop %v1008
        %v1025 = vrsqrt.pop %v1009
        %v1026 = vrsqrt.pop %v1010
        %v1027 = vrsqrt.pop %v1011
        %v1028 = vrsqrt.pop %v1012
        %v1029 = vrsqrt.pop %v1013
        %v1030 = vrsqrt.pop %v1014
        %v1031 = vrsqrt.pop %v1015
        %v1032 = vrsqrt.pop %v1016
        %v1033 = vrsqrt.pop %v1017
        %v1034 = vrsqrt.pop %v1018
        %v1035 = vrsqrt.pop %v1019
        %v1036 = vrsqrt.pop %v1020
        %v1037 = vrsqrt.pop %v1021
        %v1038 = vmul.f32 %v878, %v1022
        %v1039 = vmul.f32 %v879, %v1022
        %v1040 = vmul.f32 %v880, %v1023
        %v1041 = vmul.f32 %v881, %v1023
        %v1042 = vmul.f32 %v882, %v1024
        %v1043 = vmul.f32 %v883, %v1024
        %v1044 = vmul.f32 %v884, %v1025
        %v1045 = vmul.f32 %v885, %v1025
        %v1046 = vmul.f32 %v886, %v1026
        %v1047 = vmul.f32 %v887, %v1026
        %v1048 = vmul.f32 %v888, %v1027
        %v1049 = vmul.f32 %v889, %v1027
        %v1050 = vmul.f32 %v890, %v1028
        %v1051 = vmul.f32 %v891, %v1028
        %v1052 = vmul.f32 %v892, %v1029
        %v1053 = vmul.f32 %v893, %v1029
        %v1054 = vmul.f32 %v894, %v1030
        %v1055 = vmul.f32 %v895, %v1030
        %v1056 = vmul.f32 %v896, %v1031
        %v1057 = vmul.f32 %v897, %v1031
        %v1058 = vmul.f32 %v898, %v1032
        %v1059 = vmul.f32 %v899, %v1032
        %v1060 = vmul.f32 %v900, %v1033
        %v1061 = vmul.f32 %v901, %v1033
        %v1062 = vmul.f32 %v902, %v1034
        %v1063 = vmul.f32 %v903, %v1034
        %v1064 = vmul.f32 %v904, %v1035
        %v1065 = vmul.f32 %v905, %v1035
        %v1066 = vmul.f32 %v906, %v1036
        %v1067 = vmul.f32 %v907, %v1036
        %v1068 = vmul.f32 %v908, %v1037
        %v1069 = vmul.f32 %v909, %v1037
        %v1070 = vlaneseq
        %v1071 = vshrl.u32 %v1070, 7
        %v1072 = vsub.s32 0, %v1071
        %v1073 = vrot.slane %v809, %v1072
        %v1074 = vlaneseq
        %v1075 = vshrl.u32 %v1074, 7
        %v1076 = vsub.s32 0, %v1075
        %v1077 = vrot.slane %v810, %v1076
        %v1078 = vmul.f32 %v1038, %v1073
        %v1079 = vmul.f32 %v1039, %v1077
        %v1080 = vmul.f32 %v1040, %v1073
        %v1081 = vmul.f32 %v1041, %v1077
        %v1082 = vmul.f32 %v1042, %v1073
        %v1083 = vmul.f32 %v1043, %v1077
        %v1084 = vmul.f32 %v1044, %v1073
        %v1085 = vmul.f32 %v1045, %v1077
        %v1086 = vmul.f32 %v1046, %v1073
        %v1087 = vmul.f32 %v1047, %v1077
        %v1088 = vmul.f32 %v1048, %v1073
        %v1089 = vmul.f32 %v1049, %v1077
        %v1090 = vmul.f32 %v1050, %v1073
        %v1091 = vmul.f32 %v1051, %v1077
        %v1092 = vmul.f32 %v1052, %v1073
        %v1093 = vmul.f32 %v1053, %v1077
        %v1094 = vmul.f32 %v1054, %v1073
        %v1095 = vmul.f32 %v1055, %v1077
        %v1096 = vmul.f32 %v1056, %v1073
        %v1097 = vmul.f32 %v1057, %v1077
        %v1098 = vmul.f32 %v1058, %v1073
        %v1099 = vmul.f32 %v1059, %v1077
        %v1100 = vmul.f32 %v1060, %v1073
        %v1101 = vmul.f32 %v1061, %v1077
        %v1102 = vmul.f32 %v1062, %v1073
        %v1103 = vmul.f32 %v1063, %v1077
        %v1104 = vmul.f32 %v1064, %v1073
        %v1105 = vmul.f32 %v1065, %v1077
        %v1106 = vmul.f32 %v1066, %v1073
        %v1107 = vmul.f32 %v1067, %v1077
        %v1108 = vmul.f32 %v1068, %v1073
        %v1109 = vmul.f32 %v1069, %v1077
        %v1110 = vlaneseq
        %v1111 = vshrl.u32 %v1110, 7
        %v1112 = vsub.s32 1, %v1111
        %v1113 = vrot.slane %v809, %v1112
        %v1114 = vlaneseq
        %v1115 = vshrl.u32 %v1114, 7
        %v1116 = vsub.s32 1, %v1115
        %v1117 = vrot.slane %v810, %v1116
        %v1118 = vadd.f32 %v1078, %v1113
        %v1119 = vadd.f32 %v1079, %v1117
        %v1120 = vadd.f32 %v1080, %v1113
        %v1121 = vadd.f32 %v1081, %v1117
        %v1122 = vadd.f32 %v1082, %v1113
        %v1123 = vadd.f32 %v1083, %v1117
        %v1124 = vadd.f32 %v1084, %v1113
        %v1125 = vadd.f32 %v1085, %v1117
        %v1126 = vadd.f32 %v1086, %v1113
        %v1127 = vadd.f32 %v1087, %v1117
        %v1128 = vadd.f32 %v1088, %v1113
        %v1129 = vadd.f32 %v1089, %v1117
        %v1130 = vadd.f32 %v1090, %v1113
        %v1131 = vadd.f32 %v1091, %v1117
        %v1132 = vadd.f32 %v1092, %v1113
        %v1133 = vadd.f32 %v1093, %v1117
        %v1134 = vadd.f32 %v1094, %v1113
        %v1135 = vadd.f32 %v1095, %v1117
        %v1136 = vadd.f32 %v1096, %v1113
        %v1137 = vadd.f32 %v1097, %v1117
        %v1138 = vadd.f32 %v1098, %v1113
        %v1139 = vadd.f32 %v1099, %v1117
        %v1140 = vadd.f32 %v1100, %v1113
        %v1141 = vadd.f32 %v1101, %v1117
        %v1142 = vadd.f32 %v1102, %v1113
        %v1143 = vadd.f32 %v1103, %v1117
        %v1144 = vadd.f32 %v1104, %v1113
        %v1145 = vadd.f32 %v1105, %v1117
        %v1146 = vadd.f32 %v1106, %v1113
        %v1147 = vadd.f32 %v1107, %v1117
        %v1148 = vadd.f32 %v1108, %v1113
        %v1149 = vadd.f32 %v1109, %v1117
        %v1150 = vpack.c.bf16 %v1120, %v1118
        %v1151 = vpack.c.bf16 %v1121, %v1119
        %v1152 = vpack.c.bf16 %v1124, %v1122
        %v1153 = vpack.c.bf16 %v1125, %v1123
        %v1154 = vpack.c.bf16 %v1128, %v1126
        %v1155 = vpack.c.bf16 %v1129, %v1127
        %v1156 = vpack.c.bf16 %v1132, %v1130
        %v1157 = vpack.c.bf16 %v1133, %v1131
        %v1158 = vpack.c.bf16 %v1136, %v1134
        %v1159 = vpack.c.bf16 %v1137, %v1135
        %v1160 = vpack.c.bf16 %v1140, %v1138
        %v1161 = vpack.c.bf16 %v1141, %v1139
        %v1162 = vpack.c.bf16 %v1144, %v1142
        %v1163 = vpack.c.bf16 %v1145, %v1143
        %v1164 = vpack.c.bf16 %v1148, %v1146
        %v1165 = vpack.c.bf16 %v1149, %v1147
        %s1166 = smul.u32 %s28, 192
        %s1167 = smul.addr %s1166, 4
        %s1168 = scalar_lea.vmem %s3, %s1167
        %v1169 = vld [vmem:[%s1168] sm:$0xff]
        %v1170 = vld [vmem:[%s1168 + $0x8] sm:$0xff]
        %v1171 = vld [vmem:[%s1168 + $0x10] sm:$0xff]
        %v1172 = vld [vmem:[%s1168 + $0x18] sm:$0xff]
        %v1173 = vld [vmem:[%s1168 + $0x20] sm:$0xff]
        %v1174 = vld [vmem:[%s1168 + $0x28] sm:$0xff]
        %v1175 = vld [vmem:[%s1168 + $0x30] sm:$0xff]
        %v1176 = vld [vmem:[%s1168 + $0x38] sm:$0xff]
        %v1177 = vld [vmem:[%s1168 + $0x40] sm:$0xff]
        %v1178 = vld [vmem:[%s1168 + $0x48] sm:$0xff]
        %v1179 = vld [vmem:[%s1168 + $0x50] sm:$0xff]
        %v1180 = vld [vmem:[%s1168 + $0x58] sm:$0xff]
        %v1181 = vld [vmem:[%s1168 + $0x60] sm:$0xff]
        %v1182 = vld [vmem:[%s1168 + $0x68] sm:$0xff]
        %v1183 = vld [vmem:[%s1168 + $0x70] sm:$0xff]
        %v1184 = vld [vmem:[%s1168 + $0x78] sm:$0xff]
        %v1185 = vld [vmem:[%s1168 + $0x80] sm:$0xff]
        %v1186 = vld [vmem:[%s1168 + $0x88] sm:$0xff]
        %v1187 = vld [vmem:[%s1168 + $0x90] sm:$0xff]
        %v1188 = vld [vmem:[%s1168 + $0x98] sm:$0xff]
        %v1189 = vld [vmem:[%s1168 + $0xa0] sm:$0xff]
        %v1190 = vld [vmem:[%s1168 + $0xa8] sm:$0xff]
        %v1191 = vld [vmem:[%s1168 + $0xb0] sm:$0xff]
        %v1192 = vld [vmem:[%s1168 + $0xb8] sm:$0xff]
        %v1193 = vld [vmem:[%s1168 + $0xc0] sm:$0xff]
        %v1194 = vld [vmem:[%s1168 + $0xc8] sm:$0xff]
        %v1195 = vld [vmem:[%s1168 + $0xd0] sm:$0xff]
        %v1196 = vld [vmem:[%s1168 + $0xd8] sm:$0xff]
        %v1197 = vld [vmem:[%s1168 + $0xe0] sm:$0xff]
        %v1198 = vld [vmem:[%s1168 + $0xe8] sm:$0xff]
        %v1199 = vld [vmem:[%s1168 + $0xf0] sm:$0xff]
        %v1200 = vld [vmem:[%s1168 + $0xf8] sm:$0xff]
        %v1201 = vld [vmem:[%s1168 + $0x100] sm:$0xff]
        %v1202 = vld [vmem:[%s1168 + $0x108] sm:$0xff]
        %v1203 = vld [vmem:[%s1168 + $0x110] sm:$0xff]
        %v1204 = vld [vmem:[%s1168 + $0x118] sm:$0xff]
        %v1205 = vld [vmem:[%s1168 + $0x120] sm:$0xff]
        %v1206 = vld [vmem:[%s1168 + $0x128] sm:$0xff]
        %v1207 = vld [vmem:[%s1168 + $0x130] sm:$0xff]
        %v1208 = vld [vmem:[%s1168 + $0x138] sm:$0xff]
        %v1209 = vld [vmem:[%s1168 + $0x140] sm:$0xff]
        %v1210 = vld [vmem:[%s1168 + $0x148] sm:$0xff]
        %v1211 = vld [vmem:[%s1168 + $0x150] sm:$0xff]
        %v1212 = vld [vmem:[%s1168 + $0x158] sm:$0xff]
        %v1213 = vld [vmem:[%s1168 + $0x160] sm:$0xff]
        %v1214 = vld [vmem:[%s1168 + $0x168] sm:$0xff]
        %v1215 = vld [vmem:[%s1168 + $0x170] sm:$0xff]
        %v1216 = vld [vmem:[%s1168 + $0x178] sm:$0xff]
        %v1217 = vld [vmem:[%s1168 + $0x180] sm:$0xff]
        %v1218 = vld [vmem:[%s1168 + $0x188] sm:$0xff]
        %v1219 = vld [vmem:[%s1168 + $0x190] sm:$0xff]
        %v1220 = vld [vmem:[%s1168 + $0x198] sm:$0xff]
        %v1221 = vld [vmem:[%s1168 + $0x1a0] sm:$0xff]
        %v1222 = vld [vmem:[%s1168 + $0x1a8] sm:$0xff]
        %v1223 = vld [vmem:[%s1168 + $0x1b0] sm:$0xff]
        %v1224 = vld [vmem:[%s1168 + $0x1b8] sm:$0xff]
        %v1225 = vld [vmem:[%s1168 + $0x1c0] sm:$0xff]
        %v1226 = vld [vmem:[%s1168 + $0x1c8] sm:$0xff]
        %v1227 = vld [vmem:[%s1168 + $0x1d0] sm:$0xff]
        %v1228 = vld [vmem:[%s1168 + $0x1d8] sm:$0xff]
        %v1229 = vld [vmem:[%s1168 + $0x1e0] sm:$0xff]
        %v1230 = vld [vmem:[%s1168 + $0x1e8] sm:$0xff]
        %v1231 = vld [vmem:[%s1168 + $0x1f0] sm:$0xff]
        %v1232 = vld [vmem:[%s1168 + $0x1f8] sm:$0xff]
        %v1233 = vld [vmem:[%s1168 + $0x200] sm:$0xff]
        %v1234 = vld [vmem:[%s1168 + $0x208] sm:$0xff]
        %v1235 = vld [vmem:[%s1168 + $0x210] sm:$0xff]
        %v1236 = vld [vmem:[%s1168 + $0x218] sm:$0xff]
        %v1237 = vld [vmem:[%s1168 + $0x220] sm:$0xff]
        %v1238 = vld [vmem:[%s1168 + $0x228] sm:$0xff]
        %v1239 = vld [vmem:[%s1168 + $0x230] sm:$0xff]
        %v1240 = vld [vmem:[%s1168 + $0x238] sm:$0xff]
        %v1241 = vld [vmem:[%s1168 + $0x240] sm:$0xff]
        %v1242 = vld [vmem:[%s1168 + $0x248] sm:$0xff]
        %v1243 = vld [vmem:[%s1168 + $0x250] sm:$0xff]
        %v1244 = vld [vmem:[%s1168 + $0x258] sm:$0xff]
        %v1245 = vld [vmem:[%s1168 + $0x260] sm:$0xff]
        %v1246 = vld [vmem:[%s1168 + $0x268] sm:$0xff]
        %v1247 = vld [vmem:[%s1168 + $0x270] sm:$0xff]
        %v1248 = vld [vmem:[%s1168 + $0x278] sm:$0xff]
        %v1249 = vld [vmem:[%s1168 + $0x280] sm:$0xff]
        %v1250 = vld [vmem:[%s1168 + $0x288] sm:$0xff]
        %v1251 = vld [vmem:[%s1168 + $0x290] sm:$0xff]
        %v1252 = vld [vmem:[%s1168 + $0x298] sm:$0xff]
        %v1253 = vld [vmem:[%s1168 + $0x2a0] sm:$0xff]
        %v1254 = vld [vmem:[%s1168 + $0x2a8] sm:$0xff]
        %v1255 = vld [vmem:[%s1168 + $0x2b0] sm:$0xff]
        %v1256 = vld [vmem:[%s1168 + $0x2b8] sm:$0xff]
        %v1257 = vld [vmem:[%s1168 + $0x2c0] sm:$0xff]
        %v1258 = vld [vmem:[%s1168 + $0x2c8] sm:$0xff]
        %v1259 = vld [vmem:[%s1168 + $0x2d0] sm:$0xff]
        %v1260 = vld [vmem:[%s1168 + $0x2d8] sm:$0xff]
        %v1261 = vld [vmem:[%s1168 + $0x2e0] sm:$0xff]
        %v1262 = vld [vmem:[%s1168 + $0x2e8] sm:$0xff]
        %v1263 = vld [vmem:[%s1168 + $0x2f0] sm:$0xff]
        %v1264 = vld [vmem:[%s1168 + $0x2f8] sm:$0xff]
        %v1361 = vunpack.c.l.b16 %v1169
        %v1362 = vunpack.c.h.b16 %v1169
        %v1363 = vunpack.c.l.b16 %v1170
        %v1364 = vunpack.c.h.b16 %v1170
        %v1365 = vunpack.c.l.b16 %v1171
        %v1366 = vunpack.c.h.b16 %v1171
        %v1367 = vunpack.c.l.b16 %v1172
        %v1368 = vunpack.c.h.b16 %v1172
        %v1369 = vunpack.c.l.b16 %v1173
        %v1370 = vunpack.c.h.b16 %v1173
        %v1371 = vunpack.c.l.b16 %v1174
        %v1372 = vunpack.c.h.b16 %v1174
        %v1373 = vunpack.c.l.b16 %v1175
        %v1374 = vunpack.c.h.b16 %v1175
        %v1375 = vunpack.c.l.b16 %v1176
        %v1376 = vunpack.c.h.b16 %v1176
        %v1377 = vunpack.c.l.b16 %v1177
        %v1378 = vunpack.c.h.b16 %v1177
        %v1379 = vunpack.c.l.b16 %v1178
        %v1380 = vunpack.c.h.b16 %v1178
        %v1381 = vunpack.c.l.b16 %v1179
        %v1382 = vunpack.c.h.b16 %v1179
        %v1383 = vunpack.c.l.b16 %v1180
        %v1384 = vunpack.c.h.b16 %v1180
        %v1385 = vunpack.c.l.b16 %v1181
        %v1386 = vunpack.c.h.b16 %v1181
        %v1387 = vunpack.c.l.b16 %v1182
        %v1388 = vunpack.c.h.b16 %v1182
        %v1389 = vunpack.c.l.b16 %v1183
        %v1390 = vunpack.c.h.b16 %v1183
        %v1391 = vunpack.c.l.b16 %v1184
        %v1392 = vunpack.c.h.b16 %v1184
        %v1393 = vunpack.c.l.b16 %v1185
        %v1394 = vunpack.c.h.b16 %v1185
        %v1395 = vunpack.c.l.b16 %v1186
        %v1396 = vunpack.c.h.b16 %v1186
        %v1397 = vunpack.c.l.b16 %v1187
        %v1398 = vunpack.c.h.b16 %v1187
        %v1399 = vunpack.c.l.b16 %v1188
        %v1400 = vunpack.c.h.b16 %v1188
        %v1401 = vunpack.c.l.b16 %v1189
        %v1402 = vunpack.c.h.b16 %v1189
        %v1403 = vunpack.c.l.b16 %v1190
        %v1404 = vunpack.c.h.b16 %v1190
        %v1405 = vunpack.c.l.b16 %v1191
        %v1406 = vunpack.c.h.b16 %v1191
        %v1407 = vunpack.c.l.b16 %v1192
        %v1408 = vunpack.c.h.b16 %v1192
        %v1409 = vunpack.c.l.b16 %v1193
        %v1410 = vunpack.c.h.b16 %v1193
        %v1411 = vunpack.c.l.b16 %v1194
        %v1412 = vunpack.c.h.b16 %v1194
        %v1413 = vunpack.c.l.b16 %v1195
        %v1414 = vunpack.c.h.b16 %v1195
        %v1415 = vunpack.c.l.b16 %v1196
        %v1416 = vunpack.c.h.b16 %v1196
        %v1417 = vunpack.c.l.b16 %v1197
        %v1418 = vunpack.c.h.b16 %v1197
        %v1419 = vunpack.c.l.b16 %v1198
        %v1420 = vunpack.c.h.b16 %v1198
        %v1421 = vunpack.c.l.b16 %v1199
        %v1422 = vunpack.c.h.b16 %v1199
        %v1423 = vunpack.c.l.b16 %v1200
        %v1424 = vunpack.c.h.b16 %v1200
        %v1425 = vunpack.c.l.b16 %v1201
        %v1426 = vunpack.c.h.b16 %v1201
        %v1427 = vunpack.c.l.b16 %v1202
        %v1428 = vunpack.c.h.b16 %v1202
        %v1429 = vunpack.c.l.b16 %v1203
        %v1430 = vunpack.c.h.b16 %v1203
        %v1431 = vunpack.c.l.b16 %v1204
        %v1432 = vunpack.c.h.b16 %v1204
        %v1433 = vunpack.c.l.b16 %v1205
        %v1434 = vunpack.c.h.b16 %v1205
        %v1435 = vunpack.c.l.b16 %v1206
        %v1436 = vunpack.c.h.b16 %v1206
        %v1437 = vunpack.c.l.b16 %v1207
        %v1438 = vunpack.c.h.b16 %v1207
        %v1439 = vunpack.c.l.b16 %v1208
        %v1440 = vunpack.c.h.b16 %v1208
        %v1441 = vunpack.c.l.b16 %v1209
        %v1442 = vunpack.c.h.b16 %v1209
        %v1443 = vunpack.c.l.b16 %v1210
        %v1444 = vunpack.c.h.b16 %v1210
        %v1445 = vunpack.c.l.b16 %v1211
        %v1446 = vunpack.c.h.b16 %v1211
        %v1447 = vunpack.c.l.b16 %v1212
        %v1448 = vunpack.c.h.b16 %v1212
        %v1449 = vunpack.c.l.b16 %v1213
        %v1450 = vunpack.c.h.b16 %v1213
        %v1451 = vunpack.c.l.b16 %v1214
        %v1452 = vunpack.c.h.b16 %v1214
        %v1453 = vunpack.c.l.b16 %v1215
        %v1454 = vunpack.c.h.b16 %v1215
        %v1455 = vunpack.c.l.b16 %v1216
        %v1456 = vunpack.c.h.b16 %v1216
        %v1457 = vunpack.c.l.b16 %v1217
        %v1458 = vunpack.c.h.b16 %v1217
        %v1459 = vunpack.c.l.b16 %v1218
        %v1460 = vunpack.c.h.b16 %v1218
        %v1461 = vunpack.c.l.b16 %v1219
        %v1462 = vunpack.c.h.b16 %v1219
        %v1463 = vunpack.c.l.b16 %v1220
        %v1464 = vunpack.c.h.b16 %v1220
        %v1465 = vunpack.c.l.b16 %v1221
        %v1466 = vunpack.c.h.b16 %v1221
        %v1467 = vunpack.c.l.b16 %v1222
        %v1468 = vunpack.c.h.b16 %v1222
        %v1469 = vunpack.c.l.b16 %v1223
        %v1470 = vunpack.c.h.b16 %v1223
        %v1471 = vunpack.c.l.b16 %v1224
        %v1472 = vunpack.c.h.b16 %v1224
        %v1473 = vunpack.c.l.b16 %v1225
        %v1474 = vunpack.c.h.b16 %v1225
        %v1475 = vunpack.c.l.b16 %v1226
        %v1476 = vunpack.c.h.b16 %v1226
        %v1477 = vunpack.c.l.b16 %v1227
        %v1478 = vunpack.c.h.b16 %v1227
        %v1479 = vunpack.c.l.b16 %v1228
        %v1480 = vunpack.c.h.b16 %v1228
        %v1481 = vunpack.c.l.b16 %v1229
        %v1482 = vunpack.c.h.b16 %v1229
        %v1483 = vunpack.c.l.b16 %v1230
        %v1484 = vunpack.c.h.b16 %v1230
        %v1485 = vunpack.c.l.b16 %v1231
        %v1486 = vunpack.c.h.b16 %v1231
        %v1487 = vunpack.c.l.b16 %v1232
        %v1488 = vunpack.c.h.b16 %v1232
        %v1489 = vunpack.c.l.b16 %v1233
        %v1490 = vunpack.c.h.b16 %v1233
        %v1491 = vunpack.c.l.b16 %v1234
        %v1492 = vunpack.c.h.b16 %v1234
        %v1493 = vunpack.c.l.b16 %v1235
        %v1494 = vunpack.c.h.b16 %v1235
        %v1495 = vunpack.c.l.b16 %v1236
        %v1496 = vunpack.c.h.b16 %v1236
        %v1497 = vunpack.c.l.b16 %v1237
        %v1498 = vunpack.c.h.b16 %v1237
        %v1499 = vunpack.c.l.b16 %v1238
        %v1500 = vunpack.c.h.b16 %v1238
        %v1501 = vunpack.c.l.b16 %v1239
        %v1502 = vunpack.c.h.b16 %v1239
        %v1503 = vunpack.c.l.b16 %v1240
        %v1504 = vunpack.c.h.b16 %v1240
        %v1505 = vunpack.c.l.b16 %v1241
        %v1506 = vunpack.c.h.b16 %v1241
        %v1507 = vunpack.c.l.b16 %v1242
        %v1508 = vunpack.c.h.b16 %v1242
        %v1509 = vunpack.c.l.b16 %v1243
        %v1510 = vunpack.c.h.b16 %v1243
        %v1511 = vunpack.c.l.b16 %v1244
        %v1512 = vunpack.c.h.b16 %v1244
        %v1513 = vunpack.c.l.b16 %v1245
        %v1514 = vunpack.c.h.b16 %v1245
        %v1515 = vunpack.c.l.b16 %v1246
        %v1516 = vunpack.c.h.b16 %v1246
        %v1517 = vunpack.c.l.b16 %v1247
        %v1518 = vunpack.c.h.b16 %v1247
        %v1519 = vunpack.c.l.b16 %v1248
        %v1520 = vunpack.c.h.b16 %v1248
        %v1521 = vunpack.c.l.b16 %v1249
        %v1522 = vunpack.c.h.b16 %v1249
        %v1523 = vunpack.c.l.b16 %v1250
        %v1524 = vunpack.c.h.b16 %v1250
        %v1525 = vunpack.c.l.b16 %v1251
        %v1526 = vunpack.c.h.b16 %v1251
        %v1527 = vunpack.c.l.b16 %v1252
        %v1528 = vunpack.c.h.b16 %v1252
        %v1529 = vunpack.c.l.b16 %v1253
        %v1530 = vunpack.c.h.b16 %v1253
        %v1531 = vunpack.c.l.b16 %v1254
        %v1532 = vunpack.c.h.b16 %v1254
        %v1533 = vunpack.c.l.b16 %v1255
        %v1534 = vunpack.c.h.b16 %v1255
        %v1535 = vunpack.c.l.b16 %v1256
        %v1536 = vunpack.c.h.b16 %v1256
        %v1537 = vunpack.c.l.b16 %v1257
        %v1538 = vunpack.c.h.b16 %v1257
        %v1539 = vunpack.c.l.b16 %v1258
        %v1540 = vunpack.c.h.b16 %v1258
        %v1541 = vunpack.c.l.b16 %v1259
        %v1542 = vunpack.c.h.b16 %v1259
        %v1543 = vunpack.c.l.b16 %v1260
        %v1544 = vunpack.c.h.b16 %v1260
        %v1545 = vunpack.c.l.b16 %v1261
        %v1546 = vunpack.c.h.b16 %v1261
        %v1547 = vunpack.c.l.b16 %v1262
        %v1548 = vunpack.c.h.b16 %v1262
        %v1549 = vunpack.c.l.b16 %v1263
        %v1550 = vunpack.c.h.b16 %v1263
        %v1551 = vunpack.c.l.b16 %v1264
        %v1552 = vunpack.c.h.b16 %v1264
        %v1553 = vpack.c.b16 %v1367, %v1361
        %v1554 = vpack.c.b16 %v1368, %v1362
        %v1555 = vpack.c.b16 %v1369, %v1363
        %v1556 = vpack.c.b16 %v1370, %v1364
        %v1557 = vpack.c.b16 %v1371, %v1365
        %v1558 = vpack.c.b16 %v1372, %v1366
        %v1559 = vpack.c.b16 %v1379, %v1373
        %v1560 = vpack.c.b16 %v1380, %v1374
        %v1561 = vpack.c.b16 %v1381, %v1375
        %v1562 = vpack.c.b16 %v1382, %v1376
        %v1563 = vpack.c.b16 %v1383, %v1377
        %v1564 = vpack.c.b16 %v1384, %v1378
        %v1565 = vpack.c.b16 %v1391, %v1385
        %v1566 = vpack.c.b16 %v1392, %v1386
        %v1567 = vpack.c.b16 %v1393, %v1387
        %v1568 = vpack.c.b16 %v1394, %v1388
        %v1569 = vpack.c.b16 %v1395, %v1389
        %v1570 = vpack.c.b16 %v1396, %v1390
        %v1571 = vpack.c.b16 %v1403, %v1397
        %v1572 = vpack.c.b16 %v1404, %v1398
        %v1573 = vpack.c.b16 %v1405, %v1399
        %v1574 = vpack.c.b16 %v1406, %v1400
        %v1575 = vpack.c.b16 %v1407, %v1401
        %v1576 = vpack.c.b16 %v1408, %v1402
        %v1577 = vpack.c.b16 %v1415, %v1409
        %v1578 = vpack.c.b16 %v1416, %v1410
        %v1579 = vpack.c.b16 %v1417, %v1411
        %v1580 = vpack.c.b16 %v1418, %v1412
        %v1581 = vpack.c.b16 %v1419, %v1413
        %v1582 = vpack.c.b16 %v1420, %v1414
        %v1583 = vpack.c.b16 %v1427, %v1421
        %v1584 = vpack.c.b16 %v1428, %v1422
        %v1585 = vpack.c.b16 %v1429, %v1423
        %v1586 = vpack.c.b16 %v1430, %v1424
        %v1587 = vpack.c.b16 %v1431, %v1425
        %v1588 = vpack.c.b16 %v1432, %v1426
        %v1589 = vpack.c.b16 %v1439, %v1433
        %v1590 = vpack.c.b16 %v1440, %v1434
        %v1591 = vpack.c.b16 %v1441, %v1435
        %v1592 = vpack.c.b16 %v1442, %v1436
        %v1593 = vpack.c.b16 %v1443, %v1437
        %v1594 = vpack.c.b16 %v1444, %v1438
        %v1595 = vpack.c.b16 %v1451, %v1445
        %v1596 = vpack.c.b16 %v1452, %v1446
        %v1597 = vpack.c.b16 %v1453, %v1447
        %v1598 = vpack.c.b16 %v1454, %v1448
        %v1599 = vpack.c.b16 %v1455, %v1449
        %v1600 = vpack.c.b16 %v1456, %v1450
        %v1601 = vpack.c.b16 %v1463, %v1457
        %v1602 = vpack.c.b16 %v1464, %v1458
        %v1603 = vpack.c.b16 %v1465, %v1459
        %v1604 = vpack.c.b16 %v1466, %v1460
        %v1605 = vpack.c.b16 %v1467, %v1461
        %v1606 = vpack.c.b16 %v1468, %v1462
        %v1607 = vpack.c.b16 %v1475, %v1469
        %v1608 = vpack.c.b16 %v1476, %v1470
        %v1609 = vpack.c.b16 %v1477, %v1471
        %v1610 = vpack.c.b16 %v1478, %v1472
        %v1611 = vpack.c.b16 %v1479, %v1473
        %v1612 = vpack.c.b16 %v1480, %v1474
        %v1613 = vpack.c.b16 %v1487, %v1481
        %v1614 = vpack.c.b16 %v1488, %v1482
        %v1615 = vpack.c.b16 %v1489, %v1483
        %v1616 = vpack.c.b16 %v1490, %v1484
        %v1617 = vpack.c.b16 %v1491, %v1485
        %v1618 = vpack.c.b16 %v1492, %v1486
        %v1619 = vpack.c.b16 %v1499, %v1493
        %v1620 = vpack.c.b16 %v1500, %v1494
        %v1621 = vpack.c.b16 %v1501, %v1495
        %v1622 = vpack.c.b16 %v1502, %v1496
        %v1623 = vpack.c.b16 %v1503, %v1497
        %v1624 = vpack.c.b16 %v1504, %v1498
        %v1625 = vpack.c.b16 %v1511, %v1505
        %v1626 = vpack.c.b16 %v1512, %v1506
        %v1627 = vpack.c.b16 %v1513, %v1507
        %v1628 = vpack.c.b16 %v1514, %v1508
        %v1629 = vpack.c.b16 %v1515, %v1509
        %v1630 = vpack.c.b16 %v1516, %v1510
        %v1631 = vpack.c.b16 %v1523, %v1517
        %v1632 = vpack.c.b16 %v1524, %v1518
        %v1633 = vpack.c.b16 %v1525, %v1519
        %v1634 = vpack.c.b16 %v1526, %v1520
        %v1635 = vpack.c.b16 %v1527, %v1521
        %v1636 = vpack.c.b16 %v1528, %v1522
        %v1637 = vpack.c.b16 %v1535, %v1529
        %v1638 = vpack.c.b16 %v1536, %v1530
        %v1639 = vpack.c.b16 %v1537, %v1531
        %v1640 = vpack.c.b16 %v1538, %v1532
        %v1641 = vpack.c.b16 %v1539, %v1533
        %v1642 = vpack.c.b16 %v1540, %v1534
        %v1643 = vpack.c.b16 %v1547, %v1541
        %v1644 = vpack.c.b16 %v1548, %v1542
        %v1645 = vpack.c.b16 %v1549, %v1543
        %v1646 = vpack.c.b16 %v1550, %v1544
        %v1647 = vpack.c.b16 %v1551, %v1545
        %v1648 = vpack.c.b16 %v1552, %v1546
        %1745 = vmatprep.subr.bf16.mxu0 %v1554
        %1746 = vmatpush1.bf16.msra.mxu0 %v1553
        %1747 = vmatprep.subr.bf16.mxu0 %v1560
        %1748 = vmatpush1.bf16.msra.mxu0 %v1559
        %1749 = vmatprep.subr.bf16.mxu0 %v1566
        %1750 = vmatpush1.bf16.msra.mxu0 %v1565
        %1751 = vmatprep.subr.bf16.mxu0 %v1572
        %1752 = vmatpush1.bf16.msra.mxu0 %v1571
        %1753 = vmatprep.subr.bf16.mxu0 %v1578
        %1754 = vmatpush1.bf16.msra.mxu0 %v1577
        %1755 = vmatprep.subr.bf16.mxu0 %v1584
        %1756 = vmatpush1.bf16.msra.mxu0 %v1583
        %1757 = vmatprep.subr.bf16.mxu0 %v1590
        %1758 = vmatpush1.bf16.msra.mxu0 %v1589
        %1759 = vmatprep.subr.bf16.mxu0 %v1596
        %1760 = vmatpush1.bf16.msra.mxu0 %v1595
        %1761 = vmatprep.subr.bf16.mxu0 %v1602
        %1762 = vmatpush1.bf16.msra.mxu0 %v1601
        %1763 = vmatprep.subr.bf16.mxu0 %v1608
        %1764 = vmatpush1.bf16.msra.mxu0 %v1607
        %1765 = vmatprep.subr.bf16.mxu0 %v1614
        %1766 = vmatpush1.bf16.msra.mxu0 %v1613
        %1767 = vmatprep.subr.bf16.mxu0 %v1620
        %1768 = vmatpush1.bf16.msra.mxu0 %v1619
        %1769 = vmatprep.subr.bf16.mxu0 %v1626
        %1770 = vmatpush1.bf16.msra.mxu0 %v1625
        %1771 = vmatprep.subr.bf16.mxu0 %v1632
        %1772 = vmatpush1.bf16.msra.mxu0 %v1631
        %1773 = vmatprep.subr.bf16.mxu0 %v1638
        %1774 = vmatpush1.bf16.msra.mxu0 %v1637
        %1775 = vmatprep.subr.bf16.mxu0 %v1644
        %1776 = vmatpush1.bf16.msra.mxu0 %v1643
        %1777 = vmatprep.mubr.bf16.mxu0 %v1151
        %1778 = vmatmul.mubr.bf16.gmra.mrb[0].mxu0 %v1150
        %v1779 = vpop.f32.mrb[0].mxu0
        %v1780 = vadd.f32 0.0, %v1779
        %v1781 = vpop.f32.mrb[0].mxu0
        %v1782 = vadd.f32 0.0, %v1781
        %v1783 = vpop.f32.mrb[0].mxu0
        %v1784 = vadd.f32 0.0, %v1783
        %v1785 = vpop.f32.mrb[0].mxu0
        %v1786 = vadd.f32 0.0, %v1785
        %1787 = vmatprep.mubr.bf16.mxu0 %v1153
        %1788 = vmatmul.mubr.bf16.gmra.mrb[0].mxu0 %v1152
        %v1789 = vpop.f32.mrb[0].mxu0
        %v1790 = vadd.f32 0.0, %v1789
        %v1791 = vpop.f32.mrb[0].mxu0
        %v1792 = vadd.f32 0.0, %v1791
        %v1793 = vpop.f32.mrb[0].mxu0
        %v1794 = vadd.f32 0.0, %v1793
        %v1795 = vpop.f32.mrb[0].mxu0
        %v1796 = vadd.f32 0.0, %v1795
        %1797 = vmatprep.mubr.bf16.mxu0 %v1155
        %1798 = vmatmul.mubr.bf16.gmra.mrb[0].mxu0 %v1154
        %v1799 = vpop.f32.mrb[0].mxu0
        %v1800 = vadd.f32 0.0, %v1799
        %v1801 = vpop.f32.mrb[0].mxu0
        %v1802 = vadd.f32 0.0, %v1801
        %v1803 = vpop.f32.mrb[0].mxu0
        %v1804 = vadd.f32 0.0, %v1803
        %v1805 = vpop.f32.mrb[0].mxu0
        %v1806 = vadd.f32 0.0, %v1805
        %1807 = vmatprep.mubr.bf16.mxu0 %v1157
        %1808 = vmatmul.mubr.bf16.gmra.mrb[0].mxu0 %v1156
        %v1809 = vpop.f32.mrb[0].mxu0
        %v1810 = vadd.f32 0.0, %v1809
        %v1811 = vpop.f32.mrb[0].mxu0
        %v1812 = vadd.f32 0.0, %v1811
        %v1813 = vpop.f32.mrb[0].mxu0
        %v1814 = vadd.f32 0.0, %v1813
        %v1815 = vpop.f32.mrb[0].mxu0
        %v1816 = vadd.f32 0.0, %v1815
        %1817 = vmatprep.mubr.bf16.mxu0 %v1159
        %1818 = vmatmul.mubr.bf16.gmra.mrb[0].mxu0 %v1158
        %v1819 = vpop.f32.mrb[0].mxu0
        %v1820 = vadd.f32 0.0, %v1819
        %v1821 = vpop.f32.mrb[0].mxu0
        %v1822 = vadd.f32 0.0, %v1821
        %v1823 = vpop.f32.mrb[0].mxu0
        %v1824 = vadd.f32 0.0, %v1823
        %v1825 = vpop.f32.mrb[0].mxu0
        %v1826 = vadd.f32 0.0, %v1825
        %1827 = vmatprep.mubr.bf16.mxu0 %v1161
        %1828 = vmatmul.mubr.bf16.gmra.mrb[0].mxu0 %v1160
        %v1829 = vpop.f32.mrb[0].mxu0
        %v1830 = vadd.f32 0.0, %v1829
        %v1831 = vpop.f32.mrb[0].mxu0
        %v1832 = vadd.f32 0.0, %v1831
        %v1833 = vpop.f32.mrb[0].mxu0
        %v1834 = vadd.f32 0.0, %v1833
        %v1835 = vpop.f32.mrb[0].mxu0
        %v1836 = vadd.f32 0.0, %v1835
        %1837 = vmatprep.mubr.bf16.mxu0 %v1163
        %1838 = vmatmul.mubr.bf16.gmra.mrb[0].mxu0 %v1162
        %v1839 = vpop.f32.mrb[0].mxu0
        %v1840 = vadd.f32 0.0, %v1839
        %v1841 = vpop.f32.mrb[0].mxu0
        %v1842 = vadd.f32 0.0, %v1841
        %v1843 = vpop.f32.mrb[0].mxu0
        %v1844 = vadd.f32 0.0, %v1843
        %v1845 = vpop.f32.mrb[0].mxu0
        %v1846 = vadd.f32 0.0, %v1845
        %1847 = vmatprep.mubr.bf16.mxu0 %v1165
        %1848 = vmatmul.mubr.bf16.gmra.mrb[0].mxu0 %v1164
        %v1849 = vpop.f32.mrb[0].mxu0
        %v1850 = vadd.f32 0.0, %v1849
        %v1851 = vpop.f32.mrb[0].mxu0
        %v1852 = vadd.f32 0.0, %v1851
        %v1853 = vpop.f32.mrb[0].mxu0
        %v1854 = vadd.f32 0.0, %v1853
        %v1855 = vpop.f32.mrb[0].mxu0
        %v1856 = vadd.f32 0.0, %v1855
        %1857 = vdwg.mxu0
        %1858 = vmatprep.subr.bf16.mxu0 %v1556
        %1859 = vmatpush1.bf16.msra.mxu0 %v1555
        %1860 = vmatprep.subr.bf16.mxu0 %v1562
        %1861 = vmatpush1.bf16.msra.mxu0 %v1561
        %1862 = vmatprep.subr.bf16.mxu0 %v1568
        %1863 = vmatpush1.bf16.msra.mxu0 %v1567
        %1864 = vmatprep.subr.bf16.mxu0 %v1574
        %1865 = vmatpush1.bf16.msra.mxu0 %v1573
        %1866 = vmatprep.subr.bf16.mxu0 %v1580
        %1867 = vmatpush1.bf16.msra.mxu0 %v1579
        %1868 = vmatprep.subr.bf16.mxu0 %v1586
        %1869 = vmatpush1.bf16.msra.mxu0 %v1585
        %1870 = vmatprep.subr.bf16.mxu0 %v1592
        %1871 = vmatpush1.bf16.msra.mxu0 %v1591
        %1872 = vmatprep.subr.bf16.mxu0 %v1598
        %1873 = vmatpush1.bf16.msra.mxu0 %v1597
        %1874 = vmatprep.subr.bf16.mxu0 %v1604
        %1875 = vmatpush1.bf16.msra.mxu0 %v1603
        %1876 = vmatprep.subr.bf16.mxu0 %v1610
        %1877 = vmatpush1.bf16.msra.mxu0 %v1609
        %1878 = vmatprep.subr.bf16.mxu0 %v1616
        %1879 = vmatpush1.bf16.msra.mxu0 %v1615
        %1880 = vmatprep.subr.bf16.mxu0 %v1622
        %1881 = vmatpush1.bf16.msra.mxu0 %v1621
        %1882 = vmatprep.subr.bf16.mxu0 %v1628
        %1883 = vmatpush1.bf16.msra.mxu0 %v1627
        %1884 = vmatprep.subr.bf16.mxu0 %v1634
        %1885 = vmatpush1.bf16.msra.mxu0 %v1633
        %1886 = vmatprep.subr.bf16.mxu0 %v1640
        %1887 = vmatpush1.bf16.msra.mxu0 %v1639
        %1888 = vmatprep.subr.bf16.mxu0 %v1646
        %1889 = vmatpush1.bf16.msra.mxu0 %v1645
        %1890 = vmatprep.mubr.bf16.mxu0 %v1151
        %1891 = vmatmul.mubr.bf16.gmra.mrb[0].mxu0 %v1150
        %v1892 = vpop.f32.mrb[0].mxu0
        %v1893 = vadd.f32 0.0, %v1892
        %v1894 = vpop.f32.mrb[0].mxu0
        %v1895 = vadd.f32 0.0, %v1894
        %v1896 = vpop.f32.mrb[0].mxu0
        %v1897 = vadd.f32 0.0, %v1896
        %v1898 = vpop.f32.mrb[0].mxu0
        %v1899 = vadd.f32 0.0, %v1898
        %1900 = vmatprep.mubr.bf16.mxu0 %v1153
        %1901 = vmatmul.mubr.bf16.gmra.mrb[0].mxu0 %v1152
        %v1902 = vpop.f32.mrb[0].mxu0
        %v1903 = vadd.f32 0.0, %v1902
        %v1904 = vpop.f32.mrb[0].mxu0
        %v1905 = vadd.f32 0.0, %v1904
        %v1906 = vpop.f32.mrb[0].mxu0
        %v1907 = vadd.f32 0.0, %v1906
        %v1908 = vpop.f32.mrb[0].mxu0
        %v1909 = vadd.f32 0.0, %v1908
        %1910 = vmatprep.mubr.bf16.mxu0 %v1155
        %1911 = vmatmul.mubr.bf16.gmra.mrb[0].mxu0 %v1154
        %v1912 = vpop.f32.mrb[0].mxu0
        %v1913 = vadd.f32 0.0, %v1912
        %v1914 = vpop.f32.mrb[0].mxu0
        %v1915 = vadd.f32 0.0, %v1914
        %v1916 = vpop.f32.mrb[0].mxu0
        %v1917 = vadd.f32 0.0, %v1916
        %v1918 = vpop.f32.mrb[0].mxu0
        %v1919 = vadd.f32 0.0, %v1918
        %1920 = vmatprep.mubr.bf16.mxu0 %v1157
        %1921 = vmatmul.mubr.bf16.gmra.mrb[0].mxu0 %v1156
        %v1922 = vpop.f32.mrb[0].mxu0
        %v1923 = vadd.f32 0.0, %v1922
        %v1924 = vpop.f32.mrb[0].mxu0
        %v1925 = vadd.f32 0.0, %v1924
        %v1926 = vpop.f32.mrb[0].mxu0
        %v1927 = vadd.f32 0.0, %v1926
        %v1928 = vpop.f32.mrb[0].mxu0
        %v1929 = vadd.f32 0.0, %v1928
        %1930 = vmatprep.mubr.bf16.mxu0 %v1159
        %1931 = vmatmul.mubr.bf16.gmra.mrb[0].mxu0 %v1158
        %v1932 = vpop.f32.mrb[0].mxu0
        %v1933 = vadd.f32 0.0, %v1932
        %v1934 = vpop.f32.mrb[0].mxu0
        %v1935 = vadd.f32 0.0, %v1934
        %v1936 = vpop.f32.mrb[0].mxu0
        %v1937 = vadd.f32 0.0, %v1936
        %v1938 = vpop.f32.mrb[0].mxu0
        %v1939 = vadd.f32 0.0, %v1938
        %1940 = vmatprep.mubr.bf16.mxu0 %v1161
        %1941 = vmatmul.mubr.bf16.gmra.mrb[0].mxu0 %v1160
        %v1942 = vpop.f32.mrb[0].mxu0
        %v1943 = vadd.f32 0.0, %v1942
        %v1944 = vpop.f32.mrb[0].mxu0
        %v1945 = vadd.f32 0.0, %v1944
        %v1946 = vpop.f32.mrb[0].mxu0
        %v1947 = vadd.f32 0.0, %v1946
        %v1948 = vpop.f32.mrb[0].mxu0
        %v1949 = vadd.f32 0.0, %v1948
        %1950 = vmatprep.mubr.bf16.mxu0 %v1163
        %1951 = vmatmul.mubr.bf16.gmra.mrb[0].mxu0 %v1162
        %v1952 = vpop.f32.mrb[0].mxu0
        %v1953 = vadd.f32 0.0, %v1952
        %v1954 = vpop.f32.mrb[0].mxu0
        %v1955 = vadd.f32 0.0, %v1954
        %v1956 = vpop.f32.mrb[0].mxu0
        %v1957 = vadd.f32 0.0, %v1956
        %v1958 = vpop.f32.mrb[0].mxu0
        %v1959 = vadd.f32 0.0, %v1958
        %1960 = vmatprep.mubr.bf16.mxu0 %v1165
        %1961 = vmatmul.mubr.bf16.gmra.mrb[0].mxu0 %v1164
        %v1962 = vpop.f32.mrb[0].mxu0
        %v1963 = vadd.f32 0.0, %v1962
        %v1964 = vpop.f32.mrb[0].mxu0
        %v1965 = vadd.f32 0.0, %v1964
        %v1966 = vpop.f32.mrb[0].mxu0
        %v1967 = vadd.f32 0.0, %v1966
        %v1968 = vpop.f32.mrb[0].mxu0
        %v1969 = vadd.f32 0.0, %v1968
        %1970 = vdwg.mxu0
        %1971 = vmatprep.subr.bf16.mxu0 %v1558
        %1972 = vmatpush1.bf16.msra.mxu0 %v1557
        %1973 = vmatprep.subr.bf16.mxu0 %v1564
        %1974 = vmatpush1.bf16.msra.mxu0 %v1563
        %1975 = vmatprep.subr.bf16.mxu0 %v1570
        %1976 = vmatpush1.bf16.msra.mxu0 %v1569
        %1977 = vmatprep.subr.bf16.mxu0 %v1576
        %1978 = vmatpush1.bf16.msra.mxu0 %v1575
        %1979 = vmatprep.subr.bf16.mxu0 %v1582
        %1980 = vmatpush1.bf16.msra.mxu0 %v1581
        %1981 = vmatprep.subr.bf16.mxu0 %v1588
        %1982 = vmatpush1.bf16.msra.mxu0 %v1587
        %1983 = vmatprep.subr.bf16.mxu0 %v1594
        %1984 = vmatpush1.bf16.msra.mxu0 %v1593
        %1985 = vmatprep.subr.bf16.mxu0 %v1600
        %1986 = vmatpush1.bf16.msra.mxu0 %v1599
        %1987 = vmatprep.subr.bf16.mxu0 %v1606
        %1988 = vmatpush1.bf16.msra.mxu0 %v1605
        %1989 = vmatprep.subr.bf16.mxu0 %v1612
        %1990 = vmatpush1.bf16.msra.mxu0 %v1611
        %1991 = vmatprep.subr.bf16.mxu0 %v1618
        %1992 = vmatpush1.bf16.msra.mxu0 %v1617
        %1993 = vmatprep.subr.bf16.mxu0 %v1624
        %1994 = vmatpush1.bf16.msra.mxu0 %v1623
        %1995 = vmatprep.subr.bf16.mxu0 %v1630
        %1996 = vmatpush1.bf16.msra.mxu0 %v1629
        %1997 = vmatprep.subr.bf16.mxu0 %v1636
        %1998 = vmatpush1.bf16.msra.mxu0 %v1635
        %1999 = vmatprep.subr.bf16.mxu0 %v1642
        %2000 = vmatpush1.bf16.msra.mxu0 %v1641
        %2001 = vmatprep.subr.bf16.mxu0 %v1648
        %2002 = vmatpush1.bf16.msra.mxu0 %v1647
        %2003 = vmatprep.mubr.bf16.mxu0 %v1151
        %2004 = vmatmul.mubr.bf16.gmra.mrb[0].mxu0 %v1150
        %v2005 = vpop.f32.mrb[0].mxu0
        %v2006 = vadd.f32 0.0, %v2005
        %v2007 = vpop.f32.mrb[0].mxu0
        %v2008 = vadd.f32 0.0, %v2007
        %v2009 = vpop.f32.mrb[0].mxu0
        %v2010 = vadd.f32 0.0, %v2009
        %v2011 = vpop.f32.mrb[0].mxu0
        %v2012 = vadd.f32 0.0, %v2011
        %2013 = vmatprep.mubr.bf16.mxu0 %v1153
        %2014 = vmatmul.mubr.bf16.gmra.mrb[0].mxu0 %v1152
        %v2015 = vpop.f32.mrb[0].mxu0
        %v2016 = vadd.f32 0.0, %v2015
        %v2017 = vpop.f32.mrb[0].mxu0
        %v2018 = vadd.f32 0.0, %v2017
        %v2019 = vpop.f32.mrb[0].mxu0
        %v2020 = vadd.f32 0.0, %v2019
        %v2021 = vpop.f32.mrb[0].mxu0
        %v2022 = vadd.f32 0.0, %v2021
        %2023 = vmatprep.mubr.bf16.mxu0 %v1155
        %2024 = vmatmul.mubr.bf16.gmra.mrb[0].mxu0 %v1154
        %v2025 = vpop.f32.mrb[0].mxu0
        %v2026 = vadd.f32 0.0, %v2025
        %v2027 = vpop.f32.mrb[0].mxu0
        %v2028 = vadd.f32 0.0, %v2027
        %v2029 = vpop.f32.mrb[0].mxu0
        %v2030 = vadd.f32 0.0, %v2029
        %v2031 = vpop.f32.mrb[0].mxu0
        %v2032 = vadd.f32 0.0, %v2031
        %2033 = vmatprep.mubr.bf16.mxu0 %v1157
        %2034 = vmatmul.mubr.bf16.gmra.mrb[0].mxu0 %v1156
        %v2035 = vpop.f32.mrb[0].mxu0
        %v2036 = vadd.f32 0.0, %v2035
        %v2037 = vpop.f32.mrb[0].mxu0
        %v2038 = vadd.f32 0.0, %v2037
        %v2039 = vpop.f32.mrb[0].mxu0
        %v2040 = vadd.f32 0.0, %v2039
        %v2041 = vpop.f32.mrb[0].mxu0
        %v2042 = vadd.f32 0.0, %v2041
        %2043 = vmatprep.mubr.bf16.mxu0 %v1159
        %2044 = vmatmul.mubr.bf16.gmra.mrb[0].mxu0 %v1158
        %v2045 = vpop.f32.mrb[0].mxu0
        %v2046 = vadd.f32 0.0, %v2045
        %v2047 = vpop.f32.mrb[0].mxu0
        %v2048 = vadd.f32 0.0, %v2047
        %v2049 = vpop.f32.mrb[0].mxu0
        %v2050 = vadd.f32 0.0, %v2049
        %v2051 = vpop.f32.mrb[0].mxu0
        %v2052 = vadd.f32 0.0, %v2051
        %2053 = vmatprep.mubr.bf16.mxu0 %v1161
        %2054 = vmatmul.mubr.bf16.gmra.mrb[0].mxu0 %v1160
        %v2055 = vpop.f32.mrb[0].mxu0
        %v2056 = vadd.f32 0.0, %v2055
        %v2057 = vpop.f32.mrb[0].mxu0
        %v2058 = vadd.f32 0.0, %v2057
        %v2059 = vpop.f32.mrb[0].mxu0
        %v2060 = vadd.f32 0.0, %v2059
        %v2061 = vpop.f32.mrb[0].mxu0
        %v2062 = vadd.f32 0.0, %v2061
        %2063 = vmatprep.mubr.bf16.mxu0 %v1163
        %2064 = vmatmul.mubr.bf16.gmra.mrb[0].mxu0 %v1162
        %v2065 = vpop.f32.mrb[0].mxu0
        %v2066 = vadd.f32 0.0, %v2065
        %v2067 = vpop.f32.mrb[0].mxu0
        %v2068 = vadd.f32 0.0, %v2067
        %v2069 = vpop.f32.mrb[0].mxu0
        %v2070 = vadd.f32 0.0, %v2069
        %v2071 = vpop.f32.mrb[0].mxu0
        %v2072 = vadd.f32 0.0, %v2071
        %2073 = vmatprep.mubr.bf16.mxu0 %v1165
        %2074 = vmatmul.mubr.bf16.gmra.mrb[0].mxu0 %v1164
        %v2075 = vpop.f32.mrb[0].mxu0
        %v2076 = vadd.f32 0.0, %v2075
        %v2077 = vpop.f32.mrb[0].mxu0
        %v2078 = vadd.f32 0.0, %v2077
        %v2079 = vpop.f32.mrb[0].mxu0
        %v2080 = vadd.f32 0.0, %v2079
        %v2081 = vpop.f32.mrb[0].mxu0
        %v2082 = vadd.f32 0.0, %v2081
        %2083 = vdwg.mxu0
        %v2084 = vpack.c.bf16 %v1784, %v1780
        %v2085 = vpack.c.bf16 %v1786, %v1782
        %v2086 = vpack.c.bf16 %v1897, %v1893
        %v2087 = vpack.c.bf16 %v1899, %v1895
        %v2088 = vpack.c.bf16 %v2010, %v2006
        %v2089 = vpack.c.bf16 %v2012, %v2008
        %v2090 = vpack.c.bf16 %v1794, %v1790
        %v2091 = vpack.c.bf16 %v1796, %v1792
        %v2092 = vpack.c.bf16 %v1907, %v1903
        %v2093 = vpack.c.bf16 %v1909, %v1905
        %v2094 = vpack.c.bf16 %v2020, %v2016
        %v2095 = vpack.c.bf16 %v2022, %v2018
        %v2096 = vpack.c.bf16 %v1804, %v1800
        %v2097 = vpack.c.bf16 %v1806, %v1802
        %v2098 = vpack.c.bf16 %v1917, %v1913
        %v2099 = vpack.c.bf16 %v1919, %v1915
        %v2100 = vpack.c.bf16 %v2030, %v2026
        %v2101 = vpack.c.bf16 %v2032, %v2028
        %v2102 = vpack.c.bf16 %v1814, %v1810
        %v2103 = vpack.c.bf16 %v1816, %v1812
        %v2104 = vpack.c.bf16 %v1927, %v1923
        %v2105 = vpack.c.bf16 %v1929, %v1925
        %v2106 = vpack.c.bf16 %v2040, %v2036
        %v2107 = vpack.c.bf16 %v2042, %v2038
        %v2108 = vpack.c.bf16 %v1824, %v1820
        %v2109 = vpack.c.bf16 %v1826, %v1822
        %v2110 = vpack.c.bf16 %v1937, %v1933
        %v2111 = vpack.c.bf16 %v1939, %v1935
        %v2112 = vpack.c.bf16 %v2050, %v2046
        %v2113 = vpack.c.bf16 %v2052, %v2048
        %v2114 = vpack.c.bf16 %v1834, %v1830
        %v2115 = vpack.c.bf16 %v1836, %v1832
        %v2116 = vpack.c.bf16 %v1947, %v1943
        %v2117 = vpack.c.bf16 %v1949, %v1945
        %v2118 = vpack.c.bf16 %v2060, %v2056
        %v2119 = vpack.c.bf16 %v2062, %v2058
        %v2120 = vpack.c.bf16 %v1844, %v1840
        %v2121 = vpack.c.bf16 %v1846, %v1842
        %v2122 = vpack.c.bf16 %v1957, %v1953
        %v2123 = vpack.c.bf16 %v1959, %v1955
        %v2124 = vpack.c.bf16 %v2070, %v2066
        %v2125 = vpack.c.bf16 %v2072, %v2068
        %v2126 = vpack.c.bf16 %v1854, %v1850
        %v2127 = vpack.c.bf16 %v1856, %v1852
        %v2128 = vpack.c.bf16 %v1967, %v1963
        %v2129 = vpack.c.bf16 %v1969, %v1965
        %v2130 = vpack.c.bf16 %v2080, %v2076
        %v2131 = vpack.c.bf16 %v2082, %v2078
        %v2132 = vlaneseq
        %v2133 = vand.u32 %v2132, 127
        %vm2134 = vcmp.lt.s32.totalorder %v2133, 101
        %v2135 = vsel %vm2134, 0.0, -1e+30
        %vm2136 = vcmask 523264
        %v2138 = vsel %vm2136, %v2084, 0
        %v2141 = vsel %vm2136, %v2090, 0
        %v2144 = vsel %vm2136, %v2096, 0
        %v2147 = vsel %vm2136, %v2102, 0
        %v2150 = vsel %vm2136, %v2108, 0
        %v2153 = vsel %vm2136, %v2114, 0
        %v2156 = vsel %vm2136, %v2120, 0
        %v2159 = vsel %vm2136, %v2126, 0
        %v2162 = vsel %vm2136, %v2086, 0
        %v2165 = vsel %vm2136, %v2092, 0
        %v2168 = vsel %vm2136, %v2098, 0
        %v2171 = vsel %vm2136, %v2104, 0
        %v2174 = vsel %vm2136, %v2110, 0
        %v2177 = vsel %vm2136, %v2116, 0
        %v2180 = vsel %vm2136, %v2122, 0
        %v2183 = vsel %vm2136, %v2128, 0
        %2185 = vmatprep.subr.bf16.mxu0 0
        %2186 = vmatpush1.bf16.xpose.msra.mxu0 %v2162
        %2187 = vmatprep.subr.bf16.mxu0 0
        %2188 = vmatpush1.bf16.xpose.msra.mxu0 %v2165
        %2189 = vmatprep.subr.bf16.mxu0 0
        %2190 = vmatpush1.bf16.xpose.msra.mxu0 %v2168
        %2191 = vmatprep.subr.bf16.mxu0 0
        %2192 = vmatpush1.bf16.xpose.msra.mxu0 %v2171
        %2193 = vmatprep.subr.bf16.mxu0 0
        %2194 = vmatpush1.bf16.xpose.msra.mxu0 %v2174
        %2195 = vmatprep.subr.bf16.mxu0 0
        %2196 = vmatpush1.bf16.xpose.msra.mxu0 %v2177
        %2197 = vmatprep.subr.bf16.mxu0 0
        %2198 = vmatpush1.bf16.xpose.msra.mxu0 %v2180
        %2199 = vmatprep.subr.bf16.mxu0 0
        %2200 = vmatpush1.bf16.xpose.msra.mxu0 %v2183
        %2201 = vmatprep.subr.bf16.mxu0 0
        %2202 = vmatpush1.bf16.xpose.msra.mxu0 0
        %2203 = vmatprep.subr.bf16.mxu0 0
        %2204 = vmatpush1.bf16.xpose.msra.mxu0 0
        %2205 = vmatprep.subr.bf16.mxu0 0
        %2206 = vmatpush1.bf16.xpose.msra.mxu0 0
        %2207 = vmatprep.subr.bf16.mxu0 0
        %2208 = vmatpush1.bf16.xpose.msra.mxu0 0
        %2209 = vmatprep.subr.bf16.mxu0 0
        %2210 = vmatpush1.bf16.xpose.msra.mxu0 0
        %2211 = vmatprep.subr.bf16.mxu0 0
        %2212 = vmatpush1.bf16.xpose.msra.mxu0 0
        %2213 = vmatprep.subr.bf16.mxu0 0
        %2214 = vmatpush1.bf16.xpose.msra.mxu0 0
        %2215 = vmatprep.subr.bf16.mxu0 0
        %2216 = vmatpush1.bf16.xpose.msra.mxu0 0
        %2217 = vmatprep.mubr.bf16.mxu0 0
        %2218 = vmatmul.mubr.bf16.gmra.mrb[0].mxu0 %v2138
        %v2219 = vpop.f32.mrb[0].mxu0
        %v2220 = vadd.f32 %v2135, %v2219
        %v2221 = vpop.f32.mrb[0].mxu0
        %v2222 = vpop.f32.mrb[0].mxu0
        %v2223 = vadd.f32 %v2135, %v2222
        %v2224 = vpop.f32.mrb[0].mxu0
        %2225 = vmatprep.mubr.bf16.mxu0 0
        %2226 = vmatmul.mubr.bf16.gmra.mrb[0].mxu0 %v2141
        %v2227 = vpop.f32.mrb[0].mxu0
        %v2228 = vadd.f32 %v2135, %v2227
        %v2229 = vpop.f32.mrb[0].mxu0
        %v2230 = vpop.f32.mrb[0].mxu0
        %v2231 = vadd.f32 %v2135, %v2230
        %v2232 = vpop.f32.mrb[0].mxu0
        %2233 = vmatprep.mubr.bf16.mxu0 0
        %2234 = vmatmul.mubr.bf16.gmra.mrb[0].mxu0 %v2144
        %v2235 = vpop.f32.mrb[0].mxu0
        %v2236 = vadd.f32 %v2135, %v2235
        %v2237 = vpop.f32.mrb[0].mxu0
        %v2238 = vpop.f32.mrb[0].mxu0
        %v2239 = vadd.f32 %v2135, %v2238
        %v2240 = vpop.f32.mrb[0].mxu0
        %2241 = vmatprep.mubr.bf16.mxu0 0
        %2242 = vmatmul.mubr.bf16.gmra.mrb[0].mxu0 %v2147
        %v2243 = vpop.f32.mrb[0].mxu0
        %v2244 = vadd.f32 %v2135, %v2243
        %v2245 = vpop.f32.mrb[0].mxu0
        %v2246 = vpop.f32.mrb[0].mxu0
        %v2247 = vadd.f32 %v2135, %v2246
        %v2248 = vpop.f32.mrb[0].mxu0
        %2249 = vmatprep.mubr.bf16.mxu0 0
        %2250 = vmatmul.mubr.bf16.gmra.mrb[0].mxu0 %v2150
        %v2251 = vpop.f32.mrb[0].mxu0
        %v2252 = vadd.f32 %v2135, %v2251
        %v2253 = vpop.f32.mrb[0].mxu0
        %v2254 = vpop.f32.mrb[0].mxu0
        %v2255 = vadd.f32 %v2135, %v2254
        %v2256 = vpop.f32.mrb[0].mxu0
        %2257 = vmatprep.mubr.bf16.mxu0 0
        %2258 = vmatmul.mubr.bf16.gmra.mrb[0].mxu0 %v2153
        %v2259 = vpop.f32.mrb[0].mxu0
        %v2260 = vadd.f32 %v2135, %v2259
        %v2261 = vpop.f32.mrb[0].mxu0
        %v2262 = vpop.f32.mrb[0].mxu0
        %v2263 = vadd.f32 %v2135, %v2262
        %v2264 = vpop.f32.mrb[0].mxu0
        %2265 = vmatprep.mubr.bf16.mxu0 0
        %2266 = vmatmul.mubr.bf16.gmra.mrb[0].mxu0 %v2156
        %v2267 = vpop.f32.mrb[0].mxu0
        %v2268 = vadd.f32 %v2135, %v2267
        %v2269 = vpop.f32.mrb[0].mxu0
        %v2270 = vpop.f32.mrb[0].mxu0
        %v2271 = vadd.f32 %v2135, %v2270
        %v2272 = vpop.f32.mrb[0].mxu0
        %2273 = vmatprep.mubr.bf16.mxu0 0
        %2274 = vmatmul.mubr.bf16.gmra.mrb[0].mxu0 %v2159
        %v2275 = vpop.f32.mrb[0].mxu0
        %v2276 = vadd.f32 %v2135, %v2275
        %v2277 = vpop.f32.mrb[0].mxu0
        %v2278 = vpop.f32.mrb[0].mxu0
        %v2279 = vadd.f32 %v2135, %v2278
        %v2280 = vpop.f32.mrb[0].mxu0
        %2281 = vdwg.mxu0
        %2282 = vmax.xlane.f32.xlu0 %v2220
        %v2283 = vpop.xlane.xlu0 %2282
        %2284 = vmax.xlane.f32.xlu0 %v2223
        %v2285 = vpop.xlane.xlu0 %2284
        %2286 = vmax.xlane.f32.xlu0 %v2228
        %v2287 = vpop.xlane.xlu0 %2286
        %2288 = vmax.xlane.f32.xlu0 %v2231
        %v2289 = vpop.xlane.xlu0 %2288
        %2290 = vmax.xlane.f32.xlu0 %v2236
        %v2291 = vpop.xlane.xlu0 %2290
        %2292 = vmax.xlane.f32.xlu0 %v2239
        %v2293 = vpop.xlane.xlu0 %2292
        %2294 = vmax.xlane.f32.xlu0 %v2244
        %v2295 = vpop.xlane.xlu0 %2294
        %2296 = vmax.xlane.f32.xlu0 %v2247
        %v2297 = vpop.xlane.xlu0 %2296
        %2298 = vmax.xlane.f32.xlu0 %v2252
        %v2299 = vpop.xlane.xlu0 %2298
        %2300 = vmax.xlane.f32.xlu0 %v2255
        %v2301 = vpop.xlane.xlu0 %2300
        %2302 = vmax.xlane.f32.xlu0 %v2260
        %v2303 = vpop.xlane.xlu0 %2302
        %2304 = vmax.xlane.f32.xlu0 %v2263
        %v2305 = vpop.xlane.xlu0 %2304
        %2306 = vmax.xlane.f32.xlu0 %v2268
        %v2307 = vpop.xlane.xlu0 %2306
        %2308 = vmax.xlane.f32.xlu0 %v2271
        %v2309 = vpop.xlane.xlu0 %2308
        %2310 = vmax.xlane.f32.xlu0 %v2276
        %v2311 = vpop.xlane.xlu0 %2310
        %2312 = vmax.xlane.f32.xlu0 %v2279
        %v2313 = vpop.xlane.xlu0 %2312
        %v2314 = vsub.f32 %v2220, %v2283
        %v2315 = vsub.f32 %v2223, %v2285
        %v2316 = vsub.f32 %v2228, %v2287
        %v2317 = vsub.f32 %v2231, %v2289
        %v2318 = vsub.f32 %v2236, %v2291
        %v2319 = vsub.f32 %v2239, %v2293
        %v2320 = vsub.f32 %v2244, %v2295
        %v2321 = vsub.f32 %v2247, %v2297
        %v2322 = vsub.f32 %v2252, %v2299
        %v2323 = vsub.f32 %v2255, %v2301
        %v2324 = vsub.f32 %v2260, %v2303
        %v2325 = vsub.f32 %v2263, %v2305
        %v2326 = vsub.f32 %v2268, %v2307
        %v2327 = vsub.f32 %v2271, %v2309
        %v2328 = vsub.f32 %v2276, %v2311
        %v2329 = vsub.f32 %v2279, %v2313
        %v2330 = vmul.f32 %v2314, 1.442695
        %v2331 = vpow.pop %v2330
        %v2332 = vmul.f32 %v2315, 1.442695
        %v2333 = vpow.pop %v2332
        %v2334 = vmul.f32 %v2316, 1.442695
        %v2335 = vpow.pop %v2334
        %v2336 = vmul.f32 %v2317, 1.442695
        %v2337 = vpow.pop %v2336
        %v2338 = vmul.f32 %v2318, 1.442695
        %v2339 = vpow.pop %v2338
        %v2340 = vmul.f32 %v2319, 1.442695
        %v2341 = vpow.pop %v2340
        %v2342 = vmul.f32 %v2320, 1.442695
        %v2343 = vpow.pop %v2342
        %v2344 = vmul.f32 %v2321, 1.442695
        %v2345 = vpow.pop %v2344
        %v2346 = vmul.f32 %v2322, 1.442695
        %v2347 = vpow.pop %v2346
        %v2348 = vmul.f32 %v2323, 1.442695
        %v2349 = vpow.pop %v2348
        %v2350 = vmul.f32 %v2324, 1.442695
        %v2351 = vpow.pop %v2350
        %v2352 = vmul.f32 %v2325, 1.442695
        %v2353 = vpow.pop %v2352
        %v2354 = vmul.f32 %v2326, 1.442695
        %v2355 = vpow.pop %v2354
        %v2356 = vmul.f32 %v2327, 1.442695
        %v2357 = vpow.pop %v2356
        %v2358 = vmul.f32 %v2328, 1.442695
        %v2359 = vpow.pop %v2358
        %v2360 = vmul.f32 %v2329, 1.442695
        %v2361 = vpow.pop %v2360
        %2362 = vadd.xlane.f32.xlu0 %v2331
        %v2363 = vpop.xlane.xlu0 %2362
        %2364 = vadd.xlane.f32.xlu0 %v2333
        %v2365 = vpop.xlane.xlu0 %2364
        %2366 = vadd.xlane.f32.xlu0 %v2335
        %v2367 = vpop.xlane.xlu0 %2366
        %2368 = vadd.xlane.f32.xlu0 %v2337
        %v2369 = vpop.xlane.xlu0 %2368
        %2370 = vadd.xlane.f32.xlu0 %v2339
        %v2371 = vpop.xlane.xlu0 %2370
        %2372 = vadd.xlane.f32.xlu0 %v2341
        %v2373 = vpop.xlane.xlu0 %2372
        %2374 = vadd.xlane.f32.xlu0 %v2343
        %v2375 = vpop.xlane.xlu0 %2374
        %2376 = vadd.xlane.f32.xlu0 %v2345
        %v2377 = vpop.xlane.xlu0 %2376
        %2378 = vadd.xlane.f32.xlu0 %v2347
        %v2379 = vpop.xlane.xlu0 %2378
        %2380 = vadd.xlane.f32.xlu0 %v2349
        %v2381 = vpop.xlane.xlu0 %2380
        %2382 = vadd.xlane.f32.xlu0 %v2351
        %v2383 = vpop.xlane.xlu0 %2382
        %2384 = vadd.xlane.f32.xlu0 %v2353
        %v2385 = vpop.xlane.xlu0 %2384
        %2386 = vadd.xlane.f32.xlu0 %v2355
        %v2387 = vpop.xlane.xlu0 %2386
        %2388 = vadd.xlane.f32.xlu0 %v2357
        %v2389 = vpop.xlane.xlu0 %2388
        %2390 = vadd.xlane.f32.xlu0 %v2359
        %v2391 = vpop.xlane.xlu0 %2390
        %2392 = vadd.xlane.f32.xlu0 %v2361
        %v2393 = vpop.xlane.xlu0 %2392
        %v2394 = vrcp.pop %v2363
        %v2395 = vmul.f32 %v2331, %v2394
        %v2396 = vrcp.pop %v2365
        %v2397 = vmul.f32 %v2333, %v2396
        %v2398 = vrcp.pop %v2367
        %v2399 = vmul.f32 %v2335, %v2398
        %v2400 = vrcp.pop %v2369
        %v2401 = vmul.f32 %v2337, %v2400
        %v2402 = vrcp.pop %v2371
        %v2403 = vmul.f32 %v2339, %v2402
        %v2404 = vrcp.pop %v2373
        %v2405 = vmul.f32 %v2341, %v2404
        %v2406 = vrcp.pop %v2375
        %v2407 = vmul.f32 %v2343, %v2406
        %v2408 = vrcp.pop %v2377
        %v2409 = vmul.f32 %v2345, %v2408
        %v2410 = vrcp.pop %v2379
        %v2411 = vmul.f32 %v2347, %v2410
        %v2412 = vrcp.pop %v2381
        %v2413 = vmul.f32 %v2349, %v2412
        %v2414 = vrcp.pop %v2383
        %v2415 = vmul.f32 %v2351, %v2414
        %v2416 = vrcp.pop %v2385
        %v2417 = vmul.f32 %v2353, %v2416
        %v2418 = vrcp.pop %v2387
        %v2419 = vmul.f32 %v2355, %v2418
        %v2420 = vrcp.pop %v2389
        %v2421 = vmul.f32 %v2357, %v2420
        %v2422 = vrcp.pop %v2391
        %v2423 = vmul.f32 %v2359, %v2422
        %v2424 = vrcp.pop %v2393
        %v2425 = vmul.f32 %v2361, %v2424
        %v2426 = vpack.c.bf16 %v2397, %v2395
        %v2427 = vpack.c.bf16 %v2401, %v2399
        %v2428 = vpack.c.bf16 %v2405, %v2403
        %v2429 = vpack.c.bf16 %v2409, %v2407
        %v2430 = vpack.c.bf16 %v2413, %v2411
        %v2431 = vpack.c.bf16 %v2417, %v2415
        %v2432 = vpack.c.bf16 %v2421, %v2419
        %v2433 = vpack.c.bf16 %v2425, %v2423
        %2434 = vmatprep.subr.bf16.mxu0 0
        %2435 = vmatpush1.bf16.msra.mxu0 %v2088
        %2436 = vmatprep.subr.bf16.mxu0 0
        %2437 = vmatpush1.bf16.msra.mxu0 %v2094
        %2438 = vmatprep.subr.bf16.mxu0 0
        %2439 = vmatpush1.bf16.msra.mxu0 %v2100
        %2440 = vmatprep.subr.bf16.mxu0 0
        %2441 = vmatpush1.bf16.msra.mxu0 %v2106
        %2442 = vmatprep.subr.bf16.mxu0 0
        %2443 = vmatpush1.bf16.msra.mxu0 %v2112
        %2444 = vmatprep.subr.bf16.mxu0 0
        %2445 = vmatpush1.bf16.msra.mxu0 %v2118
        %2446 = vmatprep.subr.bf16.mxu0 0
        %2447 = vmatpush1.bf16.msra.mxu0 %v2124
        %2448 = vmatprep.subr.bf16.mxu0 0
        %2449 = vmatpush1.bf16.msra.mxu0 %v2130
        %2450 = vmatprep.subr.bf16.mxu0 0
        %2451 = vmatpush1.bf16.msra.mxu0 0
        %2452 = vmatprep.subr.bf16.mxu0 0
        %2453 = vmatpush1.bf16.msra.mxu0 0
        %2454 = vmatprep.subr.bf16.mxu0 0
        %2455 = vmatpush1.bf16.msra.mxu0 0
        %2456 = vmatprep.subr.bf16.mxu0 0
        %2457 = vmatpush1.bf16.msra.mxu0 0
        %2458 = vmatprep.subr.bf16.mxu0 0
        %2459 = vmatpush1.bf16.msra.mxu0 0
        %2460 = vmatprep.subr.bf16.mxu0 0
        %2461 = vmatpush1.bf16.msra.mxu0 0
        %2462 = vmatprep.subr.bf16.mxu0 0
        %2463 = vmatpush1.bf16.msra.mxu0 0
        %2464 = vmatprep.subr.bf16.mxu0 0
        %2465 = vmatpush1.bf16.msra.mxu0 0
        %2466 = vmatprep.mubr.bf16.mxu0 0
        %2467 = vmatmul.mubr.bf16.gmra.mrb[0].mxu0 %v2426
        %v2468 = vpop.f32.mrb[0].mxu0
        %v2469 = vadd.f32 0.0, %v2468
        %v2470 = vpop.f32.mrb[0].mxu0
        %v2471 = vpop.f32.mrb[0].mxu0
        %v2472 = vadd.f32 0.0, %v2471
        %v2473 = vpop.f32.mrb[0].mxu0
        %2474 = vmatprep.mubr.bf16.mxu0 0
        %2475 = vmatmul.mubr.bf16.gmra.mrb[0].mxu0 %v2427
        %v2476 = vpop.f32.mrb[0].mxu0
        %v2477 = vadd.f32 0.0, %v2476
        %v2478 = vpop.f32.mrb[0].mxu0
        %v2479 = vpop.f32.mrb[0].mxu0
        %v2480 = vadd.f32 0.0, %v2479
        %v2481 = vpop.f32.mrb[0].mxu0
        %2482 = vmatprep.mubr.bf16.mxu0 0
        %2483 = vmatmul.mubr.bf16.gmra.mrb[0].mxu0 %v2428
        %v2484 = vpop.f32.mrb[0].mxu0
        %v2485 = vadd.f32 0.0, %v2484
        %v2486 = vpop.f32.mrb[0].mxu0
        %v2487 = vpop.f32.mrb[0].mxu0
        %v2488 = vadd.f32 0.0, %v2487
        %v2489 = vpop.f32.mrb[0].mxu0
        %2490 = vmatprep.mubr.bf16.mxu0 0
        %2491 = vmatmul.mubr.bf16.gmra.mrb[0].mxu0 %v2429
        %v2492 = vpop.f32.mrb[0].mxu0
        %v2493 = vadd.f32 0.0, %v2492
        %v2494 = vpop.f32.mrb[0].mxu0
        %v2495 = vpop.f32.mrb[0].mxu0
        %v2496 = vadd.f32 0.0, %v2495
        %v2497 = vpop.f32.mrb[0].mxu0
        %2498 = vmatprep.mubr.bf16.mxu0 0
        %2499 = vmatmul.mubr.bf16.gmra.mrb[0].mxu0 %v2430
        %v2500 = vpop.f32.mrb[0].mxu0
        %v2501 = vadd.f32 0.0, %v2500
        %v2502 = vpop.f32.mrb[0].mxu0
        %v2503 = vpop.f32.mrb[0].mxu0
        %v2504 = vadd.f32 0.0, %v2503
        %v2505 = vpop.f32.mrb[0].mxu0
        %2506 = vmatprep.mubr.bf16.mxu0 0
        %2507 = vmatmul.mubr.bf16.gmra.mrb[0].mxu0 %v2431
        %v2508 = vpop.f32.mrb[0].mxu0
        %v2509 = vadd.f32 0.0, %v2508
        %v2510 = vpop.f32.mrb[0].mxu0
        %v2511 = vpop.f32.mrb[0].mxu0
        %v2512 = vadd.f32 0.0, %v2511
        %v2513 = vpop.f32.mrb[0].mxu0
        %2514 = vmatprep.mubr.bf16.mxu0 0
        %2515 = vmatmul.mubr.bf16.gmra.mrb[0].mxu0 %v2432
        %v2516 = vpop.f32.mrb[0].mxu0
        %v2517 = vadd.f32 0.0, %v2516
        %v2518 = vpop.f32.mrb[0].mxu0
        %v2519 = vpop.f32.mrb[0].mxu0
        %v2520 = vadd.f32 0.0, %v2519
        %v2521 = vpop.f32.mrb[0].mxu0
        %2522 = vmatprep.mubr.bf16.mxu0 0
        %2523 = vmatmul.mubr.bf16.gmra.mrb[0].mxu0 %v2433
        %v2524 = vpop.f32.mrb[0].mxu0
        %v2525 = vadd.f32 0.0, %v2524
        %v2526 = vpop.f32.mrb[0].mxu0
        %v2527 = vpop.f32.mrb[0].mxu0
        %v2528 = vadd.f32 0.0, %v2527
        %v2529 = vpop.f32.mrb[0].mxu0
        %2530 = vdwg.mxu0
        %2539 = vrot.lane.b32.xlu0 %v2084, 64
        %v2540 = vpop.permute.xlu0 %2539
        %2541 = vrot.lane.b32.xlu0 %v2090, 64
        %v2542 = vpop.permute.xlu0 %2541
        %2543 = vrot.lane.b32.xlu0 %v2096, 64
        %v2544 = vpop.permute.xlu0 %2543
        %2545 = vrot.lane.b32.xlu0 %v2102, 64
        %v2546 = vpop.permute.xlu0 %2545
        %2547 = vrot.lane.b32.xlu0 %v2108, 64
        %v2548 = vpop.permute.xlu0 %2547
        %2549 = vrot.lane.b32.xlu0 %v2114, 64
        %v2550 = vpop.permute.xlu0 %2549
        %2551 = vrot.lane.b32.xlu0 %v2120, 64
        %v2552 = vpop.permute.xlu0 %2551
        %2553 = vrot.lane.b32.xlu0 %v2126, 64
        %v2554 = vpop.permute.xlu0 %2553
        %2563 = vrot.lane.b32.xlu0 %v2086, 64
        %v2564 = vpop.permute.xlu0 %2563
        %2565 = vrot.lane.b32.xlu0 %v2092, 64
        %v2566 = vpop.permute.xlu0 %2565
        %2567 = vrot.lane.b32.xlu0 %v2098, 64
        %v2568 = vpop.permute.xlu0 %2567
        %2569 = vrot.lane.b32.xlu0 %v2104, 64
        %v2570 = vpop.permute.xlu0 %2569
        %2571 = vrot.lane.b32.xlu0 %v2110, 64
        %v2572 = vpop.permute.xlu0 %2571
        %2573 = vrot.lane.b32.xlu0 %v2116, 64
        %v2574 = vpop.permute.xlu0 %2573
        %2575 = vrot.lane.b32.xlu0 %v2122, 64
        %v2576 = vpop.permute.xlu0 %2575
        %2577 = vrot.lane.b32.xlu0 %v2128, 64
        %v2578 = vpop.permute.xlu0 %2577
        %v2580 = vsel %vm2136, %v2540, 0
        %v2583 = vsel %vm2136, %v2542, 0
        %v2586 = vsel %vm2136, %v2544, 0
        %v2589 = vsel %vm2136, %v2546, 0
        %v2592 = vsel %vm2136, %v2548, 0
        %v2595 = vsel %vm2136, %v2550, 0
        %v2598 = vsel %vm2136, %v2552, 0
        %v2601 = vsel %vm2136, %v2554, 0
        %v2604 = vsel %vm2136, %v2564, 0
        %v2607 = vsel %vm2136, %v2566, 0
        %v2610 = vsel %vm2136, %v2568, 0
        %v2613 = vsel %vm2136, %v2570, 0
        %v2616 = vsel %vm2136, %v2572, 0
        %v2619 = vsel %vm2136, %v2574, 0
        %v2622 = vsel %vm2136, %v2576, 0
        %v2625 = vsel %vm2136, %v2578, 0
        %2627 = vmatprep.subr.bf16.mxu0 0
        %2628 = vmatpush1.bf16.xpose.msra.mxu0 %v2604
        %2629 = vmatprep.subr.bf16.mxu0 0
        %2630 = vmatpush1.bf16.xpose.msra.mxu0 %v2607
        %2631 = vmatprep.subr.bf16.mxu0 0
        %2632 = vmatpush1.bf16.xpose.msra.mxu0 %v2610
        %2633 = vmatprep.subr.bf16.mxu0 0
        %2634 = vmatpush1.bf16.xpose.msra.mxu0 %v2613
        %2635 = vmatprep.subr.bf16.mxu0 0
        %2636 = vmatpush1.bf16.xpose.msra.mxu0 %v2616
        %2637 = vmatprep.subr.bf16.mxu0 0
        %2638 = vmatpush1.bf16.xpose.msra.mxu0 %v2619
        %2639 = vmatprep.subr.bf16.mxu0 0
        %2640 = vmatpush1.bf16.xpose.msra.mxu0 %v2622
        %2641 = vmatprep.subr.bf16.mxu0 0
        %2642 = vmatpush1.bf16.xpose.msra.mxu0 %v2625
        %2643 = vmatprep.subr.bf16.mxu0 0
        %2644 = vmatpush1.bf16.xpose.msra.mxu0 0
        %2645 = vmatprep.subr.bf16.mxu0 0
        %2646 = vmatpush1.bf16.xpose.msra.mxu0 0
        %2647 = vmatprep.subr.bf16.mxu0 0
        %2648 = vmatpush1.bf16.xpose.msra.mxu0 0
        %2649 = vmatprep.subr.bf16.mxu0 0
        %2650 = vmatpush1.bf16.xpose.msra.mxu0 0
        %2651 = vmatprep.subr.bf16.mxu0 0
        %2652 = vmatpush1.bf16.xpose.msra.mxu0 0
        %2653 = vmatprep.subr.bf16.mxu0 0
        %2654 = vmatpush1.bf16.xpose.msra.mxu0 0
        %2655 = vmatprep.subr.bf16.mxu0 0
        %2656 = vmatpush1.bf16.xpose.msra.mxu0 0
        %2657 = vmatprep.subr.bf16.mxu0 0
        %2658 = vmatpush1.bf16.xpose.msra.mxu0 0
        %2659 = vmatprep.mubr.bf16.mxu0 0
        %2660 = vmatmul.mubr.bf16.gmra.mrb[0].mxu0 %v2580
        %v2661 = vpop.f32.mrb[0].mxu0
        %v2662 = vadd.f32 %v2135, %v2661
        %v2663 = vpop.f32.mrb[0].mxu0
        %v2664 = vpop.f32.mrb[0].mxu0
        %v2665 = vadd.f32 %v2135, %v2664
        %v2666 = vpop.f32.mrb[0].mxu0
        %2667 = vmatprep.mubr.bf16.mxu0 0
        %2668 = vmatmul.mubr.bf16.gmra.mrb[0].mxu0 %v2583
        %v2669 = vpop.f32.mrb[0].mxu0
        %v2670 = vadd.f32 %v2135, %v2669
        %v2671 = vpop.f32.mrb[0].mxu0
        %v2672 = vpop.f32.mrb[0].mxu0
        %v2673 = vadd.f32 %v2135, %v2672
        %v2674 = vpop.f32.mrb[0].mxu0
        %2675 = vmatprep.mubr.bf16.mxu0 0
        %2676 = vmatmul.mubr.bf16.gmra.mrb[0].mxu0 %v2586
        %v2677 = vpop.f32.mrb[0].mxu0
        %v2678 = vadd.f32 %v2135, %v2677
        %v2679 = vpop.f32.mrb[0].mxu0
        %v2680 = vpop.f32.mrb[0].mxu0
        %v2681 = vadd.f32 %v2135, %v2680
        %v2682 = vpop.f32.mrb[0].mxu0
        %2683 = vmatprep.mubr.bf16.mxu0 0
        %2684 = vmatmul.mubr.bf16.gmra.mrb[0].mxu0 %v2589
        %v2685 = vpop.f32.mrb[0].mxu0
        %v2686 = vadd.f32 %v2135, %v2685
        %v2687 = vpop.f32.mrb[0].mxu0
        %v2688 = vpop.f32.mrb[0].mxu0
        %v2689 = vadd.f32 %v2135, %v2688
        %v2690 = vpop.f32.mrb[0].mxu0
        %2691 = vmatprep.mubr.bf16.mxu0 0
        %2692 = vmatmul.mubr.bf16.gmra.mrb[0].mxu0 %v2592
        %v2693 = vpop.f32.mrb[0].mxu0
        %v2694 = vadd.f32 %v2135, %v2693
        %v2695 = vpop.f32.mrb[0].mxu0
        %v2696 = vpop.f32.mrb[0].mxu0
        %v2697 = vadd.f32 %v2135, %v2696
        %v2698 = vpop.f32.mrb[0].mxu0
        %2699 = vmatprep.mubr.bf16.mxu0 0
        %2700 = vmatmul.mubr.bf16.gmra.mrb[0].mxu0 %v2595
        %v2701 = vpop.f32.mrb[0].mxu0
        %v2702 = vadd.f32 %v2135, %v2701
        %v2703 = vpop.f32.mrb[0].mxu0
        %v2704 = vpop.f32.mrb[0].mxu0
        %v2705 = vadd.f32 %v2135, %v2704
        %v2706 = vpop.f32.mrb[0].mxu0
        %2707 = vmatprep.mubr.bf16.mxu0 0
        %2708 = vmatmul.mubr.bf16.gmra.mrb[0].mxu0 %v2598
        %v2709 = vpop.f32.mrb[0].mxu0
        %v2710 = vadd.f32 %v2135, %v2709
        %v2711 = vpop.f32.mrb[0].mxu0
        %v2712 = vpop.f32.mrb[0].mxu0
        %v2713 = vadd.f32 %v2135, %v2712
        %v2714 = vpop.f32.mrb[0].mxu0
        %2715 = vmatprep.mubr.bf16.mxu0 0
        %2716 = vmatmul.mubr.bf16.gmra.mrb[0].mxu0 %v2601
        %v2717 = vpop.f32.mrb[0].mxu0
        %v2718 = vadd.f32 %v2135, %v2717
        %v2719 = vpop.f32.mrb[0].mxu0
        %v2720 = vpop.f32.mrb[0].mxu0
        %v2721 = vadd.f32 %v2135, %v2720
        %v2722 = vpop.f32.mrb[0].mxu0
        %2723 = vdwg.mxu0
        %2724 = vmax.xlane.f32.xlu0 %v2662
        %v2725 = vpop.xlane.xlu0 %2724
        %2726 = vmax.xlane.f32.xlu0 %v2665
        %v2727 = vpop.xlane.xlu0 %2726
        %2728 = vmax.xlane.f32.xlu0 %v2670
        %v2729 = vpop.xlane.xlu0 %2728
        %2730 = vmax.xlane.f32.xlu0 %v2673
        %v2731 = vpop.xlane.xlu0 %2730
        %2732 = vmax.xlane.f32.xlu0 %v2678
        %v2733 = vpop.xlane.xlu0 %2732
        %2734 = vmax.xlane.f32.xlu0 %v2681
        %v2735 = vpop.xlane.xlu0 %2734
        %2736 = vmax.xlane.f32.xlu0 %v2686
        %v2737 = vpop.xlane.xlu0 %2736
        %2738 = vmax.xlane.f32.xlu0 %v2689
        %v2739 = vpop.xlane.xlu0 %2738
        %2740 = vmax.xlane.f32.xlu0 %v2694
        %v2741 = vpop.xlane.xlu0 %2740
        %2742 = vmax.xlane.f32.xlu0 %v2697
        %v2743 = vpop.xlane.xlu0 %2742
        %2744 = vmax.xlane.f32.xlu0 %v2702
        %v2745 = vpop.xlane.xlu0 %2744
        %2746 = vmax.xlane.f32.xlu0 %v2705
        %v2747 = vpop.xlane.xlu0 %2746
        %2748 = vmax.xlane.f32.xlu0 %v2710
        %v2749 = vpop.xlane.xlu0 %2748
        %2750 = vmax.xlane.f32.xlu0 %v2713
        %v2751 = vpop.xlane.xlu0 %2750
        %2752 = vmax.xlane.f32.xlu0 %v2718
        %v2753 = vpop.xlane.xlu0 %2752
        %2754 = vmax.xlane.f32.xlu0 %v2721
        %v2755 = vpop.xlane.xlu0 %2754
        %v2756 = vsub.f32 %v2662, %v2725
        %v2757 = vsub.f32 %v2665, %v2727
        %v2758 = vsub.f32 %v2670, %v2729
        %v2759 = vsub.f32 %v2673, %v2731
        %v2760 = vsub.f32 %v2678, %v2733
        %v2761 = vsub.f32 %v2681, %v2735
        %v2762 = vsub.f32 %v2686, %v2737
        %v2763 = vsub.f32 %v2689, %v2739
        %v2764 = vsub.f32 %v2694, %v2741
        %v2765 = vsub.f32 %v2697, %v2743
        %v2766 = vsub.f32 %v2702, %v2745
        %v2767 = vsub.f32 %v2705, %v2747
        %v2768 = vsub.f32 %v2710, %v2749
        %v2769 = vsub.f32 %v2713, %v2751
        %v2770 = vsub.f32 %v2718, %v2753
        %v2771 = vsub.f32 %v2721, %v2755
        %v2772 = vmul.f32 %v2756, 1.442695
        %v2773 = vpow.pop %v2772
        %v2774 = vmul.f32 %v2757, 1.442695
        %v2775 = vpow.pop %v2774
        %v2776 = vmul.f32 %v2758, 1.442695
        %v2777 = vpow.pop %v2776
        %v2778 = vmul.f32 %v2759, 1.442695
        %v2779 = vpow.pop %v2778
        %v2780 = vmul.f32 %v2760, 1.442695
        %v2781 = vpow.pop %v2780
        %v2782 = vmul.f32 %v2761, 1.442695
        %v2783 = vpow.pop %v2782
        %v2784 = vmul.f32 %v2762, 1.442695
        %v2785 = vpow.pop %v2784
        %v2786 = vmul.f32 %v2763, 1.442695
        %v2787 = vpow.pop %v2786
        %v2788 = vmul.f32 %v2764, 1.442695
        %v2789 = vpow.pop %v2788
        %v2790 = vmul.f32 %v2765, 1.442695
        %v2791 = vpow.pop %v2790
        %v2792 = vmul.f32 %v2766, 1.442695
        %v2793 = vpow.pop %v2792
        %v2794 = vmul.f32 %v2767, 1.442695
        %v2795 = vpow.pop %v2794
        %v2796 = vmul.f32 %v2768, 1.442695
        %v2797 = vpow.pop %v2796
        %v2798 = vmul.f32 %v2769, 1.442695
        %v2799 = vpow.pop %v2798
        %v2800 = vmul.f32 %v2770, 1.442695
        %v2801 = vpow.pop %v2800
        %v2802 = vmul.f32 %v2771, 1.442695
        %v2803 = vpow.pop %v2802
        %2804 = vadd.xlane.f32.xlu0 %v2773
        %v2805 = vpop.xlane.xlu0 %2804
        %2806 = vadd.xlane.f32.xlu0 %v2775
        %v2807 = vpop.xlane.xlu0 %2806
        %2808 = vadd.xlane.f32.xlu0 %v2777
        %v2809 = vpop.xlane.xlu0 %2808
        %2810 = vadd.xlane.f32.xlu0 %v2779
        %v2811 = vpop.xlane.xlu0 %2810
        %2812 = vadd.xlane.f32.xlu0 %v2781
        %v2813 = vpop.xlane.xlu0 %2812
        %2814 = vadd.xlane.f32.xlu0 %v2783
        %v2815 = vpop.xlane.xlu0 %2814
        %2816 = vadd.xlane.f32.xlu0 %v2785
        %v2817 = vpop.xlane.xlu0 %2816
        %2818 = vadd.xlane.f32.xlu0 %v2787
        %v2819 = vpop.xlane.xlu0 %2818
        %2820 = vadd.xlane.f32.xlu0 %v2789
        %v2821 = vpop.xlane.xlu0 %2820
        %2822 = vadd.xlane.f32.xlu0 %v2791
        %v2823 = vpop.xlane.xlu0 %2822
        %2824 = vadd.xlane.f32.xlu0 %v2793
        %v2825 = vpop.xlane.xlu0 %2824
        %2826 = vadd.xlane.f32.xlu0 %v2795
        %v2827 = vpop.xlane.xlu0 %2826
        %2828 = vadd.xlane.f32.xlu0 %v2797
        %v2829 = vpop.xlane.xlu0 %2828
        %2830 = vadd.xlane.f32.xlu0 %v2799
        %v2831 = vpop.xlane.xlu0 %2830
        %2832 = vadd.xlane.f32.xlu0 %v2801
        %v2833 = vpop.xlane.xlu0 %2832
        %2834 = vadd.xlane.f32.xlu0 %v2803
        %v2835 = vpop.xlane.xlu0 %2834
        %v2836 = vrcp.pop %v2805
        %v2837 = vmul.f32 %v2773, %v2836
        %v2838 = vrcp.pop %v2807
        %v2839 = vmul.f32 %v2775, %v2838
        %v2840 = vrcp.pop %v2809
        %v2841 = vmul.f32 %v2777, %v2840
        %v2842 = vrcp.pop %v2811
        %v2843 = vmul.f32 %v2779, %v2842
        %v2844 = vrcp.pop %v2813
        %v2845 = vmul.f32 %v2781, %v2844
        %v2846 = vrcp.pop %v2815
        %v2847 = vmul.f32 %v2783, %v2846
        %v2848 = vrcp.pop %v2817
        %v2849 = vmul.f32 %v2785, %v2848
        %v2850 = vrcp.pop %v2819
        %v2851 = vmul.f32 %v2787, %v2850
        %v2852 = vrcp.pop %v2821
        %v2853 = vmul.f32 %v2789, %v2852
        %v2854 = vrcp.pop %v2823
        %v2855 = vmul.f32 %v2791, %v2854
        %v2856 = vrcp.pop %v2825
        %v2857 = vmul.f32 %v2793, %v2856
        %v2858 = vrcp.pop %v2827
        %v2859 = vmul.f32 %v2795, %v2858
        %v2860 = vrcp.pop %v2829
        %v2861 = vmul.f32 %v2797, %v2860
        %v2862 = vrcp.pop %v2831
        %v2863 = vmul.f32 %v2799, %v2862
        %v2864 = vrcp.pop %v2833
        %v2865 = vmul.f32 %v2801, %v2864
        %v2866 = vrcp.pop %v2835
        %v2867 = vmul.f32 %v2803, %v2866
        %v2868 = vpack.c.bf16 %v2839, %v2837
        %v2869 = vpack.c.bf16 %v2843, %v2841
        %v2870 = vpack.c.bf16 %v2847, %v2845
        %v2871 = vpack.c.bf16 %v2851, %v2849
        %v2872 = vpack.c.bf16 %v2855, %v2853
        %v2873 = vpack.c.bf16 %v2859, %v2857
        %v2874 = vpack.c.bf16 %v2863, %v2861
        %v2875 = vpack.c.bf16 %v2867, %v2865
        %2884 = vrot.lane.b32.xlu0 %v2088, 64
        %v2885 = vpop.permute.xlu0 %2884
        %2886 = vrot.lane.b32.xlu0 %v2094, 64
        %v2887 = vpop.permute.xlu0 %2886
        %2888 = vrot.lane.b32.xlu0 %v2100, 64
        %v2889 = vpop.permute.xlu0 %2888
        %2890 = vrot.lane.b32.xlu0 %v2106, 64
        %v2891 = vpop.permute.xlu0 %2890
        %2892 = vrot.lane.b32.xlu0 %v2112, 64
        %v2893 = vpop.permute.xlu0 %2892
        %2894 = vrot.lane.b32.xlu0 %v2118, 64
        %v2895 = vpop.permute.xlu0 %2894
        %2896 = vrot.lane.b32.xlu0 %v2124, 64
        %v2897 = vpop.permute.xlu0 %2896
        %2898 = vrot.lane.b32.xlu0 %v2130, 64
        %v2899 = vpop.permute.xlu0 %2898
        %2908 = vmatprep.subr.bf16.mxu0 0
        %2909 = vmatpush1.bf16.msra.mxu0 %v2885
        %2910 = vmatprep.subr.bf16.mxu0 0
        %2911 = vmatpush1.bf16.msra.mxu0 %v2887
        %2912 = vmatprep.subr.bf16.mxu0 0
        %2913 = vmatpush1.bf16.msra.mxu0 %v2889
        %2914 = vmatprep.subr.bf16.mxu0 0
        %2915 = vmatpush1.bf16.msra.mxu0 %v2891
        %2916 = vmatprep.subr.bf16.mxu0 0
        %2917 = vmatpush1.bf16.msra.mxu0 %v2893
        %2918 = vmatprep.subr.bf16.mxu0 0
        %2919 = vmatpush1.bf16.msra.mxu0 %v2895
        %2920 = vmatprep.subr.bf16.mxu0 0
        %2921 = vmatpush1.bf16.msra.mxu0 %v2897
        %2922 = vmatprep.subr.bf16.mxu0 0
        %2923 = vmatpush1.bf16.msra.mxu0 %v2899
        %2924 = vmatprep.subr.bf16.mxu0 0
        %2925 = vmatpush1.bf16.msra.mxu0 0
        %2926 = vmatprep.subr.bf16.mxu0 0
        %2927 = vmatpush1.bf16.msra.mxu0 0
        %2928 = vmatprep.subr.bf16.mxu0 0
        %2929 = vmatpush1.bf16.msra.mxu0 0
        %2930 = vmatprep.subr.bf16.mxu0 0
        %2931 = vmatpush1.bf16.msra.mxu0 0
        %2932 = vmatprep.subr.bf16.mxu0 0
        %2933 = vmatpush1.bf16.msra.mxu0 0
        %2934 = vmatprep.subr.bf16.mxu0 0
        %2935 = vmatpush1.bf16.msra.mxu0 0
        %2936 = vmatprep.subr.bf16.mxu0 0
        %2937 = vmatpush1.bf16.msra.mxu0 0
        %2938 = vmatprep.subr.bf16.mxu0 0
        %2939 = vmatpush1.bf16.msra.mxu0 0
        %2940 = vmatprep.mubr.bf16.mxu0 0
        %2941 = vmatmul.mubr.bf16.gmra.mrb[0].mxu0 %v2868
        %v2942 = vpop.f32.mrb[0].mxu0
        %v2943 = vadd.f32 0.0, %v2942
        %v2944 = vpop.f32.mrb[0].mxu0
        %v2945 = vpop.f32.mrb[0].mxu0
        %v2946 = vadd.f32 0.0, %v2945
        %v2947 = vpop.f32.mrb[0].mxu0
        %2948 = vmatprep.mubr.bf16.mxu0 0
        %2949 = vmatmul.mubr.bf16.gmra.mrb[0].mxu0 %v2869
        %v2950 = vpop.f32.mrb[0].mxu0
        %v2951 = vadd.f32 0.0, %v2950
        %v2952 = vpop.f32.mrb[0].mxu0
        %v2953 = vpop.f32.mrb[0].mxu0
        %v2954 = vadd.f32 0.0, %v2953
        %v2955 = vpop.f32.mrb[0].mxu0
        %2956 = vmatprep.mubr.bf16.mxu0 0
        %2957 = vmatmul.mubr.bf16.gmra.mrb[0].mxu0 %v2870
        %v2958 = vpop.f32.mrb[0].mxu0
        %v2959 = vadd.f32 0.0, %v2958
        %v2960 = vpop.f32.mrb[0].mxu0
        %v2961 = vpop.f32.mrb[0].mxu0
        %v2962 = vadd.f32 0.0, %v2961
        %v2963 = vpop.f32.mrb[0].mxu0
        %2964 = vmatprep.mubr.bf16.mxu0 0
        %2965 = vmatmul.mubr.bf16.gmra.mrb[0].mxu0 %v2871
        %v2966 = vpop.f32.mrb[0].mxu0
        %v2967 = vadd.f32 0.0, %v2966
        %v2968 = vpop.f32.mrb[0].mxu0
        %v2969 = vpop.f32.mrb[0].mxu0
        %v2970 = vadd.f32 0.0, %v2969
        %v2971 = vpop.f32.mrb[0].mxu0
        %2972 = vmatprep.mubr.bf16.mxu0 0
        %2973 = vmatmul.mubr.bf16.gmra.mrb[0].mxu0 %v2872
        %v2974 = vpop.f32.mrb[0].mxu0
        %v2975 = vadd.f32 0.0, %v2974
        %v2976 = vpop.f32.mrb[0].mxu0
        %v2977 = vpop.f32.mrb[0].mxu0
        %v2978 = vadd.f32 0.0, %v2977
        %v2979 = vpop.f32.mrb[0].mxu0
        %2980 = vmatprep.mubr.bf16.mxu0 0
        %2981 = vmatmul.mubr.bf16.gmra.mrb[0].mxu0 %v2873
        %v2982 = vpop.f32.mrb[0].mxu0
        %v2983 = vadd.f32 0.0, %v2982
        %v2984 = vpop.f32.mrb[0].mxu0
        %v2985 = vpop.f32.mrb[0].mxu0
        %v2986 = vadd.f32 0.0, %v2985
        %v2987 = vpop.f32.mrb[0].mxu0
        %2988 = vmatprep.mubr.bf16.mxu0 0
        %2989 = vmatmul.mubr.bf16.gmra.mrb[0].mxu0 %v2874
        %v2990 = vpop.f32.mrb[0].mxu0
        %v2991 = vadd.f32 0.0, %v2990
        %v2992 = vpop.f32.mrb[0].mxu0
        %v2993 = vpop.f32.mrb[0].mxu0
        %v2994 = vadd.f32 0.0, %v2993
        %v2995 = vpop.f32.mrb[0].mxu0
        %2996 = vmatprep.mubr.bf16.mxu0 0
        %2997 = vmatmul.mubr.bf16.gmra.mrb[0].mxu0 %v2875
        %v2998 = vpop.f32.mrb[0].mxu0
        %v2999 = vadd.f32 0.0, %v2998
        %v3000 = vpop.f32.mrb[0].mxu0
        %v3001 = vpop.f32.mrb[0].mxu0
        %v3002 = vadd.f32 0.0, %v3001
        %v3003 = vpop.f32.mrb[0].mxu0
        %3004 = vdwg.mxu0
        %v3006 = vsel %vm2136, %v2085, 0
        %v3009 = vsel %vm2136, %v2091, 0
        %v3012 = vsel %vm2136, %v2097, 0
        %v3015 = vsel %vm2136, %v2103, 0
        %v3018 = vsel %vm2136, %v2109, 0
        %v3021 = vsel %vm2136, %v2115, 0
        %v3024 = vsel %vm2136, %v2121, 0
        %v3027 = vsel %vm2136, %v2127, 0
        %v3030 = vsel %vm2136, %v2087, 0
        %v3033 = vsel %vm2136, %v2093, 0
        %v3036 = vsel %vm2136, %v2099, 0
        %v3039 = vsel %vm2136, %v2105, 0
        %v3042 = vsel %vm2136, %v2111, 0
        %v3045 = vsel %vm2136, %v2117, 0
        %v3048 = vsel %vm2136, %v2123, 0
        %v3051 = vsel %vm2136, %v2129, 0
        %3053 = vmatprep.subr.bf16.mxu0 0
        %3054 = vmatpush1.bf16.xpose.msra.mxu0 %v3030
        %3055 = vmatprep.subr.bf16.mxu0 0
        %3056 = vmatpush1.bf16.xpose.msra.mxu0 %v3033
        %3057 = vmatprep.subr.bf16.mxu0 0
        %3058 = vmatpush1.bf16.xpose.msra.mxu0 %v3036
        %3059 = vmatprep.subr.bf16.mxu0 0
        %3060 = vmatpush1.bf16.xpose.msra.mxu0 %v3039
        %3061 = vmatprep.subr.bf16.mxu0 0
        %3062 = vmatpush1.bf16.xpose.msra.mxu0 %v3042
        %3063 = vmatprep.subr.bf16.mxu0 0
        %3064 = vmatpush1.bf16.xpose.msra.mxu0 %v3045
        %3065 = vmatprep.subr.bf16.mxu0 0
        %3066 = vmatpush1.bf16.xpose.msra.mxu0 %v3048
        %3067 = vmatprep.subr.bf16.mxu0 0
        %3068 = vmatpush1.bf16.xpose.msra.mxu0 %v3051
        %3069 = vmatprep.subr.bf16.mxu0 0
        %3070 = vmatpush1.bf16.xpose.msra.mxu0 0
        %3071 = vmatprep.subr.bf16.mxu0 0
        %3072 = vmatpush1.bf16.xpose.msra.mxu0 0
        %3073 = vmatprep.subr.bf16.mxu0 0
        %3074 = vmatpush1.bf16.xpose.msra.mxu0 0
        %3075 = vmatprep.subr.bf16.mxu0 0
        %3076 = vmatpush1.bf16.xpose.msra.mxu0 0
        %3077 = vmatprep.subr.bf16.mxu0 0
        %3078 = vmatpush1.bf16.xpose.msra.mxu0 0
        %3079 = vmatprep.subr.bf16.mxu0 0
        %3080 = vmatpush1.bf16.xpose.msra.mxu0 0
        %3081 = vmatprep.subr.bf16.mxu0 0
        %3082 = vmatpush1.bf16.xpose.msra.mxu0 0
        %3083 = vmatprep.subr.bf16.mxu0 0
        %3084 = vmatpush1.bf16.xpose.msra.mxu0 0
        %3085 = vmatprep.mubr.bf16.mxu0 0
        %3086 = vmatmul.mubr.bf16.gmra.mrb[0].mxu0 %v3006
        %v3087 = vpop.f32.mrb[0].mxu0
        %v3088 = vadd.f32 %v2135, %v3087
        %v3089 = vpop.f32.mrb[0].mxu0
        %v3090 = vpop.f32.mrb[0].mxu0
        %v3091 = vadd.f32 %v2135, %v3090
        %v3092 = vpop.f32.mrb[0].mxu0
        %3093 = vmatprep.mubr.bf16.mxu0 0
        %3094 = vmatmul.mubr.bf16.gmra.mrb[0].mxu0 %v3009
        %v3095 = vpop.f32.mrb[0].mxu0
        %v3096 = vadd.f32 %v2135, %v3095
        %v3097 = vpop.f32.mrb[0].mxu0
        %v3098 = vpop.f32.mrb[0].mxu0
        %v3099 = vadd.f32 %v2135, %v3098
        %v3100 = vpop.f32.mrb[0].mxu0
        %3101 = vmatprep.mubr.bf16.mxu0 0
        %3102 = vmatmul.mubr.bf16.gmra.mrb[0].mxu0 %v3012
        %v3103 = vpop.f32.mrb[0].mxu0
        %v3104 = vadd.f32 %v2135, %v3103
        %v3105 = vpop.f32.mrb[0].mxu0
        %v3106 = vpop.f32.mrb[0].mxu0
        %v3107 = vadd.f32 %v2135, %v3106
        %v3108 = vpop.f32.mrb[0].mxu0
        %3109 = vmatprep.mubr.bf16.mxu0 0
        %3110 = vmatmul.mubr.bf16.gmra.mrb[0].mxu0 %v3015
        %v3111 = vpop.f32.mrb[0].mxu0
        %v3112 = vadd.f32 %v2135, %v3111
        %v3113 = vpop.f32.mrb[0].mxu0
        %v3114 = vpop.f32.mrb[0].mxu0
        %v3115 = vadd.f32 %v2135, %v3114
        %v3116 = vpop.f32.mrb[0].mxu0
        %3117 = vmatprep.mubr.bf16.mxu0 0
        %3118 = vmatmul.mubr.bf16.gmra.mrb[0].mxu0 %v3018
        %v3119 = vpop.f32.mrb[0].mxu0
        %v3120 = vadd.f32 %v2135, %v3119
        %v3121 = vpop.f32.mrb[0].mxu0
        %v3122 = vpop.f32.mrb[0].mxu0
        %v3123 = vadd.f32 %v2135, %v3122
        %v3124 = vpop.f32.mrb[0].mxu0
        %3125 = vmatprep.mubr.bf16.mxu0 0
        %3126 = vmatmul.mubr.bf16.gmra.mrb[0].mxu0 %v3021
        %v3127 = vpop.f32.mrb[0].mxu0
        %v3128 = vadd.f32 %v2135, %v3127
        %v3129 = vpop.f32.mrb[0].mxu0
        %v3130 = vpop.f32.mrb[0].mxu0
        %v3131 = vadd.f32 %v2135, %v3130
        %v3132 = vpop.f32.mrb[0].mxu0
        %3133 = vmatprep.mubr.bf16.mxu0 0
        %3134 = vmatmul.mubr.bf16.gmra.mrb[0].mxu0 %v3024
        %v3135 = vpop.f32.mrb[0].mxu0
        %v3136 = vadd.f32 %v2135, %v3135
        %v3137 = vpop.f32.mrb[0].mxu0
        %v3138 = vpop.f32.mrb[0].mxu0
        %v3139 = vadd.f32 %v2135, %v3138
        %v3140 = vpop.f32.mrb[0].mxu0
        %3141 = vmatprep.mubr.bf16.mxu0 0
        %3142 = vmatmul.mubr.bf16.gmra.mrb[0].mxu0 %v3027
        %v3143 = vpop.f32.mrb[0].mxu0
        %v3144 = vadd.f32 %v2135, %v3143
        %v3145 = vpop.f32.mrb[0].mxu0
        %v3146 = vpop.f32.mrb[0].mxu0
        %v3147 = vadd.f32 %v2135, %v3146
        %v3148 = vpop.f32.mrb[0].mxu0
        %3149 = vdwg.mxu0
        %3150 = vmax.xlane.f32.xlu0 %v3088
        %v3151 = vpop.xlane.xlu0 %3150
        %3152 = vmax.xlane.f32.xlu0 %v3091
        %v3153 = vpop.xlane.xlu0 %3152
        %3154 = vmax.xlane.f32.xlu0 %v3096
        %v3155 = vpop.xlane.xlu0 %3154
        %3156 = vmax.xlane.f32.xlu0 %v3099
        %v3157 = vpop.xlane.xlu0 %3156
        %3158 = vmax.xlane.f32.xlu0 %v3104
        %v3159 = vpop.xlane.xlu0 %3158
        %3160 = vmax.xlane.f32.xlu0 %v3107
        %v3161 = vpop.xlane.xlu0 %3160
        %3162 = vmax.xlane.f32.xlu0 %v3112
        %v3163 = vpop.xlane.xlu0 %3162
        %3164 = vmax.xlane.f32.xlu0 %v3115
        %v3165 = vpop.xlane.xlu0 %3164
        %3166 = vmax.xlane.f32.xlu0 %v3120
        %v3167 = vpop.xlane.xlu0 %3166
        %3168 = vmax.xlane.f32.xlu0 %v3123
        %v3169 = vpop.xlane.xlu0 %3168
        %3170 = vmax.xlane.f32.xlu0 %v3128
        %v3171 = vpop.xlane.xlu0 %3170
        %3172 = vmax.xlane.f32.xlu0 %v3131
        %v3173 = vpop.xlane.xlu0 %3172
        %3174 = vmax.xlane.f32.xlu0 %v3136
        %v3175 = vpop.xlane.xlu0 %3174
        %3176 = vmax.xlane.f32.xlu0 %v3139
        %v3177 = vpop.xlane.xlu0 %3176
        %3178 = vmax.xlane.f32.xlu0 %v3144
        %v3179 = vpop.xlane.xlu0 %3178
        %3180 = vmax.xlane.f32.xlu0 %v3147
        %v3181 = vpop.xlane.xlu0 %3180
        %v3182 = vsub.f32 %v3088, %v3151
        %v3183 = vsub.f32 %v3091, %v3153
        %v3184 = vsub.f32 %v3096, %v3155
        %v3185 = vsub.f32 %v3099, %v3157
        %v3186 = vsub.f32 %v3104, %v3159
        %v3187 = vsub.f32 %v3107, %v3161
        %v3188 = vsub.f32 %v3112, %v3163
        %v3189 = vsub.f32 %v3115, %v3165
        %v3190 = vsub.f32 %v3120, %v3167
        %v3191 = vsub.f32 %v3123, %v3169
        %v3192 = vsub.f32 %v3128, %v3171
        %v3193 = vsub.f32 %v3131, %v3173
        %v3194 = vsub.f32 %v3136, %v3175
        %v3195 = vsub.f32 %v3139, %v3177
        %v3196 = vsub.f32 %v3144, %v3179
        %v3197 = vsub.f32 %v3147, %v3181
        %v3198 = vmul.f32 %v3182, 1.442695
        %v3199 = vpow.pop %v3198
        %v3200 = vmul.f32 %v3183, 1.442695
        %v3201 = vpow.pop %v3200
        %v3202 = vmul.f32 %v3184, 1.442695
        %v3203 = vpow.pop %v3202
        %v3204 = vmul.f32 %v3185, 1.442695
        %v3205 = vpow.pop %v3204
        %v3206 = vmul.f32 %v3186, 1.442695
        %v3207 = vpow.pop %v3206
        %v3208 = vmul.f32 %v3187, 1.442695
        %v3209 = vpow.pop %v3208
        %v3210 = vmul.f32 %v3188, 1.442695
        %v3211 = vpow.pop %v3210
        %v3212 = vmul.f32 %v3189, 1.442695
        %v3213 = vpow.pop %v3212
        %v3214 = vmul.f32 %v3190, 1.442695
        %v3215 = vpow.pop %v3214
        %v3216 = vmul.f32 %v3191, 1.442695
        %v3217 = vpow.pop %v3216
        %v3218 = vmul.f32 %v3192, 1.442695
        %v3219 = vpow.pop %v3218
        %v3220 = vmul.f32 %v3193, 1.442695
        %v3221 = vpow.pop %v3220
        %v3222 = vmul.f32 %v3194, 1.442695
        %v3223 = vpow.pop %v3222
        %v3224 = vmul.f32 %v3195, 1.442695
        %v3225 = vpow.pop %v3224
        %v3226 = vmul.f32 %v3196, 1.442695
        %v3227 = vpow.pop %v3226
        %v3228 = vmul.f32 %v3197, 1.442695
        %v3229 = vpow.pop %v3228
        %3230 = vadd.xlane.f32.xlu0 %v3199
        %v3231 = vpop.xlane.xlu0 %3230
        %3232 = vadd.xlane.f32.xlu0 %v3201
        %v3233 = vpop.xlane.xlu0 %3232
        %3234 = vadd.xlane.f32.xlu0 %v3203
        %v3235 = vpop.xlane.xlu0 %3234
        %3236 = vadd.xlane.f32.xlu0 %v3205
        %v3237 = vpop.xlane.xlu0 %3236
        %3238 = vadd.xlane.f32.xlu0 %v3207
        %v3239 = vpop.xlane.xlu0 %3238
        %3240 = vadd.xlane.f32.xlu0 %v3209
        %v3241 = vpop.xlane.xlu0 %3240
        %3242 = vadd.xlane.f32.xlu0 %v3211
        %v3243 = vpop.xlane.xlu0 %3242
        %3244 = vadd.xlane.f32.xlu0 %v3213
        %v3245 = vpop.xlane.xlu0 %3244
        %3246 = vadd.xlane.f32.xlu0 %v3215
        %v3247 = vpop.xlane.xlu0 %3246
        %3248 = vadd.xlane.f32.xlu0 %v3217
        %v3249 = vpop.xlane.xlu0 %3248
        %3250 = vadd.xlane.f32.xlu0 %v3219
        %v3251 = vpop.xlane.xlu0 %3250
        %3252 = vadd.xlane.f32.xlu0 %v3221
        %v3253 = vpop.xlane.xlu0 %3252
        %3254 = vadd.xlane.f32.xlu0 %v3223
        %v3255 = vpop.xlane.xlu0 %3254
        %3256 = vadd.xlane.f32.xlu0 %v3225
        %v3257 = vpop.xlane.xlu0 %3256
        %3258 = vadd.xlane.f32.xlu0 %v3227
        %v3259 = vpop.xlane.xlu0 %3258
        %3260 = vadd.xlane.f32.xlu0 %v3229
        %v3261 = vpop.xlane.xlu0 %3260
        %v3262 = vrcp.pop %v3231
        %v3263 = vmul.f32 %v3199, %v3262
        %v3264 = vrcp.pop %v3233
        %v3265 = vmul.f32 %v3201, %v3264
        %v3266 = vrcp.pop %v3235
        %v3267 = vmul.f32 %v3203, %v3266
        %v3268 = vrcp.pop %v3237
        %v3269 = vmul.f32 %v3205, %v3268
        %v3270 = vrcp.pop %v3239
        %v3271 = vmul.f32 %v3207, %v3270
        %v3272 = vrcp.pop %v3241
        %v3273 = vmul.f32 %v3209, %v3272
        %v3274 = vrcp.pop %v3243
        %v3275 = vmul.f32 %v3211, %v3274
        %v3276 = vrcp.pop %v3245
        %v3277 = vmul.f32 %v3213, %v3276
        %v3278 = vrcp.pop %v3247
        %v3279 = vmul.f32 %v3215, %v3278
        %v3280 = vrcp.pop %v3249
        %v3281 = vmul.f32 %v3217, %v3280
        %v3282 = vrcp.pop %v3251
        %v3283 = vmul.f32 %v3219, %v3282
        %v3284 = vrcp.pop %v3253
        %v3285 = vmul.f32 %v3221, %v3284
        %v3286 = vrcp.pop %v3255
        %v3287 = vmul.f32 %v3223, %v3286
        %v3288 = vrcp.pop %v3257
        %v3289 = vmul.f32 %v3225, %v3288
        %v3290 = vrcp.pop %v3259
        %v3291 = vmul.f32 %v3227, %v3290
        %v3292 = vrcp.pop %v3261
        %v3293 = vmul.f32 %v3229, %v3292
        %v3294 = vpack.c.bf16 %v3265, %v3263
        %v3295 = vpack.c.bf16 %v3269, %v3267
        %v3296 = vpack.c.bf16 %v3273, %v3271
        %v3297 = vpack.c.bf16 %v3277, %v3275
        %v3298 = vpack.c.bf16 %v3281, %v3279
        %v3299 = vpack.c.bf16 %v3285, %v3283
        %v3300 = vpack.c.bf16 %v3289, %v3287
        %v3301 = vpack.c.bf16 %v3293, %v3291
        %3302 = vmatprep.subr.bf16.mxu0 0
        %3303 = vmatpush1.bf16.msra.mxu0 %v2089
        %3304 = vmatprep.subr.bf16.mxu0 0
        %3305 = vmatpush1.bf16.msra.mxu0 %v2095
        %3306 = vmatprep.subr.bf16.mxu0 0
        %3307 = vmatpush1.bf16.msra.mxu0 %v2101
        %3308 = vmatprep.subr.bf16.mxu0 0
        %3309 = vmatpush1.bf16.msra.mxu0 %v2107
        %3310 = vmatprep.subr.bf16.mxu0 0
        %3311 = vmatpush1.bf16.msra.mxu0 %v2113
        %3312 = vmatprep.subr.bf16.mxu0 0
        %3313 = vmatpush1.bf16.msra.mxu0 %v2119
        %3314 = vmatprep.subr.bf16.mxu0 0
        %3315 = vmatpush1.bf16.msra.mxu0 %v2125
        %3316 = vmatprep.subr.bf16.mxu0 0
        %3317 = vmatpush1.bf16.msra.mxu0 %v2131
        %3318 = vmatprep.subr.bf16.mxu0 0
        %3319 = vmatpush1.bf16.msra.mxu0 0
        %3320 = vmatprep.subr.bf16.mxu0 0
        %3321 = vmatpush1.bf16.msra.mxu0 0
        %3322 = vmatprep.subr.bf16.mxu0 0
        %3323 = vmatpush1.bf16.msra.mxu0 0
        %3324 = vmatprep.subr.bf16.mxu0 0
        %3325 = vmatpush1.bf16.msra.mxu0 0
        %3326 = vmatprep.subr.bf16.mxu0 0
        %3327 = vmatpush1.bf16.msra.mxu0 0
        %3328 = vmatprep.subr.bf16.mxu0 0
        %3329 = vmatpush1.bf16.msra.mxu0 0
        %3330 = vmatprep.subr.bf16.mxu0 0
        %3331 = vmatpush1.bf16.msra.mxu0 0
        %3332 = vmatprep.subr.bf16.mxu0 0
        %3333 = vmatpush1.bf16.msra.mxu0 0
        %3334 = vmatprep.mubr.bf16.mxu0 0
        %3335 = vmatmul.mubr.bf16.gmra.mrb[0].mxu0 %v3294
        %v3336 = vpop.f32.mrb[0].mxu0
        %v3337 = vadd.f32 0.0, %v3336
        %v3338 = vpop.f32.mrb[0].mxu0
        %v3339 = vpop.f32.mrb[0].mxu0
        %v3340 = vadd.f32 0.0, %v3339
        %v3341 = vpop.f32.mrb[0].mxu0
        %3342 = vmatprep.mubr.bf16.mxu0 0
        %3343 = vmatmul.mubr.bf16.gmra.mrb[0].mxu0 %v3295
        %v3344 = vpop.f32.mrb[0].mxu0
        %v3345 = vadd.f32 0.0, %v3344
        %v3346 = vpop.f32.mrb[0].mxu0
        %v3347 = vpop.f32.mrb[0].mxu0
        %v3348 = vadd.f32 0.0, %v3347
        %v3349 = vpop.f32.mrb[0].mxu0
        %3350 = vmatprep.mubr.bf16.mxu0 0
        %3351 = vmatmul.mubr.bf16.gmra.mrb[0].mxu0 %v3296
        %v3352 = vpop.f32.mrb[0].mxu0
        %v3353 = vadd.f32 0.0, %v3352
        %v3354 = vpop.f32.mrb[0].mxu0
        %v3355 = vpop.f32.mrb[0].mxu0
        %v3356 = vadd.f32 0.0, %v3355
        %v3357 = vpop.f32.mrb[0].mxu0
        %3358 = vmatprep.mubr.bf16.mxu0 0
        %3359 = vmatmul.mubr.bf16.gmra.mrb[0].mxu0 %v3297
        %v3360 = vpop.f32.mrb[0].mxu0
        %v3361 = vadd.f32 0.0, %v3360
        %v3362 = vpop.f32.mrb[0].mxu0
        %v3363 = vpop.f32.mrb[0].mxu0
        %v3364 = vadd.f32 0.0, %v3363
        %v3365 = vpop.f32.mrb[0].mxu0
        %3366 = vmatprep.mubr.bf16.mxu0 0
        %3367 = vmatmul.mubr.bf16.gmra.mrb[0].mxu0 %v3298
        %v3368 = vpop.f32.mrb[0].mxu0
        %v3369 = vadd.f32 0.0, %v3368
        %v3370 = vpop.f32.mrb[0].mxu0
        %v3371 = vpop.f32.mrb[0].mxu0
        %v3372 = vadd.f32 0.0, %v3371
        %v3373 = vpop.f32.mrb[0].mxu0
        %3374 = vmatprep.mubr.bf16.mxu0 0
        %3375 = vmatmul.mubr.bf16.gmra.mrb[0].mxu0 %v3299
        %v3376 = vpop.f32.mrb[0].mxu0
        %v3377 = vadd.f32 0.0, %v3376
        %v3378 = vpop.f32.mrb[0].mxu0
        %v3379 = vpop.f32.mrb[0].mxu0
        %v3380 = vadd.f32 0.0, %v3379
        %v3381 = vpop.f32.mrb[0].mxu0
        %3382 = vmatprep.mubr.bf16.mxu0 0
        %3383 = vmatmul.mubr.bf16.gmra.mrb[0].mxu0 %v3300
        %v3384 = vpop.f32.mrb[0].mxu0
        %v3385 = vadd.f32 0.0, %v3384
        %v3386 = vpop.f32.mrb[0].mxu0
        %v3387 = vpop.f32.mrb[0].mxu0
        %v3388 = vadd.f32 0.0, %v3387
        %v3389 = vpop.f32.mrb[0].mxu0
        %3390 = vmatprep.mubr.bf16.mxu0 0
        %3391 = vmatmul.mubr.bf16.gmra.mrb[0].mxu0 %v3301
        %v3392 = vpop.f32.mrb[0].mxu0
        %v3393 = vadd.f32 0.0, %v3392
        %v3394 = vpop.f32.mrb[0].mxu0
        %v3395 = vpop.f32.mrb[0].mxu0
        %v3396 = vadd.f32 0.0, %v3395
        %v3397 = vpop.f32.mrb[0].mxu0
        %3398 = vdwg.mxu0
        %3407 = vrot.lane.b32.xlu0 %v2085, 64
        %v3408 = vpop.permute.xlu0 %3407
        %3409 = vrot.lane.b32.xlu0 %v2091, 64
        %v3410 = vpop.permute.xlu0 %3409
        %3411 = vrot.lane.b32.xlu0 %v2097, 64
        %v3412 = vpop.permute.xlu0 %3411
        %3413 = vrot.lane.b32.xlu0 %v2103, 64
        %v3414 = vpop.permute.xlu0 %3413
        %3415 = vrot.lane.b32.xlu0 %v2109, 64
        %v3416 = vpop.permute.xlu0 %3415
        %3417 = vrot.lane.b32.xlu0 %v2115, 64
        %v3418 = vpop.permute.xlu0 %3417
        %3419 = vrot.lane.b32.xlu0 %v2121, 64
        %v3420 = vpop.permute.xlu0 %3419
        %3421 = vrot.lane.b32.xlu0 %v2127, 64
        %v3422 = vpop.permute.xlu0 %3421
        %3431 = vrot.lane.b32.xlu0 %v2087, 64
        %v3432 = vpop.permute.xlu0 %3431
        %3433 = vrot.lane.b32.xlu0 %v2093, 64
        %v3434 = vpop.permute.xlu0 %3433
        %3435 = vrot.lane.b32.xlu0 %v2099, 64
        %v3436 = vpop.permute.xlu0 %3435
        %3437 = vrot.lane.b32.xlu0 %v2105, 64
        %v3438 = vpop.permute.xlu0 %3437
        %3439 = vrot.lane.b32.xlu0 %v2111, 64
        %v3440 = vpop.permute.xlu0 %3439
        %3441 = vrot.lane.b32.xlu0 %v2117, 64
        %v3442 = vpop.permute.xlu0 %3441
        %3443 = vrot.lane.b32.xlu0 %v2123, 64
        %v3444 = vpop.permute.xlu0 %3443
        %3445 = vrot.lane.b32.xlu0 %v2129, 64
        %v3446 = vpop.permute.xlu0 %3445
        %v3448 = vsel %vm2136, %v3408, 0
        %v3451 = vsel %vm2136, %v3410, 0
        %v3454 = vsel %vm2136, %v3412, 0
        %v3457 = vsel %vm2136, %v3414, 0
        %v3460 = vsel %vm2136, %v3416, 0
        %v3463 = vsel %vm2136, %v3418, 0
        %v3466 = vsel %vm2136, %v3420, 0
        %v3469 = vsel %vm2136, %v3422, 0
        %v3472 = vsel %vm2136, %v3432, 0
        %v3475 = vsel %vm2136, %v3434, 0
        %v3478 = vsel %vm2136, %v3436, 0
        %v3481 = vsel %vm2136, %v3438, 0
        %v3484 = vsel %vm2136, %v3440, 0
        %v3487 = vsel %vm2136, %v3442, 0
        %v3490 = vsel %vm2136, %v3444, 0
        %v3493 = vsel %vm2136, %v3446, 0
        %3495 = vmatprep.subr.bf16.mxu0 0
        %3496 = vmatpush1.bf16.xpose.msra.mxu0 %v3472
        %3497 = vmatprep.subr.bf16.mxu0 0
        %3498 = vmatpush1.bf16.xpose.msra.mxu0 %v3475
        %3499 = vmatprep.subr.bf16.mxu0 0
        %3500 = vmatpush1.bf16.xpose.msra.mxu0 %v3478
        %3501 = vmatprep.subr.bf16.mxu0 0
        %3502 = vmatpush1.bf16.xpose.msra.mxu0 %v3481
        %3503 = vmatprep.subr.bf16.mxu0 0
        %3504 = vmatpush1.bf16.xpose.msra.mxu0 %v3484
        %3505 = vmatprep.subr.bf16.mxu0 0
        %3506 = vmatpush1.bf16.xpose.msra.mxu0 %v3487
        %3507 = vmatprep.subr.bf16.mxu0 0
        %3508 = vmatpush1.bf16.xpose.msra.mxu0 %v3490
        %3509 = vmatprep.subr.bf16.mxu0 0
        %3510 = vmatpush1.bf16.xpose.msra.mxu0 %v3493
        %3511 = vmatprep.subr.bf16.mxu0 0
        %3512 = vmatpush1.bf16.xpose.msra.mxu0 0
        %3513 = vmatprep.subr.bf16.mxu0 0
        %3514 = vmatpush1.bf16.xpose.msra.mxu0 0
        %3515 = vmatprep.subr.bf16.mxu0 0
        %3516 = vmatpush1.bf16.xpose.msra.mxu0 0
        %3517 = vmatprep.subr.bf16.mxu0 0
        %3518 = vmatpush1.bf16.xpose.msra.mxu0 0
        %3519 = vmatprep.subr.bf16.mxu0 0
        %3520 = vmatpush1.bf16.xpose.msra.mxu0 0
        %3521 = vmatprep.subr.bf16.mxu0 0
        %3522 = vmatpush1.bf16.xpose.msra.mxu0 0
        %3523 = vmatprep.subr.bf16.mxu0 0
        %3524 = vmatpush1.bf16.xpose.msra.mxu0 0
        %3525 = vmatprep.subr.bf16.mxu0 0
        %3526 = vmatpush1.bf16.xpose.msra.mxu0 0
        %3527 = vmatprep.mubr.bf16.mxu0 0
        %3528 = vmatmul.mubr.bf16.gmra.mrb[0].mxu0 %v3448
        %v3529 = vpop.f32.mrb[0].mxu0
        %v3530 = vadd.f32 %v2135, %v3529
        %v3531 = vpop.f32.mrb[0].mxu0
        %v3532 = vpop.f32.mrb[0].mxu0
        %v3533 = vadd.f32 %v2135, %v3532
        %v3534 = vpop.f32.mrb[0].mxu0
        %3535 = vmatprep.mubr.bf16.mxu0 0
        %3536 = vmatmul.mubr.bf16.gmra.mrb[0].mxu0 %v3451
        %v3537 = vpop.f32.mrb[0].mxu0
        %v3538 = vadd.f32 %v2135, %v3537
        %v3539 = vpop.f32.mrb[0].mxu0
        %v3540 = vpop.f32.mrb[0].mxu0
        %v3541 = vadd.f32 %v2135, %v3540
        %v3542 = vpop.f32.mrb[0].mxu0
        %3543 = vmatprep.mubr.bf16.mxu0 0
        %3544 = vmatmul.mubr.bf16.gmra.mrb[0].mxu0 %v3454
        %v3545 = vpop.f32.mrb[0].mxu0
        %v3546 = vadd.f32 %v2135, %v3545
        %v3547 = vpop.f32.mrb[0].mxu0
        %v3548 = vpop.f32.mrb[0].mxu0
        %v3549 = vadd.f32 %v2135, %v3548
        %v3550 = vpop.f32.mrb[0].mxu0
        %3551 = vmatprep.mubr.bf16.mxu0 0
        %3552 = vmatmul.mubr.bf16.gmra.mrb[0].mxu0 %v3457
        %v3553 = vpop.f32.mrb[0].mxu0
        %v3554 = vadd.f32 %v2135, %v3553
        %v3555 = vpop.f32.mrb[0].mxu0
        %v3556 = vpop.f32.mrb[0].mxu0
        %v3557 = vadd.f32 %v2135, %v3556
        %v3558 = vpop.f32.mrb[0].mxu0
        %3559 = vmatprep.mubr.bf16.mxu0 0
        %3560 = vmatmul.mubr.bf16.gmra.mrb[0].mxu0 %v3460
        %v3561 = vpop.f32.mrb[0].mxu0
        %v3562 = vadd.f32 %v2135, %v3561
        %v3563 = vpop.f32.mrb[0].mxu0
        %v3564 = vpop.f32.mrb[0].mxu0
        %v3565 = vadd.f32 %v2135, %v3564
        %v3566 = vpop.f32.mrb[0].mxu0
        %3567 = vmatprep.mubr.bf16.mxu0 0
        %3568 = vmatmul.mubr.bf16.gmra.mrb[0].mxu0 %v3463
        %v3569 = vpop.f32.mrb[0].mxu0
        %v3570 = vadd.f32 %v2135, %v3569
        %v3571 = vpop.f32.mrb[0].mxu0
        %v3572 = vpop.f32.mrb[0].mxu0
        %v3573 = vadd.f32 %v2135, %v3572
        %v3574 = vpop.f32.mrb[0].mxu0
        %3575 = vmatprep.mubr.bf16.mxu0 0
        %3576 = vmatmul.mubr.bf16.gmra.mrb[0].mxu0 %v3466
        %v3577 = vpop.f32.mrb[0].mxu0
        %v3578 = vadd.f32 %v2135, %v3577
        %v3579 = vpop.f32.mrb[0].mxu0
        %v3580 = vpop.f32.mrb[0].mxu0
        %v3581 = vadd.f32 %v2135, %v3580
        %v3582 = vpop.f32.mrb[0].mxu0
        %3583 = vmatprep.mubr.bf16.mxu0 0
        %3584 = vmatmul.mubr.bf16.gmra.mrb[0].mxu0 %v3469
        %v3585 = vpop.f32.mrb[0].mxu0
        %v3586 = vadd.f32 %v2135, %v3585
        %v3587 = vpop.f32.mrb[0].mxu0
        %v3588 = vpop.f32.mrb[0].mxu0
        %v3589 = vadd.f32 %v2135, %v3588
        %v3590 = vpop.f32.mrb[0].mxu0
        %3591 = vdwg.mxu0
        %3592 = vmax.xlane.f32.xlu0 %v3530
        %v3593 = vpop.xlane.xlu0 %3592
        %3594 = vmax.xlane.f32.xlu0 %v3533
        %v3595 = vpop.xlane.xlu0 %3594
        %3596 = vmax.xlane.f32.xlu0 %v3538
        %v3597 = vpop.xlane.xlu0 %3596
        %3598 = vmax.xlane.f32.xlu0 %v3541
        %v3599 = vpop.xlane.xlu0 %3598
        %3600 = vmax.xlane.f32.xlu0 %v3546
        %v3601 = vpop.xlane.xlu0 %3600
        %3602 = vmax.xlane.f32.xlu0 %v3549
        %v3603 = vpop.xlane.xlu0 %3602
        %3604 = vmax.xlane.f32.xlu0 %v3554
        %v3605 = vpop.xlane.xlu0 %3604
        %3606 = vmax.xlane.f32.xlu0 %v3557
        %v3607 = vpop.xlane.xlu0 %3606
        %3608 = vmax.xlane.f32.xlu0 %v3562
        %v3609 = vpop.xlane.xlu0 %3608
        %3610 = vmax.xlane.f32.xlu0 %v3565
        %v3611 = vpop.xlane.xlu0 %3610
        %3612 = vmax.xlane.f32.xlu0 %v3570
        %v3613 = vpop.xlane.xlu0 %3612
        %3614 = vmax.xlane.f32.xlu0 %v3573
        %v3615 = vpop.xlane.xlu0 %3614
        %3616 = vmax.xlane.f32.xlu0 %v3578
        %v3617 = vpop.xlane.xlu0 %3616
        %3618 = vmax.xlane.f32.xlu0 %v3581
        %v3619 = vpop.xlane.xlu0 %3618
        %3620 = vmax.xlane.f32.xlu0 %v3586
        %v3621 = vpop.xlane.xlu0 %3620
        %3622 = vmax.xlane.f32.xlu0 %v3589
        %v3623 = vpop.xlane.xlu0 %3622
        %v3624 = vsub.f32 %v3530, %v3593
        %v3625 = vsub.f32 %v3533, %v3595
        %v3626 = vsub.f32 %v3538, %v3597
        %v3627 = vsub.f32 %v3541, %v3599
        %v3628 = vsub.f32 %v3546, %v3601
        %v3629 = vsub.f32 %v3549, %v3603
        %v3630 = vsub.f32 %v3554, %v3605
        %v3631 = vsub.f32 %v3557, %v3607
        %v3632 = vsub.f32 %v3562, %v3609
        %v3633 = vsub.f32 %v3565, %v3611
        %v3634 = vsub.f32 %v3570, %v3613
        %v3635 = vsub.f32 %v3573, %v3615
        %v3636 = vsub.f32 %v3578, %v3617
        %v3637 = vsub.f32 %v3581, %v3619
        %v3638 = vsub.f32 %v3586, %v3621
        %v3639 = vsub.f32 %v3589, %v3623
        %v3640 = vmul.f32 %v3624, 1.442695
        %v3641 = vpow.pop %v3640
        %v3642 = vmul.f32 %v3625, 1.442695
        %v3643 = vpow.pop %v3642
        %v3644 = vmul.f32 %v3626, 1.442695
        %v3645 = vpow.pop %v3644
        %v3646 = vmul.f32 %v3627, 1.442695
        %v3647 = vpow.pop %v3646
        %v3648 = vmul.f32 %v3628, 1.442695
        %v3649 = vpow.pop %v3648
        %v3650 = vmul.f32 %v3629, 1.442695
        %v3651 = vpow.pop %v3650
        %v3652 = vmul.f32 %v3630, 1.442695
        %v3653 = vpow.pop %v3652
        %v3654 = vmul.f32 %v3631, 1.442695
        %v3655 = vpow.pop %v3654
        %v3656 = vmul.f32 %v3632, 1.442695
        %v3657 = vpow.pop %v3656
        %v3658 = vmul.f32 %v3633, 1.442695
        %v3659 = vpow.pop %v3658
        %v3660 = vmul.f32 %v3634, 1.442695
        %v3661 = vpow.pop %v3660
        %v3662 = vmul.f32 %v3635, 1.442695
        %v3663 = vpow.pop %v3662
        %v3664 = vmul.f32 %v3636, 1.442695
        %v3665 = vpow.pop %v3664
        %v3666 = vmul.f32 %v3637, 1.442695
        %v3667 = vpow.pop %v3666
        %v3668 = vmul.f32 %v3638, 1.442695
        %v3669 = vpow.pop %v3668
        %v3670 = vmul.f32 %v3639, 1.442695
        %v3671 = vpow.pop %v3670
        %3672 = vadd.xlane.f32.xlu0 %v3641
        %v3673 = vpop.xlane.xlu0 %3672
        %3674 = vadd.xlane.f32.xlu0 %v3643
        %v3675 = vpop.xlane.xlu0 %3674
        %3676 = vadd.xlane.f32.xlu0 %v3645
        %v3677 = vpop.xlane.xlu0 %3676
        %3678 = vadd.xlane.f32.xlu0 %v3647
        %v3679 = vpop.xlane.xlu0 %3678
        %3680 = vadd.xlane.f32.xlu0 %v3649
        %v3681 = vpop.xlane.xlu0 %3680
        %3682 = vadd.xlane.f32.xlu0 %v3651
        %v3683 = vpop.xlane.xlu0 %3682
        %3684 = vadd.xlane.f32.xlu0 %v3653
        %v3685 = vpop.xlane.xlu0 %3684
        %3686 = vadd.xlane.f32.xlu0 %v3655
        %v3687 = vpop.xlane.xlu0 %3686
        %3688 = vadd.xlane.f32.xlu0 %v3657
        %v3689 = vpop.xlane.xlu0 %3688
        %3690 = vadd.xlane.f32.xlu0 %v3659
        %v3691 = vpop.xlane.xlu0 %3690
        %3692 = vadd.xlane.f32.xlu0 %v3661
        %v3693 = vpop.xlane.xlu0 %3692
        %3694 = vadd.xlane.f32.xlu0 %v3663
        %v3695 = vpop.xlane.xlu0 %3694
        %3696 = vadd.xlane.f32.xlu0 %v3665
        %v3697 = vpop.xlane.xlu0 %3696
        %3698 = vadd.xlane.f32.xlu0 %v3667
        %v3699 = vpop.xlane.xlu0 %3698
        %3700 = vadd.xlane.f32.xlu0 %v3669
        %v3701 = vpop.xlane.xlu0 %3700
        %3702 = vadd.xlane.f32.xlu0 %v3671
        %v3703 = vpop.xlane.xlu0 %3702
        %v3704 = vrcp.pop %v3673
        %v3705 = vmul.f32 %v3641, %v3704
        %v3706 = vrcp.pop %v3675
        %v3707 = vmul.f32 %v3643, %v3706
        %v3708 = vrcp.pop %v3677
        %v3709 = vmul.f32 %v3645, %v3708
        %v3710 = vrcp.pop %v3679
        %v3711 = vmul.f32 %v3647, %v3710
        %v3712 = vrcp.pop %v3681
        %v3713 = vmul.f32 %v3649, %v3712
        %v3714 = vrcp.pop %v3683
        %v3715 = vmul.f32 %v3651, %v3714
        %v3716 = vrcp.pop %v3685
        %v3717 = vmul.f32 %v3653, %v3716
        %v3718 = vrcp.pop %v3687
        %v3719 = vmul.f32 %v3655, %v3718
        %v3720 = vrcp.pop %v3689
        %v3721 = vmul.f32 %v3657, %v3720
        %v3722 = vrcp.pop %v3691
        %v3723 = vmul.f32 %v3659, %v3722
        %v3724 = vrcp.pop %v3693
        %v3725 = vmul.f32 %v3661, %v3724
        %v3726 = vrcp.pop %v3695
        %v3727 = vmul.f32 %v3663, %v3726
        %v3728 = vrcp.pop %v3697
        %v3729 = vmul.f32 %v3665, %v3728
        %v3730 = vrcp.pop %v3699
        %v3731 = vmul.f32 %v3667, %v3730
        %v3732 = vrcp.pop %v3701
        %v3733 = vmul.f32 %v3669, %v3732
        %v3734 = vrcp.pop %v3703
        %v3735 = vmul.f32 %v3671, %v3734
        %v3736 = vpack.c.bf16 %v3707, %v3705
        %v3737 = vpack.c.bf16 %v3711, %v3709
        %v3738 = vpack.c.bf16 %v3715, %v3713
        %v3739 = vpack.c.bf16 %v3719, %v3717
        %v3740 = vpack.c.bf16 %v3723, %v3721
        %v3741 = vpack.c.bf16 %v3727, %v3725
        %v3742 = vpack.c.bf16 %v3731, %v3729
        %v3743 = vpack.c.bf16 %v3735, %v3733
        %3752 = vrot.lane.b32.xlu0 %v2089, 64
        %v3753 = vpop.permute.xlu0 %3752
        %3754 = vrot.lane.b32.xlu0 %v2095, 64
        %v3755 = vpop.permute.xlu0 %3754
        %3756 = vrot.lane.b32.xlu0 %v2101, 64
        %v3757 = vpop.permute.xlu0 %3756
        %3758 = vrot.lane.b32.xlu0 %v2107, 64
        %v3759 = vpop.permute.xlu0 %3758
        %3760 = vrot.lane.b32.xlu0 %v2113, 64
        %v3761 = vpop.permute.xlu0 %3760
        %3762 = vrot.lane.b32.xlu0 %v2119, 64
        %v3763 = vpop.permute.xlu0 %3762
        %3764 = vrot.lane.b32.xlu0 %v2125, 64
        %v3765 = vpop.permute.xlu0 %3764
        %3766 = vrot.lane.b32.xlu0 %v2131, 64
        %v3767 = vpop.permute.xlu0 %3766
        %3776 = vmatprep.subr.bf16.mxu0 0
        %3777 = vmatpush1.bf16.msra.mxu0 %v3753
        %3778 = vmatprep.subr.bf16.mxu0 0
        %3779 = vmatpush1.bf16.msra.mxu0 %v3755
        %3780 = vmatprep.subr.bf16.mxu0 0
        %3781 = vmatpush1.bf16.msra.mxu0 %v3757
        %3782 = vmatprep.subr.bf16.mxu0 0
        %3783 = vmatpush1.bf16.msra.mxu0 %v3759
        %3784 = vmatprep.subr.bf16.mxu0 0
        %3785 = vmatpush1.bf16.msra.mxu0 %v3761
        %3786 = vmatprep.subr.bf16.mxu0 0
        %3787 = vmatpush1.bf16.msra.mxu0 %v3763
        %3788 = vmatprep.subr.bf16.mxu0 0
        %3789 = vmatpush1.bf16.msra.mxu0 %v3765
        %3790 = vmatprep.subr.bf16.mxu0 0
        %3791 = vmatpush1.bf16.msra.mxu0 %v3767
        %3792 = vmatprep.subr.bf16.mxu0 0
        %3793 = vmatpush1.bf16.msra.mxu0 0
        %3794 = vmatprep.subr.bf16.mxu0 0
        %3795 = vmatpush1.bf16.msra.mxu0 0
        %3796 = vmatprep.subr.bf16.mxu0 0
        %3797 = vmatpush1.bf16.msra.mxu0 0
        %3798 = vmatprep.subr.bf16.mxu0 0
        %3799 = vmatpush1.bf16.msra.mxu0 0
        %3800 = vmatprep.subr.bf16.mxu0 0
        %3801 = vmatpush1.bf16.msra.mxu0 0
        %3802 = vmatprep.subr.bf16.mxu0 0
        %3803 = vmatpush1.bf16.msra.mxu0 0
        %3804 = vmatprep.subr.bf16.mxu0 0
        %3805 = vmatpush1.bf16.msra.mxu0 0
        %3806 = vmatprep.subr.bf16.mxu0 0
        %3807 = vmatpush1.bf16.msra.mxu0 0
        %3808 = vmatprep.mubr.bf16.mxu0 0
        %3809 = vmatmul.mubr.bf16.gmra.mrb[0].mxu0 %v3736
        %v3810 = vpop.f32.mrb[0].mxu0
        %v3811 = vadd.f32 0.0, %v3810
        %v3812 = vpop.f32.mrb[0].mxu0
        %v3813 = vpop.f32.mrb[0].mxu0
        %v3814 = vadd.f32 0.0, %v3813
        %v3815 = vpop.f32.mrb[0].mxu0
        %3816 = vmatprep.mubr.bf16.mxu0 0
        %3817 = vmatmul.mubr.bf16.gmra.mrb[0].mxu0 %v3737
        %v3818 = vpop.f32.mrb[0].mxu0
        %v3819 = vadd.f32 0.0, %v3818
        %v3820 = vpop.f32.mrb[0].mxu0
        %v3821 = vpop.f32.mrb[0].mxu0
        %v3822 = vadd.f32 0.0, %v3821
        %v3823 = vpop.f32.mrb[0].mxu0
        %3824 = vmatprep.mubr.bf16.mxu0 0
        %3825 = vmatmul.mubr.bf16.gmra.mrb[0].mxu0 %v3738
        %v3826 = vpop.f32.mrb[0].mxu0
        %v3827 = vadd.f32 0.0, %v3826
        %v3828 = vpop.f32.mrb[0].mxu0
        %v3829 = vpop.f32.mrb[0].mxu0
        %v3830 = vadd.f32 0.0, %v3829
        %v3831 = vpop.f32.mrb[0].mxu0
        %3832 = vmatprep.mubr.bf16.mxu0 0
        %3833 = vmatmul.mubr.bf16.gmra.mrb[0].mxu0 %v3739
        %v3834 = vpop.f32.mrb[0].mxu0
        %v3835 = vadd.f32 0.0, %v3834
        %v3836 = vpop.f32.mrb[0].mxu0
        %v3837 = vpop.f32.mrb[0].mxu0
        %v3838 = vadd.f32 0.0, %v3837
        %v3839 = vpop.f32.mrb[0].mxu0
        %3840 = vmatprep.mubr.bf16.mxu0 0
        %3841 = vmatmul.mubr.bf16.gmra.mrb[0].mxu0 %v3740
        %v3842 = vpop.f32.mrb[0].mxu0
        %v3843 = vadd.f32 0.0, %v3842
        %v3844 = vpop.f32.mrb[0].mxu0
        %v3845 = vpop.f32.mrb[0].mxu0
        %v3846 = vadd.f32 0.0, %v3845
        %v3847 = vpop.f32.mrb[0].mxu0
        %3848 = vmatprep.mubr.bf16.mxu0 0
        %3849 = vmatmul.mubr.bf16.gmra.mrb[0].mxu0 %v3741
        %v3850 = vpop.f32.mrb[0].mxu0
        %v3851 = vadd.f32 0.0, %v3850
        %v3852 = vpop.f32.mrb[0].mxu0
        %v3853 = vpop.f32.mrb[0].mxu0
        %v3854 = vadd.f32 0.0, %v3853
        %v3855 = vpop.f32.mrb[0].mxu0
        %3856 = vmatprep.mubr.bf16.mxu0 0
        %3857 = vmatmul.mubr.bf16.gmra.mrb[0].mxu0 %v3742
        %v3858 = vpop.f32.mrb[0].mxu0
        %v3859 = vadd.f32 0.0, %v3858
        %v3860 = vpop.f32.mrb[0].mxu0
        %v3861 = vpop.f32.mrb[0].mxu0
        %v3862 = vadd.f32 0.0, %v3861
        %v3863 = vpop.f32.mrb[0].mxu0
        %3864 = vmatprep.mubr.bf16.mxu0 0
        %3865 = vmatmul.mubr.bf16.gmra.mrb[0].mxu0 %v3743
        %v3866 = vpop.f32.mrb[0].mxu0
        %v3867 = vadd.f32 0.0, %v3866
        %v3868 = vpop.f32.mrb[0].mxu0
        %v3869 = vpop.f32.mrb[0].mxu0
        %v3870 = vadd.f32 0.0, %v3869
        %v3871 = vpop.f32.mrb[0].mxu0
        %3872 = vdwg.mxu0
        %3889 = vrot.lane.b32.xlu0 %v2943, 64
        %v3890 = vpop.permute.xlu0 %3889
        %3891 = vrot.lane.b32.xlu0 %v2946, 64
        %v3892 = vpop.permute.xlu0 %3891
        %3893 = vrot.lane.b32.xlu0 %v2951, 64
        %v3894 = vpop.permute.xlu0 %3893
        %3895 = vrot.lane.b32.xlu0 %v2954, 64
        %v3896 = vpop.permute.xlu0 %3895
        %3897 = vrot.lane.b32.xlu0 %v2959, 64
        %v3898 = vpop.permute.xlu0 %3897
        %3899 = vrot.lane.b32.xlu0 %v2962, 64
        %v3900 = vpop.permute.xlu0 %3899
        %3901 = vrot.lane.b32.xlu0 %v2967, 64
        %v3902 = vpop.permute.xlu0 %3901
        %3903 = vrot.lane.b32.xlu0 %v2970, 64
        %v3904 = vpop.permute.xlu0 %3903
        %3905 = vrot.lane.b32.xlu0 %v2975, 64
        %v3906 = vpop.permute.xlu0 %3905
        %3907 = vrot.lane.b32.xlu0 %v2978, 64
        %v3908 = vpop.permute.xlu0 %3907
        %3909 = vrot.lane.b32.xlu0 %v2983, 64
        %v3910 = vpop.permute.xlu0 %3909
        %3911 = vrot.lane.b32.xlu0 %v2986, 64
        %v3912 = vpop.permute.xlu0 %3911
        %3913 = vrot.lane.b32.xlu0 %v2991, 64
        %v3914 = vpop.permute.xlu0 %3913
        %3915 = vrot.lane.b32.xlu0 %v2994, 64
        %v3916 = vpop.permute.xlu0 %3915
        %3917 = vrot.lane.b32.xlu0 %v2999, 64
        %v3918 = vpop.permute.xlu0 %3917
        %3919 = vrot.lane.b32.xlu0 %v3002, 64
        %v3920 = vpop.permute.xlu0 %3919
        %3953 = vrot.lane.b32.xlu0 %v3811, 64
        %v3954 = vpop.permute.xlu0 %3953
        %3955 = vrot.lane.b32.xlu0 %v3814, 64
        %v3956 = vpop.permute.xlu0 %3955
        %3957 = vrot.lane.b32.xlu0 %v3819, 64
        %v3958 = vpop.permute.xlu0 %3957
        %3959 = vrot.lane.b32.xlu0 %v3822, 64
        %v3960 = vpop.permute.xlu0 %3959
        %3961 = vrot.lane.b32.xlu0 %v3827, 64
        %v3962 = vpop.permute.xlu0 %3961
        %3963 = vrot.lane.b32.xlu0 %v3830, 64
        %v3964 = vpop.permute.xlu0 %3963
        %3965 = vrot.lane.b32.xlu0 %v3835, 64
        %v3966 = vpop.permute.xlu0 %3965
        %3967 = vrot.lane.b32.xlu0 %v3838, 64
        %v3968 = vpop.permute.xlu0 %3967
        %3969 = vrot.lane.b32.xlu0 %v3843, 64
        %v3970 = vpop.permute.xlu0 %3969
        %3971 = vrot.lane.b32.xlu0 %v3846, 64
        %v3972 = vpop.permute.xlu0 %3971
        %3973 = vrot.lane.b32.xlu0 %v3851, 64
        %v3974 = vpop.permute.xlu0 %3973
        %3975 = vrot.lane.b32.xlu0 %v3854, 64
        %v3976 = vpop.permute.xlu0 %3975
        %3977 = vrot.lane.b32.xlu0 %v3859, 64
        %v3978 = vpop.permute.xlu0 %3977
        %3979 = vrot.lane.b32.xlu0 %v3862, 64
        %v3980 = vpop.permute.xlu0 %3979
        %3981 = vrot.lane.b32.xlu0 %v3867, 64
        %v3982 = vpop.permute.xlu0 %3981
        %3983 = vrot.lane.b32.xlu0 %v3870, 64
        %v3984 = vpop.permute.xlu0 %3983
        %v4001 = vsel %vm2136, %v2469, %v3890
        %v4002 = vsel %vm2136, %v2472, %v3892
        %v4003 = vsel %vm2136, %v2477, %v3894
        %v4004 = vsel %vm2136, %v2480, %v3896
        %v4005 = vsel %vm2136, %v2485, %v3898
        %v4006 = vsel %vm2136, %v2488, %v3900
        %v4007 = vsel %vm2136, %v2493, %v3902
        %v4008 = vsel %vm2136, %v2496, %v3904
        %v4009 = vsel %vm2136, %v2501, %v3906
        %v4010 = vsel %vm2136, %v2504, %v3908
        %v4011 = vsel %vm2136, %v2509, %v3910
        %v4012 = vsel %vm2136, %v2512, %v3912
        %v4013 = vsel %vm2136, %v2517, %v3914
        %v4014 = vsel %vm2136, %v2520, %v3916
        %v4015 = vsel %vm2136, %v2525, %v3918
        %v4016 = vsel %vm2136, %v2528, %v3920
        %v4017 = vsel %vm2136, %v3337, %v3954
        %v4018 = vsel %vm2136, %v3340, %v3956
        %v4019 = vsel %vm2136, %v3345, %v3958
        %v4020 = vsel %vm2136, %v3348, %v3960
        %v4021 = vsel %vm2136, %v3353, %v3962
        %v4022 = vsel %vm2136, %v3356, %v3964
        %v4023 = vsel %vm2136, %v3361, %v3966
        %v4024 = vsel %vm2136, %v3364, %v3968
        %v4025 = vsel %vm2136, %v3369, %v3970
        %v4026 = vsel %vm2136, %v3372, %v3972
        %v4027 = vsel %vm2136, %v3377, %v3974
        %v4028 = vsel %vm2136, %v3380, %v3976
        %v4029 = vsel %vm2136, %v3385, %v3978
        %v4030 = vsel %vm2136, %v3388, %v3980
        %v4031 = vsel %vm2136, %v3393, %v3982
        %v4032 = vsel %vm2136, %v3396, %v3984
        %v4033 = vpack.c.bf16 %v4002, %v4001
        %v4034 = vpack.c.bf16 %v4018, %v4017
        %v4035 = vpack.c.bf16 %v4004, %v4003
        %v4036 = vpack.c.bf16 %v4020, %v4019
        %v4037 = vpack.c.bf16 %v4006, %v4005
        %v4038 = vpack.c.bf16 %v4022, %v4021
        %v4039 = vpack.c.bf16 %v4008, %v4007
        %v4040 = vpack.c.bf16 %v4024, %v4023
        %v4041 = vpack.c.bf16 %v4010, %v4009
        %v4042 = vpack.c.bf16 %v4026, %v4025
        %v4043 = vpack.c.bf16 %v4012, %v4011
        %v4044 = vpack.c.bf16 %v4028, %v4027
        %v4045 = vpack.c.bf16 %v4014, %v4013
        %v4046 = vpack.c.bf16 %v4030, %v4029
        %v4047 = vpack.c.bf16 %v4016, %v4015
        %v4048 = vpack.c.bf16 %v4032, %v4031
        %s4049 = smul.u32 %s28, 64
        %s4050 = smul.addr %s4049, 4
        %s4051 = scalar_lea.vmem %s4, %s4050
        %v4052 = vld [vmem:[%s4051] sm:$0xff]
        %v4053 = vld [vmem:[%s4051 + $0x8] sm:$0xff]
        %v4054 = vld [vmem:[%s4051 + $0x10] sm:$0xff]
        %v4055 = vld [vmem:[%s4051 + $0x18] sm:$0xff]
        %v4056 = vld [vmem:[%s4051 + $0x20] sm:$0xff]
        %v4057 = vld [vmem:[%s4051 + $0x28] sm:$0xff]
        %v4058 = vld [vmem:[%s4051 + $0x30] sm:$0xff]
        %v4059 = vld [vmem:[%s4051 + $0x38] sm:$0xff]
        %v4060 = vld [vmem:[%s4051 + $0x40] sm:$0xff]
        %v4061 = vld [vmem:[%s4051 + $0x48] sm:$0xff]
        %v4062 = vld [vmem:[%s4051 + $0x50] sm:$0xff]
        %v4063 = vld [vmem:[%s4051 + $0x58] sm:$0xff]
        %v4064 = vld [vmem:[%s4051 + $0x60] sm:$0xff]
        %v4065 = vld [vmem:[%s4051 + $0x68] sm:$0xff]
        %v4066 = vld [vmem:[%s4051 + $0x70] sm:$0xff]
        %v4067 = vld [vmem:[%s4051 + $0x78] sm:$0xff]
        %v4068 = vld [vmem:[%s4051 + $0x80] sm:$0xff]
        %v4069 = vld [vmem:[%s4051 + $0x88] sm:$0xff]
        %v4070 = vld [vmem:[%s4051 + $0x90] sm:$0xff]
        %v4071 = vld [vmem:[%s4051 + $0x98] sm:$0xff]
        %v4072 = vld [vmem:[%s4051 + $0xa0] sm:$0xff]
        %v4073 = vld [vmem:[%s4051 + $0xa8] sm:$0xff]
        %v4074 = vld [vmem:[%s4051 + $0xb0] sm:$0xff]
        %v4075 = vld [vmem:[%s4051 + $0xb8] sm:$0xff]
        %v4076 = vld [vmem:[%s4051 + $0xc0] sm:$0xff]
        %v4077 = vld [vmem:[%s4051 + $0xc8] sm:$0xff]
        %v4078 = vld [vmem:[%s4051 + $0xd0] sm:$0xff]
        %v4079 = vld [vmem:[%s4051 + $0xd8] sm:$0xff]
        %v4080 = vld [vmem:[%s4051 + $0xe0] sm:$0xff]
        %v4081 = vld [vmem:[%s4051 + $0xe8] sm:$0xff]
        %v4082 = vld [vmem:[%s4051 + $0xf0] sm:$0xff]
        %v4083 = vld [vmem:[%s4051 + $0xf8] sm:$0xff]
        %v4116 = vunpack.c.l.b16 %v4052
        %v4117 = vunpack.c.h.b16 %v4052
        %v4118 = vunpack.c.l.b16 %v4053
        %v4119 = vunpack.c.h.b16 %v4053
        %v4120 = vunpack.c.l.b16 %v4054
        %v4121 = vunpack.c.h.b16 %v4054
        %v4122 = vunpack.c.l.b16 %v4055
        %v4123 = vunpack.c.h.b16 %v4055
        %v4124 = vunpack.c.l.b16 %v4056
        %v4125 = vunpack.c.h.b16 %v4056
        %v4126 = vunpack.c.l.b16 %v4057
        %v4127 = vunpack.c.h.b16 %v4057
        %v4128 = vunpack.c.l.b16 %v4058
        %v4129 = vunpack.c.h.b16 %v4058
        %v4130 = vunpack.c.l.b16 %v4059
        %v4131 = vunpack.c.h.b16 %v4059
        %v4132 = vunpack.c.l.b16 %v4060
        %v4133 = vunpack.c.h.b16 %v4060
        %v4134 = vunpack.c.l.b16 %v4061
        %v4135 = vunpack.c.h.b16 %v4061
        %v4136 = vunpack.c.l.b16 %v4062
        %v4137 = vunpack.c.h.b16 %v4062
        %v4138 = vunpack.c.l.b16 %v4063
        %v4139 = vunpack.c.h.b16 %v4063
        %v4140 = vunpack.c.l.b16 %v4064
        %v4141 = vunpack.c.h.b16 %v4064
        %v4142 = vunpack.c.l.b16 %v4065
        %v4143 = vunpack.c.h.b16 %v4065
        %v4144 = vunpack.c.l.b16 %v4066
        %v4145 = vunpack.c.h.b16 %v4066
        %v4146 = vunpack.c.l.b16 %v4067
        %v4147 = vunpack.c.h.b16 %v4067
        %v4148 = vunpack.c.l.b16 %v4068
        %v4149 = vunpack.c.h.b16 %v4068
        %v4150 = vunpack.c.l.b16 %v4069
        %v4151 = vunpack.c.h.b16 %v4069
        %v4152 = vunpack.c.l.b16 %v4070
        %v4153 = vunpack.c.h.b16 %v4070
        %v4154 = vunpack.c.l.b16 %v4071
        %v4155 = vunpack.c.h.b16 %v4071
        %v4156 = vunpack.c.l.b16 %v4072
        %v4157 = vunpack.c.h.b16 %v4072
        %v4158 = vunpack.c.l.b16 %v4073
        %v4159 = vunpack.c.h.b16 %v4073
        %v4160 = vunpack.c.l.b16 %v4074
        %v4161 = vunpack.c.h.b16 %v4074
        %v4162 = vunpack.c.l.b16 %v4075
        %v4163 = vunpack.c.h.b16 %v4075
        %v4164 = vunpack.c.l.b16 %v4076
        %v4165 = vunpack.c.h.b16 %v4076
        %v4166 = vunpack.c.l.b16 %v4077
        %v4167 = vunpack.c.h.b16 %v4077
        %v4168 = vunpack.c.l.b16 %v4078
        %v4169 = vunpack.c.h.b16 %v4078
        %v4170 = vunpack.c.l.b16 %v4079
        %v4171 = vunpack.c.h.b16 %v4079
        %v4172 = vunpack.c.l.b16 %v4080
        %v4173 = vunpack.c.h.b16 %v4080
        %v4174 = vunpack.c.l.b16 %v4081
        %v4175 = vunpack.c.h.b16 %v4081
        %v4176 = vunpack.c.l.b16 %v4082
        %v4177 = vunpack.c.h.b16 %v4082
        %v4178 = vunpack.c.l.b16 %v4083
        %v4179 = vunpack.c.h.b16 %v4083
        %v4180 = vpack.c.b16 %v4118, %v4116
        %v4181 = vpack.c.b16 %v4119, %v4117
        %v4182 = vpack.c.b16 %v4122, %v4120
        %v4183 = vpack.c.b16 %v4123, %v4121
        %v4184 = vpack.c.b16 %v4126, %v4124
        %v4185 = vpack.c.b16 %v4127, %v4125
        %v4186 = vpack.c.b16 %v4130, %v4128
        %v4187 = vpack.c.b16 %v4131, %v4129
        %v4188 = vpack.c.b16 %v4134, %v4132
        %v4189 = vpack.c.b16 %v4135, %v4133
        %v4190 = vpack.c.b16 %v4138, %v4136
        %v4191 = vpack.c.b16 %v4139, %v4137
        %v4192 = vpack.c.b16 %v4142, %v4140
        %v4193 = vpack.c.b16 %v4143, %v4141
        %v4194 = vpack.c.b16 %v4146, %v4144
        %v4195 = vpack.c.b16 %v4147, %v4145
        %v4196 = vpack.c.b16 %v4150, %v4148
        %v4197 = vpack.c.b16 %v4151, %v4149
        %v4198 = vpack.c.b16 %v4154, %v4152
        %v4199 = vpack.c.b16 %v4155, %v4153
        %v4200 = vpack.c.b16 %v4158, %v4156
        %v4201 = vpack.c.b16 %v4159, %v4157
        %v4202 = vpack.c.b16 %v4162, %v4160
        %v4203 = vpack.c.b16 %v4163, %v4161
        %v4204 = vpack.c.b16 %v4166, %v4164
        %v4205 = vpack.c.b16 %v4167, %v4165
        %v4206 = vpack.c.b16 %v4170, %v4168
        %v4207 = vpack.c.b16 %v4171, %v4169
        %v4208 = vpack.c.b16 %v4174, %v4172
        %v4209 = vpack.c.b16 %v4175, %v4173
        %v4210 = vpack.c.b16 %v4178, %v4176
        %v4211 = vpack.c.b16 %v4179, %v4177
        %4244 = vmatprep.subr.bf16.mxu0 %v4181
        %4245 = vmatpush1.bf16.msra.mxu0 %v4180
        %4246 = vmatprep.subr.bf16.mxu0 %v4183
        %4247 = vmatpush1.bf16.msra.mxu0 %v4182
        %4248 = vmatprep.subr.bf16.mxu0 %v4185
        %4249 = vmatpush1.bf16.msra.mxu0 %v4184
        %4250 = vmatprep.subr.bf16.mxu0 %v4187
        %4251 = vmatpush1.bf16.msra.mxu0 %v4186
        %4252 = vmatprep.subr.bf16.mxu0 %v4189
        %4253 = vmatpush1.bf16.msra.mxu0 %v4188
        %4254 = vmatprep.subr.bf16.mxu0 %v4191
        %4255 = vmatpush1.bf16.msra.mxu0 %v4190
        %4256 = vmatprep.subr.bf16.mxu0 %v4193
        %4257 = vmatpush1.bf16.msra.mxu0 %v4192
        %4258 = vmatprep.subr.bf16.mxu0 %v4195
        %4259 = vmatpush1.bf16.msra.mxu0 %v4194
        %4260 = vmatprep.subr.bf16.mxu0 %v4197
        %4261 = vmatpush1.bf16.msra.mxu0 %v4196
        %4262 = vmatprep.subr.bf16.mxu0 %v4199
        %4263 = vmatpush1.bf16.msra.mxu0 %v4198
        %4264 = vmatprep.subr.bf16.mxu0 %v4201
        %4265 = vmatpush1.bf16.msra.mxu0 %v4200
        %4266 = vmatprep.subr.bf16.mxu0 %v4203
        %4267 = vmatpush1.bf16.msra.mxu0 %v4202
        %4268 = vmatprep.subr.bf16.mxu0 %v4205
        %4269 = vmatpush1.bf16.msra.mxu0 %v4204
        %4270 = vmatprep.subr.bf16.mxu0 %v4207
        %4271 = vmatpush1.bf16.msra.mxu0 %v4206
        %4272 = vmatprep.subr.bf16.mxu0 %v4209
        %4273 = vmatpush1.bf16.msra.mxu0 %v4208
        %4274 = vmatprep.subr.bf16.mxu0 %v4211
        %4275 = vmatpush1.bf16.msra.mxu0 %v4210
        %4276 = vmatprep.mubr.bf16.mxu0 %v4034
        %4277 = vmatmul.mubr.bf16.gmra.mrb[0].mxu0 %v4033
        %v4278 = vpop.f32.mrb[0].mxu0
        %v4279 = vadd.f32 0.0, %v4278
        %v4280 = vpop.f32.mrb[0].mxu0
        %v4281 = vadd.f32 0.0, %v4280
        %v4282 = vpop.f32.mrb[0].mxu0
        %v4283 = vadd.f32 0.0, %v4282
        %v4284 = vpop.f32.mrb[0].mxu0
        %v4285 = vadd.f32 0.0, %v4284
        %4286 = vmatprep.mubr.bf16.mxu0 %v4036
        %4287 = vmatmul.mubr.bf16.gmra.mrb[0].mxu0 %v4035
        %v4288 = vpop.f32.mrb[0].mxu0
        %v4289 = vadd.f32 0.0, %v4288
        %v4290 = vpop.f32.mrb[0].mxu0
        %v4291 = vadd.f32 0.0, %v4290
        %v4292 = vpop.f32.mrb[0].mxu0
        %v4293 = vadd.f32 0.0, %v4292
        %v4294 = vpop.f32.mrb[0].mxu0
        %v4295 = vadd.f32 0.0, %v4294
        %4296 = vmatprep.mubr.bf16.mxu0 %v4038
        %4297 = vmatmul.mubr.bf16.gmra.mrb[0].mxu0 %v4037
        %v4298 = vpop.f32.mrb[0].mxu0
        %v4299 = vadd.f32 0.0, %v4298
        %v4300 = vpop.f32.mrb[0].mxu0
        %v4301 = vadd.f32 0.0, %v4300
        %v4302 = vpop.f32.mrb[0].mxu0
        %v4303 = vadd.f32 0.0, %v4302
        %v4304 = vpop.f32.mrb[0].mxu0
        %v4305 = vadd.f32 0.0, %v4304
        %4306 = vmatprep.mubr.bf16.mxu0 %v4040
        %4307 = vmatmul.mubr.bf16.gmra.mrb[0].mxu0 %v4039
        %v4308 = vpop.f32.mrb[0].mxu0
        %v4309 = vadd.f32 0.0, %v4308
        %v4310 = vpop.f32.mrb[0].mxu0
        %v4311 = vadd.f32 0.0, %v4310
        %v4312 = vpop.f32.mrb[0].mxu0
        %v4313 = vadd.f32 0.0, %v4312
        %v4314 = vpop.f32.mrb[0].mxu0
        %v4315 = vadd.f32 0.0, %v4314
        %4316 = vmatprep.mubr.bf16.mxu0 %v4042
        %4317 = vmatmul.mubr.bf16.gmra.mrb[0].mxu0 %v4041
        %v4318 = vpop.f32.mrb[0].mxu0
        %v4319 = vadd.f32 0.0, %v4318
        %v4320 = vpop.f32.mrb[0].mxu0
        %v4321 = vadd.f32 0.0, %v4320
        %v4322 = vpop.f32.mrb[0].mxu0
        %v4323 = vadd.f32 0.0, %v4322
        %v4324 = vpop.f32.mrb[0].mxu0
        %v4325 = vadd.f32 0.0, %v4324
        %4326 = vmatprep.mubr.bf16.mxu0 %v4044
        %4327 = vmatmul.mubr.bf16.gmra.mrb[0].mxu0 %v4043
        %v4328 = vpop.f32.mrb[0].mxu0
        %v4329 = vadd.f32 0.0, %v4328
        %v4330 = vpop.f32.mrb[0].mxu0
        %v4331 = vadd.f32 0.0, %v4330
        %v4332 = vpop.f32.mrb[0].mxu0
        %v4333 = vadd.f32 0.0, %v4332
        %v4334 = vpop.f32.mrb[0].mxu0
        %v4335 = vadd.f32 0.0, %v4334
        %4336 = vmatprep.mubr.bf16.mxu0 %v4046
        %4337 = vmatmul.mubr.bf16.gmra.mrb[0].mxu0 %v4045
        %v4338 = vpop.f32.mrb[0].mxu0
        %v4339 = vadd.f32 0.0, %v4338
        %v4340 = vpop.f32.mrb[0].mxu0
        %v4341 = vadd.f32 0.0, %v4340
        %v4342 = vpop.f32.mrb[0].mxu0
        %v4343 = vadd.f32 0.0, %v4342
        %v4344 = vpop.f32.mrb[0].mxu0
        %v4345 = vadd.f32 0.0, %v4344
        %4346 = vmatprep.mubr.bf16.mxu0 %v4048
        %4347 = vmatmul.mubr.bf16.gmra.mrb[0].mxu0 %v4047
        %v4348 = vpop.f32.mrb[0].mxu0
        %v4349 = vadd.f32 0.0, %v4348
        %v4350 = vpop.f32.mrb[0].mxu0
        %v4351 = vadd.f32 0.0, %v4350
        %v4352 = vpop.f32.mrb[0].mxu0
        %v4353 = vadd.f32 0.0, %v4352
        %v4354 = vpop.f32.mrb[0].mxu0
        %v4355 = vadd.f32 0.0, %v4354
        %4356 = vdwg.mxu0
        %v4357 = vadd.f32 %v774, %v4279
        %v4358 = vadd.f32 %v775, %v4281
        %v4359 = vadd.f32 %v776, %v4283
        %v4360 = vadd.f32 %v777, %v4285
        %v4361 = vadd.f32 %v778, %v4289
        %v4362 = vadd.f32 %v779, %v4291
        %v4363 = vadd.f32 %v780, %v4293
        %v4364 = vadd.f32 %v781, %v4295
        %v4365 = vadd.f32 %v782, %v4299
        %v4366 = vadd.f32 %v783, %v4301
        %v4367 = vadd.f32 %v784, %v4303
        %v4368 = vadd.f32 %v785, %v4305
        %v4369 = vadd.f32 %v786, %v4309
        %v4370 = vadd.f32 %v787, %v4311
        %v4371 = vadd.f32 %v788, %v4313
        %v4372 = vadd.f32 %v789, %v4315
        %v4373 = vadd.f32 %v790, %v4319
        %v4374 = vadd.f32 %v791, %v4321
        %v4375 = vadd.f32 %v792, %v4323
        %v4376 = vadd.f32 %v793, %v4325
        %v4377 = vadd.f32 %v794, %v4329
        %v4378 = vadd.f32 %v795, %v4331
        %v4379 = vadd.f32 %v796, %v4333
        %v4380 = vadd.f32 %v797, %v4335
        %v4381 = vadd.f32 %v798, %v4339
        %v4382 = vadd.f32 %v799, %v4341
        %v4383 = vadd.f32 %v800, %v4343
        %v4384 = vadd.f32 %v801, %v4345
        %v4385 = vadd.f32 %v802, %v4349
        %v4386 = vadd.f32 %v803, %v4351
        %v4387 = vadd.f32 %v804, %v4353
        %v4388 = vadd.f32 %v805, %v4355
        %v4389 = vlaneseq
        %v4390 = vshrl.u32 %v4389, 7
        %v4391 = vsub.s32 4, %v4390
        %v4392 = vrot.slane %v809, %v4391
        %v4393 = vlaneseq
        %v4394 = vshrl.u32 %v4393, 7
        %v4395 = vsub.s32 4, %v4394
        %v4396 = vrot.slane %v810, %v4395
        %v4397 = vadd.f32 %v4357, %v4392
        %v4398 = vadd.f32 %v4358, %v4396
        %v4399 = vadd.f32 %v4359, %v4392
        %v4400 = vadd.f32 %v4360, %v4396
        %v4401 = vadd.f32 %v4361, %v4392
        %v4402 = vadd.f32 %v4362, %v4396
        %v4403 = vadd.f32 %v4363, %v4392
        %v4404 = vadd.f32 %v4364, %v4396
        %v4405 = vadd.f32 %v4365, %v4392
        %v4406 = vadd.f32 %v4366, %v4396
        %v4407 = vadd.f32 %v4367, %v4392
        %v4408 = vadd.f32 %v4368, %v4396
        %v4409 = vadd.f32 %v4369, %v4392
        %v4410 = vadd.f32 %v4370, %v4396
        %v4411 = vadd.f32 %v4371, %v4392
        %v4412 = vadd.f32 %v4372, %v4396
        %v4413 = vadd.f32 %v4373, %v4392
        %v4414 = vadd.f32 %v4374, %v4396
        %v4415 = vadd.f32 %v4375, %v4392
        %v4416 = vadd.f32 %v4376, %v4396
        %v4417 = vadd.f32 %v4377, %v4392
        %v4418 = vadd.f32 %v4378, %v4396
        %v4419 = vadd.f32 %v4379, %v4392
        %v4420 = vadd.f32 %v4380, %v4396
        %v4421 = vadd.f32 %v4381, %v4392
        %v4422 = vadd.f32 %v4382, %v4396
        %v4423 = vadd.f32 %v4383, %v4392
        %v4424 = vadd.f32 %v4384, %v4396
        %v4425 = vadd.f32 %v4385, %v4392
        %v4426 = vadd.f32 %v4386, %v4396
        %v4427 = vadd.f32 %v4387, %v4392
        %v4428 = vadd.f32 %v4388, %v4396
        %v4429 = vadd.f32 %v4397, %v4398
        %4430 = vadd.xlane.f32.xlu0 %v4429
        %v4431 = vpop.xlane.xlu0 %4430
        %v4432 = vadd.f32 %v4399, %v4400
        %4433 = vadd.xlane.f32.xlu0 %v4432
        %v4434 = vpop.xlane.xlu0 %4433
        %v4435 = vadd.f32 %v4401, %v4402
        %4436 = vadd.xlane.f32.xlu0 %v4435
        %v4437 = vpop.xlane.xlu0 %4436
        %v4438 = vadd.f32 %v4403, %v4404
        %4439 = vadd.xlane.f32.xlu0 %v4438
        %v4440 = vpop.xlane.xlu0 %4439
        %v4441 = vadd.f32 %v4405, %v4406
        %4442 = vadd.xlane.f32.xlu0 %v4441
        %v4443 = vpop.xlane.xlu0 %4442
        %v4444 = vadd.f32 %v4407, %v4408
        %4445 = vadd.xlane.f32.xlu0 %v4444
        %v4446 = vpop.xlane.xlu0 %4445
        %v4447 = vadd.f32 %v4409, %v4410
        %4448 = vadd.xlane.f32.xlu0 %v4447
        %v4449 = vpop.xlane.xlu0 %4448
        %v4450 = vadd.f32 %v4411, %v4412
        %4451 = vadd.xlane.f32.xlu0 %v4450
        %v4452 = vpop.xlane.xlu0 %4451
        %v4453 = vadd.f32 %v4413, %v4414
        %4454 = vadd.xlane.f32.xlu0 %v4453
        %v4455 = vpop.xlane.xlu0 %4454
        %v4456 = vadd.f32 %v4415, %v4416
        %4457 = vadd.xlane.f32.xlu0 %v4456
        %v4458 = vpop.xlane.xlu0 %4457
        %v4459 = vadd.f32 %v4417, %v4418
        %4460 = vadd.xlane.f32.xlu0 %v4459
        %v4461 = vpop.xlane.xlu0 %4460
        %v4462 = vadd.f32 %v4419, %v4420
        %4463 = vadd.xlane.f32.xlu0 %v4462
        %v4464 = vpop.xlane.xlu0 %4463
        %v4465 = vadd.f32 %v4421, %v4422
        %4466 = vadd.xlane.f32.xlu0 %v4465
        %v4467 = vpop.xlane.xlu0 %4466
        %v4468 = vadd.f32 %v4423, %v4424
        %4469 = vadd.xlane.f32.xlu0 %v4468
        %v4470 = vpop.xlane.xlu0 %4469
        %v4471 = vadd.f32 %v4425, %v4426
        %4472 = vadd.xlane.f32.xlu0 %v4471
        %v4473 = vpop.xlane.xlu0 %4472
        %v4474 = vadd.f32 %v4427, %v4428
        %4475 = vadd.xlane.f32.xlu0 %v4474
        %v4476 = vpop.xlane.xlu0 %4475
        %v4477 = vmul.f32 %v4431, %v861
        %v4478 = vmul.f32 %v4434, %v861
        %v4479 = vmul.f32 %v4437, %v861
        %v4480 = vmul.f32 %v4440, %v861
        %v4481 = vmul.f32 %v4443, %v861
        %v4482 = vmul.f32 %v4446, %v861
        %v4483 = vmul.f32 %v4449, %v861
        %v4484 = vmul.f32 %v4452, %v861
        %v4485 = vmul.f32 %v4455, %v861
        %v4486 = vmul.f32 %v4458, %v861
        %v4487 = vmul.f32 %v4461, %v861
        %v4488 = vmul.f32 %v4464, %v861
        %v4489 = vmul.f32 %v4467, %v861
        %v4490 = vmul.f32 %v4470, %v861
        %v4491 = vmul.f32 %v4473, %v861
        %v4492 = vmul.f32 %v4476, %v861
        %v4493 = vsub.f32 %v4397, %v4477
        %v4494 = vsub.f32 %v4398, %v4477
        %v4495 = vsub.f32 %v4399, %v4478
        %v4496 = vsub.f32 %v4400, %v4478
        %v4497 = vsub.f32 %v4401, %v4479
        %v4498 = vsub.f32 %v4402, %v4479
        %v4499 = vsub.f32 %v4403, %v4480
        %v4500 = vsub.f32 %v4404, %v4480
        %v4501 = vsub.f32 %v4405, %v4481
        %v4502 = vsub.f32 %v4406, %v4481
        %v4503 = vsub.f32 %v4407, %v4482
        %v4504 = vsub.f32 %v4408, %v4482
        %v4505 = vsub.f32 %v4409, %v4483
        %v4506 = vsub.f32 %v4410, %v4483
        %v4507 = vsub.f32 %v4411, %v4484
        %v4508 = vsub.f32 %v4412, %v4484
        %v4509 = vsub.f32 %v4413, %v4485
        %v4510 = vsub.f32 %v4414, %v4485
        %v4511 = vsub.f32 %v4415, %v4486
        %v4512 = vsub.f32 %v4416, %v4486
        %v4513 = vsub.f32 %v4417, %v4487
        %v4514 = vsub.f32 %v4418, %v4487
        %v4515 = vsub.f32 %v4419, %v4488
        %v4516 = vsub.f32 %v4420, %v4488
        %v4517 = vsub.f32 %v4421, %v4489
        %v4518 = vsub.f32 %v4422, %v4489
        %v4519 = vsub.f32 %v4423, %v4490
        %v4520 = vsub.f32 %v4424, %v4490
        %v4521 = vsub.f32 %v4425, %v4491
        %v4522 = vsub.f32 %v4426, %v4491
        %v4523 = vsub.f32 %v4427, %v4492
        %v4524 = vsub.f32 %v4428, %v4492
        %v4525 = vmul.f32 %v4493, %v4493
        %v4526 = vmul.f32 %v4494, %v4494
        %v4527 = vmul.f32 %v4495, %v4495
        %v4528 = vmul.f32 %v4496, %v4496
        %v4529 = vmul.f32 %v4497, %v4497
        %v4530 = vmul.f32 %v4498, %v4498
        %v4531 = vmul.f32 %v4499, %v4499
        %v4532 = vmul.f32 %v4500, %v4500
        %v4533 = vmul.f32 %v4501, %v4501
        %v4534 = vmul.f32 %v4502, %v4502
        %v4535 = vmul.f32 %v4503, %v4503
        %v4536 = vmul.f32 %v4504, %v4504
        %v4537 = vmul.f32 %v4505, %v4505
        %v4538 = vmul.f32 %v4506, %v4506
        %v4539 = vmul.f32 %v4507, %v4507
        %v4540 = vmul.f32 %v4508, %v4508
        %v4541 = vmul.f32 %v4509, %v4509
        %v4542 = vmul.f32 %v4510, %v4510
        %v4543 = vmul.f32 %v4511, %v4511
        %v4544 = vmul.f32 %v4512, %v4512
        %v4545 = vmul.f32 %v4513, %v4513
        %v4546 = vmul.f32 %v4514, %v4514
        %v4547 = vmul.f32 %v4515, %v4515
        %v4548 = vmul.f32 %v4516, %v4516
        %v4549 = vmul.f32 %v4517, %v4517
        %v4550 = vmul.f32 %v4518, %v4518
        %v4551 = vmul.f32 %v4519, %v4519
        %v4552 = vmul.f32 %v4520, %v4520
        %v4553 = vmul.f32 %v4521, %v4521
        %v4554 = vmul.f32 %v4522, %v4522
        %v4555 = vmul.f32 %v4523, %v4523
        %v4556 = vmul.f32 %v4524, %v4524
        %v4557 = vadd.f32 %v4525, %v4526
        %4558 = vadd.xlane.f32.xlu0 %v4557
        %v4559 = vpop.xlane.xlu0 %4558
        %v4560 = vadd.f32 %v4527, %v4528
        %4561 = vadd.xlane.f32.xlu0 %v4560
        %v4562 = vpop.xlane.xlu0 %4561
        %v4563 = vadd.f32 %v4529, %v4530
        %4564 = vadd.xlane.f32.xlu0 %v4563
        %v4565 = vpop.xlane.xlu0 %4564
        %v4566 = vadd.f32 %v4531, %v4532
        %4567 = vadd.xlane.f32.xlu0 %v4566
        %v4568 = vpop.xlane.xlu0 %4567
        %v4569 = vadd.f32 %v4533, %v4534
        %4570 = vadd.xlane.f32.xlu0 %v4569
        %v4571 = vpop.xlane.xlu0 %4570
        %v4572 = vadd.f32 %v4535, %v4536
        %4573 = vadd.xlane.f32.xlu0 %v4572
        %v4574 = vpop.xlane.xlu0 %4573
        %v4575 = vadd.f32 %v4537, %v4538
        %4576 = vadd.xlane.f32.xlu0 %v4575
        %v4577 = vpop.xlane.xlu0 %4576
        %v4578 = vadd.f32 %v4539, %v4540
        %4579 = vadd.xlane.f32.xlu0 %v4578
        %v4580 = vpop.xlane.xlu0 %4579
        %v4581 = vadd.f32 %v4541, %v4542
        %4582 = vadd.xlane.f32.xlu0 %v4581
        %v4583 = vpop.xlane.xlu0 %4582
        %v4584 = vadd.f32 %v4543, %v4544
        %4585 = vadd.xlane.f32.xlu0 %v4584
        %v4586 = vpop.xlane.xlu0 %4585
        %v4587 = vadd.f32 %v4545, %v4546
        %4588 = vadd.xlane.f32.xlu0 %v4587
        %v4589 = vpop.xlane.xlu0 %4588
        %v4590 = vadd.f32 %v4547, %v4548
        %4591 = vadd.xlane.f32.xlu0 %v4590
        %v4592 = vpop.xlane.xlu0 %4591
        %v4593 = vadd.f32 %v4549, %v4550
        %4594 = vadd.xlane.f32.xlu0 %v4593
        %v4595 = vpop.xlane.xlu0 %4594
        %v4596 = vadd.f32 %v4551, %v4552
        %4597 = vadd.xlane.f32.xlu0 %v4596
        %v4598 = vpop.xlane.xlu0 %4597
        %v4599 = vadd.f32 %v4553, %v4554
        %4600 = vadd.xlane.f32.xlu0 %v4599
        %v4601 = vpop.xlane.xlu0 %4600
        %v4602 = vadd.f32 %v4555, %v4556
        %4603 = vadd.xlane.f32.xlu0 %v4602
        %v4604 = vpop.xlane.xlu0 %4603
        %v4605 = vmul.f32 %v4559, %v861
        %v4606 = vmul.f32 %v4562, %v861
        %v4607 = vmul.f32 %v4565, %v861
        %v4608 = vmul.f32 %v4568, %v861
        %v4609 = vmul.f32 %v4571, %v861
        %v4610 = vmul.f32 %v4574, %v861
        %v4611 = vmul.f32 %v4577, %v861
        %v4612 = vmul.f32 %v4580, %v861
        %v4613 = vmul.f32 %v4583, %v861
        %v4614 = vmul.f32 %v4586, %v861
        %v4615 = vmul.f32 %v4589, %v861
        %v4616 = vmul.f32 %v4592, %v861
        %v4617 = vmul.f32 %v4595, %v861
        %v4618 = vmul.f32 %v4598, %v861
        %v4619 = vmul.f32 %v4601, %v861
        %v4620 = vmul.f32 %v4604, %v861
        %v4621 = vadd.f32 %v4605, 1e-05
        %v4622 = vadd.f32 %v4606, 1e-05
        %v4623 = vadd.f32 %v4607, 1e-05
        %v4624 = vadd.f32 %v4608, 1e-05
        %v4625 = vadd.f32 %v4609, 1e-05
        %v4626 = vadd.f32 %v4610, 1e-05
        %v4627 = vadd.f32 %v4611, 1e-05
        %v4628 = vadd.f32 %v4612, 1e-05
        %v4629 = vadd.f32 %v4613, 1e-05
        %v4630 = vadd.f32 %v4614, 1e-05
        %v4631 = vadd.f32 %v4615, 1e-05
        %v4632 = vadd.f32 %v4616, 1e-05
        %v4633 = vadd.f32 %v4617, 1e-05
        %v4634 = vadd.f32 %v4618, 1e-05
        %v4635 = vadd.f32 %v4619, 1e-05
        %v4636 = vadd.f32 %v4620, 1e-05
        %v4637 = vrsqrt.pop %v4621
        %v4638 = vrsqrt.pop %v4622
        %v4639 = vrsqrt.pop %v4623
        %v4640 = vrsqrt.pop %v4624
        %v4641 = vrsqrt.pop %v4625
        %v4642 = vrsqrt.pop %v4626
        %v4643 = vrsqrt.pop %v4627
        %v4644 = vrsqrt.pop %v4628
        %v4645 = vrsqrt.pop %v4629
        %v4646 = vrsqrt.pop %v4630
        %v4647 = vrsqrt.pop %v4631
        %v4648 = vrsqrt.pop %v4632
        %v4649 = vrsqrt.pop %v4633
        %v4650 = vrsqrt.pop %v4634
        %v4651 = vrsqrt.pop %v4635
        %v4652 = vrsqrt.pop %v4636
        %v4653 = vmul.f32 %v4493, %v4637
        %v4654 = vmul.f32 %v4494, %v4637
        %v4655 = vmul.f32 %v4495, %v4638
        %v4656 = vmul.f32 %v4496, %v4638
        %v4657 = vmul.f32 %v4497, %v4639
        %v4658 = vmul.f32 %v4498, %v4639
        %v4659 = vmul.f32 %v4499, %v4640
        %v4660 = vmul.f32 %v4500, %v4640
        %v4661 = vmul.f32 %v4501, %v4641
        %v4662 = vmul.f32 %v4502, %v4641
        %v4663 = vmul.f32 %v4503, %v4642
        %v4664 = vmul.f32 %v4504, %v4642
        %v4665 = vmul.f32 %v4505, %v4643
        %v4666 = vmul.f32 %v4506, %v4643
        %v4667 = vmul.f32 %v4507, %v4644
        %v4668 = vmul.f32 %v4508, %v4644
        %v4669 = vmul.f32 %v4509, %v4645
        %v4670 = vmul.f32 %v4510, %v4645
        %v4671 = vmul.f32 %v4511, %v4646
        %v4672 = vmul.f32 %v4512, %v4646
        %v4673 = vmul.f32 %v4513, %v4647
        %v4674 = vmul.f32 %v4514, %v4647
        %v4675 = vmul.f32 %v4515, %v4648
        %v4676 = vmul.f32 %v4516, %v4648
        %v4677 = vmul.f32 %v4517, %v4649
        %v4678 = vmul.f32 %v4518, %v4649
        %v4679 = vmul.f32 %v4519, %v4650
        %v4680 = vmul.f32 %v4520, %v4650
        %v4681 = vmul.f32 %v4521, %v4651
        %v4682 = vmul.f32 %v4522, %v4651
        %v4683 = vmul.f32 %v4523, %v4652
        %v4684 = vmul.f32 %v4524, %v4652
        %v4685 = vlaneseq
        %v4686 = vshrl.u32 %v4685, 7
        %v4687 = vsub.s32 2, %v4686
        %v4688 = vrot.slane %v809, %v4687
        %v4689 = vlaneseq
        %v4690 = vshrl.u32 %v4689, 7
        %v4691 = vsub.s32 2, %v4690
        %v4692 = vrot.slane %v810, %v4691
        %v4693 = vmul.f32 %v4653, %v4688
        %v4694 = vmul.f32 %v4654, %v4692
        %v4695 = vmul.f32 %v4655, %v4688
        %v4696 = vmul.f32 %v4656, %v4692
        %v4697 = vmul.f32 %v4657, %v4688
        %v4698 = vmul.f32 %v4658, %v4692
        %v4699 = vmul.f32 %v4659, %v4688
        %v4700 = vmul.f32 %v4660, %v4692
        %v4701 = vmul.f32 %v4661, %v4688
        %v4702 = vmul.f32 %v4662, %v4692
        %v4703 = vmul.f32 %v4663, %v4688
        %v4704 = vmul.f32 %v4664, %v4692
        %v4705 = vmul.f32 %v4665, %v4688
        %v4706 = vmul.f32 %v4666, %v4692
        %v4707 = vmul.f32 %v4667, %v4688
        %v4708 = vmul.f32 %v4668, %v4692
        %v4709 = vmul.f32 %v4669, %v4688
        %v4710 = vmul.f32 %v4670, %v4692
        %v4711 = vmul.f32 %v4671, %v4688
        %v4712 = vmul.f32 %v4672, %v4692
        %v4713 = vmul.f32 %v4673, %v4688
        %v4714 = vmul.f32 %v4674, %v4692
        %v4715 = vmul.f32 %v4675, %v4688
        %v4716 = vmul.f32 %v4676, %v4692
        %v4717 = vmul.f32 %v4677, %v4688
        %v4718 = vmul.f32 %v4678, %v4692
        %v4719 = vmul.f32 %v4679, %v4688
        %v4720 = vmul.f32 %v4680, %v4692
        %v4721 = vmul.f32 %v4681, %v4688
        %v4722 = vmul.f32 %v4682, %v4692
        %v4723 = vmul.f32 %v4683, %v4688
        %v4724 = vmul.f32 %v4684, %v4692
        %v4725 = vlaneseq
        %v4726 = vshrl.u32 %v4725, 7
        %v4727 = vsub.s32 3, %v4726
        %v4728 = vrot.slane %v809, %v4727
        %v4729 = vlaneseq
        %v4730 = vshrl.u32 %v4729, 7
        %v4731 = vsub.s32 3, %v4730
        %v4732 = vrot.slane %v810, %v4731
        %v4733 = vadd.f32 %v4693, %v4728
        %v4734 = vadd.f32 %v4694, %v4732
        %v4735 = vadd.f32 %v4695, %v4728
        %v4736 = vadd.f32 %v4696, %v4732
        %v4737 = vadd.f32 %v4697, %v4728
        %v4738 = vadd.f32 %v4698, %v4732
        %v4739 = vadd.f32 %v4699, %v4728
        %v4740 = vadd.f32 %v4700, %v4732
        %v4741 = vadd.f32 %v4701, %v4728
        %v4742 = vadd.f32 %v4702, %v4732
        %v4743 = vadd.f32 %v4703, %v4728
        %v4744 = vadd.f32 %v4704, %v4732
        %v4745 = vadd.f32 %v4705, %v4728
        %v4746 = vadd.f32 %v4706, %v4732
        %v4747 = vadd.f32 %v4707, %v4728
        %v4748 = vadd.f32 %v4708, %v4732
        %v4749 = vadd.f32 %v4709, %v4728
        %v4750 = vadd.f32 %v4710, %v4732
        %v4751 = vadd.f32 %v4711, %v4728
        %v4752 = vadd.f32 %v4712, %v4732
        %v4753 = vadd.f32 %v4713, %v4728
        %v4754 = vadd.f32 %v4714, %v4732
        %v4755 = vadd.f32 %v4715, %v4728
        %v4756 = vadd.f32 %v4716, %v4732
        %v4757 = vadd.f32 %v4717, %v4728
        %v4758 = vadd.f32 %v4718, %v4732
        %v4759 = vadd.f32 %v4719, %v4728
        %v4760 = vadd.f32 %v4720, %v4732
        %v4761 = vadd.f32 %v4721, %v4728
        %v4762 = vadd.f32 %v4722, %v4732
        %v4763 = vadd.f32 %v4723, %v4728
        %v4764 = vadd.f32 %v4724, %v4732
        %v4765 = vpack.c.bf16 %v4735, %v4733
        %v4766 = vpack.c.bf16 %v4736, %v4734
        %v4767 = vpack.c.bf16 %v4739, %v4737
        %v4768 = vpack.c.bf16 %v4740, %v4738
        %v4769 = vpack.c.bf16 %v4743, %v4741
        %v4770 = vpack.c.bf16 %v4744, %v4742
        %v4771 = vpack.c.bf16 %v4747, %v4745
        %v4772 = vpack.c.bf16 %v4748, %v4746
        %v4773 = vpack.c.bf16 %v4751, %v4749
        %v4774 = vpack.c.bf16 %v4752, %v4750
        %v4775 = vpack.c.bf16 %v4755, %v4753
        %v4776 = vpack.c.bf16 %v4756, %v4754
        %v4777 = vpack.c.bf16 %v4759, %v4757
        %v4778 = vpack.c.bf16 %v4760, %v4758
        %v4779 = vpack.c.bf16 %v4763, %v4761
        %v4780 = vpack.c.bf16 %v4764, %v4762
        %s4781 = smul.u32 %s28, 128
        %s4782 = smul.addr %s4781, 4
        %s4783 = scalar_lea.vmem [#allocation3], %s4782
        %v4784 = vld [vmem:[%s4783] sm:$0xff]
        %v4785 = vld [vmem:[%s4783 + $0x8] sm:$0xff]
        %v4786 = vld [vmem:[%s4783 + $0x10] sm:$0xff]
        %v4787 = vld [vmem:[%s4783 + $0x18] sm:$0xff]
        %v4788 = vld [vmem:[%s4783 + $0x20] sm:$0xff]
        %v4789 = vld [vmem:[%s4783 + $0x28] sm:$0xff]
        %v4790 = vld [vmem:[%s4783 + $0x30] sm:$0xff]
        %v4791 = vld [vmem:[%s4783 + $0x38] sm:$0xff]
        %v4792 = vld [vmem:[%s4783 + $0x40] sm:$0xff]
        %v4793 = vld [vmem:[%s4783 + $0x48] sm:$0xff]
        %v4794 = vld [vmem:[%s4783 + $0x50] sm:$0xff]
        %v4795 = vld [vmem:[%s4783 + $0x58] sm:$0xff]
        %v4796 = vld [vmem:[%s4783 + $0x60] sm:$0xff]
        %v4797 = vld [vmem:[%s4783 + $0x68] sm:$0xff]
        %v4798 = vld [vmem:[%s4783 + $0x70] sm:$0xff]
        %v4799 = vld [vmem:[%s4783 + $0x78] sm:$0xff]
        %v4800 = vld [vmem:[%s4783 + $0x80] sm:$0xff]
        %v4801 = vld [vmem:[%s4783 + $0x88] sm:$0xff]
        %v4802 = vld [vmem:[%s4783 + $0x90] sm:$0xff]
        %v4803 = vld [vmem:[%s4783 + $0x98] sm:$0xff]
        %v4804 = vld [vmem:[%s4783 + $0xa0] sm:$0xff]
        %v4805 = vld [vmem:[%s4783 + $0xa8] sm:$0xff]
        %v4806 = vld [vmem:[%s4783 + $0xb0] sm:$0xff]
        %v4807 = vld [vmem:[%s4783 + $0xb8] sm:$0xff]
        %v4808 = vld [vmem:[%s4783 + $0xc0] sm:$0xff]
        %v4809 = vld [vmem:[%s4783 + $0xc8] sm:$0xff]
        %v4810 = vld [vmem:[%s4783 + $0xd0] sm:$0xff]
        %v4811 = vld [vmem:[%s4783 + $0xd8] sm:$0xff]
        %v4812 = vld [vmem:[%s4783 + $0xe0] sm:$0xff]
        %v4813 = vld [vmem:[%s4783 + $0xe8] sm:$0xff]
        %v4814 = vld [vmem:[%s4783 + $0xf0] sm:$0xff]
        %v4815 = vld [vmem:[%s4783 + $0xf8] sm:$0xff]
        %v4816 = vld [vmem:[%s4783 + $0x100] sm:$0xff]
        %v4817 = vld [vmem:[%s4783 + $0x108] sm:$0xff]
        %v4818 = vld [vmem:[%s4783 + $0x110] sm:$0xff]
        %v4819 = vld [vmem:[%s4783 + $0x118] sm:$0xff]
        %v4820 = vld [vmem:[%s4783 + $0x120] sm:$0xff]
        %v4821 = vld [vmem:[%s4783 + $0x128] sm:$0xff]
        %v4822 = vld [vmem:[%s4783 + $0x130] sm:$0xff]
        %v4823 = vld [vmem:[%s4783 + $0x138] sm:$0xff]
        %v4824 = vld [vmem:[%s4783 + $0x140] sm:$0xff]
        %v4825 = vld [vmem:[%s4783 + $0x148] sm:$0xff]
        %v4826 = vld [vmem:[%s4783 + $0x150] sm:$0xff]
        %v4827 = vld [vmem:[%s4783 + $0x158] sm:$0xff]
        %v4828 = vld [vmem:[%s4783 + $0x160] sm:$0xff]
        %v4829 = vld [vmem:[%s4783 + $0x168] sm:$0xff]
        %v4830 = vld [vmem:[%s4783 + $0x170] sm:$0xff]
        %v4831 = vld [vmem:[%s4783 + $0x178] sm:$0xff]
        %v4832 = vld [vmem:[%s4783 + $0x180] sm:$0xff]
        %v4833 = vld [vmem:[%s4783 + $0x188] sm:$0xff]
        %v4834 = vld [vmem:[%s4783 + $0x190] sm:$0xff]
        %v4835 = vld [vmem:[%s4783 + $0x198] sm:$0xff]
        %v4836 = vld [vmem:[%s4783 + $0x1a0] sm:$0xff]
        %v4837 = vld [vmem:[%s4783 + $0x1a8] sm:$0xff]
        %v4838 = vld [vmem:[%s4783 + $0x1b0] sm:$0xff]
        %v4839 = vld [vmem:[%s4783 + $0x1b8] sm:$0xff]
        %v4840 = vld [vmem:[%s4783 + $0x1c0] sm:$0xff]
        %v4841 = vld [vmem:[%s4783 + $0x1c8] sm:$0xff]
        %v4842 = vld [vmem:[%s4783 + $0x1d0] sm:$0xff]
        %v4843 = vld [vmem:[%s4783 + $0x1d8] sm:$0xff]
        %v4844 = vld [vmem:[%s4783 + $0x1e0] sm:$0xff]
        %v4845 = vld [vmem:[%s4783 + $0x1e8] sm:$0xff]
        %v4846 = vld [vmem:[%s4783 + $0x1f0] sm:$0xff]
        %v4847 = vld [vmem:[%s4783 + $0x1f8] sm:$0xff]
        %v4848 = vlaneseq
        %v4849 = vshrl.u32 %v4848, 7
        %v4850 = vsub.s32 5, %v4849
        %v4851 = vrot.slane %v809, %v4850
        %v4852 = vlaneseq
        %v4853 = vshrl.u32 %v4852, 7
        %v4854 = vsub.s32 5, %v4853
        %v4855 = vrot.slane %v810, %v4854
        %v4856 = vlaneseq
        %v4857 = vshrl.u32 %v4856, 7
        %v4858 = vsub.s32 5, %v4857
        %v4859 = vrot.slane %v811, %v4858
        %v4860 = vlaneseq
        %v4861 = vshrl.u32 %v4860, 7
        %v4862 = vsub.s32 5, %v4861
        %v4863 = vrot.slane %v812, %v4862
        %v4928 = vunpack.c.l.b16 %v4784
        %v4929 = vunpack.c.h.b16 %v4784
        %v4930 = vunpack.c.l.b16 %v4785
        %v4931 = vunpack.c.h.b16 %v4785
        %v4932 = vunpack.c.l.b16 %v4786
        %v4933 = vunpack.c.h.b16 %v4786
        %v4934 = vunpack.c.l.b16 %v4787
        %v4935 = vunpack.c.h.b16 %v4787
        %v4936 = vunpack.c.l.b16 %v4788
        %v4937 = vunpack.c.h.b16 %v4788
        %v4938 = vunpack.c.l.b16 %v4789
        %v4939 = vunpack.c.h.b16 %v4789
        %v4940 = vunpack.c.l.b16 %v4790
        %v4941 = vunpack.c.h.b16 %v4790
        %v4942 = vunpack.c.l.b16 %v4791
        %v4943 = vunpack.c.h.b16 %v4791
        %v4944 = vunpack.c.l.b16 %v4792
        %v4945 = vunpack.c.h.b16 %v4792
        %v4946 = vunpack.c.l.b16 %v4793
        %v4947 = vunpack.c.h.b16 %v4793
        %v4948 = vunpack.c.l.b16 %v4794
        %v4949 = vunpack.c.h.b16 %v4794
        %v4950 = vunpack.c.l.b16 %v4795
        %v4951 = vunpack.c.h.b16 %v4795
        %v4952 = vunpack.c.l.b16 %v4796
        %v4953 = vunpack.c.h.b16 %v4796
        %v4954 = vunpack.c.l.b16 %v4797
        %v4955 = vunpack.c.h.b16 %v4797
        %v4956 = vunpack.c.l.b16 %v4798
        %v4957 = vunpack.c.h.b16 %v4798
        %v4958 = vunpack.c.l.b16 %v4799
        %v4959 = vunpack.c.h.b16 %v4799
        %v4960 = vunpack.c.l.b16 %v4800
        %v4961 = vunpack.c.h.b16 %v4800
        %v4962 = vunpack.c.l.b16 %v4801
        %v4963 = vunpack.c.h.b16 %v4801
        %v4964 = vunpack.c.l.b16 %v4802
        %v4965 = vunpack.c.h.b16 %v4802
        %v4966 = vunpack.c.l.b16 %v4803
        %v4967 = vunpack.c.h.b16 %v4803
        %v4968 = vunpack.c.l.b16 %v4804
        %v4969 = vunpack.c.h.b16 %v4804
        %v4970 = vunpack.c.l.b16 %v4805
        %v4971 = vunpack.c.h.b16 %v4805
        %v4972 = vunpack.c.l.b16 %v4806
        %v4973 = vunpack.c.h.b16 %v4806
        %v4974 = vunpack.c.l.b16 %v4807
        %v4975 = vunpack.c.h.b16 %v4807
        %v4976 = vunpack.c.l.b16 %v4808
        %v4977 = vunpack.c.h.b16 %v4808
        %v4978 = vunpack.c.l.b16 %v4809
        %v4979 = vunpack.c.h.b16 %v4809
        %v4980 = vunpack.c.l.b16 %v4810
        %v4981 = vunpack.c.h.b16 %v4810
        %v4982 = vunpack.c.l.b16 %v4811
        %v4983 = vunpack.c.h.b16 %v4811
        %v4984 = vunpack.c.l.b16 %v4812
        %v4985 = vunpack.c.h.b16 %v4812
        %v4986 = vunpack.c.l.b16 %v4813
        %v4987 = vunpack.c.h.b16 %v4813
        %v4988 = vunpack.c.l.b16 %v4814
        %v4989 = vunpack.c.h.b16 %v4814
        %v4990 = vunpack.c.l.b16 %v4815
        %v4991 = vunpack.c.h.b16 %v4815
        %v4992 = vunpack.c.l.b16 %v4816
        %v4993 = vunpack.c.h.b16 %v4816
        %v4994 = vunpack.c.l.b16 %v4817
        %v4995 = vunpack.c.h.b16 %v4817
        %v4996 = vunpack.c.l.b16 %v4818
        %v4997 = vunpack.c.h.b16 %v4818
        %v4998 = vunpack.c.l.b16 %v4819
        %v4999 = vunpack.c.h.b16 %v4819
        %v5000 = vunpack.c.l.b16 %v4820
        %v5001 = vunpack.c.h.b16 %v4820
        %v5002 = vunpack.c.l.b16 %v4821
        %v5003 = vunpack.c.h.b16 %v4821
        %v5004 = vunpack.c.l.b16 %v4822
        %v5005 = vunpack.c.h.b16 %v4822
        %v5006 = vunpack.c.l.b16 %v4823
        %v5007 = vunpack.c.h.b16 %v4823
        %v5008 = vunpack.c.l.b16 %v4824
        %v5009 = vunpack.c.h.b16 %v4824
        %v5010 = vunpack.c.l.b16 %v4825
        %v5011 = vunpack.c.h.b16 %v4825
        %v5012 = vunpack.c.l.b16 %v4826
        %v5013 = vunpack.c.h.b16 %v4826
        %v5014 = vunpack.c.l.b16 %v4827
        %v5015 = vunpack.c.h.b16 %v4827
        %v5016 = vunpack.c.l.b16 %v4828
        %v5017 = vunpack.c.h.b16 %v4828
        %v5018 = vunpack.c.l.b16 %v4829
        %v5019 = vunpack.c.h.b16 %v4829
        %v5020 = vunpack.c.l.b16 %v4830
        %v5021 = vunpack.c.h.b16 %v4830
        %v5022 = vunpack.c.l.b16 %v4831
        %v5023 = vunpack.c.h.b16 %v4831
        %v5024 = vunpack.c.l.b16 %v4832
        %v5025 = vunpack.c.h.b16 %v4832
        %v5026 = vunpack.c.l.b16 %v4833
        %v5027 = vunpack.c.h.b16 %v4833
        %v5028 = vunpack.c.l.b16 %v4834
        %v5029 = vunpack.c.h.b16 %v4834
        %v5030 = vunpack.c.l.b16 %v4835
        %v5031 = vunpack.c.h.b16 %v4835
        %v5032 = vunpack.c.l.b16 %v4836
        %v5033 = vunpack.c.h.b16 %v4836
        %v5034 = vunpack.c.l.b16 %v4837
        %v5035 = vunpack.c.h.b16 %v4837
        %v5036 = vunpack.c.l.b16 %v4838
        %v5037 = vunpack.c.h.b16 %v4838
        %v5038 = vunpack.c.l.b16 %v4839
        %v5039 = vunpack.c.h.b16 %v4839
        %v5040 = vunpack.c.l.b16 %v4840
        %v5041 = vunpack.c.h.b16 %v4840
        %v5042 = vunpack.c.l.b16 %v4841
        %v5043 = vunpack.c.h.b16 %v4841
        %v5044 = vunpack.c.l.b16 %v4842
        %v5045 = vunpack.c.h.b16 %v4842
        %v5046 = vunpack.c.l.b16 %v4843
        %v5047 = vunpack.c.h.b16 %v4843
        %v5048 = vunpack.c.l.b16 %v4844
        %v5049 = vunpack.c.h.b16 %v4844
        %v5050 = vunpack.c.l.b16 %v4845
        %v5051 = vunpack.c.h.b16 %v4845
        %v5052 = vunpack.c.l.b16 %v4846
        %v5053 = vunpack.c.h.b16 %v4846
        %v5054 = vunpack.c.l.b16 %v4847
        %v5055 = vunpack.c.h.b16 %v4847
        %v5056 = vpack.c.b16 %v4932, %v4928
        %v5057 = vpack.c.b16 %v4933, %v4929
        %v5058 = vpack.c.b16 %v4934, %v4930
        %v5059 = vpack.c.b16 %v4935, %v4931
        %v5060 = vpack.c.b16 %v4940, %v4936
        %v5061 = vpack.c.b16 %v4941, %v4937
        %v5062 = vpack.c.b16 %v4942, %v4938
        %v5063 = vpack.c.b16 %v4943, %v4939
        %v5064 = vpack.c.b16 %v4948, %v4944
        %v5065 = vpack.c.b16 %v4949, %v4945
        %v5066 = vpack.c.b16 %v4950, %v4946
        %v5067 = vpack.c.b16 %v4951, %v4947
        %v5068 = vpack.c.b16 %v4956, %v4952
        %v5069 = vpack.c.b16 %v4957, %v4953
        %v5070 = vpack.c.b16 %v4958, %v4954
        %v5071 = vpack.c.b16 %v4959, %v4955
        %v5072 = vpack.c.b16 %v4964, %v4960
        %v5073 = vpack.c.b16 %v4965, %v4961
        %v5074 = vpack.c.b16 %v4966, %v4962
        %v5075 = vpack.c.b16 %v4967, %v4963
        %v5076 = vpack.c.b16 %v4972, %v4968
        %v5077 = vpack.c.b16 %v4973, %v4969
        %v5078 = vpack.c.b16 %v4974, %v4970
        %v5079 = vpack.c.b16 %v4975, %v4971
        %v5080 = vpack.c.b16 %v4980, %v4976
        %v5081 = vpack.c.b16 %v4981, %v4977
        %v5082 = vpack.c.b16 %v4982, %v4978
        %v5083 = vpack.c.b16 %v4983, %v4979
        %v5084 = vpack.c.b16 %v4988, %v4984
        %v5085 = vpack.c.b16 %v4989, %v4985
        %v5086 = vpack.c.b16 %v4990, %v4986
        %v5087 = vpack.c.b16 %v4991, %v4987
        %v5088 = vpack.c.b16 %v4996, %v4992
        %v5089 = vpack.c.b16 %v4997, %v4993
        %v5090 = vpack.c.b16 %v4998, %v4994
        %v5091 = vpack.c.b16 %v4999, %v4995
        %v5092 = vpack.c.b16 %v5004, %v5000
        %v5093 = vpack.c.b16 %v5005, %v5001
        %v5094 = vpack.c.b16 %v5006, %v5002
        %v5095 = vpack.c.b16 %v5007, %v5003
        %v5096 = vpack.c.b16 %v5012, %v5008
        %v5097 = vpack.c.b16 %v5013, %v5009
        %v5098 = vpack.c.b16 %v5014, %v5010
        %v5099 = vpack.c.b16 %v5015, %v5011
        %v5100 = vpack.c.b16 %v5020, %v5016
        %v5101 = vpack.c.b16 %v5021, %v5017
        %v5102 = vpack.c.b16 %v5022, %v5018
        %v5103 = vpack.c.b16 %v5023, %v5019
        %v5104 = vpack.c.b16 %v5028, %v5024
        %v5105 = vpack.c.b16 %v5029, %v5025
        %v5106 = vpack.c.b16 %v5030, %v5026
        %v5107 = vpack.c.b16 %v5031, %v5027
        %v5108 = vpack.c.b16 %v5036, %v5032
        %v5109 = vpack.c.b16 %v5037, %v5033
        %v5110 = vpack.c.b16 %v5038, %v5034
        %v5111 = vpack.c.b16 %v5039, %v5035
        %v5112 = vpack.c.b16 %v5044, %v5040
        %v5113 = vpack.c.b16 %v5045, %v5041
        %v5114 = vpack.c.b16 %v5046, %v5042
        %v5115 = vpack.c.b16 %v5047, %v5043
        %v5116 = vpack.c.b16 %v5052, %v5048
        %v5117 = vpack.c.b16 %v5053, %v5049
        %v5118 = vpack.c.b16 %v5054, %v5050
        %v5119 = vpack.c.b16 %v5055, %v5051
        %5184 = vmatprep.subr.bf16.mxu0 %v5057
        %5185 = vmatpush1.bf16.msra.mxu0 %v5056
        %5186 = vmatprep.subr.bf16.mxu0 %v5061
        %5187 = vmatpush1.bf16.msra.mxu0 %v5060
        %5188 = vmatprep.subr.bf16.mxu0 %v5065
        %5189 = vmatpush1.bf16.msra.mxu0 %v5064
        %5190 = vmatprep.subr.bf16.mxu0 %v5069
        %5191 = vmatpush1.bf16.msra.mxu0 %v5068
        %5192 = vmatprep.subr.bf16.mxu0 %v5073
        %5193 = vmatpush1.bf16.msra.mxu0 %v5072
        %5194 = vmatprep.subr.bf16.mxu0 %v5077
        %5195 = vmatpush1.bf16.msra.mxu0 %v5076
        %5196 = vmatprep.subr.bf16.mxu0 %v5081
        %5197 = vmatpush1.bf16.msra.mxu0 %v5080
        %5198 = vmatprep.subr.bf16.mxu0 %v5085
        %5199 = vmatpush1.bf16.msra.mxu0 %v5084
        %5200 = vmatprep.subr.bf16.mxu0 %v5089
        %5201 = vmatpush1.bf16.msra.mxu0 %v5088
        %5202 = vmatprep.subr.bf16.mxu0 %v5093
        %5203 = vmatpush1.bf16.msra.mxu0 %v5092
        %5204 = vmatprep.subr.bf16.mxu0 %v5097
        %5205 = vmatpush1.bf16.msra.mxu0 %v5096
        %5206 = vmatprep.subr.bf16.mxu0 %v5101
        %5207 = vmatpush1.bf16.msra.mxu0 %v5100
        %5208 = vmatprep.subr.bf16.mxu0 %v5105
        %5209 = vmatpush1.bf16.msra.mxu0 %v5104
        %5210 = vmatprep.subr.bf16.mxu0 %v5109
        %5211 = vmatpush1.bf16.msra.mxu0 %v5108
        %5212 = vmatprep.subr.bf16.mxu0 %v5113
        %5213 = vmatpush1.bf16.msra.mxu0 %v5112
        %5214 = vmatprep.subr.bf16.mxu0 %v5117
        %5215 = vmatpush1.bf16.msra.mxu0 %v5116
        %5216 = vmatprep.mubr.bf16.mxu0 %v4766
        %5217 = vmatmul.mubr.bf16.gmra.mrb[0].mxu0 %v4765
        %v5218 = vpop.f32.mrb[0].mxu0
        %v5219 = vadd.f32 %v4851, %v5218
        %v5220 = vpop.f32.mrb[0].mxu0
        %v5221 = vadd.f32 %v4855, %v5220
        %v5222 = vpop.f32.mrb[0].mxu0
        %v5223 = vadd.f32 %v4851, %v5222
        %v5224 = vpop.f32.mrb[0].mxu0
        %v5225 = vadd.f32 %v4855, %v5224
        %5226 = vmatprep.mubr.bf16.mxu0 %v4768
        %5227 = vmatmul.mubr.bf16.gmra.mrb[0].mxu0 %v4767
        %v5228 = vpop.f32.mrb[0].mxu0
        %v5229 = vadd.f32 %v4851, %v5228
        %v5230 = vpop.f32.mrb[0].mxu0
        %v5231 = vadd.f32 %v4855, %v5230
        %v5232 = vpop.f32.mrb[0].mxu0
        %v5233 = vadd.f32 %v4851, %v5232
        %v5234 = vpop.f32.mrb[0].mxu0
        %v5235 = vadd.f32 %v4855, %v5234
        %5236 = vmatprep.mubr.bf16.mxu0 %v4770
        %5237 = vmatmul.mubr.bf16.gmra.mrb[0].mxu0 %v4769
        %v5238 = vpop.f32.mrb[0].mxu0
        %v5239 = vadd.f32 %v4851, %v5238
        %v5240 = vpop.f32.mrb[0].mxu0
        %v5241 = vadd.f32 %v4855, %v5240
        %v5242 = vpop.f32.mrb[0].mxu0
        %v5243 = vadd.f32 %v4851, %v5242
        %v5244 = vpop.f32.mrb[0].mxu0
        %v5245 = vadd.f32 %v4855, %v5244
        %5246 = vmatprep.mubr.bf16.mxu0 %v4772
        %5247 = vmatmul.mubr.bf16.gmra.mrb[0].mxu0 %v4771
        %v5248 = vpop.f32.mrb[0].mxu0
        %v5249 = vadd.f32 %v4851, %v5248
        %v5250 = vpop.f32.mrb[0].mxu0
        %v5251 = vadd.f32 %v4855, %v5250
        %v5252 = vpop.f32.mrb[0].mxu0
        %v5253 = vadd.f32 %v4851, %v5252
        %v5254 = vpop.f32.mrb[0].mxu0
        %v5255 = vadd.f32 %v4855, %v5254
        %5256 = vmatprep.mubr.bf16.mxu0 %v4774
        %5257 = vmatmul.mubr.bf16.gmra.mrb[0].mxu0 %v4773
        %v5258 = vpop.f32.mrb[0].mxu0
        %v5259 = vadd.f32 %v4851, %v5258
        %v5260 = vpop.f32.mrb[0].mxu0
        %v5261 = vadd.f32 %v4855, %v5260
        %v5262 = vpop.f32.mrb[0].mxu0
        %v5263 = vadd.f32 %v4851, %v5262
        %v5264 = vpop.f32.mrb[0].mxu0
        %v5265 = vadd.f32 %v4855, %v5264
        %5266 = vmatprep.mubr.bf16.mxu0 %v4776
        %5267 = vmatmul.mubr.bf16.gmra.mrb[0].mxu0 %v4775
        %v5268 = vpop.f32.mrb[0].mxu0
        %v5269 = vadd.f32 %v4851, %v5268
        %v5270 = vpop.f32.mrb[0].mxu0
        %v5271 = vadd.f32 %v4855, %v5270
        %v5272 = vpop.f32.mrb[0].mxu0
        %v5273 = vadd.f32 %v4851, %v5272
        %v5274 = vpop.f32.mrb[0].mxu0
        %v5275 = vadd.f32 %v4855, %v5274
        %5276 = vmatprep.mubr.bf16.mxu0 %v4778
        %5277 = vmatmul.mubr.bf16.gmra.mrb[0].mxu0 %v4777
        %v5278 = vpop.f32.mrb[0].mxu0
        %v5279 = vadd.f32 %v4851, %v5278
        %v5280 = vpop.f32.mrb[0].mxu0
        %v5281 = vadd.f32 %v4855, %v5280
        %v5282 = vpop.f32.mrb[0].mxu0
        %v5283 = vadd.f32 %v4851, %v5282
        %v5284 = vpop.f32.mrb[0].mxu0
        %v5285 = vadd.f32 %v4855, %v5284
        %5286 = vmatprep.mubr.bf16.mxu0 %v4780
        %5287 = vmatmul.mubr.bf16.gmra.mrb[0].mxu0 %v4779
        %v5288 = vpop.f32.mrb[0].mxu0
        %v5289 = vadd.f32 %v4851, %v5288
        %v5290 = vpop.f32.mrb[0].mxu0
        %v5291 = vadd.f32 %v4855, %v5290
        %v5292 = vpop.f32.mrb[0].mxu0
        %v5293 = vadd.f32 %v4851, %v5292
        %v5294 = vpop.f32.mrb[0].mxu0
        %v5295 = vadd.f32 %v4855, %v5294
        %5296 = vdwg.mxu0
        %5297 = vmatprep.subr.bf16.mxu0 %v5059
        %5298 = vmatpush1.bf16.msra.mxu0 %v5058
        %5299 = vmatprep.subr.bf16.mxu0 %v5063
        %5300 = vmatpush1.bf16.msra.mxu0 %v5062
        %5301 = vmatprep.subr.bf16.mxu0 %v5067
        %5302 = vmatpush1.bf16.msra.mxu0 %v5066
        %5303 = vmatprep.subr.bf16.mxu0 %v5071
        %5304 = vmatpush1.bf16.msra.mxu0 %v5070
        %5305 = vmatprep.subr.bf16.mxu0 %v5075
        %5306 = vmatpush1.bf16.msra.mxu0 %v5074
        %5307 = vmatprep.subr.bf16.mxu0 %v5079
        %5308 = vmatpush1.bf16.msra.mxu0 %v5078
        %5309 = vmatprep.subr.bf16.mxu0 %v5083
        %5310 = vmatpush1.bf16.msra.mxu0 %v5082
        %5311 = vmatprep.subr.bf16.mxu0 %v5087
        %5312 = vmatpush1.bf16.msra.mxu0 %v5086
        %5313 = vmatprep.subr.bf16.mxu0 %v5091
        %5314 = vmatpush1.bf16.msra.mxu0 %v5090
        %5315 = vmatprep.subr.bf16.mxu0 %v5095
        %5316 = vmatpush1.bf16.msra.mxu0 %v5094
        %5317 = vmatprep.subr.bf16.mxu0 %v5099
        %5318 = vmatpush1.bf16.msra.mxu0 %v5098
        %5319 = vmatprep.subr.bf16.mxu0 %v5103
        %5320 = vmatpush1.bf16.msra.mxu0 %v5102
        %5321 = vmatprep.subr.bf16.mxu0 %v5107
        %5322 = vmatpush1.bf16.msra.mxu0 %v5106
        %5323 = vmatprep.subr.bf16.mxu0 %v5111
        %5324 = vmatpush1.bf16.msra.mxu0 %v5110
        %5325 = vmatprep.subr.bf16.mxu0 %v5115
        %5326 = vmatpush1.bf16.msra.mxu0 %v5114
        %5327 = vmatprep.subr.bf16.mxu0 %v5119
        %5328 = vmatpush1.bf16.msra.mxu0 %v5118
        %5329 = vmatprep.mubr.bf16.mxu0 %v4766
        %5330 = vmatmul.mubr.bf16.gmra.mrb[0].mxu0 %v4765
        %v5331 = vpop.f32.mrb[0].mxu0
        %v5332 = vadd.f32 %v4859, %v5331
        %v5333 = vpop.f32.mrb[0].mxu0
        %v5334 = vadd.f32 %v4863, %v5333
        %v5335 = vpop.f32.mrb[0].mxu0
        %v5336 = vadd.f32 %v4859, %v5335
        %v5337 = vpop.f32.mrb[0].mxu0
        %v5338 = vadd.f32 %v4863, %v5337
        %5339 = vmatprep.mubr.bf16.mxu0 %v4768
        %5340 = vmatmul.mubr.bf16.gmra.mrb[0].mxu0 %v4767
        %v5341 = vpop.f32.mrb[0].mxu0
        %v5342 = vadd.f32 %v4859, %v5341
        %v5343 = vpop.f32.mrb[0].mxu0
        %v5344 = vadd.f32 %v4863, %v5343
        %v5345 = vpop.f32.mrb[0].mxu0
        %v5346 = vadd.f32 %v4859, %v5345
        %v5347 = vpop.f32.mrb[0].mxu0
        %v5348 = vadd.f32 %v4863, %v5347
        %5349 = vmatprep.mubr.bf16.mxu0 %v4770
        %5350 = vmatmul.mubr.bf16.gmra.mrb[0].mxu0 %v4769
        %v5351 = vpop.f32.mrb[0].mxu0
        %v5352 = vadd.f32 %v4859, %v5351
        %v5353 = vpop.f32.mrb[0].mxu0
        %v5354 = vadd.f32 %v4863, %v5353
        %v5355 = vpop.f32.mrb[0].mxu0
        %v5356 = vadd.f32 %v4859, %v5355
        %v5357 = vpop.f32.mrb[0].mxu0
        %v5358 = vadd.f32 %v4863, %v5357
        %5359 = vmatprep.mubr.bf16.mxu0 %v4772
        %5360 = vmatmul.mubr.bf16.gmra.mrb[0].mxu0 %v4771
        %v5361 = vpop.f32.mrb[0].mxu0
        %v5362 = vadd.f32 %v4859, %v5361
        %v5363 = vpop.f32.mrb[0].mxu0
        %v5364 = vadd.f32 %v4863, %v5363
        %v5365 = vpop.f32.mrb[0].mxu0
        %v5366 = vadd.f32 %v4859, %v5365
        %v5367 = vpop.f32.mrb[0].mxu0
        %v5368 = vadd.f32 %v4863, %v5367
        %5369 = vmatprep.mubr.bf16.mxu0 %v4774
        %5370 = vmatmul.mubr.bf16.gmra.mrb[0].mxu0 %v4773
        %v5371 = vpop.f32.mrb[0].mxu0
        %v5372 = vadd.f32 %v4859, %v5371
        %v5373 = vpop.f32.mrb[0].mxu0
        %v5374 = vadd.f32 %v4863, %v5373
        %v5375 = vpop.f32.mrb[0].mxu0
        %v5376 = vadd.f32 %v4859, %v5375
        %v5377 = vpop.f32.mrb[0].mxu0
        %v5378 = vadd.f32 %v4863, %v5377
        %5379 = vmatprep.mubr.bf16.mxu0 %v4776
        %5380 = vmatmul.mubr.bf16.gmra.mrb[0].mxu0 %v4775
        %v5381 = vpop.f32.mrb[0].mxu0
        %v5382 = vadd.f32 %v4859, %v5381
        %v5383 = vpop.f32.mrb[0].mxu0
        %v5384 = vadd.f32 %v4863, %v5383
        %v5385 = vpop.f32.mrb[0].mxu0
        %v5386 = vadd.f32 %v4859, %v5385
        %v5387 = vpop.f32.mrb[0].mxu0
        %v5388 = vadd.f32 %v4863, %v5387
        %5389 = vmatprep.mubr.bf16.mxu0 %v4778
        %5390 = vmatmul.mubr.bf16.gmra.mrb[0].mxu0 %v4777
        %v5391 = vpop.f32.mrb[0].mxu0
        %v5392 = vadd.f32 %v4859, %v5391
        %v5393 = vpop.f32.mrb[0].mxu0
        %v5394 = vadd.f32 %v4863, %v5393
        %v5395 = vpop.f32.mrb[0].mxu0
        %v5396 = vadd.f32 %v4859, %v5395
        %v5397 = vpop.f32.mrb[0].mxu0
        %v5398 = vadd.f32 %v4863, %v5397
        %5399 = vmatprep.mubr.bf16.mxu0 %v4780
        %5400 = vmatmul.mubr.bf16.gmra.mrb[0].mxu0 %v4779
        %v5401 = vpop.f32.mrb[0].mxu0
        %v5402 = vadd.f32 %v4859, %v5401
        %v5403 = vpop.f32.mrb[0].mxu0
        %v5404 = vadd.f32 %v4863, %v5403
        %v5405 = vpop.f32.mrb[0].mxu0
        %v5406 = vadd.f32 %v4859, %v5405
        %v5407 = vpop.f32.mrb[0].mxu0
        %v5408 = vadd.f32 %v4863, %v5407
        %5409 = vdwg.mxu0
        %v5410 = vmul.f32 %v5219, 0.5
        %v5411 = vmul.f32 %v5221, 0.5
        %v5412 = vmul.f32 %v5332, 0.5
        %v5413 = vmul.f32 %v5334, 0.5
        %v5414 = vmul.f32 %v5223, 0.5
        %v5415 = vmul.f32 %v5225, 0.5
        %v5416 = vmul.f32 %v5336, 0.5
        %v5417 = vmul.f32 %v5338, 0.5
        %v5418 = vmul.f32 %v5229, 0.5
        %v5419 = vmul.f32 %v5231, 0.5
        %v5420 = vmul.f32 %v5342, 0.5
        %v5421 = vmul.f32 %v5344, 0.5
        %v5422 = vmul.f32 %v5233, 0.5
        %v5423 = vmul.f32 %v5235, 0.5
        %v5424 = vmul.f32 %v5346, 0.5
        %v5425 = vmul.f32 %v5348, 0.5
        %v5426 = vmul.f32 %v5239, 0.5
        %v5427 = vmul.f32 %v5241, 0.5
        %v5428 = vmul.f32 %v5352, 0.5
        %v5429 = vmul.f32 %v5354, 0.5
        %v5430 = vmul.f32 %v5243, 0.5
        %v5431 = vmul.f32 %v5245, 0.5
        %v5432 = vmul.f32 %v5356, 0.5
        %v5433 = vmul.f32 %v5358, 0.5
        %v5434 = vmul.f32 %v5249, 0.5
        %v5435 = vmul.f32 %v5251, 0.5
        %v5436 = vmul.f32 %v5362, 0.5
        %v5437 = vmul.f32 %v5364, 0.5
        %v5438 = vmul.f32 %v5253, 0.5
        %v5439 = vmul.f32 %v5255, 0.5
        %v5440 = vmul.f32 %v5366, 0.5
        %v5441 = vmul.f32 %v5368, 0.5
        %v5442 = vmul.f32 %v5259, 0.5
        %v5443 = vmul.f32 %v5261, 0.5
        %v5444 = vmul.f32 %v5372, 0.5
        %v5445 = vmul.f32 %v5374, 0.5
        %v5446 = vmul.f32 %v5263, 0.5
        %v5447 = vmul.f32 %v5265, 0.5
        %v5448 = vmul.f32 %v5376, 0.5
        %v5449 = vmul.f32 %v5378, 0.5
        %v5450 = vmul.f32 %v5269, 0.5
        %v5451 = vmul.f32 %v5271, 0.5
        %v5452 = vmul.f32 %v5382, 0.5
        %v5453 = vmul.f32 %v5384, 0.5
        %v5454 = vmul.f32 %v5273, 0.5
        %v5455 = vmul.f32 %v5275, 0.5
        %v5456 = vmul.f32 %v5386, 0.5
        %v5457 = vmul.f32 %v5388, 0.5
        %v5458 = vmul.f32 %v5279, 0.5
        %v5459 = vmul.f32 %v5281, 0.5
        %v5460 = vmul.f32 %v5392, 0.5
        %v5461 = vmul.f32 %v5394, 0.5
        %v5462 = vmul.f32 %v5283, 0.5
        %v5463 = vmul.f32 %v5285, 0.5
        %v5464 = vmul.f32 %v5396, 0.5
        %v5465 = vmul.f32 %v5398, 0.5
        %v5466 = vmul.f32 %v5289, 0.5
        %v5467 = vmul.f32 %v5291, 0.5
        %v5468 = vmul.f32 %v5402, 0.5
        %v5469 = vmul.f32 %v5404, 0.5
        %v5470 = vmul.f32 %v5293, 0.5
        %v5471 = vmul.f32 %v5295, 0.5
        %v5472 = vmul.f32 %v5406, 0.5
        %v5473 = vmul.f32 %v5408, 0.5
        %v5474 = vmul.f32 %v5219, 0.044715
        %v5475 = vmul.f32 %v5221, 0.044715
        %v5476 = vmul.f32 %v5332, 0.044715
        %v5477 = vmul.f32 %v5334, 0.044715
        %v5478 = vmul.f32 %v5223, 0.044715
        %v5479 = vmul.f32 %v5225, 0.044715
        %v5480 = vmul.f32 %v5336, 0.044715
        %v5481 = vmul.f32 %v5338, 0.044715
        %v5482 = vmul.f32 %v5229, 0.044715
        %v5483 = vmul.f32 %v5231, 0.044715
        %v5484 = vmul.f32 %v5342, 0.044715
        %v5485 = vmul.f32 %v5344, 0.044715
        %v5486 = vmul.f32 %v5233, 0.044715
        %v5487 = vmul.f32 %v5235, 0.044715
        %v5488 = vmul.f32 %v5346, 0.044715
        %v5489 = vmul.f32 %v5348, 0.044715
        %v5490 = vmul.f32 %v5239, 0.044715
        %v5491 = vmul.f32 %v5241, 0.044715
        %v5492 = vmul.f32 %v5352, 0.044715
        %v5493 = vmul.f32 %v5354, 0.044715
        %v5494 = vmul.f32 %v5243, 0.044715
        %v5495 = vmul.f32 %v5245, 0.044715
        %v5496 = vmul.f32 %v5356, 0.044715
        %v5497 = vmul.f32 %v5358, 0.044715
        %v5498 = vmul.f32 %v5249, 0.044715
        %v5499 = vmul.f32 %v5251, 0.044715
        %v5500 = vmul.f32 %v5362, 0.044715
        %v5501 = vmul.f32 %v5364, 0.044715
        %v5502 = vmul.f32 %v5253, 0.044715
        %v5503 = vmul.f32 %v5255, 0.044715
        %v5504 = vmul.f32 %v5366, 0.044715
        %v5505 = vmul.f32 %v5368, 0.044715
        %v5506 = vmul.f32 %v5259, 0.044715
        %v5507 = vmul.f32 %v5261, 0.044715
        %v5508 = vmul.f32 %v5372, 0.044715
        %v5509 = vmul.f32 %v5374, 0.044715
        %v5510 = vmul.f32 %v5263, 0.044715
        %v5511 = vmul.f32 %v5265, 0.044715
        %v5512 = vmul.f32 %v5376, 0.044715
        %v5513 = vmul.f32 %v5378, 0.044715
        %v5514 = vmul.f32 %v5269, 0.044715
        %v5515 = vmul.f32 %v5271, 0.044715
        %v5516 = vmul.f32 %v5382, 0.044715
        %v5517 = vmul.f32 %v5384, 0.044715
        %v5518 = vmul.f32 %v5273, 0.044715
        %v5519 = vmul.f32 %v5275, 0.044715
        %v5520 = vmul.f32 %v5386, 0.044715
        %v5521 = vmul.f32 %v5388, 0.044715
        %v5522 = vmul.f32 %v5279, 0.044715
        %v5523 = vmul.f32 %v5281, 0.044715
        %v5524 = vmul.f32 %v5392, 0.044715
        %v5525 = vmul.f32 %v5394, 0.044715
        %v5526 = vmul.f32 %v5283, 0.044715
        %v5527 = vmul.f32 %v5285, 0.044715
        %v5528 = vmul.f32 %v5396, 0.044715
        %v5529 = vmul.f32 %v5398, 0.044715
        %v5530 = vmul.f32 %v5289, 0.044715
        %v5531 = vmul.f32 %v5291, 0.044715
        %v5532 = vmul.f32 %v5402, 0.044715
        %v5533 = vmul.f32 %v5404, 0.044715
        %v5534 = vmul.f32 %v5293, 0.044715
        %v5535 = vmul.f32 %v5295, 0.044715
        %v5536 = vmul.f32 %v5406, 0.044715
        %v5537 = vmul.f32 %v5408, 0.044715
        %v5538 = vmul.f32 %v5474, %v5219
        %v5539 = vmul.f32 %v5475, %v5221
        %v5540 = vmul.f32 %v5476, %v5332
        %v5541 = vmul.f32 %v5477, %v5334
        %v5542 = vmul.f32 %v5478, %v5223
        %v5543 = vmul.f32 %v5479, %v5225
        %v5544 = vmul.f32 %v5480, %v5336
        %v5545 = vmul.f32 %v5481, %v5338
        %v5546 = vmul.f32 %v5482, %v5229
        %v5547 = vmul.f32 %v5483, %v5231
        %v5548 = vmul.f32 %v5484, %v5342
        %v5549 = vmul.f32 %v5485, %v5344
        %v5550 = vmul.f32 %v5486, %v5233
        %v5551 = vmul.f32 %v5487, %v5235
        %v5552 = vmul.f32 %v5488, %v5346
        %v5553 = vmul.f32 %v5489, %v5348
        %v5554 = vmul.f32 %v5490, %v5239
        %v5555 = vmul.f32 %v5491, %v5241
        %v5556 = vmul.f32 %v5492, %v5352
        %v5557 = vmul.f32 %v5493, %v5354
        %v5558 = vmul.f32 %v5494, %v5243
        %v5559 = vmul.f32 %v5495, %v5245
        %v5560 = vmul.f32 %v5496, %v5356
        %v5561 = vmul.f32 %v5497, %v5358
        %v5562 = vmul.f32 %v5498, %v5249
        %v5563 = vmul.f32 %v5499, %v5251
        %v5564 = vmul.f32 %v5500, %v5362
        %v5565 = vmul.f32 %v5501, %v5364
        %v5566 = vmul.f32 %v5502, %v5253
        %v5567 = vmul.f32 %v5503, %v5255
        %v5568 = vmul.f32 %v5504, %v5366
        %v5569 = vmul.f32 %v5505, %v5368
        %v5570 = vmul.f32 %v5506, %v5259
        %v5571 = vmul.f32 %v5507, %v5261
        %v5572 = vmul.f32 %v5508, %v5372
        %v5573 = vmul.f32 %v5509, %v5374
        %v5574 = vmul.f32 %v5510, %v5263
        %v5575 = vmul.f32 %v5511, %v5265
        %v5576 = vmul.f32 %v5512, %v5376
        %v5577 = vmul.f32 %v5513, %v5378
        %v5578 = vmul.f32 %v5514, %v5269
        %v5579 = vmul.f32 %v5515, %v5271
        %v5580 = vmul.f32 %v5516, %v5382
        %v5581 = vmul.f32 %v5517, %v5384
        %v5582 = vmul.f32 %v5518, %v5273
        %v5583 = vmul.f32 %v5519, %v5275
        %v5584 = vmul.f32 %v5520, %v5386
        %v5585 = vmul.f32 %v5521, %v5388
        %v5586 = vmul.f32 %v5522, %v5279
        %v5587 = vmul.f32 %v5523, %v5281
        %v5588 = vmul.f32 %v5524, %v5392
        %v5589 = vmul.f32 %v5525, %v5394
        %v5590 = vmul.f32 %v5526, %v5283
        %v5591 = vmul.f32 %v5527, %v5285
        %v5592 = vmul.f32 %v5528, %v5396
        %v5593 = vmul.f32 %v5529, %v5398
        %v5594 = vmul.f32 %v5530, %v5289
        %v5595 = vmul.f32 %v5531, %v5291
        %v5596 = vmul.f32 %v5532, %v5402
        %v5597 = vmul.f32 %v5533, %v5404
        %v5598 = vmul.f32 %v5534, %v5293
        %v5599 = vmul.f32 %v5535, %v5295
        %v5600 = vmul.f32 %v5536, %v5406
        %v5601 = vmul.f32 %v5537, %v5408
        %v5602 = vmul.f32 %v5538, %v5219
        %v5603 = vmul.f32 %v5539, %v5221
        %v5604 = vmul.f32 %v5540, %v5332
        %v5605 = vmul.f32 %v5541, %v5334
        %v5606 = vmul.f32 %v5542, %v5223
        %v5607 = vmul.f32 %v5543, %v5225
        %v5608 = vmul.f32 %v5544, %v5336
        %v5609 = vmul.f32 %v5545, %v5338
        %v5610 = vmul.f32 %v5546, %v5229
        %v5611 = vmul.f32 %v5547, %v5231
        %v5612 = vmul.f32 %v5548, %v5342
        %v5613 = vmul.f32 %v5549, %v5344
        %v5614 = vmul.f32 %v5550, %v5233
        %v5615 = vmul.f32 %v5551, %v5235
        %v5616 = vmul.f32 %v5552, %v5346
        %v5617 = vmul.f32 %v5553, %v5348
        %v5618 = vmul.f32 %v5554, %v5239
        %v5619 = vmul.f32 %v5555, %v5241
        %v5620 = vmul.f32 %v5556, %v5352
        %v5621 = vmul.f32 %v5557, %v5354
        %v5622 = vmul.f32 %v5558, %v5243
        %v5623 = vmul.f32 %v5559, %v5245
        %v5624 = vmul.f32 %v5560, %v5356
        %v5625 = vmul.f32 %v5561, %v5358
        %v5626 = vmul.f32 %v5562, %v5249
        %v5627 = vmul.f32 %v5563, %v5251
        %v5628 = vmul.f32 %v5564, %v5362
        %v5629 = vmul.f32 %v5565, %v5364
        %v5630 = vmul.f32 %v5566, %v5253
        %v5631 = vmul.f32 %v5567, %v5255
        %v5632 = vmul.f32 %v5568, %v5366
        %v5633 = vmul.f32 %v5569, %v5368
        %v5634 = vmul.f32 %v5570, %v5259
        %v5635 = vmul.f32 %v5571, %v5261
        %v5636 = vmul.f32 %v5572, %v5372
        %v5637 = vmul.f32 %v5573, %v5374
        %v5638 = vmul.f32 %v5574, %v5263
        %v5639 = vmul.f32 %v5575, %v5265
        %v5640 = vmul.f32 %v5576, %v5376
        %v5641 = vmul.f32 %v5577, %v5378
        %v5642 = vmul.f32 %v5578, %v5269
        %v5643 = vmul.f32 %v5579, %v5271
        %v5644 = vmul.f32 %v5580, %v5382
        %v5645 = vmul.f32 %v5581, %v5384
        %v5646 = vmul.f32 %v5582, %v5273
        %v5647 = vmul.f32 %v5583, %v5275
        %v5648 = vmul.f32 %v5584, %v5386
        %v5649 = vmul.f32 %v5585, %v5388
        %v5650 = vmul.f32 %v5586, %v5279
        %v5651 = vmul.f32 %v5587, %v5281
        %v5652 = vmul.f32 %v5588, %v5392
        %v5653 = vmul.f32 %v5589, %v5394
        %v5654 = vmul.f32 %v5590, %v5283
        %v5655 = vmul.f32 %v5591, %v5285
        %v5656 = vmul.f32 %v5592, %v5396
        %v5657 = vmul.f32 %v5593, %v5398
        %v5658 = vmul.f32 %v5594, %v5289
        %v5659 = vmul.f32 %v5595, %v5291
        %v5660 = vmul.f32 %v5596, %v5402
        %v5661 = vmul.f32 %v5597, %v5404
        %v5662 = vmul.f32 %v5598, %v5293
        %v5663 = vmul.f32 %v5599, %v5295
        %v5664 = vmul.f32 %v5600, %v5406
        %v5665 = vmul.f32 %v5601, %v5408
        %v5666 = vadd.f32 %v5219, %v5602
        %v5667 = vadd.f32 %v5221, %v5603
        %v5668 = vadd.f32 %v5332, %v5604
        %v5669 = vadd.f32 %v5334, %v5605
        %v5670 = vadd.f32 %v5223, %v5606
        %v5671 = vadd.f32 %v5225, %v5607
        %v5672 = vadd.f32 %v5336, %v5608
        %v5673 = vadd.f32 %v5338, %v5609
        %v5674 = vadd.f32 %v5229, %v5610
        %v5675 = vadd.f32 %v5231, %v5611
        %v5676 = vadd.f32 %v5342, %v5612
        %v5677 = vadd.f32 %v5344, %v5613
        %v5678 = vadd.f32 %v5233, %v5614
        %v5679 = vadd.f32 %v5235, %v5615
        %v5680 = vadd.f32 %v5346, %v5616
        %v5681 = vadd.f32 %v5348, %v5617
        %v5682 = vadd.f32 %v5239, %v5618
        %v5683 = vadd.f32 %v5241, %v5619
        %v5684 = vadd.f32 %v5352, %v5620
        %v5685 = vadd.f32 %v5354, %v5621
        %v5686 = vadd.f32 %v5243, %v5622
        %v5687 = vadd.f32 %v5245, %v5623
        %v5688 = vadd.f32 %v5356, %v5624
        %v5689 = vadd.f32 %v5358, %v5625
        %v5690 = vadd.f32 %v5249, %v5626
        %v5691 = vadd.f32 %v5251, %v5627
        %v5692 = vadd.f32 %v5362, %v5628
        %v5693 = vadd.f32 %v5364, %v5629
        %v5694 = vadd.f32 %v5253, %v5630
        %v5695 = vadd.f32 %v5255, %v5631
        %v5696 = vadd.f32 %v5366, %v5632
        %v5697 = vadd.f32 %v5368, %v5633
        %v5698 = vadd.f32 %v5259, %v5634
        %v5699 = vadd.f32 %v5261, %v5635
        %v5700 = vadd.f32 %v5372, %v5636
        %v5701 = vadd.f32 %v5374, %v5637
        %v5702 = vadd.f32 %v5263, %v5638
        %v5703 = vadd.f32 %v5265, %v5639
        %v5704 = vadd.f32 %v5376, %v5640
        %v5705 = vadd.f32 %v5378, %v5641
        %v5706 = vadd.f32 %v5269, %v5642
        %v5707 = vadd.f32 %v5271, %v5643
        %v5708 = vadd.f32 %v5382, %v5644
        %v5709 = vadd.f32 %v5384, %v5645
        %v5710 = vadd.f32 %v5273, %v5646
        %v5711 = vadd.f32 %v5275, %v5647
        %v5712 = vadd.f32 %v5386, %v5648
        %v5713 = vadd.f32 %v5388, %v5649
        %v5714 = vadd.f32 %v5279, %v5650
        %v5715 = vadd.f32 %v5281, %v5651
        %v5716 = vadd.f32 %v5392, %v5652
        %v5717 = vadd.f32 %v5394, %v5653
        %v5718 = vadd.f32 %v5283, %v5654
        %v5719 = vadd.f32 %v5285, %v5655
        %v5720 = vadd.f32 %v5396, %v5656
        %v5721 = vadd.f32 %v5398, %v5657
        %v5722 = vadd.f32 %v5289, %v5658
        %v5723 = vadd.f32 %v5291, %v5659
        %v5724 = vadd.f32 %v5402, %v5660
        %v5725 = vadd.f32 %v5404, %v5661
        %v5726 = vadd.f32 %v5293, %v5662
        %v5727 = vadd.f32 %v5295, %v5663
        %v5728 = vadd.f32 %v5406, %v5664
        %v5729 = vadd.f32 %v5408, %v5665
        %v5730 = vmul.f32 %v5666, 0.7978846
        %v5731 = vmul.f32 %v5667, 0.7978846
        %v5732 = vmul.f32 %v5668, 0.7978846
        %v5733 = vmul.f32 %v5669, 0.7978846
        %v5734 = vmul.f32 %v5670, 0.7978846
        %v5735 = vmul.f32 %v5671, 0.7978846
        %v5736 = vmul.f32 %v5672, 0.7978846
        %v5737 = vmul.f32 %v5673, 0.7978846
        %v5738 = vmul.f32 %v5674, 0.7978846
        %v5739 = vmul.f32 %v5675, 0.7978846
        %v5740 = vmul.f32 %v5676, 0.7978846
        %v5741 = vmul.f32 %v5677, 0.7978846
        %v5742 = vmul.f32 %v5678, 0.7978846
        %v5743 = vmul.f32 %v5679, 0.7978846
        %v5744 = vmul.f32 %v5680, 0.7978846
        %v5745 = vmul.f32 %v5681, 0.7978846
        %v5746 = vmul.f32 %v5682, 0.7978846
        %v5747 = vmul.f32 %v5683, 0.7978846
        %v5748 = vmul.f32 %v5684, 0.7978846
        %v5749 = vmul.f32 %v5685, 0.7978846
        %v5750 = vmul.f32 %v5686, 0.7978846
        %v5751 = vmul.f32 %v5687, 0.7978846
        %v5752 = vmul.f32 %v5688, 0.7978846
        %v5753 = vmul.f32 %v5689, 0.7978846
        %v5754 = vmul.f32 %v5690, 0.7978846
        %v5755 = vmul.f32 %v5691, 0.7978846
        %v5756 = vmul.f32 %v5692, 0.7978846
        %v5757 = vmul.f32 %v5693, 0.7978846
        %v5758 = vmul.f32 %v5694, 0.7978846
        %v5759 = vmul.f32 %v5695, 0.7978846
        %v5760 = vmul.f32 %v5696, 0.7978846
        %v5761 = vmul.f32 %v5697, 0.7978846
        %v5762 = vmul.f32 %v5698, 0.7978846
        %v5763 = vmul.f32 %v5699, 0.7978846
        %v5764 = vmul.f32 %v5700, 0.7978846
        %v5765 = vmul.f32 %v5701, 0.7978846
        %v5766 = vmul.f32 %v5702, 0.7978846
        %v5767 = vmul.f32 %v5703, 0.7978846
        %v5768 = vmul.f32 %v5704, 0.7978846
        %v5769 = vmul.f32 %v5705, 0.7978846
        %v5770 = vmul.f32 %v5706, 0.7978846
        %v5771 = vmul.f32 %v5707, 0.7978846
        %v5772 = vmul.f32 %v5708, 0.7978846
        %v5773 = vmul.f32 %v5709, 0.7978846
        %v5774 = vmul.f32 %v5710, 0.7978846
        %v5775 = vmul.f32 %v5711, 0.7978846
        %v5776 = vmul.f32 %v5712, 0.7978846
        %v5777 = vmul.f32 %v5713, 0.7978846
        %v5778 = vmul.f32 %v5714, 0.7978846
        %v5779 = vmul.f32 %v5715, 0.7978846
        %v5780 = vmul.f32 %v5716, 0.7978846
        %v5781 = vmul.f32 %v5717, 0.7978846
        %v5782 = vmul.f32 %v5718, 0.7978846
        %v5783 = vmul.f32 %v5719, 0.7978846
        %v5784 = vmul.f32 %v5720, 0.7978846
        %v5785 = vmul.f32 %v5721, 0.7978846
        %v5786 = vmul.f32 %v5722, 0.7978846
        %v5787 = vmul.f32 %v5723, 0.7978846
        %v5788 = vmul.f32 %v5724, 0.7978846
        %v5789 = vmul.f32 %v5725, 0.7978846
        %v5790 = vmul.f32 %v5726, 0.7978846
        %v5791 = vmul.f32 %v5727, 0.7978846
        %v5792 = vmul.f32 %v5728, 0.7978846
        %v5793 = vmul.f32 %v5729, 0.7978846
        %v5794 = vtanh.pop %v5730
        %v5795 = vtanh.pop %v5731
        %v5796 = vtanh.pop %v5732
        %v5797 = vtanh.pop %v5733
        %v5798 = vtanh.pop %v5734
        %v5799 = vtanh.pop %v5735
        %v5800 = vtanh.pop %v5736
        %v5801 = vtanh.pop %v5737
        %v5802 = vtanh.pop %v5738
        %v5803 = vtanh.pop %v5739
        %v5804 = vtanh.pop %v5740
        %v5805 = vtanh.pop %v5741
        %v5806 = vtanh.pop %v5742
        %v5807 = vtanh.pop %v5743
        %v5808 = vtanh.pop %v5744
        %v5809 = vtanh.pop %v5745
        %v5810 = vtanh.pop %v5746
        %v5811 = vtanh.pop %v5747
        %v5812 = vtanh.pop %v5748
        %v5813 = vtanh.pop %v5749
        %v5814 = vtanh.pop %v5750
        %v5815 = vtanh.pop %v5751
        %v5816 = vtanh.pop %v5752
        %v5817 = vtanh.pop %v5753
        %v5818 = vtanh.pop %v5754
        %v5819 = vtanh.pop %v5755
        %v5820 = vtanh.pop %v5756
        %v5821 = vtanh.pop %v5757
        %v5822 = vtanh.pop %v5758
        %v5823 = vtanh.pop %v5759
        %v5824 = vtanh.pop %v5760
        %v5825 = vtanh.pop %v5761
        %v5826 = vtanh.pop %v5762
        %v5827 = vtanh.pop %v5763
        %v5828 = vtanh.pop %v5764
        %v5829 = vtanh.pop %v5765
        %v5830 = vtanh.pop %v5766
        %v5831 = vtanh.pop %v5767
        %v5832 = vtanh.pop %v5768
        %v5833 = vtanh.pop %v5769
        %v5834 = vtanh.pop %v5770
        %v5835 = vtanh.pop %v5771
        %v5836 = vtanh.pop %v5772
        %v5837 = vtanh.pop %v5773
        %v5838 = vtanh.pop %v5774
        %v5839 = vtanh.pop %v5775
        %v5840 = vtanh.pop %v5776
        %v5841 = vtanh.pop %v5777
        %v5842 = vtanh.pop %v5778
        %v5843 = vtanh.pop %v5779
        %v5844 = vtanh.pop %v5780
        %v5845 = vtanh.pop %v5781
        %v5846 = vtanh.pop %v5782
        %v5847 = vtanh.pop %v5783
        %v5848 = vtanh.pop %v5784
        %v5849 = vtanh.pop %v5785
        %v5850 = vtanh.pop %v5786
        %v5851 = vtanh.pop %v5787
        %v5852 = vtanh.pop %v5788
        %v5853 = vtanh.pop %v5789
        %v5854 = vtanh.pop %v5790
        %v5855 = vtanh.pop %v5791
        %v5856 = vtanh.pop %v5792
        %v5857 = vtanh.pop %v5793
        %v5858 = vadd.f32 %v5794, 1.0
        %v5859 = vadd.f32 %v5795, 1.0
        %v5860 = vadd.f32 %v5796, 1.0
        %v5861 = vadd.f32 %v5797, 1.0
        %v5862 = vadd.f32 %v5798, 1.0
        %v5863 = vadd.f32 %v5799, 1.0
        %v5864 = vadd.f32 %v5800, 1.0
        %v5865 = vadd.f32 %v5801, 1.0
        %v5866 = vadd.f32 %v5802, 1.0
        %v5867 = vadd.f32 %v5803, 1.0
        %v5868 = vadd.f32 %v5804, 1.0
        %v5869 = vadd.f32 %v5805, 1.0
        %v5870 = vadd.f32 %v5806, 1.0
        %v5871 = vadd.f32 %v5807, 1.0
        %v5872 = vadd.f32 %v5808, 1.0
        %v5873 = vadd.f32 %v5809, 1.0
        %v5874 = vadd.f32 %v5810, 1.0
        %v5875 = vadd.f32 %v5811, 1.0
        %v5876 = vadd.f32 %v5812, 1.0
        %v5877 = vadd.f32 %v5813, 1.0
        %v5878 = vadd.f32 %v5814, 1.0
        %v5879 = vadd.f32 %v5815, 1.0
        %v5880 = vadd.f32 %v5816, 1.0
        %v5881 = vadd.f32 %v5817, 1.0
        %v5882 = vadd.f32 %v5818, 1.0
        %v5883 = vadd.f32 %v5819, 1.0
        %v5884 = vadd.f32 %v5820, 1.0
        %v5885 = vadd.f32 %v5821, 1.0
        %v5886 = vadd.f32 %v5822, 1.0
        %v5887 = vadd.f32 %v5823, 1.0
        %v5888 = vadd.f32 %v5824, 1.0
        %v5889 = vadd.f32 %v5825, 1.0
        %v5890 = vadd.f32 %v5826, 1.0
        %v5891 = vadd.f32 %v5827, 1.0
        %v5892 = vadd.f32 %v5828, 1.0
        %v5893 = vadd.f32 %v5829, 1.0
        %v5894 = vadd.f32 %v5830, 1.0
        %v5895 = vadd.f32 %v5831, 1.0
        %v5896 = vadd.f32 %v5832, 1.0
        %v5897 = vadd.f32 %v5833, 1.0
        %v5898 = vadd.f32 %v5834, 1.0
        %v5899 = vadd.f32 %v5835, 1.0
        %v5900 = vadd.f32 %v5836, 1.0
        %v5901 = vadd.f32 %v5837, 1.0
        %v5902 = vadd.f32 %v5838, 1.0
        %v5903 = vadd.f32 %v5839, 1.0
        %v5904 = vadd.f32 %v5840, 1.0
        %v5905 = vadd.f32 %v5841, 1.0
        %v5906 = vadd.f32 %v5842, 1.0
        %v5907 = vadd.f32 %v5843, 1.0
        %v5908 = vadd.f32 %v5844, 1.0
        %v5909 = vadd.f32 %v5845, 1.0
        %v5910 = vadd.f32 %v5846, 1.0
        %v5911 = vadd.f32 %v5847, 1.0
        %v5912 = vadd.f32 %v5848, 1.0
        %v5913 = vadd.f32 %v5849, 1.0
        %v5914 = vadd.f32 %v5850, 1.0
        %v5915 = vadd.f32 %v5851, 1.0
        %v5916 = vadd.f32 %v5852, 1.0
        %v5917 = vadd.f32 %v5853, 1.0
        %v5918 = vadd.f32 %v5854, 1.0
        %v5919 = vadd.f32 %v5855, 1.0
        %v5920 = vadd.f32 %v5856, 1.0
        %v5921 = vadd.f32 %v5857, 1.0
        %v5922 = vmul.f32 %v5410, %v5858
        %v5923 = vmul.f32 %v5411, %v5859
        %v5924 = vmul.f32 %v5412, %v5860
        %v5925 = vmul.f32 %v5413, %v5861
        %v5926 = vmul.f32 %v5414, %v5862
        %v5927 = vmul.f32 %v5415, %v5863
        %v5928 = vmul.f32 %v5416, %v5864
        %v5929 = vmul.f32 %v5417, %v5865
        %v5930 = vmul.f32 %v5418, %v5866
        %v5931 = vmul.f32 %v5419, %v5867
        %v5932 = vmul.f32 %v5420, %v5868
        %v5933 = vmul.f32 %v5421, %v5869
        %v5934 = vmul.f32 %v5422, %v5870
        %v5935 = vmul.f32 %v5423, %v5871
        %v5936 = vmul.f32 %v5424, %v5872
        %v5937 = vmul.f32 %v5425, %v5873
        %v5938 = vmul.f32 %v5426, %v5874
        %v5939 = vmul.f32 %v5427, %v5875
        %v5940 = vmul.f32 %v5428, %v5876
        %v5941 = vmul.f32 %v5429, %v5877
        %v5942 = vmul.f32 %v5430, %v5878
        %v5943 = vmul.f32 %v5431, %v5879
        %v5944 = vmul.f32 %v5432, %v5880
        %v5945 = vmul.f32 %v5433, %v5881
        %v5946 = vmul.f32 %v5434, %v5882
        %v5947 = vmul.f32 %v5435, %v5883
        %v5948 = vmul.f32 %v5436, %v5884
        %v5949 = vmul.f32 %v5437, %v5885
        %v5950 = vmul.f32 %v5438, %v5886
        %v5951 = vmul.f32 %v5439, %v5887
        %v5952 = vmul.f32 %v5440, %v5888
        %v5953 = vmul.f32 %v5441, %v5889
        %v5954 = vmul.f32 %v5442, %v5890
        %v5955 = vmul.f32 %v5443, %v5891
        %v5956 = vmul.f32 %v5444, %v5892
        %v5957 = vmul.f32 %v5445, %v5893
        %v5958 = vmul.f32 %v5446, %v5894
        %v5959 = vmul.f32 %v5447, %v5895
        %v5960 = vmul.f32 %v5448, %v5896
        %v5961 = vmul.f32 %v5449, %v5897
        %v5962 = vmul.f32 %v5450, %v5898
        %v5963 = vmul.f32 %v5451, %v5899
        %v5964 = vmul.f32 %v5452, %v5900
        %v5965 = vmul.f32 %v5453, %v5901
        %v5966 = vmul.f32 %v5454, %v5902
        %v5967 = vmul.f32 %v5455, %v5903
        %v5968 = vmul.f32 %v5456, %v5904
        %v5969 = vmul.f32 %v5457, %v5905
        %v5970 = vmul.f32 %v5458, %v5906
        %v5971 = vmul.f32 %v5459, %v5907
        %v5972 = vmul.f32 %v5460, %v5908
        %v5973 = vmul.f32 %v5461, %v5909
        %v5974 = vmul.f32 %v5462, %v5910
        %v5975 = vmul.f32 %v5463, %v5911
        %v5976 = vmul.f32 %v5464, %v5912
        %v5977 = vmul.f32 %v5465, %v5913
        %v5978 = vmul.f32 %v5466, %v5914
        %v5979 = vmul.f32 %v5467, %v5915
        %v5980 = vmul.f32 %v5468, %v5916
        %v5981 = vmul.f32 %v5469, %v5917
        %v5982 = vmul.f32 %v5470, %v5918
        %v5983 = vmul.f32 %v5471, %v5919
        %v5984 = vmul.f32 %v5472, %v5920
        %v5985 = vmul.f32 %v5473, %v5921
        %v5986 = vpack.c.bf16 %v5926, %v5922
        %v5987 = vpack.c.bf16 %v5927, %v5923
        %v5988 = vpack.c.bf16 %v5928, %v5924
        %v5989 = vpack.c.bf16 %v5929, %v5925
        %v5990 = vpack.c.bf16 %v5934, %v5930
        %v5991 = vpack.c.bf16 %v5935, %v5931
        %v5992 = vpack.c.bf16 %v5936, %v5932
        %v5993 = vpack.c.bf16 %v5937, %v5933
        %v5994 = vpack.c.bf16 %v5942, %v5938
        %v5995 = vpack.c.bf16 %v5943, %v5939
        %v5996 = vpack.c.bf16 %v5944, %v5940
        %v5997 = vpack.c.bf16 %v5945, %v5941
        %v5998 = vpack.c.bf16 %v5950, %v5946
        %v5999 = vpack.c.bf16 %v5951, %v5947
        %v6000 = vpack.c.bf16 %v5952, %v5948
        %v6001 = vpack.c.bf16 %v5953, %v5949
        %v6002 = vpack.c.bf16 %v5958, %v5954
        %v6003 = vpack.c.bf16 %v5959, %v5955
        %v6004 = vpack.c.bf16 %v5960, %v5956
        %v6005 = vpack.c.bf16 %v5961, %v5957
        %v6006 = vpack.c.bf16 %v5966, %v5962
        %v6007 = vpack.c.bf16 %v5967, %v5963
        %v6008 = vpack.c.bf16 %v5968, %v5964
        %v6009 = vpack.c.bf16 %v5969, %v5965
        %v6010 = vpack.c.bf16 %v5974, %v5970
        %v6011 = vpack.c.bf16 %v5975, %v5971
        %v6012 = vpack.c.bf16 %v5976, %v5972
        %v6013 = vpack.c.bf16 %v5977, %v5973
        %v6014 = vpack.c.bf16 %v5982, %v5978
        %v6015 = vpack.c.bf16 %v5983, %v5979
        %v6016 = vpack.c.bf16 %v5984, %v5980
        %v6017 = vpack.c.bf16 %v5985, %v5981
        %s6018 = smul.addr %s4781, 4
        %s6019 = scalar_lea.vmem [#allocation5], %s6018
        %v6020 = vld [vmem:[%s6019] sm:$0xff]
        %v6021 = vld [vmem:[%s6019 + $0x8] sm:$0xff]
        %v6022 = vld [vmem:[%s6019 + $0x10] sm:$0xff]
        %v6023 = vld [vmem:[%s6019 + $0x18] sm:$0xff]
        %v6024 = vld [vmem:[%s6019 + $0x20] sm:$0xff]
        %v6025 = vld [vmem:[%s6019 + $0x28] sm:$0xff]
        %v6026 = vld [vmem:[%s6019 + $0x30] sm:$0xff]
        %v6027 = vld [vmem:[%s6019 + $0x38] sm:$0xff]
        %v6028 = vld [vmem:[%s6019 + $0x40] sm:$0xff]
        %v6029 = vld [vmem:[%s6019 + $0x48] sm:$0xff]
        %v6030 = vld [vmem:[%s6019 + $0x50] sm:$0xff]
        %v6031 = vld [vmem:[%s6019 + $0x58] sm:$0xff]
        %v6032 = vld [vmem:[%s6019 + $0x60] sm:$0xff]
        %v6033 = vld [vmem:[%s6019 + $0x68] sm:$0xff]
        %v6034 = vld [vmem:[%s6019 + $0x70] sm:$0xff]
        %v6035 = vld [vmem:[%s6019 + $0x78] sm:$0xff]
        %v6036 = vld [vmem:[%s6019 + $0x80] sm:$0xff]
        %v6037 = vld [vmem:[%s6019 + $0x88] sm:$0xff]
        %v6038 = vld [vmem:[%s6019 + $0x90] sm:$0xff]
        %v6039 = vld [vmem:[%s6019 + $0x98] sm:$0xff]
        %v6040 = vld [vmem:[%s6019 + $0xa0] sm:$0xff]
        %v6041 = vld [vmem:[%s6019 + $0xa8] sm:$0xff]
        %v6042 = vld [vmem:[%s6019 + $0xb0] sm:$0xff]
        %v6043 = vld [vmem:[%s6019 + $0xb8] sm:$0xff]
        %v6044 = vld [vmem:[%s6019 + $0xc0] sm:$0xff]
        %v6045 = vld [vmem:[%s6019 + $0xc8] sm:$0xff]
        %v6046 = vld [vmem:[%s6019 + $0xd0] sm:$0xff]
        %v6047 = vld [vmem:[%s6019 + $0xd8] sm:$0xff]
        %v6048 = vld [vmem:[%s6019 + $0xe0] sm:$0xff]
        %v6049 = vld [vmem:[%s6019 + $0xe8] sm:$0xff]
        %v6050 = vld [vmem:[%s6019 + $0xf0] sm:$0xff]
        %v6051 = vld [vmem:[%s6019 + $0xf8] sm:$0xff]
        %v6052 = vld [vmem:[%s6019 + $0x100] sm:$0xff]
        %v6053 = vld [vmem:[%s6019 + $0x108] sm:$0xff]
        %v6054 = vld [vmem:[%s6019 + $0x110] sm:$0xff]
        %v6055 = vld [vmem:[%s6019 + $0x118] sm:$0xff]
        %v6056 = vld [vmem:[%s6019 + $0x120] sm:$0xff]
        %v6057 = vld [vmem:[%s6019 + $0x128] sm:$0xff]
        %v6058 = vld [vmem:[%s6019 + $0x130] sm:$0xff]
        %v6059 = vld [vmem:[%s6019 + $0x138] sm:$0xff]
        %v6060 = vld [vmem:[%s6019 + $0x140] sm:$0xff]
        %v6061 = vld [vmem:[%s6019 + $0x148] sm:$0xff]
        %v6062 = vld [vmem:[%s6019 + $0x150] sm:$0xff]
        %v6063 = vld [vmem:[%s6019 + $0x158] sm:$0xff]
        %v6064 = vld [vmem:[%s6019 + $0x160] sm:$0xff]
        %v6065 = vld [vmem:[%s6019 + $0x168] sm:$0xff]
        %v6066 = vld [vmem:[%s6019 + $0x170] sm:$0xff]
        %v6067 = vld [vmem:[%s6019 + $0x178] sm:$0xff]
        %v6068 = vld [vmem:[%s6019 + $0x180] sm:$0xff]
        %v6069 = vld [vmem:[%s6019 + $0x188] sm:$0xff]
        %v6070 = vld [vmem:[%s6019 + $0x190] sm:$0xff]
        %v6071 = vld [vmem:[%s6019 + $0x198] sm:$0xff]
        %v6072 = vld [vmem:[%s6019 + $0x1a0] sm:$0xff]
        %v6073 = vld [vmem:[%s6019 + $0x1a8] sm:$0xff]
        %v6074 = vld [vmem:[%s6019 + $0x1b0] sm:$0xff]
        %v6075 = vld [vmem:[%s6019 + $0x1b8] sm:$0xff]
        %v6076 = vld [vmem:[%s6019 + $0x1c0] sm:$0xff]
        %v6077 = vld [vmem:[%s6019 + $0x1c8] sm:$0xff]
        %v6078 = vld [vmem:[%s6019 + $0x1d0] sm:$0xff]
        %v6079 = vld [vmem:[%s6019 + $0x1d8] sm:$0xff]
        %v6080 = vld [vmem:[%s6019 + $0x1e0] sm:$0xff]
        %v6081 = vld [vmem:[%s6019 + $0x1e8] sm:$0xff]
        %v6082 = vld [vmem:[%s6019 + $0x1f0] sm:$0xff]
        %v6083 = vld [vmem:[%s6019 + $0x1f8] sm:$0xff]
        %v6084 = vlaneseq
        %v6085 = vshrl.u32 %v6084, 7
        %v6086 = vsub.s32 6, %v6085
        %v6087 = vrot.slane %v809, %v6086
        %v6088 = vlaneseq
        %v6089 = vshrl.u32 %v6088, 7
        %v6090 = vsub.s32 6, %v6089
        %v6091 = vrot.slane %v810, %v6090
        %v6156 = vunpack.c.l.b16 %v6020
        %v6157 = vunpack.c.h.b16 %v6020
        %v6158 = vunpack.c.l.b16 %v6021
        %v6159 = vunpack.c.h.b16 %v6021
        %v6160 = vunpack.c.l.b16 %v6022
        %v6161 = vunpack.c.h.b16 %v6022
        %v6162 = vunpack.c.l.b16 %v6023
        %v6163 = vunpack.c.h.b16 %v6023
        %v6164 = vunpack.c.l.b16 %v6024
        %v6165 = vunpack.c.h.b16 %v6024
        %v6166 = vunpack.c.l.b16 %v6025
        %v6167 = vunpack.c.h.b16 %v6025
        %v6168 = vunpack.c.l.b16 %v6026
        %v6169 = vunpack.c.h.b16 %v6026
        %v6170 = vunpack.c.l.b16 %v6027
        %v6171 = vunpack.c.h.b16 %v6027
        %v6172 = vunpack.c.l.b16 %v6028
        %v6173 = vunpack.c.h.b16 %v6028
        %v6174 = vunpack.c.l.b16 %v6029
        %v6175 = vunpack.c.h.b16 %v6029
        %v6176 = vunpack.c.l.b16 %v6030
        %v6177 = vunpack.c.h.b16 %v6030
        %v6178 = vunpack.c.l.b16 %v6031
        %v6179 = vunpack.c.h.b16 %v6031
        %v6180 = vunpack.c.l.b16 %v6032
        %v6181 = vunpack.c.h.b16 %v6032
        %v6182 = vunpack.c.l.b16 %v6033
        %v6183 = vunpack.c.h.b16 %v6033
        %v6184 = vunpack.c.l.b16 %v6034
        %v6185 = vunpack.c.h.b16 %v6034
        %v6186 = vunpack.c.l.b16 %v6035
        %v6187 = vunpack.c.h.b16 %v6035
        %v6188 = vunpack.c.l.b16 %v6036
        %v6189 = vunpack.c.h.b16 %v6036
        %v6190 = vunpack.c.l.b16 %v6037
        %v6191 = vunpack.c.h.b16 %v6037
        %v6192 = vunpack.c.l.b16 %v6038
        %v6193 = vunpack.c.h.b16 %v6038
        %v6194 = vunpack.c.l.b16 %v6039
        %v6195 = vunpack.c.h.b16 %v6039
        %v6196 = vunpack.c.l.b16 %v6040
        %v6197 = vunpack.c.h.b16 %v6040
        %v6198 = vunpack.c.l.b16 %v6041
        %v6199 = vunpack.c.h.b16 %v6041
        %v6200 = vunpack.c.l.b16 %v6042
        %v6201 = vunpack.c.h.b16 %v6042
        %v6202 = vunpack.c.l.b16 %v6043
        %v6203 = vunpack.c.h.b16 %v6043
        %v6204 = vunpack.c.l.b16 %v6044
        %v6205 = vunpack.c.h.b16 %v6044
        %v6206 = vunpack.c.l.b16 %v6045
        %v6207 = vunpack.c.h.b16 %v6045
        %v6208 = vunpack.c.l.b16 %v6046
        %v6209 = vunpack.c.h.b16 %v6046
        %v6210 = vunpack.c.l.b16 %v6047
        %v6211 = vunpack.c.h.b16 %v6047
        %v6212 = vunpack.c.l.b16 %v6048
        %v6213 = vunpack.c.h.b16 %v6048
        %v6214 = vunpack.c.l.b16 %v6049
        %v6215 = vunpack.c.h.b16 %v6049
        %v6216 = vunpack.c.l.b16 %v6050
        %v6217 = vunpack.c.h.b16 %v6050
        %v6218 = vunpack.c.l.b16 %v6051
        %v6219 = vunpack.c.h.b16 %v6051
        %v6220 = vunpack.c.l.b16 %v6052
        %v6221 = vunpack.c.h.b16 %v6052
        %v6222 = vunpack.c.l.b16 %v6053
        %v6223 = vunpack.c.h.b16 %v6053
        %v6224 = vunpack.c.l.b16 %v6054
        %v6225 = vunpack.c.h.b16 %v6054
        %v6226 = vunpack.c.l.b16 %v6055
        %v6227 = vunpack.c.h.b16 %v6055
        %v6228 = vunpack.c.l.b16 %v6056
        %v6229 = vunpack.c.h.b16 %v6056
        %v6230 = vunpack.c.l.b16 %v6057
        %v6231 = vunpack.c.h.b16 %v6057
        %v6232 = vunpack.c.l.b16 %v6058
        %v6233 = vunpack.c.h.b16 %v6058
        %v6234 = vunpack.c.l.b16 %v6059
        %v6235 = vunpack.c.h.b16 %v6059
        %v6236 = vunpack.c.l.b16 %v6060
        %v6237 = vunpack.c.h.b16 %v6060
        %v6238 = vunpack.c.l.b16 %v6061
        %v6239 = vunpack.c.h.b16 %v6061
        %v6240 = vunpack.c.l.b16 %v6062
        %v6241 = vunpack.c.h.b16 %v6062
        %v6242 = vunpack.c.l.b16 %v6063
        %v6243 = vunpack.c.h.b16 %v6063
        %v6244 = vunpack.c.l.b16 %v6064
        %v6245 = vunpack.c.h.b16 %v6064
        %v6246 = vunpack.c.l.b16 %v6065
        %v6247 = vunpack.c.h.b16 %v6065
        %v6248 = vunpack.c.l.b16 %v6066
        %v6249 = vunpack.c.h.b16 %v6066
        %v6250 = vunpack.c.l.b16 %v6067
        %v6251 = vunpack.c.h.b16 %v6067
        %v6252 = vunpack.c.l.b16 %v6068
        %v6253 = vunpack.c.h.b16 %v6068
        %v6254 = vunpack.c.l.b16 %v6069
        %v6255 = vunpack.c.h.b16 %v6069
        %v6256 = vunpack.c.l.b16 %v6070
        %v6257 = vunpack.c.h.b16 %v6070
        %v6258 = vunpack.c.l.b16 %v6071
        %v6259 = vunpack.c.h.b16 %v6071
        %v6260 = vunpack.c.l.b16 %v6072
        %v6261 = vunpack.c.h.b16 %v6072
        %v6262 = vunpack.c.l.b16 %v6073
        %v6263 = vunpack.c.h.b16 %v6073
        %v6264 = vunpack.c.l.b16 %v6074
        %v6265 = vunpack.c.h.b16 %v6074
        %v6266 = vunpack.c.l.b16 %v6075
        %v6267 = vunpack.c.h.b16 %v6075
        %v6268 = vunpack.c.l.b16 %v6076
        %v6269 = vunpack.c.h.b16 %v6076
        %v6270 = vunpack.c.l.b16 %v6077
        %v6271 = vunpack.c.h.b16 %v6077
        %v6272 = vunpack.c.l.b16 %v6078
        %v6273 = vunpack.c.h.b16 %v6078
        %v6274 = vunpack.c.l.b16 %v6079
        %v6275 = vunpack.c.h.b16 %v6079
        %v6276 = vunpack.c.l.b16 %v6080
        %v6277 = vunpack.c.h.b16 %v6080
        %v6278 = vunpack.c.l.b16 %v6081
        %v6279 = vunpack.c.h.b16 %v6081
        %v6280 = vunpack.c.l.b16 %v6082
        %v6281 = vunpack.c.h.b16 %v6082
        %v6282 = vunpack.c.l.b16 %v6083
        %v6283 = vunpack.c.h.b16 %v6083
        %v6284 = vpack.c.b16 %v6158, %v6156
        %v6285 = vpack.c.b16 %v6159, %v6157
        %v6286 = vpack.c.b16 %v6162, %v6160
        %v6287 = vpack.c.b16 %v6163, %v6161
        %v6288 = vpack.c.b16 %v6166, %v6164
        %v6289 = vpack.c.b16 %v6167, %v6165
        %v6290 = vpack.c.b16 %v6170, %v6168
        %v6291 = vpack.c.b16 %v6171, %v6169
        %v6292 = vpack.c.b16 %v6174, %v6172
        %v6293 = vpack.c.b16 %v6175, %v6173
        %v6294 = vpack.c.b16 %v6178, %v6176
        %v6295 = vpack.c.b16 %v6179, %v6177
        %v6296 = vpack.c.b16 %v6182, %v6180
        %v6297 = vpack.c.b16 %v6183, %v6181
        %v6298 = vpack.c.b16 %v6186, %v6184
        %v6299 = vpack.c.b16 %v6187, %v6185
        %v6300 = vpack.c.b16 %v6190, %v6188
        %v6301 = vpack.c.b16 %v6191, %v6189
        %v6302 = vpack.c.b16 %v6194, %v6192
        %v6303 = vpack.c.b16 %v6195, %v6193
        %v6304 = vpack.c.b16 %v6198, %v6196
        %v6305 = vpack.c.b16 %v6199, %v6197
        %v6306 = vpack.c.b16 %v6202, %v6200
        %v6307 = vpack.c.b16 %v6203, %v6201
        %v6308 = vpack.c.b16 %v6206, %v6204
        %v6309 = vpack.c.b16 %v6207, %v6205
        %v6310 = vpack.c.b16 %v6210, %v6208
        %v6311 = vpack.c.b16 %v6211, %v6209
        %v6312 = vpack.c.b16 %v6214, %v6212
        %v6313 = vpack.c.b16 %v6215, %v6213
        %v6314 = vpack.c.b16 %v6218, %v6216
        %v6315 = vpack.c.b16 %v6219, %v6217
        %v6316 = vpack.c.b16 %v6222, %v6220
        %v6317 = vpack.c.b16 %v6223, %v6221
        %v6318 = vpack.c.b16 %v6226, %v6224
        %v6319 = vpack.c.b16 %v6227, %v6225
        %v6320 = vpack.c.b16 %v6230, %v6228
        %v6321 = vpack.c.b16 %v6231, %v6229
        %v6322 = vpack.c.b16 %v6234, %v6232
        %v6323 = vpack.c.b16 %v6235, %v6233
        %v6324 = vpack.c.b16 %v6238, %v6236
        %v6325 = vpack.c.b16 %v6239, %v6237
        %v6326 = vpack.c.b16 %v6242, %v6240
        %v6327 = vpack.c.b16 %v6243, %v6241
        %v6328 = vpack.c.b16 %v6246, %v6244
        %v6329 = vpack.c.b16 %v6247, %v6245
        %v6330 = vpack.c.b16 %v6250, %v6248
        %v6331 = vpack.c.b16 %v6251, %v6249
        %v6332 = vpack.c.b16 %v6254, %v6252
        %v6333 = vpack.c.b16 %v6255, %v6253
        %v6334 = vpack.c.b16 %v6258, %v6256
        %v6335 = vpack.c.b16 %v6259, %v6257
        %v6336 = vpack.c.b16 %v6262, %v6260
        %v6337 = vpack.c.b16 %v6263, %v6261
        %v6338 = vpack.c.b16 %v6266, %v6264
        %v6339 = vpack.c.b16 %v6267, %v6265
        %v6340 = vpack.c.b16 %v6270, %v6268
        %v6341 = vpack.c.b16 %v6271, %v6269
        %v6342 = vpack.c.b16 %v6274, %v6272
        %v6343 = vpack.c.b16 %v6275, %v6273
        %v6344 = vpack.c.b16 %v6278, %v6276
        %v6345 = vpack.c.b16 %v6279, %v6277
        %v6346 = vpack.c.b16 %v6282, %v6280
        %v6347 = vpack.c.b16 %v6283, %v6281
        %6412 = vmatprep.subr.bf16.mxu0 %v6285
        %6413 = vmatpush1.bf16.msra.mxu0 %v6284
        %6414 = vmatprep.subr.bf16.mxu0 %v6287
        %6415 = vmatpush1.bf16.msra.mxu0 %v6286
        %6416 = vmatprep.subr.bf16.mxu0 %v6289
        %6417 = vmatpush1.bf16.msra.mxu0 %v6288
        %6418 = vmatprep.subr.bf16.mxu0 %v6291
        %6419 = vmatpush1.bf16.msra.mxu0 %v6290
        %6420 = vmatprep.subr.bf16.mxu0 %v6293
        %6421 = vmatpush1.bf16.msra.mxu0 %v6292
        %6422 = vmatprep.subr.bf16.mxu0 %v6295
        %6423 = vmatpush1.bf16.msra.mxu0 %v6294
        %6424 = vmatprep.subr.bf16.mxu0 %v6297
        %6425 = vmatpush1.bf16.msra.mxu0 %v6296
        %6426 = vmatprep.subr.bf16.mxu0 %v6299
        %6427 = vmatpush1.bf16.msra.mxu0 %v6298
        %6428 = vmatprep.subr.bf16.mxu0 %v6301
        %6429 = vmatpush1.bf16.msra.mxu0 %v6300
        %6430 = vmatprep.subr.bf16.mxu0 %v6303
        %6431 = vmatpush1.bf16.msra.mxu0 %v6302
        %6432 = vmatprep.subr.bf16.mxu0 %v6305
        %6433 = vmatpush1.bf16.msra.mxu0 %v6304
        %6434 = vmatprep.subr.bf16.mxu0 %v6307
        %6435 = vmatpush1.bf16.msra.mxu0 %v6306
        %6436 = vmatprep.subr.bf16.mxu0 %v6309
        %6437 = vmatpush1.bf16.msra.mxu0 %v6308
        %6438 = vmatprep.subr.bf16.mxu0 %v6311
        %6439 = vmatpush1.bf16.msra.mxu0 %v6310
        %6440 = vmatprep.subr.bf16.mxu0 %v6313
        %6441 = vmatpush1.bf16.msra.mxu0 %v6312
        %6442 = vmatprep.subr.bf16.mxu0 %v6315
        %6443 = vmatpush1.bf16.msra.mxu0 %v6314
        %6444 = vmatprep.mubr.bf16.mxu0 %v5987
        %6445 = vmatmul.mubr.bf16.gmra.mrb[0].mxu0 %v5986
        %v6446 = vpop.f32.mrb[0].mxu0
        %v6447 = vadd.f32 %v6087, %v6446
        %v6448 = vpop.f32.mrb[0].mxu0
        %v6449 = vadd.f32 %v6091, %v6448
        %v6450 = vpop.f32.mrb[0].mxu0
        %v6451 = vadd.f32 %v6087, %v6450
        %v6452 = vpop.f32.mrb[0].mxu0
        %v6453 = vadd.f32 %v6091, %v6452
        %6454 = vmatprep.mubr.bf16.mxu0 %v5991
        %6455 = vmatmul.mubr.bf16.gmra.mrb[0].mxu0 %v5990
        %v6456 = vpop.f32.mrb[0].mxu0
        %v6457 = vadd.f32 %v6087, %v6456
        %v6458 = vpop.f32.mrb[0].mxu0
        %v6459 = vadd.f32 %v6091, %v6458
        %v6460 = vpop.f32.mrb[0].mxu0
        %v6461 = vadd.f32 %v6087, %v6460
        %v6462 = vpop.f32.mrb[0].mxu0
        %v6463 = vadd.f32 %v6091, %v6462
        %6464 = vmatprep.mubr.bf16.mxu0 %v5995
        %6465 = vmatmul.mubr.bf16.gmra.mrb[0].mxu0 %v5994
        %v6466 = vpop.f32.mrb[0].mxu0
        %v6467 = vadd.f32 %v6087, %v6466
        %v6468 = vpop.f32.mrb[0].mxu0
        %v6469 = vadd.f32 %v6091, %v6468
        %v6470 = vpop.f32.mrb[0].mxu0
        %v6471 = vadd.f32 %v6087, %v6470
        %v6472 = vpop.f32.mrb[0].mxu0
        %v6473 = vadd.f32 %v6091, %v6472
        %6474 = vmatprep.mubr.bf16.mxu0 %v5999
        %6475 = vmatmul.mubr.bf16.gmra.mrb[0].mxu0 %v5998
        %v6476 = vpop.f32.mrb[0].mxu0
        %v6477 = vadd.f32 %v6087, %v6476
        %v6478 = vpop.f32.mrb[0].mxu0
        %v6479 = vadd.f32 %v6091, %v6478
        %v6480 = vpop.f32.mrb[0].mxu0
        %v6481 = vadd.f32 %v6087, %v6480
        %v6482 = vpop.f32.mrb[0].mxu0
        %v6483 = vadd.f32 %v6091, %v6482
        %6484 = vmatprep.mubr.bf16.mxu0 %v6003
        %6485 = vmatmul.mubr.bf16.gmra.mrb[0].mxu0 %v6002
        %v6486 = vpop.f32.mrb[0].mxu0
        %v6487 = vadd.f32 %v6087, %v6486
        %v6488 = vpop.f32.mrb[0].mxu0
        %v6489 = vadd.f32 %v6091, %v6488
        %v6490 = vpop.f32.mrb[0].mxu0
        %v6491 = vadd.f32 %v6087, %v6490
        %v6492 = vpop.f32.mrb[0].mxu0
        %v6493 = vadd.f32 %v6091, %v6492
        %6494 = vmatprep.mubr.bf16.mxu0 %v6007
        %6495 = vmatmul.mubr.bf16.gmra.mrb[0].mxu0 %v6006
        %v6496 = vpop.f32.mrb[0].mxu0
        %v6497 = vadd.f32 %v6087, %v6496
        %v6498 = vpop.f32.mrb[0].mxu0
        %v6499 = vadd.f32 %v6091, %v6498
        %v6500 = vpop.f32.mrb[0].mxu0
        %v6501 = vadd.f32 %v6087, %v6500
        %v6502 = vpop.f32.mrb[0].mxu0
        %v6503 = vadd.f32 %v6091, %v6502
        %6504 = vmatprep.mubr.bf16.mxu0 %v6011
        %6505 = vmatmul.mubr.bf16.gmra.mrb[0].mxu0 %v6010
        %v6506 = vpop.f32.mrb[0].mxu0
        %v6507 = vadd.f32 %v6087, %v6506
        %v6508 = vpop.f32.mrb[0].mxu0
        %v6509 = vadd.f32 %v6091, %v6508
        %v6510 = vpop.f32.mrb[0].mxu0
        %v6511 = vadd.f32 %v6087, %v6510
        %v6512 = vpop.f32.mrb[0].mxu0
        %v6513 = vadd.f32 %v6091, %v6512
        %6514 = vmatprep.mubr.bf16.mxu0 %v6015
        %6515 = vmatmul.mubr.bf16.gmra.mrb[0].mxu0 %v6014
        %v6516 = vpop.f32.mrb[0].mxu0
        %v6517 = vadd.f32 %v6087, %v6516
        %v6518 = vpop.f32.mrb[0].mxu0
        %v6519 = vadd.f32 %v6091, %v6518
        %v6520 = vpop.f32.mrb[0].mxu0
        %v6521 = vadd.f32 %v6087, %v6520
        %v6522 = vpop.f32.mrb[0].mxu0
        %v6523 = vadd.f32 %v6091, %v6522
        %6524 = vdwg.mxu0
        %6525 = vmatprep.subr.bf16.mxu0 %v6317
        %6526 = vmatpush1.bf16.msra.mxu0 %v6316
        %6527 = vmatprep.subr.bf16.mxu0 %v6319
        %6528 = vmatpush1.bf16.msra.mxu0 %v6318
        %6529 = vmatprep.subr.bf16.mxu0 %v6321
        %6530 = vmatpush1.bf16.msra.mxu0 %v6320
        %6531 = vmatprep.subr.bf16.mxu0 %v6323
        %6532 = vmatpush1.bf16.msra.mxu0 %v6322
        %6533 = vmatprep.subr.bf16.mxu0 %v6325
        %6534 = vmatpush1.bf16.msra.mxu0 %v6324
        %6535 = vmatprep.subr.bf16.mxu0 %v6327
        %6536 = vmatpush1.bf16.msra.mxu0 %v6326
        %6537 = vmatprep.subr.bf16.mxu0 %v6329
        %6538 = vmatpush1.bf16.msra.mxu0 %v6328
        %6539 = vmatprep.subr.bf16.mxu0 %v6331
        %6540 = vmatpush1.bf16.msra.mxu0 %v6330
        %6541 = vmatprep.subr.bf16.mxu0 %v6333
        %6542 = vmatpush1.bf16.msra.mxu0 %v6332
        %6543 = vmatprep.subr.bf16.mxu0 %v6335
        %6544 = vmatpush1.bf16.msra.mxu0 %v6334
        %6545 = vmatprep.subr.bf16.mxu0 %v6337
        %6546 = vmatpush1.bf16.msra.mxu0 %v6336
        %6547 = vmatprep.subr.bf16.mxu0 %v6339
        %6548 = vmatpush1.bf16.msra.mxu0 %v6338
        %6549 = vmatprep.subr.bf16.mxu0 %v6341
        %6550 = vmatpush1.bf16.msra.mxu0 %v6340
        %6551 = vmatprep.subr.bf16.mxu0 %v6343
        %6552 = vmatpush1.bf16.msra.mxu0 %v6342
        %6553 = vmatprep.subr.bf16.mxu0 %v6345
        %6554 = vmatpush1.bf16.msra.mxu0 %v6344
        %6555 = vmatprep.subr.bf16.mxu0 %v6347
        %6556 = vmatpush1.bf16.msra.mxu0 %v6346
        %6557 = vmatprep.mubr.bf16.mxu0 %v5989
        %6558 = vmatmul.mubr.bf16.gmra.mrb[0].mxu0 %v5988
        %v6559 = vpop.f32.mrb[0].mxu0
        %v6560 = vadd.f32 %v6447, %v6559
        %v6561 = vpop.f32.mrb[0].mxu0
        %v6562 = vadd.f32 %v6449, %v6561
        %v6563 = vpop.f32.mrb[0].mxu0
        %v6564 = vadd.f32 %v6451, %v6563
        %v6565 = vpop.f32.mrb[0].mxu0
        %v6566 = vadd.f32 %v6453, %v6565
        %6567 = vmatprep.mubr.bf16.mxu0 %v5993
        %6568 = vmatmul.mubr.bf16.gmra.mrb[0].mxu0 %v5992
        %v6569 = vpop.f32.mrb[0].mxu0
        %v6570 = vadd.f32 %v6457, %v6569
        %v6571 = vpop.f32.mrb[0].mxu0
        %v6572 = vadd.f32 %v6459, %v6571
        %v6573 = vpop.f32.mrb[0].mxu0
        %v6574 = vadd.f32 %v6461, %v6573
        %v6575 = vpop.f32.mrb[0].mxu0
        %v6576 = vadd.f32 %v6463, %v6575
        %6577 = vmatprep.mubr.bf16.mxu0 %v5997
        %6578 = vmatmul.mubr.bf16.gmra.mrb[0].mxu0 %v5996
        %v6579 = vpop.f32.mrb[0].mxu0
        %v6580 = vadd.f32 %v6467, %v6579
        %v6581 = vpop.f32.mrb[0].mxu0
        %v6582 = vadd.f32 %v6469, %v6581
        %v6583 = vpop.f32.mrb[0].mxu0
        %v6584 = vadd.f32 %v6471, %v6583
        %v6585 = vpop.f32.mrb[0].mxu0
        %v6586 = vadd.f32 %v6473, %v6585
        %6587 = vmatprep.mubr.bf16.mxu0 %v6001
        %6588 = vmatmul.mubr.bf16.gmra.mrb[0].mxu0 %v6000
        %v6589 = vpop.f32.mrb[0].mxu0
        %v6590 = vadd.f32 %v6477, %v6589
        %v6591 = vpop.f32.mrb[0].mxu0
        %v6592 = vadd.f32 %v6479, %v6591
        %v6593 = vpop.f32.mrb[0].mxu0
        %v6594 = vadd.f32 %v6481, %v6593
        %v6595 = vpop.f32.mrb[0].mxu0
        %v6596 = vadd.f32 %v6483, %v6595
        %6597 = vmatprep.mubr.bf16.mxu0 %v6005
        %6598 = vmatmul.mubr.bf16.gmra.mrb[0].mxu0 %v6004
        %v6599 = vpop.f32.mrb[0].mxu0
        %v6600 = vadd.f32 %v6487, %v6599
        %v6601 = vpop.f32.mrb[0].mxu0
        %v6602 = vadd.f32 %v6489, %v6601
        %v6603 = vpop.f32.mrb[0].mxu0
        %v6604 = vadd.f32 %v6491, %v6603
        %v6605 = vpop.f32.mrb[0].mxu0
        %v6606 = vadd.f32 %v6493, %v6605
        %6607 = vmatprep.mubr.bf16.mxu0 %v6009
        %6608 = vmatmul.mubr.bf16.gmra.mrb[0].mxu0 %v6008
        %v6609 = vpop.f32.mrb[0].mxu0
        %v6610 = vadd.f32 %v6497, %v6609
        %v6611 = vpop.f32.mrb[0].mxu0
        %v6612 = vadd.f32 %v6499, %v6611
        %v6613 = vpop.f32.mrb[0].mxu0
        %v6614 = vadd.f32 %v6501, %v6613
        %v6615 = vpop.f32.mrb[0].mxu0
        %v6616 = vadd.f32 %v6503, %v6615
        %6617 = vmatprep.mubr.bf16.mxu0 %v6013
        %6618 = vmatmul.mubr.bf16.gmra.mrb[0].mxu0 %v6012
        %v6619 = vpop.f32.mrb[0].mxu0
        %v6620 = vadd.f32 %v6507, %v6619
        %v6621 = vpop.f32.mrb[0].mxu0
        %v6622 = vadd.f32 %v6509, %v6621
        %v6623 = vpop.f32.mrb[0].mxu0
        %v6624 = vadd.f32 %v6511, %v6623
        %v6625 = vpop.f32.mrb[0].mxu0
        %v6626 = vadd.f32 %v6513, %v6625
        %6627 = vmatprep.mubr.bf16.mxu0 %v6017
        %6628 = vmatmul.mubr.bf16.gmra.mrb[0].mxu0 %v6016
        %v6629 = vpop.f32.mrb[0].mxu0
        %v6630 = vadd.f32 %v6517, %v6629
        %v6631 = vpop.f32.mrb[0].mxu0
        %v6632 = vadd.f32 %v6519, %v6631
        %v6633 = vpop.f32.mrb[0].mxu0
        %v6634 = vadd.f32 %v6521, %v6633
        %v6635 = vpop.f32.mrb[0].mxu0
        %v6636 = vadd.f32 %v6523, %v6635
        %6637 = vdwg.mxu0
        %v6638 = vadd.f32 %v4397, %v6560
        %v6639 = vadd.f32 %v4398, %v6562
        %v6640 = vadd.f32 %v4399, %v6564
        %v6641 = vadd.f32 %v4400, %v6566
        %v6642 = vadd.f32 %v4401, %v6570
        %v6643 = vadd.f32 %v4402, %v6572
        %v6644 = vadd.f32 %v4403, %v6574
        %v6645 = vadd.f32 %v4404, %v6576
        %v6646 = vadd.f32 %v4405, %v6580
        %v6647 = vadd.f32 %v4406, %v6582
        %v6648 = vadd.f32 %v4407, %v6584
        %v6649 = vadd.f32 %v4408, %v6586
        %v6650 = vadd.f32 %v4409, %v6590
        %v6651 = vadd.f32 %v4410, %v6592
        %v6652 = vadd.f32 %v4411, %v6594
        %v6653 = vadd.f32 %v4412, %v6596
        %v6654 = vadd.f32 %v4413, %v6600
        %v6655 = vadd.f32 %v4414, %v6602
        %v6656 = vadd.f32 %v4415, %v6604
        %v6657 = vadd.f32 %v4416, %v6606
        %v6658 = vadd.f32 %v4417, %v6610
        %v6659 = vadd.f32 %v4418, %v6612
        %v6660 = vadd.f32 %v4419, %v6614
        %v6661 = vadd.f32 %v4420, %v6616
        %v6662 = vadd.f32 %v4421, %v6620
        %v6663 = vadd.f32 %v4422, %v6622
        %v6664 = vadd.f32 %v4423, %v6624
        %v6665 = vadd.f32 %v4424, %v6626
        %v6666 = vadd.f32 %v4425, %v6630
        %v6667 = vadd.f32 %v4426, %v6632
        %v6668 = vadd.f32 %v4427, %v6634
        %v6669 = vadd.f32 %v4428, %v6636
        %6670 = vst [vmem:[#allocation2] sm:$0xff] %v6638
        %6671 = vst [vmem:[#allocation2 + $0x8] sm:$0xff] %v6639
        %6672 = vst [vmem:[#allocation2 + $0x10] sm:$0xff] %v6640
        %6673 = vst [vmem:[#allocation2 + $0x18] sm:$0xff] %v6641
        %6674 = vst [vmem:[#allocation2 + $0x20] sm:$0xff] %v6642
        %6675 = vst [vmem:[#allocation2 + $0x28] sm:$0xff] %v6643
        %6676 = vst [vmem:[#allocation2 + $0x30] sm:$0xff] %v6644
        %6677 = vst [vmem:[#allocation2 + $0x38] sm:$0xff] %v6645
        %6678 = vst [vmem:[#allocation2 + $0x40] sm:$0xff] %v6646
        %6679 = vst [vmem:[#allocation2 + $0x48] sm:$0xff] %v6647
        %6680 = vst [vmem:[#allocation2 + $0x50] sm:$0xff] %v6648
        %6681 = vst [vmem:[#allocation2 + $0x58] sm:$0xff] %v6649
        %6682 = vst [vmem:[#allocation2 + $0x60] sm:$0xff] %v6650
        %6683 = vst [vmem:[#allocation2 + $0x68] sm:$0xff] %v6651
        %6684 = vst [vmem:[#allocation2 + $0x70] sm:$0xff] %v6652
        %6685 = vst [vmem:[#allocation2 + $0x78] sm:$0xff] %v6653
        %6686 = vst [vmem:[#allocation2 + $0x80] sm:$0xff] %v6654
        %6687 = vst [vmem:[#allocation2 + $0x88] sm:$0xff] %v6655
        %6688 = vst [vmem:[#allocation2 + $0x90] sm:$0xff] %v6656
        %6689 = vst [vmem:[#allocation2 + $0x98] sm:$0xff] %v6657
        %6690 = vst [vmem:[#allocation2 + $0xa0] sm:$0xff] %v6658
        %6691 = vst [vmem:[#allocation2 + $0xa8] sm:$0xff] %v6659
        %6692 = vst [vmem:[#allocation2 + $0xb0] sm:$0xff] %v6660
        %6693 = vst [vmem:[#allocation2 + $0xb8] sm:$0xff] %v6661
        %6694 = vst [vmem:[#allocation2 + $0xc0] sm:$0xff] %v6662
        %6695 = vst [vmem:[#allocation2 + $0xc8] sm:$0xff] %v6663
        %6696 = vst [vmem:[#allocation2 + $0xd0] sm:$0xff] %v6664
        %6697 = vst [vmem:[#allocation2 + $0xd8] sm:$0xff] %v6665
        %6698 = vst [vmem:[#allocation2 + $0xe0] sm:$0xff] %v6666
        %6699 = vst [vmem:[#allocation2 + $0xe8] sm:$0xff] %v6667
        %6700 = vst [vmem:[#allocation2 + $0xf0] sm:$0xff] %v6668
        %6701 = vst [vmem:[#allocation2 + $0xf8] sm:$0xff] %v6669
        %p6702 = scmp.eq.s32.totalorder %s28, 5
        // Predicated region
        $region73: #{vit_forward.1} parent=59 // pred_check
          %p6703 = pneg %p6702
        $region74: #{vit_forward.1} parent=59 // pred_check_branch
          %6705 = sbr.rel (%p6703) target = $region76
        $region75: #{vit_forward.1} parent=59 // pred_region
          %v6706 = vld [vmem:[#allocation2] sm:$0xff]
          %v6707 = vld [vmem:[#allocation2 + $0x8] sm:$0xff]
          %v6708 = vld [vmem:[%s8] ss:$8 sm:$0x3]
          %s6709 = scalar_lea.vmem %s8, 1
          %v6710 = vld [vmem:[%s6709] ss:$8 sm:$0x3]
          %v6711 = vadd.f32 %v6706, %v6707
          %6712 = vadd.xlane.f32.xlu0 %v6711
          %v6713 = vpop.xlane.xlu0 %6712
          %v6714 = vmul.f32 %v6713, %v861
          %v6715 = vsub.f32 %v6706, %v6714
          %v6716 = vsub.f32 %v6707, %v6714
          %v6717 = vmul.f32 %v6715, %v6715
          %v6718 = vmul.f32 %v6716, %v6716
          %v6719 = vadd.f32 %v6717, %v6718
          %6720 = vadd.xlane.f32.xlu0 %v6719
          %v6721 = vpop.xlane.xlu0 %6720
          %v6722 = vmul.f32 %v6721, %v861
          %v6723 = vadd.f32 %v6722, 1e-05
          %v6724 = vrsqrt.pop %v6723
          %v6725 = vmul.f32 %v6715, %v6724
          %v6726 = vmul.f32 %v6716, %v6724
          %v6728 = vlaneseq
          %v6729 = vshrl.u32 %v6728, 7
          %v6730 = vsub.s32 0, %v6729
          %v6731 = vrot.slane %v6708, %v6730
          %v6732 = vlaneseq
          %v6733 = vshrl.u32 %v6732, 7
          %v6734 = vsub.s32 1, %v6733
          %v6735 = vrot.slane %v6708, %v6734
          %v6738 = vmul.f32 %v6725, %v6731
          %v6739 = vmul.f32 %v6726, %v6735
          %v6741 = vlaneseq
          %v6742 = vshrl.u32 %v6741, 7
          %v6743 = vsub.s32 0, %v6742
          %v6744 = vrot.slane %v6710, %v6743
          %v6745 = vlaneseq
          %v6746 = vshrl.u32 %v6745, 7
          %v6747 = vsub.s32 1, %v6746
          %v6748 = vrot.slane %v6710, %v6747
          %v6751 = vadd.f32 %v6738, %v6744
          %v6752 = vadd.f32 %v6739, %v6748
          %v6753 = vpack.c.bf16 %v6751, %v6751
          %v6754 = vpack.c.bf16 %v6752, %v6752
          %v6755 = vld [vmem:[%s9] sm:$0xf]
          %v6756 = vld [vmem:[%s9 + $0x4] sm:$0xf]
          %v6757 = vld [vmem:[%s9 + $0x8] sm:$0xf]
          %v6758 = vld [vmem:[%s9 + $0xc] sm:$0xf]
          %v6759 = vld [vmem:[%s9 + $0x10] sm:$0xf]
          %v6760 = vld [vmem:[%s9 + $0x14] sm:$0xf]
          %v6761 = vld [vmem:[%s9 + $0x18] sm:$0xf]
          %v6762 = vld [vmem:[%s9 + $0x1c] sm:$0xf]
          %v6763 = vld [vmem:[%s9 + $0x20] sm:$0xf]
          %v6764 = vld [vmem:[%s9 + $0x24] sm:$0xf]
          %v6765 = vld [vmem:[%s9 + $0x28] sm:$0xf]
          %v6766 = vld [vmem:[%s9 + $0x2c] sm:$0xf]
          %v6767 = vld [vmem:[%s9 + $0x30] sm:$0xf]
          %v6768 = vld [vmem:[%s9 + $0x34] sm:$0xf]
          %v6769 = vld [vmem:[%s9 + $0x38] sm:$0xf]
          %v6770 = vld [vmem:[%s9 + $0x3c] sm:$0xf]
          %v6771 = vld [vmem:[%s9 + $0x40] sm:$0xf]
          %v6772 = vld [vmem:[%s9 + $0x44] sm:$0xf]
          %v6773 = vld [vmem:[%s9 + $0x48] sm:$0xf]
          %v6774 = vld [vmem:[%s9 + $0x4c] sm:$0xf]
          %v6775 = vld [vmem:[%s9 + $0x50] sm:$0xf]
          %v6776 = vld [vmem:[%s9 + $0x54] sm:$0xf]
          %v6777 = vld [vmem:[%s9 + $0x58] sm:$0xf]
          %v6778 = vld [vmem:[%s9 + $0x5c] sm:$0xf]
          %v6779 = vld [vmem:[%s9 + $0x60] sm:$0xf]
          %v6780 = vld [vmem:[%s9 + $0x64] sm:$0xf]
          %v6781 = vld [vmem:[%s9 + $0x68] sm:$0xf]
          %v6782 = vld [vmem:[%s9 + $0x6c] sm:$0xf]
          %v6783 = vld [vmem:[%s9 + $0x70] sm:$0xf]
          %v6784 = vld [vmem:[%s9 + $0x74] sm:$0xf]
          %v6785 = vld [vmem:[%s9 + $0x78] sm:$0xf]
          %v6786 = vld [vmem:[%s9 + $0x7c] sm:$0xf]
          %v6787 = vld [vmem:[%s8 + $0x2] ss:$0 sm:$0xff]
          %v6820 = vunpack.c.l.b16 %v6755
          %v6821 = vunpack.c.l.b16 %v6756
          %v6822 = vunpack.c.l.b16 %v6757
          %v6823 = vunpack.c.l.b16 %v6758
          %v6824 = vunpack.c.l.b16 %v6759
          %v6825 = vunpack.c.l.b16 %v6760
          %v6826 = vunpack.c.l.b16 %v6761
          %v6827 = vunpack.c.l.b16 %v6762
          %v6828 = vunpack.c.l.b16 %v6763
          %v6829 = vunpack.c.l.b16 %v6764
          %v6830 = vunpack.c.l.b16 %v6765
          %v6831 = vunpack.c.l.b16 %v6766
          %v6832 = vunpack.c.l.b16 %v6767
          %v6833 = vunpack.c.l.b16 %v6768
          %v6834 = vunpack.c.l.b16 %v6769
          %v6835 = vunpack.c.l.b16 %v6770
          %v6836 = vunpack.c.l.b16 %v6771
          %v6837 = vunpack.c.l.b16 %v6772
          %v6838 = vunpack.c.l.b16 %v6773
          %v6839 = vunpack.c.l.b16 %v6774
          %v6840 = vunpack.c.l.b16 %v6775
          %v6841 = vunpack.c.l.b16 %v6776
          %v6842 = vunpack.c.l.b16 %v6777
          %v6843 = vunpack.c.l.b16 %v6778
          %v6844 = vunpack.c.l.b16 %v6779
          %v6845 = vunpack.c.l.b16 %v6780
          %v6846 = vunpack.c.l.b16 %v6781
          %v6847 = vunpack.c.l.b16 %v6782
          %v6848 = vunpack.c.l.b16 %v6783
          %v6849 = vunpack.c.l.b16 %v6784
          %v6850 = vunpack.c.l.b16 %v6785
          %v6851 = vunpack.c.l.b16 %v6786
          %v6852 = vpack.c.b16 %v6821, %v6820
          %v6853 = vpack.c.b16 %v6823, %v6822
          %v6854 = vpack.c.b16 %v6825, %v6824
          %v6855 = vpack.c.b16 %v6827, %v6826
          %v6856 = vpack.c.b16 %v6829, %v6828
          %v6857 = vpack.c.b16 %v6831, %v6830
          %v6858 = vpack.c.b16 %v6833, %v6832
          %v6859 = vpack.c.b16 %v6835, %v6834
          %v6860 = vpack.c.b16 %v6837, %v6836
          %v6861 = vpack.c.b16 %v6839, %v6838
          %v6862 = vpack.c.b16 %v6841, %v6840
          %v6863 = vpack.c.b16 %v6843, %v6842
          %v6864 = vpack.c.b16 %v6845, %v6844
          %v6865 = vpack.c.b16 %v6847, %v6846
          %v6866 = vpack.c.b16 %v6849, %v6848
          %v6867 = vpack.c.b16 %v6851, %v6850
          %6884 = vmatprep.subr.bf16.mxu0 0
          %6885 = vmatpush1.bf16.msra.mxu0 %v6852
          %6886 = vmatprep.subr.bf16.mxu0 0
          %6887 = vmatpush1.bf16.msra.mxu0 %v6853
          %6888 = vmatprep.subr.bf16.mxu0 0
          %6889 = vmatpush1.bf16.msra.mxu0 %v6854
          %6890 = vmatprep.subr.bf16.mxu0 0
          %6891 = vmatpush1.bf16.msra.mxu0 %v6855
          %6892 = vmatprep.subr.bf16.mxu0 0
          %6893 = vmatpush1.bf16.msra.mxu0 %v6856
          %6894 = vmatprep.subr.bf16.mxu0 0
          %6895 = vmatpush1.bf16.msra.mxu0 %v6857
          %6896 = vmatprep.subr.bf16.mxu0 0
          %6897 = vmatpush1.bf16.msra.mxu0 %v6858
          %6898 = vmatprep.subr.bf16.mxu0 0
          %6899 = vmatpush1.bf16.msra.mxu0 %v6859
          %6900 = vmatprep.subr.bf16.mxu0 0
          %6901 = vmatpush1.bf16.msra.mxu0 %v6860
          %6902 = vmatprep.subr.bf16.mxu0 0
          %6903 = vmatpush1.bf16.msra.mxu0 %v6861
          %6904 = vmatprep.subr.bf16.mxu0 0
          %6905 = vmatpush1.bf16.msra.mxu0 %v6862
          %6906 = vmatprep.subr.bf16.mxu0 0
          %6907 = vmatpush1.bf16.msra.mxu0 %v6863
          %6908 = vmatprep.subr.bf16.mxu0 0
          %6909 = vmatpush1.bf16.msra.mxu0 %v6864
          %6910 = vmatprep.subr.bf16.mxu0 0
          %6911 = vmatpush1.bf16.msra.mxu0 %v6865
          %6912 = vmatprep.subr.bf16.mxu0 0
          %6913 = vmatpush1.bf16.msra.mxu0 %v6866
          %6914 = vmatprep.subr.bf16.mxu0 0
          %6915 = vmatpush1.bf16.msra.mxu0 %v6867
          %6916 = vmatprep.mubr.bf16.mxu0 %v6754
          %6917 = vmatmul.mubr.bf16.gmra.mrb[0].mxu0 %v6753
          %v6918 = vpop.f32.mrb[0].mxu0
          %v6919 = vadd.f32 %v6787, %v6918
          %v6920 = vpop.f32.mrb[0].mxu0
          %v6921 = vpop.f32.mrb[0].mxu0
          %v6922 = vpop.f32.mrb[0].mxu0
          %6923 = vdwg.mxu0
          %v6924 = vtanh.pop %v6919
          %6925 = vst [vmem:[%s399] sm:$0xff] %v6924
        $region76: #{vit_forward.1} parent=59 // pred_fallthru
          _
        %p6926 = scmp.lt.s32.totalorder %s27, 1
        %s6927 = scalar_select %p6926, %s27, 1
        %s6928 = smul.addr %s6927, 8
        %s6929 = scalar_lea.vmem %s10, %s6928
        // Predicated region
        $region77: #{vit_forward.1} parent=59 // pred_check
          %p6930 = pneg %p268
        $region78: #{vit_forward.1} parent=59 // pred_check_branch
          %6932 = sbr.rel (%p6930) target = $region80
        $region79: #{vit_forward.1} parent=59 // pred_region
          _
        $region80: #{vit_forward.1} parent=59 // pred_fallthru
          _
      $region60: #{vit_forward.1} parent=5 // pred_fallthru
        _
      %p6933 = scmp.le.s32.totalorder 2, %s18
      // Predicated region
      $region81: #{vit_forward.1} parent=5 // pred_check
        %p6934 = pneg %p6933
      $region82: #{vit_forward.1} parent=5 // pred_check_branch
        %6936 = sbr.rel (%p6934) target = $region84
      $region83: #{vit_forward.1} parent=5 // pred_region
        %s6937 = ssub.s32 %s18, 2
        // Predicated region
        $region85: #{vit_forward.1} parent=83 // pred_check
          %p6938 = pneg %p274
        $region86: #{vit_forward.1} parent=83 // pred_check_branch
          %6940 = sbr.rel (%p6938) target = $region88
        $region87: #{vit_forward.1} parent=83 // pred_region
          %p6941 = scmp.lt.s32.totalorder %s29, 1
          %s6942 = scalar_select %p6941, %s29, 1
          %s6943 = smul.addr %s6942, 8
          %s6944 = scalar_lea.vmem %s10, %s6943
        $region88: #{vit_forward.1} parent=83 // pred_fallthru
          _
      $region84: #{vit_forward.1} parent=5 // pred_fallthru
        _
    $region6: #{vit_forward.1} parent=1 // loop_footer
      %s22 = sadd.s32 1, %s18
    $region7: #{vit_forward.1} parent=1 // loop_footer_branch
      %17 = sbr.rel target = $region3
    $region8: #{vit_forward.1} parent=1 // loop_exit
      _
    %6945 = vsyncpa [#allocation4], 1
    %s6946 = scalar_lea.sflag [#allocation4], 1
    %6947 = vsyncpa %s6946, 1
    %6948 = vsyncpa [#allocation6], 1

</llo_original>
